<compile_context>
chip_gen: v5e
topology: v5e:2x2
jax: 0.10.0
libtpu: 0.0.40
codegen_flags: <defaults>
</compile_context>

<pallas_src>
import functools

import jax
import jax.numpy as jnp
from jax import lax
from jax.experimental import pallas as pl
from jax.experimental.pallas import tpu as pltpu


def _round_up(x, m):
    return ((x + m - 1) // m) * m


def _softmax(x):
    m = jnp.max(x, axis=-1, keepdims=True)
    e = jnp.exp(x - m)
    s = jnp.sum(e, axis=-1, keepdims=True)
    r = pl.reciprocal(s, approx=True)        # EUP slot (free-ish)
    r = r * (2.0 - s * r)                    # one Newton step -> ~f32 accuracy
    return e * r


def _dot_nt(a, b):
    # a (M, K) contracted with b (N, K) on the minor (lane) dim -> (M, N); no transpose copy.
    return lax.dot_general(a, b, (((1,), (1,)), ((), ())),
                           preferred_element_type=jnp.float32)


def slot_decoder_kernel(slot_ref, h0_ref, enc_ref, mask_ref, ids_ref, embed_ref,
                        wi_ref, wh_ref, bi_ref, bh_ref, wgen_ref, wgenb_ref,
                        wgate_ref, wgateb_ref, point_ref, gate_ref,
                        ctx_scr, pctx_scr, *, v_real):
    bb, S, _ = enc_ref.shape
    R, H = slot_ref.shape
    Jp = R // bb                              # slots per batch element, padded to 8
    J = point_ref.shape[1]
    max_len = point_ref.shape[2]
    Vpad = embed_ref.shape[0]
    Hp = wi_ref.shape[1] // 3

    embed = embed_ref[...]                    # (Vpad, H): the ONLY vocab-sized VMEM table
    wi, wh = wi_ref[...], wh_ref[...]         # (H, 3*Hp)
    bi, bh = bi_ref[...], bh_ref[...]         # (1, 3*Hp)

    # ---- decode-step-invariant per-batch-element data (hoisted out of the k loop) ----
    iota_sv = lax.broadcasted_iota(jnp.int32, (S, Vpad), 1)
    onehot_ids = [(ids_ref[b] == iota_sv).astype(jnp.float32) for b in range(bb)]
    enc_blocks = [enc_ref[b] for b in range(bb)]       # (S, H) each
    mask_rows = [mask_ref[b] for b in range(bb)]       # (1, S) each, additive -1e9 mask

    iota_v = lax.broadcasted_iota(jnp.int32, (R, Vpad), 1)

    x = slot_ref[...]                         # (R, H): initial decoder inputs (slot embeddings)
    h = h0_ref[...]                           # (R, H): initial GRU hidden

    # statically unrolled greedy decode loop (dropout == identity in eval mode)
    for k in range(max_len):
        # ---- fused GRU cell: 2 MXU matmuls, gates in 128-aligned column blocks (r, z, n) ----
        gi = jnp.dot(x, wi, preferred_element_type=jnp.float32) + bi     # (R, 3*Hp)
        gh = jnp.dot(h, wh, preferred_element_type=jnp.float32) + bh     # (R, 3*Hp)
        r_g = jax.nn.sigmoid(gi[:, 0:H] + gh[:, 0:H])
        z_g = jax.nn.sigmoid(gi[:, Hp:Hp + H] + gh[:, Hp:Hp + H])
        n_g = jnp.tanh(gi[:, 2 * Hp:2 * Hp + H] + r_g * gh[:, 2 * Hp:2 * Hp + H])
        h_new = (1.0 - z_g) * n_g + z_g * h                              # (R, H)

        # ---- per-batch-element encoder attention, context and pointer distribution ----
        for b in range(bb):
            h_b = h_new[b * Jp:(b + 1) * Jp, :]                          # (Jp, H)
            attn_b = _softmax(_dot_nt(h_b, enc_blocks[b]) + mask_rows[b])  # (Jp, S)
            ctx_scr[b * Jp:(b + 1) * Jp, :] = jnp.dot(
                attn_b, enc_blocks[b], preferred_element_type=jnp.float32)     # (Jp, H)
            pctx_scr[b * Jp:(b + 1) * Jp, :] = jnp.dot(
                attn_b, onehot_ids[b], preferred_element_type=jnp.float32)     # (Jp, Vpad)
        context = ctx_scr[...]                                           # (R, H)
        p_ctx = pctx_scr[...]                                            # (R, Vpad)

        # ---- vocab attention against the single (Vpad, H) table (NT matmul) ----
        attn_v = _dot_nt(h_new, embed)                                   # (R, Vpad)
        if v_real < Vpad:                     # static: keep padded vocab cols out of softmax
            attn_v = jnp.where(iota_v < v_real, attn_v, -1e9)
        attn_vocab = _softmax(attn_v)

        # ---- pointer/generator gate: one MXU matmul instead of 3 XLU row reductions ----
        feat = jnp.concatenate([x, h_new, context], axis=-1)             # (R, 3H)
        p_gen = jax.nn.sigmoid(
            jnp.dot(feat, wgen_ref[...], preferred_element_type=jnp.float32)
            + wgenb_ref[...])                                            # (R, 1)

        p_final = p_gen * attn_vocab + (1.0 - p_gen) * p_ctx             # (R, Vpad)

        # write point output directly in final (b, slot, step, vocab) layout
        for b in range(bb):
            point_ref[b, :, k, :] = p_final[b * Jp:b * Jp + J, :]

        if k == 0:  # slot gate: only on the first decoding step
            gate = (jnp.dot(context, wgate_ref[...], preferred_element_type=jnp.float32)
                    + wgateb_ref[...])                                   # (R, GPAD)
            for b in range(bb):
                gate_ref[b, :, :] = gate[b * Jp:b * Jp + J, :]

        if k + 1 < max_len:
            # greedy next token: first-max argmax, then gather its embedding row via a
            # one-hot matmul against the resident (Vpad, H) table.
            m = jnp.max(p_final, axis=-1, keepdims=True)
            w_idx = jnp.min(jnp.where(p_final == m, iota_v, Vpad),
                            axis=-1, keepdims=True)                      # (R, 1)
            onehot_w = (iota_v == w_idx).astype(jnp.float32)             # (R, Vpad)
            x = jnp.dot(onehot_w, embed, preferred_element_type=jnp.float32)   # (R, H)
        h = h_new


def slot_generator_forward(params, input_ids, encoder_output, hidden,
                           input_masks, slot_idx, max_len):
    """JAX/Pallas equivalent of SlotGenerator.forward (teacher=None, eval mode)."""
    embed_w = params['embed']                       # (V, H)
    B, S = input_ids.shape
    V, H = embed_w.shape
    J = slot_idx.shape[0]
    n_gate = params['wgate_b'].shape[-1]

    Vpad = _round_up(max(V, 128), 128)              # lane-dense vocab dim
    GPAD = _round_up(max(n_gate, 128), 128)         # lane-dense gate dim
    Hp = _round_up(H, 128)                          # 128-aligned per-gate column blocks
    Jp = _round_up(J, 8)                            # slots padded to a full sublane tile

    bb = 1                                          # batch elements per grid step
    for cand in range(min(B, 8), 0, -1):
        if B % cand == 0:
            bb = cand
            break
    num_blocks = B // bb
    R = bb * Jp                                     # matmul M dimension inside the kernel

    f32 = jnp.float32

    # ---- one-time parameter prep (single vocab table, fused GRU weights) ----
    embed_pad = jnp.zeros((Vpad, H), f32).at[:V, :].set(embed_w)
    wi_all = jnp.zeros((H, 3 * Hp), f32)
    wh_all = jnp.zeros((H, 3 * Hp), f32)
    bi_all = jnp.zeros((1, 3 * Hp), f32)
    bh_all = jnp.zeros((1, 3 * Hp), f32)
    for g in range(3):
        wi_all = wi_all.at[:, g * Hp:g * Hp + H].set(params['wi_t'][g])
        wh_all = wh_all.at[:, g * Hp:g * Hp + H].set(params['wh_t'][g])
        bi_all = bi_all.at[:, g * Hp:g * Hp + H].set(params['b_ih'][g])
        bh_all = bh_all.at[:, g * Hp:g * Hp + H].set(params['b_hh'][g])
    wgen_all = params['wgen_w'].reshape(3 * H, 1)                # cat order [w, h, ctx]
    wgen_b = params['wgen_b'].reshape(1, 1)
    wgate_w_pad = jnp.zeros((H, GPAD), f32).at[:, :n_gate].set(params['wgate_w'])
    wgate_b_pad = jnp.zeros((1, GPAD), f32).at[:, :n_gate].set(params['wgate_b'])

    # ---- per-call input prep (no J-repeat of enc/ids/masks, no enc^T copy) ----
    slot_e = jnp.sum(embed_w[slot_idx], axis=1)                                   # (J, H)
    slot_rows = jnp.tile(jnp.zeros((Jp, H), f32).at[:J, :].set(slot_e), (bb, 1))  # (R, H)
    h0_rows = jnp.repeat(hidden[0].astype(f32), Jp, axis=0)                       # (B*Jp, H)
    mask_add = jnp.where(input_masks != 1, -1e9, 0.0).astype(f32)[:, None, :]     # (B, 1, S)
    ids = input_ids.astype(jnp.int32)[:, :, None]                                 # (B, S, 1)
    enc = encoder_output.astype(f32)                                              # (B, S, H)

    kernel = functools.partial(slot_decoder_kernel, v_real=V)

    def run(single_buffer_invariants):
        def inv(shape):
            # grid-invariant block: single-buffered (no wasted second VMEM copy)
            kw = dict(pipeline_mode=pl.Buffered(1)) if single_buffer_invariants else {}
            return pl.BlockSpec(shape, lambda i: (0,) * len(shape), **kw)

        in_specs = [
            inv((R, H)),                                          # initial slot rows
            pl.BlockSpec((bb * Jp, H), lambda i: (i, 0)),         # initial GRU hidden rows
            pl.BlockSpec((bb, S, H), lambda i: (i, 0, 0)),        # encoder output
            pl.BlockSpec((bb, 1, S), lambda i: (i, 0, 0)),        # additive mask
            pl.BlockSpec((bb, S, 1), lambda i: (i, 0, 0)),        # input ids
            inv((Vpad, H)),                                       # embedding table (single copy)
            inv((H, 3 * Hp)),                                     # fused W_ih
            inv((H, 3 * Hp)),                                     # fused W_hh
            inv((1, 3 * Hp)),                                     # fused b_ih
            inv((1, 3 * Hp)),                                     # fused b_hh
            inv((3 * H, 1)),                                      # w_gen weight
            inv((1, 1)),                                          # w_gen bias
            inv((H, GPAD)),                                       # w_gate weight
            inv((1, GPAD)),                                       # w_gate bias
        ]
        return pl.pallas_call(
            kernel,
            out_shape=(jax.ShapeDtypeStruct((B, J, max_len, Vpad), f32),
                       jax.ShapeDtypeStruct((B, J, GPAD), f32)),
            grid=(num_blocks,),
            in_specs=in_specs,
            out_specs=(
                pl.BlockSpec((bb, J, max_len, Vpad), lambda i: (i, 0, 0, 0)),
                pl.BlockSpec((bb, J, GPAD), lambda i: (i, 0, 0)),
            ),
            scratch_shapes=[pltpu.VMEM((R, H), f32),       # assembled context rows
                            pltpu.VMEM((R, Vpad), f32)],   # assembled pointer-dist rows
            compiler_params=pltpu.CompilerParams(
                dimension_semantics=("parallel",),
                vmem_limit_bytes=32 * 1024 * 1024),
        )(slot_rows, h0_rows, enc, mask_add, ids, embed_pad, wi_all, wh_all,
          bi_all, bh_all, wgen_all, wgen_b, wgate_w_pad, wgate_b_pad)

    try:
        out_point, out_gate = run(True)
    except Exception:
        # pl.Buffered(1) unsupported on this JAX version -> fall back to default buffering
        out_point, out_gate = run(False)

    all_point_outputs = out_point[..., :V]          # (B, J, max_len, V): final layout already
    all_gate_outputs = out_gate[..., :n_gate]       # (B, J, n_gate)
    return all_point_outputs, all_gate_outputs


# ---------------- pure-JAX reference (same math, no Pallas) ----------------
def reference_forward(params, input_ids, encoder_output, hidden,
                      input_masks, slot_idx, max_len):
    embed_w = params['embed']
    B, S = input_ids.shape
    V, H = embed_w.shape
    J = slot_idx.shape[0]
    n_gate = params['wgate_b'].shape[-1]

    slot_e = jnp.sum(embed_w[slot_idx], axis=1)
    w = jnp.tile(slot_e, (B, 1))
    h = jnp.repeat(hidden[0], J, axis=0)
    enc = jnp.repeat(encoder_output, J, axis=0)
    ids = jnp.repeat(input_ids, J, axis=0)
    masks = jnp.repeat(input_masks, J, axis=0)
    mask_add = jnp.where(masks != 1, -1e9, 0.0).astype(jnp.float32)
    ids1h = jax.nn.one_hot(ids, V, dtype=jnp.float32)

    points = []
    gate = None
    for k in range(max_len):
        lin = lambda a, W, b, g: a @ W[g] + b[g]
        r = jax.nn.sigmoid(lin(w, params['wi_t'], params['b_ih'], 0)
                           + lin(h, params['wh_t'], params['b_hh'], 0))
        z = jax.nn.sigmoid(lin(w, params['wi_t'], params['b_ih'], 1)
                           + lin(h, params['wh_t'], params['b_hh'], 1))
        n = jnp.tanh(lin(w, params['wi_t'], params['b_ih'], 2)
                     + r * lin(h, params['wh_t'], params['b_hh'], 2))
        h = (1 - z) * n + z * h
        attn_e = jnp.einsum('rsh,rh->rs', enc, h) + mask_add
        attn_history = jax.nn.softmax(attn_e, axis=-1)
        attn_vocab = jax.nn.softmax(h @ embed_w.T, axis=-1)
        context = jnp.einsum('rs,rsh->rh', attn_history, enc)
        wg = params['wgen_w']
        p_gen = jax.nn.sigmoid(
            jnp.sum(w * wg[0], -1, keepdims=True)
            + jnp.sum(h * wg[1], -1, keepdims=True)
            + jnp.sum(context * wg[2], -1, keepdims=True) + params['wgen_b'])
        p_ctx = jnp.einsum('rs,rsv->rv', attn_history, ids1h)
        p_final = p_gen * attn_vocab + (1 - p_gen) * p_ctx
        points.append(p_final)
        w = embed_w[jnp.argmax(p_final, axis=-1)]
        if k == 0:
            gate = context @ params['wgate_w'] + params['wgate_b']
    pts = jnp.stack(points, axis=0).transpose(1, 0, 2).reshape(B, J, max_len, V)
    return pts, gate.reshape(B, J, n_gate)


if __name__ == "__main__":
    # Small synthetic config (vocab_size=64, hidden_size=32, proj_dim=None,
    # n_gate=3, dropout eval-mode, pad_idx=0).
    V, H, B, S, J, L, N_GATE, MAX_LEN = 64, 32, 2, 8, 3, 4, 3, 4
    key = jax.random.PRNGKey(0)
    keys = jax.random.split(key, 12)

    embed = 0.02 * jax.random.normal(keys[0], (V, H), jnp.float32)
    embed = embed.at[0].set(0.0)  # padding_idx=0 row is zero
    sc = 1.0 / jnp.sqrt(H)
    params = {
        'embed':   embed,
        'wi_t':    sc * jax.random.normal(keys[1], (3, H, H), jnp.float32),
        'wh_t':    sc * jax.random.normal(keys[2], (3, H, H), jnp.float32),
        'b_ih':    sc * jax.random.normal(keys[3], (3, H), jnp.float32),
        'b_hh':    sc * jax.random.normal(keys[4], (3, H), jnp.float32),
        'wgen_w':  sc * jax.random.normal(keys[5], (3, H), jnp.float32),
        'wgen_b':  sc * jax.random.normal(keys[6], (1, 1), jnp.float32),
        'wgate_w': sc * jax.random.normal(keys[7], (H, N_GATE), jnp.float32),
        'wgate_b': sc * jax.random.normal(keys[8], (1, N_GATE), jnp.float32),
    }

    lengths = jnp.array([S, 5])
    input_masks = (jnp.arange(S)[None, :] < lengths[:, None]).astype(jnp.int32)  # 1=valid
    input_ids = jax.random.randint(keys[9], (B, S), 2, V).astype(jnp.int32)
    input_ids = jnp.where(input_masks == 1, input_ids, 0)
    encoder_output = jax.random.normal(keys[10], (B, S, H), jnp.float32)
    hidden = jax.random.normal(keys[11], (1, B, H), jnp.float32)
    slot_idx = jnp.array([[3, 5, 2, 0], [7, 1, 0, 0], [9, 4, 6, 8]], jnp.int32)

    point_out, gate_out = slot_generator_forward(
        params, input_ids, encoder_output, hidden, input_masks, slot_idx, MAX_LEN)
    jax.block_until_ready((point_out, gate_out))

    ref_point, ref_gate = reference_forward(
        params, input_ids, encoder_output, hidden, input_masks, slot_idx, MAX_LEN)

    assert point_out.shape == (B, J, MAX_LEN, V)
    assert gate_out.shape == (B, J, N_GATE)
    assert bool(jnp.all(jnp.isfinite(point_out)))
    assert bool(jnp.allclose(point_out, ref_point, atol=2e-3, rtol=2e-3))
    assert bool(jnp.allclose(gate_out, ref_gate, atol=2e-3, rtol=2e-3))
    print("KERNEL_OK")
</pallas_src>

<mosaic_0001>
module attributes {stable_mosaic.version = 11 : i64} {
  func.func @slot_decoder_kernel(%arg0: i32, %arg1: memref<16x32xf32, #tpu.memory_space<vmem>>, %arg2: memref<16x32xf32, #tpu.memory_space<vmem>>, %arg3: memref<2x8x32xf32, #tpu.memory_space<vmem>>, %arg4: memref<2x1x8xf32, #tpu.memory_space<vmem>>, %arg5: memref<2x8x1xi32, #tpu.memory_space<vmem>>, %arg6: memref<128x32xf32, #tpu.memory_space<vmem>>, %arg7: memref<32x384xf32, #tpu.memory_space<vmem>>, %arg8: memref<32x384xf32, #tpu.memory_space<vmem>>, %arg9: memref<1x384xf32, #tpu.memory_space<vmem>>, %arg10: memref<1x384xf32, #tpu.memory_space<vmem>>, %arg11: memref<96x1xf32, #tpu.memory_space<vmem>>, %arg12: memref<1x1xf32, #tpu.memory_space<vmem>>, %arg13: memref<32x128xf32, #tpu.memory_space<vmem>>, %arg14: memref<1x128xf32, #tpu.memory_space<vmem>>, %arg15: memref<2x3x4x128xf32, #tpu.memory_space<vmem>>, %arg16: memref<2x3x128xf32, #tpu.memory_space<vmem>>, %arg17: memref<16x32xf32, #tpu.memory_space<vmem>>, %arg18: memref<16x128xf32, #tpu.memory_space<vmem>>) attributes {dimension_semantics = [#tpu.dimension_semantics<parallel>], iteration_bounds = array<i64: 1>, scalar_prefetch = 0 : i64, scratch_operands = 2 : i64, tpu.core_type = #tpu.core_type<tc>, window_params = [{pipeline_mode = #tpu.pipeline_mode<synchronous>, transform_indices = @transform_0, window_bounds = array<i64: 16, 32>}, {transform_indices = @transform_1, window_bounds = array<i64: 16, 32>}, {transform_indices = @transform_2, window_bounds = array<i64: 2, 8, 32>}, {transform_indices = @transform_3, window_bounds = array<i64: 2, 1, 8>}, {transform_indices = @transform_4, window_bounds = array<i64: 2, 8, 1>}, {pipeline_mode = #tpu.pipeline_mode<synchronous>, transform_indices = @transform_5, window_bounds = array<i64: 128, 32>}, {pipeline_mode = #tpu.pipeline_mode<synchronous>, transform_indices = @transform_6, window_bounds = array<i64: 32, 384>}, {pipeline_mode = #tpu.pipeline_mode<synchronous>, transform_indices = @transform_7, window_bounds = array<i64: 32, 384>}, {pipeline_mode = #tpu.pipeline_mode<synchronous>, transform_indices = @transform_8, window_bounds = array<i64: 1, 384>}, {pipeline_mode = #tpu.pipeline_mode<synchronous>, transform_indices = @transform_9, window_bounds = array<i64: 1, 384>}, {pipeline_mode = #tpu.pipeline_mode<synchronous>, transform_indices = @transform_10, window_bounds = array<i64: 96, 1>}, {pipeline_mode = #tpu.pipeline_mode<synchronous>, transform_indices = @transform_11, window_bounds = array<i64: 1, 1>}, {pipeline_mode = #tpu.pipeline_mode<synchronous>, transform_indices = @transform_12, window_bounds = array<i64: 32, 128>}, {pipeline_mode = #tpu.pipeline_mode<synchronous>, transform_indices = @transform_13, window_bounds = array<i64: 1, 128>}, {transform_indices = @transform_14, window_bounds = array<i64: 2, 3, 4, 128>}, {transform_indices = @transform_15, window_bounds = array<i64: 2, 3, 128>}]} {
    %c0 = arith.constant 0 : index
    %c0_0 = arith.constant 0 : index
    %0 = vector.load %arg6[%c0, %c0_0] : memref<128x32xf32, #tpu.memory_space<vmem>>, vector<128x32xf32>
    %c0_1 = arith.constant 0 : index
    %c0_2 = arith.constant 0 : index
    %1 = vector.load %arg7[%c0_1, %c0_2] : memref<32x384xf32, #tpu.memory_space<vmem>>, vector<32x384xf32>
    %c0_3 = arith.constant 0 : index
    %c0_4 = arith.constant 0 : index
    %2 = vector.load %arg8[%c0_3, %c0_4] : memref<32x384xf32, #tpu.memory_space<vmem>>, vector<32x384xf32>
    %c0_5 = arith.constant 0 : index
    %c0_6 = arith.constant 0 : index
    %3 = vector.load %arg9[%c0_5, %c0_6] : memref<1x384xf32, #tpu.memory_space<vmem>>, vector<1x384xf32>
    %c0_7 = arith.constant 0 : index
    %c0_8 = arith.constant 0 : index
    %4 = vector.load %arg10[%c0_7, %c0_8] : memref<1x384xf32, #tpu.memory_space<vmem>>, vector<1x384xf32>
    %5 = tpu.iota {dimensions = array<i32: 1>} : vector<8x128xi32>
    %c0_9 = arith.constant 0 : index
    %c0_10 = arith.constant 0 : index
    %c0_11 = arith.constant 0 : index
    %6 = vector.load %arg5[%c0_9, %c0_10, %c0_11] : memref<2x8x1xi32, #tpu.memory_space<vmem>>, vector<1x8x1xi32>
    %7 = vector.shape_cast %6 : vector<1x8x1xi32> to vector<8x1xi32>
    %8 = vector.broadcast %7 : vector<8x1xi32> to vector<8x128xi32>
    %9 = arith.cmpi eq, %8, %5 : vector<8x128xi32>
    %10 = arith.extui %9 : vector<8x128xi1> to vector<8x128xi32>
    %11 = arith.sitofp %10 : vector<8x128xi32> to vector<8x128xf32>
    %c1 = arith.constant 1 : index
    %c0_12 = arith.constant 0 : index
    %c0_13 = arith.constant 0 : index
    %12 = vector.load %arg5[%c1, %c0_12, %c0_13] : memref<2x8x1xi32, #tpu.memory_space<vmem>>, vector<1x8x1xi32>
    %13 = vector.shape_cast %12 : vector<1x8x1xi32> to vector<8x1xi32>
    %14 = vector.broadcast %13 : vector<8x1xi32> to vector<8x128xi32>
    %15 = arith.cmpi eq, %14, %5 : vector<8x128xi32>
    %16 = arith.extui %15 : vector<8x128xi1> to vector<8x128xi32>
    %17 = arith.sitofp %16 : vector<8x128xi32> to vector<8x128xf32>
    %c0_14 = arith.constant 0 : index
    %c0_15 = arith.constant 0 : index
    %c0_16 = arith.constant 0 : index
    %18 = vector.load %arg3[%c0_14, %c0_15, %c0_16] : memref<2x8x32xf32, #tpu.memory_space<vmem>>, vector<1x8x32xf32>
    %19 = vector.shape_cast %18 : vector<1x8x32xf32> to vector<8x32xf32>
    %c1_17 = arith.constant 1 : index
    %c0_18 = arith.constant 0 : index
    %c0_19 = arith.constant 0 : index
    %20 = vector.load %arg3[%c1_17, %c0_18, %c0_19] : memref<2x8x32xf32, #tpu.memory_space<vmem>>, vector<1x8x32xf32>
    %21 = vector.shape_cast %20 : vector<1x8x32xf32> to vector<8x32xf32>
    %c0_20 = arith.constant 0 : index
    %c0_21 = arith.constant 0 : index
    %c0_22 = arith.constant 0 : index
    %22 = vector.load %arg4[%c0_20, %c0_21, %c0_22] : memref<2x1x8xf32, #tpu.memory_space<vmem>>, vector<1x1x8xf32>
    %23 = vector.shape_cast %22 : vector<1x1x8xf32> to vector<1x8xf32>
    %c1_23 = arith.constant 1 : index
    %c0_24 = arith.constant 0 : index
    %c0_25 = arith.constant 0 : index
    %24 = vector.load %arg4[%c1_23, %c0_24, %c0_25] : memref<2x1x8xf32, #tpu.memory_space<vmem>>, vector<1x1x8xf32>
    %25 = vector.shape_cast %24 : vector<1x1x8xf32> to vector<1x8xf32>
    %26 = tpu.iota {dimensions = array<i32: 1>} : vector<16x128xi32>
    %c0_26 = arith.constant 0 : index
    %c0_27 = arith.constant 0 : index
    %27 = vector.load %arg1[%c0_26, %c0_27] : memref<16x32xf32, #tpu.memory_space<vmem>>, vector<16x32xf32>
    %c0_28 = arith.constant 0 : index
    %c0_29 = arith.constant 0 : index
    %28 = vector.load %arg2[%c0_28, %c0_29] : memref<16x32xf32, #tpu.memory_space<vmem>>, vector<16x32xf32>
    %cst = arith.constant dense<0.000000e+00> : vector<16x384xf32>
    %29 = tpu.matmul %27, %1, %cst {dimension_numbers = #tpu.dot_dimension_numbers<[1], [0], [0], [1], [0, 0, 1, 1], [], []>} : vector<16x32xf32>, vector<32x384xf32>, vector<16x384xf32> -> vector<16x384xf32>
    %30 = vector.broadcast %3 : vector<1x384xf32> to vector<16x384xf32>
    %31 = arith.addf %29, %30 : vector<16x384xf32>
    %cst_30 = arith.constant dense<0.000000e+00> : vector<16x384xf32>
    %32 = tpu.matmul %28, %2, %cst_30 {dimension_numbers = #tpu.dot_dimension_numbers<[1], [0], [0], [1], [0, 0, 1, 1], [], []>} : vector<16x32xf32>, vector<32x384xf32>, vector<16x384xf32> -> vector<16x384xf32>
    %33 = vector.broadcast %4 : vector<1x384xf32> to vector<16x384xf32>
    %34 = arith.addf %32, %33 : vector<16x384xf32>
    %35 = vector.extract_strided_slice %31 {offsets = [0, 0], sizes = [16, 32], strides = [1, 1]} : vector<16x384xf32> to vector<16x32xf32>
    %36 = vector.extract_strided_slice %34 {offsets = [0, 0], sizes = [16, 32], strides = [1, 1]} : vector<16x384xf32> to vector<16x32xf32>
    %37 = arith.addf %35, %36 : vector<16x32xf32>
    %38 = arith.negf %37 : vector<16x32xf32>
    %39 = math.exp %38 : vector<16x32xf32>
    %cst_31 = arith.constant 1.000000e+00 : f32
    %40 = vector.broadcast %cst_31 : f32 to vector<16x32xf32>
    %41 = arith.addf %40, %39 : vector<16x32xf32>
    %42 = arith.divf %40, %41 : vector<16x32xf32>
    %43 = vector.extract_strided_slice %31 {offsets = [0, 128], sizes = [16, 32], strides = [1, 1]} : vector<16x384xf32> to vector<16x32xf32>
    %44 = vector.extract_strided_slice %34 {offsets = [0, 128], sizes = [16, 32], strides = [1, 1]} : vector<16x384xf32> to vector<16x32xf32>
    %45 = arith.addf %43, %44 : vector<16x32xf32>
    %46 = arith.negf %45 : vector<16x32xf32>
    %47 = math.exp %46 : vector<16x32xf32>
    %cst_32 = arith.constant 1.000000e+00 : f32
    %48 = vector.broadcast %cst_32 : f32 to vector<16x32xf32>
    %49 = arith.addf %48, %47 : vector<16x32xf32>
    %50 = arith.divf %48, %49 : vector<16x32xf32>
    %51 = vector.extract_strided_slice %31 {offsets = [0, 256], sizes = [16, 32], strides = [1, 1]} : vector<16x384xf32> to vector<16x32xf32>
    %52 = vector.extract_strided_slice %34 {offsets = [0, 256], sizes = [16, 32], strides = [1, 1]} : vector<16x384xf32> to vector<16x32xf32>
    %53 = arith.mulf %42, %52 : vector<16x32xf32>
    %54 = arith.addf %51, %53 : vector<16x32xf32>
    %55 = math.tanh %54 : vector<16x32xf32>
    %cst_33 = arith.constant 1.000000e+00 : f32
    %56 = vector.broadcast %cst_33 : f32 to vector<16x32xf32>
    %57 = arith.subf %56, %50 : vector<16x32xf32>
    %58 = arith.mulf %57, %55 : vector<16x32xf32>
    %59 = arith.mulf %50, %28 : vector<16x32xf32>
    %60 = arith.addf %58, %59 : vector<16x32xf32>
    %61 = vector.extract_strided_slice %60 {offsets = [0, 0], sizes = [8, 32], strides = [1, 1]} : vector<16x32xf32> to vector<8x32xf32>
    %cst_34 = arith.constant dense<0.000000e+00> : vector<8x8xf32>
    %62 = tpu.matmul %61, %19, %cst_34 {dimension_numbers = #tpu.dot_dimension_numbers<[1], [1], [0], [0], [0, 0, 1, 0], [], []>} : vector<8x32xf32>, vector<8x32xf32>, vector<8x8xf32> -> vector<8x8xf32>
    %63 = vector.broadcast %23 : vector<1x8xf32> to vector<8x8xf32>
    %64 = arith.addf %62, %63 : vector<8x8xf32>
    %cst_35 = arith.constant dense<0xFF800000> : vector<8xf32>
    %65 = vector.multi_reduction <maximumf>, %64, %cst_35 [1] : vector<8x8xf32> to vector<8xf32>
    %66 = vector.shape_cast %65 : vector<8xf32> to vector<8x1xf32>
    %67 = vector.broadcast %66 : vector<8x1xf32> to vector<8x8xf32>
    %68 = arith.subf %64, %67 : vector<8x8xf32>
    %69 = math.exp %68 : vector<8x8xf32>
    %cst_36 = arith.constant dense<0.000000e+00> : vector<8xf32>
    %70 = vector.multi_reduction <add>, %69, %cst_36 [1] : vector<8x8xf32> to vector<8xf32>
    %71 = vector.shape_cast %70 : vector<8xf32> to vector<8x1xf32>
    %72 = tpu.reciprocal %71 {approx = true} : vector<8x1xf32> -> vector<8x1xf32>
    %73 = arith.mulf %71, %72 : vector<8x1xf32>
    %cst_37 = arith.constant 2.000000e+00 : f32
    %74 = vector.broadcast %cst_37 : f32 to vector<8x1xf32>
    %75 = arith.subf %74, %73 : vector<8x1xf32>
    %76 = arith.mulf %72, %75 : vector<8x1xf32>
    %77 = vector.broadcast %76 : vector<8x1xf32> to vector<8x8xf32>
    %78 = arith.mulf %69, %77 : vector<8x8xf32>
    %cst_38 = arith.constant dense<0.000000e+00> : vector<8x32xf32>
    %79 = tpu.matmul %78, %19, %cst_38 {dimension_numbers = #tpu.dot_dimension_numbers<[1], [0], [0], [1], [0, 0, 1, 1], [], []>} : vector<8x8xf32>, vector<8x32xf32>, vector<8x32xf32> -> vector<8x32xf32>
    %c0_39 = arith.constant 0 : index
    %c0_40 = arith.constant 0 : index
    %80 = vector.load %arg17[%c0_39, %c0_40] : memref<16x32xf32, #tpu.memory_space<vmem>>, vector<8x32xf32>
    tpu.vector_store %arg17[%c0_39, %c0_40], %79 {strides = array<i32>} : memref<16x32xf32, #tpu.memory_space<vmem>>, vector<8x32xf32>,
    %cst_41 = arith.constant dense<0.000000e+00> : vector<8x128xf32>
    %81 = tpu.matmul %78, %11, %cst_41 {dimension_numbers = #tpu.dot_dimension_numbers<[1], [0], [0], [1], [0, 0, 1, 1], [], []>} : vector<8x8xf32>, vector<8x128xf32>, vector<8x128xf32> -> vector<8x128xf32>
    %c0_42 = arith.constant 0 : index
    %c0_43 = arith.constant 0 : index
    %82 = vector.load %arg18[%c0_42, %c0_43] : memref<16x128xf32, #tpu.memory_space<vmem>>, vector<8x128xf32>
    tpu.vector_store %arg18[%c0_42, %c0_43], %81 {strides = array<i32>} : memref<16x128xf32, #tpu.memory_space<vmem>>, vector<8x128xf32>,
    %83 = vector.extract_strided_slice %60 {offsets = [8, 0], sizes = [8, 32], strides = [1, 1]} : vector<16x32xf32> to vector<8x32xf32>
    %cst_44 = arith.constant dense<0.000000e+00> : vector<8x8xf32>
    %84 = tpu.matmul %83, %21, %cst_44 {dimension_numbers = #tpu.dot_dimension_numbers<[1], [1], [0], [0], [0, 0, 1, 0], [], []>} : vector<8x32xf32>, vector<8x32xf32>, vector<8x8xf32> -> vector<8x8xf32>
    %85 = vector.broadcast %25 : vector<1x8xf32> to vector<8x8xf32>
    %86 = arith.addf %84, %85 : vector<8x8xf32>
    %cst_45 = arith.constant dense<0xFF800000> : vector<8xf32>
    %87 = vector.multi_reduction <maximumf>, %86, %cst_45 [1] : vector<8x8xf32> to vector<8xf32>
    %88 = vector.shape_cast %87 : vector<8xf32> to vector<8x1xf32>
    %89 = vector.broadcast %88 : vector<8x1xf32> to vector<8x8xf32>
    %90 = arith.subf %86, %89 : vector<8x8xf32>
    %91 = math.exp %90 : vector<8x8xf32>
    %cst_46 = arith.constant dense<0.000000e+00> : vector<8xf32>
    %92 = vector.multi_reduction <add>, %91, %cst_46 [1] : vector<8x8xf32> to vector<8xf32>
    %93 = vector.shape_cast %92 : vector<8xf32> to vector<8x1xf32>
    %94 = tpu.reciprocal %93 {approx = true} : vector<8x1xf32> -> vector<8x1xf32>
    %95 = arith.mulf %93, %94 : vector<8x1xf32>
    %cst_47 = arith.constant 2.000000e+00 : f32
    %96 = vector.broadcast %cst_47 : f32 to vector<8x1xf32>
    %97 = arith.subf %96, %95 : vector<8x1xf32>
    %98 = arith.mulf %94, %97 : vector<8x1xf32>
    %99 = vector.broadcast %98 : vector<8x1xf32> to vector<8x8xf32>
    %100 = arith.mulf %91, %99 : vector<8x8xf32>
    %cst_48 = arith.constant dense<0.000000e+00> : vector<8x32xf32>
    %101 = tpu.matmul %100, %21, %cst_48 {dimension_numbers = #tpu.dot_dimension_numbers<[1], [0], [0], [1], [0, 0, 1, 1], [], []>} : vector<8x8xf32>, vector<8x32xf32>, vector<8x32xf32> -> vector<8x32xf32>
    %c8 = arith.constant 8 : index
    %c0_49 = arith.constant 0 : index
    %102 = vector.load %arg17[%c8, %c0_49] : memref<16x32xf32, #tpu.memory_space<vmem>>, vector<8x32xf32>
    tpu.vector_store %arg17[%c8, %c0_49], %101 {strides = array<i32>} : memref<16x32xf32, #tpu.memory_space<vmem>>, vector<8x32xf32>,
    %cst_50 = arith.constant dense<0.000000e+00> : vector<8x128xf32>
    %103 = tpu.matmul %100, %17, %cst_50 {dimension_numbers = #tpu.dot_dimension_numbers<[1], [0], [0], [1], [0, 0, 1, 1], [], []>} : vector<8x8xf32>, vector<8x128xf32>, vector<8x128xf32> -> vector<8x128xf32>
    %c8_51 = arith.constant 8 : index
    %c0_52 = arith.constant 0 : index
    %104 = vector.load %arg18[%c8_51, %c0_52] : memref<16x128xf32, #tpu.memory_space<vmem>>, vector<8x128xf32>
    tpu.vector_store %arg18[%c8_51, %c0_52], %103 {strides = array<i32>} : memref<16x128xf32, #tpu.memory_space<vmem>>, vector<8x128xf32>,
    %c0_53 = arith.constant 0 : index
    %c0_54 = arith.constant 0 : index
    %105 = vector.load %arg17[%c0_53, %c0_54] : memref<16x32xf32, #tpu.memory_space<vmem>>, vector<16x32xf32>
    %c0_55 = arith.constant 0 : index
    %c0_56 = arith.constant 0 : index
    %106 = vector.load %arg18[%c0_55, %c0_56] : memref<16x128xf32, #tpu.memory_space<vmem>>, vector<16x128xf32>
    %cst_57 = arith.constant dense<0.000000e+00> : vector<16x128xf32>
    %107 = tpu.matmul %60, %0, %cst_57 {dimension_numbers = #tpu.dot_dimension_numbers<[1], [1], [0], [0], [0, 0, 1, 0], [], []>} : vector<16x32xf32>, vector<128x32xf32>, vector<16x128xf32> -> vector<16x128xf32>
    %c64_i32 = arith.constant 64 : i32
    %108 = vector.broadcast %c64_i32 : i32 to vector<16x128xi32>
    %109 = arith.cmpi slt, %26, %108 : vector<16x128xi32>
    %cst_58 = arith.constant -1.000000e+09 : f32
    %110 = vector.broadcast %cst_58 : f32 to vector<16x128xf32>
    %111 = arith.select %109, %107, %110 : vector<16x128xi1>, vector<16x128xf32>
    %cst_59 = arith.constant dense<0xFF800000> : vector<16xf32>
    %112 = vector.multi_reduction <maximumf>, %111, %cst_59 [1] : vector<16x128xf32> to vector<16xf32>
    %113 = vector.shape_cast %112 : vector<16xf32> to vector<16x1xf32>
    %114 = vector.broadcast %113 : vector<16x1xf32> to vector<16x128xf32>
    %115 = arith.subf %111, %114 : vector<16x128xf32>
    %116 = math.exp %115 : vector<16x128xf32>
    %cst_60 = arith.constant dense<0.000000e+00> : vector<16xf32>
    %117 = vector.multi_reduction <add>, %116, %cst_60 [1] : vector<16x128xf32> to vector<16xf32>
    %118 = vector.shape_cast %117 : vector<16xf32> to vector<16x1xf32>
    %119 = tpu.reciprocal %118 {approx = true} : vector<16x1xf32> -> vector<16x1xf32>
    %120 = arith.mulf %118, %119 : vector<16x1xf32>
    %cst_61 = arith.constant 2.000000e+00 : f32
    %121 = vector.broadcast %cst_61 : f32 to vector<16x1xf32>
    %122 = arith.subf %121, %120 : vector<16x1xf32>
    %123 = arith.mulf %119, %122 : vector<16x1xf32>
    %124 = vector.broadcast %123 : vector<16x1xf32> to vector<16x128xf32>
    %125 = arith.mulf %116, %124 : vector<16x128xf32>
    %126 = tpu.concatenate %27, %60, %105 in 1 : vector<16x32xf32>, vector<16x32xf32>, vector<16x32xf32> -> vector<16x96xf32>
    %c0_62 = arith.constant 0 : index
    %c0_63 = arith.constant 0 : index
    %127 = vector.load %arg11[%c0_62, %c0_63] : memref<96x1xf32, #tpu.memory_space<vmem>>, vector<96x1xf32>
    %cst_64 = arith.constant dense<0.000000e+00> : vector<16x1xf32>
    %128 = tpu.matmul %126, %127, %cst_64 {dimension_numbers = #tpu.dot_dimension_numbers<[1], [0], [0], [1], [0, 0, 1, 1], [], []>} : vector<16x96xf32>, vector<96x1xf32>, vector<16x1xf32> -> vector<16x1xf32>
    %c0_65 = arith.constant 0 : index
    %c0_66 = arith.constant 0 : index
    %129 = vector.load %arg12[%c0_65, %c0_66] : memref<1x1xf32, #tpu.memory_space<vmem>>, vector<1x1xf32>
    %130 = vector.broadcast %129 : vector<1x1xf32> to vector<16x1xf32>
    %131 = arith.addf %128, %130 : vector<16x1xf32>
    %132 = arith.negf %131 : vector<16x1xf32>
    %133 = math.exp %132 : vector<16x1xf32>
    %cst_67 = arith.constant 1.000000e+00 : f32
    %134 = vector.broadcast %cst_67 : f32 to vector<16x1xf32>
    %135 = arith.addf %134, %133 : vector<16x1xf32>
    %136 = arith.divf %134, %135 : vector<16x1xf32>
    %137 = vector.broadcast %136 : vector<16x1xf32> to vector<16x128xf32>
    %138 = arith.mulf %137, %125 : vector<16x128xf32>
    %cst_68 = arith.constant 1.000000e+00 : f32
    %139 = vector.broadcast %cst_68 : f32 to vector<16x1xf32>
    %140 = arith.subf %139, %136 : vector<16x1xf32>
    %141 = vector.broadcast %140 : vector<16x1xf32> to vector<16x128xf32>
    %142 = arith.mulf %141, %106 : vector<16x128xf32>
    %143 = arith.addf %138, %142 : vector<16x128xf32>
    %144 = vector.extract_strided_slice %143 {offsets = [0, 0], sizes = [3, 128], strides = [1, 1]} : vector<16x128xf32> to vector<3x128xf32>
    %c0_69 = arith.constant 0 : index
    %c0_70 = arith.constant 0 : index
    %c0_71 = arith.constant 0 : index
    %c0_72 = arith.constant 0 : index
    %145 = vector.load %arg15[%c0_69, %c0_70, %c0_71, %c0_72] : memref<2x3x4x128xf32, #tpu.memory_space<vmem>>, vector<1x3x1x128xf32>
    %146 = vector.shape_cast %145 : vector<1x3x1x128xf32> to vector<3x128xf32>
    %147 = vector.shape_cast %144 : vector<3x128xf32> to vector<1x3x1x128xf32>
    tpu.vector_store %arg15[%c0_69, %c0_70, %c0_71, %c0_72], %147 {strides = array<i32>} : memref<2x3x4x128xf32, #tpu.memory_space<vmem>>, vector<1x3x1x128xf32>,
    %148 = vector.extract_strided_slice %143 {offsets = [8, 0], sizes = [3, 128], strides = [1, 1]} : vector<16x128xf32> to vector<3x128xf32>
    %c1_73 = arith.constant 1 : index
    %c0_74 = arith.constant 0 : index
    %c0_75 = arith.constant 0 : index
    %c0_76 = arith.constant 0 : index
    %149 = vector.load %arg15[%c1_73, %c0_74, %c0_75, %c0_76] : memref<2x3x4x128xf32, #tpu.memory_space<vmem>>, vector<1x3x1x128xf32>
    %150 = vector.shape_cast %149 : vector<1x3x1x128xf32> to vector<3x128xf32>
    %151 = vector.shape_cast %148 : vector<3x128xf32> to vector<1x3x1x128xf32>
    tpu.vector_store %arg15[%c1_73, %c0_74, %c0_75, %c0_76], %151 {strides = array<i32>} : memref<2x3x4x128xf32, #tpu.memory_space<vmem>>, vector<1x3x1x128xf32>,
    %c0_77 = arith.constant 0 : index
    %c0_78 = arith.constant 0 : index
    %152 = vector.load %arg13[%c0_77, %c0_78] : memref<32x128xf32, #tpu.memory_space<vmem>>, vector<32x128xf32>
    %cst_79 = arith.constant dense<0.000000e+00> : vector<16x128xf32>
    %153 = tpu.matmul %105, %152, %cst_79 {dimension_numbers = #tpu.dot_dimension_numbers<[1], [0], [0], [1], [0, 0, 1, 1], [], []>} : vector<16x32xf32>, vector<32x128xf32>, vector<16x128xf32> -> vector<16x128xf32>
    %c0_80 = arith.constant 0 : index
    %c0_81 = arith.constant 0 : index
    %154 = vector.load %arg14[%c0_80, %c0_81] : memref<1x128xf32, #tpu.memory_space<vmem>>, vector<1x128xf32>
    %155 = vector.broadcast %154 : vector<1x128xf32> to vector<16x128xf32>
    %156 = arith.addf %153, %155 : vector<16x128xf32>
    %157 = vector.extract_strided_slice %156 {offsets = [0, 0], sizes = [3, 128], strides = [1, 1]} : vector<16x128xf32> to vector<3x128xf32>
    %c0_82 = arith.constant 0 : index
    %c0_83 = arith.constant 0 : index
    %c0_84 = arith.constant 0 : index
    %158 = vector.load %arg16[%c0_82, %c0_83, %c0_84] : memref<2x3x128xf32, #tpu.memory_space<vmem>>, vector<1x3x128xf32>
    %159 = vector.shape_cast %158 : vector<1x3x128xf32> to vector<3x128xf32>
    %160 = vector.shape_cast %157 : vector<3x128xf32> to vector<1x3x128xf32>
    tpu.vector_store %arg16[%c0_82, %c0_83, %c0_84], %160 {strides = array<i32>} : memref<2x3x128xf32, #tpu.memory_space<vmem>>, vector<1x3x128xf32>,
    %161 = vector.extract_strided_slice %156 {offsets = [8, 0], sizes = [3, 128], strides = [1, 1]} : vector<16x128xf32> to vector<3x128xf32>
    %c1_85 = arith.constant 1 : index
    %c0_86 = arith.constant 0 : index
    %c0_87 = arith.constant 0 : index
    %162 = vector.load %arg16[%c1_85, %c0_86, %c0_87] : memref<2x3x128xf32, #tpu.memory_space<vmem>>, vector<1x3x128xf32>
    %163 = vector.shape_cast %162 : vector<1x3x128xf32> to vector<3x128xf32>
    %164 = vector.shape_cast %161 : vector<3x128xf32> to vector<1x3x128xf32>
    tpu.vector_store %arg16[%c1_85, %c0_86, %c0_87], %164 {strides = array<i32>} : memref<2x3x128xf32, #tpu.memory_space<vmem>>, vector<1x3x128xf32>,
    %cst_88 = arith.constant dense<0xFF800000> : vector<16xf32>
    %165 = vector.multi_reduction <maximumf>, %143, %cst_88 [1] : vector<16x128xf32> to vector<16xf32>
    %166 = vector.shape_cast %165 : vector<16xf32> to vector<16x1xf32>
    %167 = vector.broadcast %166 : vector<16x1xf32> to vector<16x128xf32>
    %168 = arith.cmpf oeq, %143, %167 : vector<16x128xf32>
    %c128_i32 = arith.constant 128 : i32
    %169 = vector.broadcast %c128_i32 : i32 to vector<16x128xi32>
    %170 = arith.select %168, %26, %169 : vector<16x128xi1>, vector<16x128xi32>
    %cst_89 = arith.constant dense<2147483647> : vector<16xi32>
    %171 = vector.multi_reduction <minsi>, %170, %cst_89 [1] : vector<16x128xi32> to vector<16xi32>
    %172 = vector.shape_cast %171 : vector<16xi32> to vector<16x1xi32>
    %173 = vector.broadcast %172 : vector<16x1xi32> to vector<16x128xi32>
    %174 = arith.cmpi eq, %26, %173 : vector<16x128xi32>
    %175 = arith.extui %174 : vector<16x128xi1> to vector<16x128xi32>
    %176 = arith.sitofp %175 : vector<16x128xi32> to vector<16x128xf32>
    %cst_90 = arith.constant dense<0.000000e+00> : vector<16x32xf32>
    %177 = tpu.matmul %176, %0, %cst_90 {dimension_numbers = #tpu.dot_dimension_numbers<[1], [0], [0], [1], [0, 0, 1, 1], [], []>} : vector<16x128xf32>, vector<128x32xf32>, vector<16x32xf32> -> vector<16x32xf32>
    %cst_91 = arith.constant dense<0.000000e+00> : vector<16x384xf32>
    %178 = tpu.matmul %177, %1, %cst_91 {dimension_numbers = #tpu.dot_dimension_numbers<[1], [0], [0], [1], [0, 0, 1, 1], [], []>} : vector<16x32xf32>, vector<32x384xf32>, vector<16x384xf32> -> vector<16x384xf32>
    %179 = vector.broadcast %3 : vector<1x384xf32> to vector<16x384xf32>
    %180 = arith.addf %178, %179 : vector<16x384xf32>
    %cst_92 = arith.constant dense<0.000000e+00> : vector<16x384xf32>
    %181 = tpu.matmul %60, %2, %cst_92 {dimension_numbers = #tpu.dot_dimension_numbers<[1], [0], [0], [1], [0, 0, 1, 1], [], []>} : vector<16x32xf32>, vector<32x384xf32>, vector<16x384xf32> -> vector<16x384xf32>
    %182 = vector.broadcast %4 : vector<1x384xf32> to vector<16x384xf32>
    %183 = arith.addf %181, %182 : vector<16x384xf32>
    %184 = vector.extract_strided_slice %180 {offsets = [0, 0], sizes = [16, 32], strides = [1, 1]} : vector<16x384xf32> to vector<16x32xf32>
    %185 = vector.extract_strided_slice %183 {offsets = [0, 0], sizes = [16, 32], strides = [1, 1]} : vector<16x384xf32> to vector<16x32xf32>
    %186 = arith.addf %184, %185 : vector<16x32xf32>
    %187 = arith.negf %186 : vector<16x32xf32>
    %188 = math.exp %187 : vector<16x32xf32>
    %cst_93 = arith.constant 1.000000e+00 : f32
    %189 = vector.broadcast %cst_93 : f32 to vector<16x32xf32>
    %190 = arith.addf %189, %188 : vector<16x32xf32>
    %191 = arith.divf %189, %190 : vector<16x32xf32>
    %192 = vector.extract_strided_slice %180 {offsets = [0, 128], sizes = [16, 32], strides = [1, 1]} : vector<16x384xf32> to vector<16x32xf32>
    %193 = vector.extract_strided_slice %183 {offsets = [0, 128], sizes = [16, 32], strides = [1, 1]} : vector<16x384xf32> to vector<16x32xf32>
    %194 = arith.addf %192, %193 : vector<16x32xf32>
    %195 = arith.negf %194 : vector<16x32xf32>
    %196 = math.exp %195 : vector<16x32xf32>
    %cst_94 = arith.constant 1.000000e+00 : f32
    %197 = vector.broadcast %cst_94 : f32 to vector<16x32xf32>
    %198 = arith.addf %197, %196 : vector<16x32xf32>
    %199 = arith.divf %197, %198 : vector<16x32xf32>
    %200 = vector.extract_strided_slice %180 {offsets = [0, 256], sizes = [16, 32], strides = [1, 1]} : vector<16x384xf32> to vector<16x32xf32>
    %201 = vector.extract_strided_slice %183 {offsets = [0, 256], sizes = [16, 32], strides = [1, 1]} : vector<16x384xf32> to vector<16x32xf32>
    %202 = arith.mulf %191, %201 : vector<16x32xf32>
    %203 = arith.addf %200, %202 : vector<16x32xf32>
    %204 = math.tanh %203 : vector<16x32xf32>
    %cst_95 = arith.constant 1.000000e+00 : f32
    %205 = vector.broadcast %cst_95 : f32 to vector<16x32xf32>
    %206 = arith.subf %205, %199 : vector<16x32xf32>
    %207 = arith.mulf %206, %204 : vector<16x32xf32>
    %208 = arith.mulf %199, %60 : vector<16x32xf32>
    %209 = arith.addf %207, %208 : vector<16x32xf32>
    %210 = vector.extract_strided_slice %209 {offsets = [0, 0], sizes = [8, 32], strides = [1, 1]} : vector<16x32xf32> to vector<8x32xf32>
    %cst_96 = arith.constant dense<0.000000e+00> : vector<8x8xf32>
    %211 = tpu.matmul %210, %19, %cst_96 {dimension_numbers = #tpu.dot_dimension_numbers<[1], [1], [0], [0], [0, 0, 1, 0], [], []>} : vector<8x32xf32>, vector<8x32xf32>, vector<8x8xf32> -> vector<8x8xf32>
    %212 = vector.broadcast %23 : vector<1x8xf32> to vector<8x8xf32>
    %213 = arith.addf %211, %212 : vector<8x8xf32>
    %cst_97 = arith.constant dense<0xFF800000> : vector<8xf32>
    %214 = vector.multi_reduction <maximumf>, %213, %cst_97 [1] : vector<8x8xf32> to vector<8xf32>
    %215 = vector.shape_cast %214 : vector<8xf32> to vector<8x1xf32>
    %216 = vector.broadcast %215 : vector<8x1xf32> to vector<8x8xf32>
    %217 = arith.subf %213, %216 : vector<8x8xf32>
    %218 = math.exp %217 : vector<8x8xf32>
    %cst_98 = arith.constant dense<0.000000e+00> : vector<8xf32>
    %219 = vector.multi_reduction <add>, %218, %cst_98 [1] : vector<8x8xf32> to vector<8xf32>
    %220 = vector.shape_cast %219 : vector<8xf32> to vector<8x1xf32>
    %221 = tpu.reciprocal %220 {approx = true} : vector<8x1xf32> -> vector<8x1xf32>
    %222 = arith.mulf %220, %221 : vector<8x1xf32>
    %cst_99 = arith.constant 2.000000e+00 : f32
    %223 = vector.broadcast %cst_99 : f32 to vector<8x1xf32>
    %224 = arith.subf %223, %222 : vector<8x1xf32>
    %225 = arith.mulf %221, %224 : vector<8x1xf32>
    %226 = vector.broadcast %225 : vector<8x1xf32> to vector<8x8xf32>
    %227 = arith.mulf %218, %226 : vector<8x8xf32>
    %cst_100 = arith.constant dense<0.000000e+00> : vector<8x32xf32>
    %228 = tpu.matmul %227, %19, %cst_100 {dimension_numbers = #tpu.dot_dimension_numbers<[1], [0], [0], [1], [0, 0, 1, 1], [], []>} : vector<8x8xf32>, vector<8x32xf32>, vector<8x32xf32> -> vector<8x32xf32>
    %c0_101 = arith.constant 0 : index
    %c0_102 = arith.constant 0 : index
    %229 = vector.load %arg17[%c0_101, %c0_102] : memref<16x32xf32, #tpu.memory_space<vmem>>, vector<8x32xf32>
    tpu.vector_store %arg17[%c0_101, %c0_102], %228 {strides = array<i32>} : memref<16x32xf32, #tpu.memory_space<vmem>>, vector<8x32xf32>,
    %cst_103 = arith.constant dense<0.000000e+00> : vector<8x128xf32>
    %230 = tpu.matmul %227, %11, %cst_103 {dimension_numbers = #tpu.dot_dimension_numbers<[1], [0], [0], [1], [0, 0, 1, 1], [], []>} : vector<8x8xf32>, vector<8x128xf32>, vector<8x128xf32> -> vector<8x128xf32>
    %c0_104 = arith.constant 0 : index
    %c0_105 = arith.constant 0 : index
    %231 = vector.load %arg18[%c0_104, %c0_105] : memref<16x128xf32, #tpu.memory_space<vmem>>, vector<8x128xf32>
    tpu.vector_store %arg18[%c0_104, %c0_105], %230 {strides = array<i32>} : memref<16x128xf32, #tpu.memory_space<vmem>>, vector<8x128xf32>,
    %232 = vector.extract_strided_slice %209 {offsets = [8, 0], sizes = [8, 32], strides = [1, 1]} : vector<16x32xf32> to vector<8x32xf32>
    %cst_106 = arith.constant dense<0.000000e+00> : vector<8x8xf32>
    %233 = tpu.matmul %232, %21, %cst_106 {dimension_numbers = #tpu.dot_dimension_numbers<[1], [1], [0], [0], [0, 0, 1, 0], [], []>} : vector<8x32xf32>, vector<8x32xf32>, vector<8x8xf32> -> vector<8x8xf32>
    %234 = vector.broadcast %25 : vector<1x8xf32> to vector<8x8xf32>
    %235 = arith.addf %233, %234 : vector<8x8xf32>
    %cst_107 = arith.constant dense<0xFF800000> : vector<8xf32>
    %236 = vector.multi_reduction <maximumf>, %235, %cst_107 [1] : vector<8x8xf32> to vector<8xf32>
    %237 = vector.shape_cast %236 : vector<8xf32> to vector<8x1xf32>
    %238 = vector.broadcast %237 : vector<8x1xf32> to vector<8x8xf32>
    %239 = arith.subf %235, %238 : vector<8x8xf32>
    %240 = math.exp %239 : vector<8x8xf32>
    %cst_108 = arith.constant dense<0.000000e+00> : vector<8xf32>
    %241 = vector.multi_reduction <add>, %240, %cst_108 [1] : vector<8x8xf32> to vector<8xf32>
    %242 = vector.shape_cast %241 : vector<8xf32> to vector<8x1xf32>
    %243 = tpu.reciprocal %242 {approx = true} : vector<8x1xf32> -> vector<8x1xf32>
    %244 = arith.mulf %242, %243 : vector<8x1xf32>
    %cst_109 = arith.constant 2.000000e+00 : f32
    %245 = vector.broadcast %cst_109 : f32 to vector<8x1xf32>
    %246 = arith.subf %245, %244 : vector<8x1xf32>
    %247 = arith.mulf %243, %246 : vector<8x1xf32>
    %248 = vector.broadcast %247 : vector<8x1xf32> to vector<8x8xf32>
    %249 = arith.mulf %240, %248 : vector<8x8xf32>
    %cst_110 = arith.constant dense<0.000000e+00> : vector<8x32xf32>
    %250 = tpu.matmul %249, %21, %cst_110 {dimension_numbers = #tpu.dot_dimension_numbers<[1], [0], [0], [1], [0, 0, 1, 1], [], []>} : vector<8x8xf32>, vector<8x32xf32>, vector<8x32xf32> -> vector<8x32xf32>
    %c8_111 = arith.constant 8 : index
    %c0_112 = arith.constant 0 : index
    %251 = vector.load %arg17[%c8_111, %c0_112] : memref<16x32xf32, #tpu.memory_space<vmem>>, vector<8x32xf32>
    tpu.vector_store %arg17[%c8_111, %c0_112], %250 {strides = array<i32>} : memref<16x32xf32, #tpu.memory_space<vmem>>, vector<8x32xf32>,
    %cst_113 = arith.constant dense<0.000000e+00> : vector<8x128xf32>
    %252 = tpu.matmul %249, %17, %cst_113 {dimension_numbers = #tpu.dot_dimension_numbers<[1], [0], [0], [1], [0, 0, 1, 1], [], []>} : vector<8x8xf32>, vector<8x128xf32>, vector<8x128xf32> -> vector<8x128xf32>
    %c8_114 = arith.constant 8 : index
    %c0_115 = arith.constant 0 : index
    %253 = vector.load %arg18[%c8_114, %c0_115] : memref<16x128xf32, #tpu.memory_space<vmem>>, vector<8x128xf32>
    tpu.vector_store %arg18[%c8_114, %c0_115], %252 {strides = array<i32>} : memref<16x128xf32, #tpu.memory_space<vmem>>, vector<8x128xf32>,
    %c0_116 = arith.constant 0 : index
    %c0_117 = arith.constant 0 : index
    %254 = vector.load %arg17[%c0_116, %c0_117] : memref<16x32xf32, #tpu.memory_space<vmem>>, vector<16x32xf32>
    %c0_118 = arith.constant 0 : index
    %c0_119 = arith.constant 0 : index
    %255 = vector.load %arg18[%c0_118, %c0_119] : memref<16x128xf32, #tpu.memory_space<vmem>>, vector<16x128xf32>
    %cst_120 = arith.constant dense<0.000000e+00> : vector<16x128xf32>
    %256 = tpu.matmul %209, %0, %cst_120 {dimension_numbers = #tpu.dot_dimension_numbers<[1], [1], [0], [0], [0, 0, 1, 0], [], []>} : vector<16x32xf32>, vector<128x32xf32>, vector<16x128xf32> -> vector<16x128xf32>
    %c64_i32_121 = arith.constant 64 : i32
    %257 = vector.broadcast %c64_i32_121 : i32 to vector<16x128xi32>
    %258 = arith.cmpi slt, %26, %257 : vector<16x128xi32>
    %cst_122 = arith.constant -1.000000e+09 : f32
    %259 = vector.broadcast %cst_122 : f32 to vector<16x128xf32>
    %260 = arith.select %258, %256, %259 : vector<16x128xi1>, vector<16x128xf32>
    %cst_123 = arith.constant dense<0xFF800000> : vector<16xf32>
    %261 = vector.multi_reduction <maximumf>, %260, %cst_123 [1] : vector<16x128xf32> to vector<16xf32>
    %262 = vector.shape_cast %261 : vector<16xf32> to vector<16x1xf32>
    %263 = vector.broadcast %262 : vector<16x1xf32> to vector<16x128xf32>
    %264 = arith.subf %260, %263 : vector<16x128xf32>
    %265 = math.exp %264 : vector<16x128xf32>
    %cst_124 = arith.constant dense<0.000000e+00> : vector<16xf32>
    %266 = vector.multi_reduction <add>, %265, %cst_124 [1] : vector<16x128xf32> to vector<16xf32>
    %267 = vector.shape_cast %266 : vector<16xf32> to vector<16x1xf32>
    %268 = tpu.reciprocal %267 {approx = true} : vector<16x1xf32> -> vector<16x1xf32>
    %269 = arith.mulf %267, %268 : vector<16x1xf32>
    %cst_125 = arith.constant 2.000000e+00 : f32
    %270 = vector.broadcast %cst_125 : f32 to vector<16x1xf32>
    %271 = arith.subf %270, %269 : vector<16x1xf32>
    %272 = arith.mulf %268, %271 : vector<16x1xf32>
    %273 = vector.broadcast %272 : vector<16x1xf32> to vector<16x128xf32>
    %274 = arith.mulf %265, %273 : vector<16x128xf32>
    %275 = tpu.concatenate %177, %209, %254 in 1 : vector<16x32xf32>, vector<16x32xf32>, vector<16x32xf32> -> vector<16x96xf32>
    %c0_126 = arith.constant 0 : index
    %c0_127 = arith.constant 0 : index
    %276 = vector.load %arg11[%c0_126, %c0_127] : memref<96x1xf32, #tpu.memory_space<vmem>>, vector<96x1xf32>
    %cst_128 = arith.constant dense<0.000000e+00> : vector<16x1xf32>
    %277 = tpu.matmul %275, %276, %cst_128 {dimension_numbers = #tpu.dot_dimension_numbers<[1], [0], [0], [1], [0, 0, 1, 1], [], []>} : vector<16x96xf32>, vector<96x1xf32>, vector<16x1xf32> -> vector<16x1xf32>
    %c0_129 = arith.constant 0 : index
    %c0_130 = arith.constant 0 : index
    %278 = vector.load %arg12[%c0_129, %c0_130] : memref<1x1xf32, #tpu.memory_space<vmem>>, vector<1x1xf32>
    %279 = vector.broadcast %278 : vector<1x1xf32> to vector<16x1xf32>
    %280 = arith.addf %277, %279 : vector<16x1xf32>
    %281 = arith.negf %280 : vector<16x1xf32>
    %282 = math.exp %281 : vector<16x1xf32>
    %cst_131 = arith.constant 1.000000e+00 : f32
    %283 = vector.broadcast %cst_131 : f32 to vector<16x1xf32>
    %284 = arith.addf %283, %282 : vector<16x1xf32>
    %285 = arith.divf %283, %284 : vector<16x1xf32>
    %286 = vector.broadcast %285 : vector<16x1xf32> to vector<16x128xf32>
    %287 = arith.mulf %286, %274 : vector<16x128xf32>
    %cst_132 = arith.constant 1.000000e+00 : f32
    %288 = vector.broadcast %cst_132 : f32 to vector<16x1xf32>
    %289 = arith.subf %288, %285 : vector<16x1xf32>
    %290 = vector.broadcast %289 : vector<16x1xf32> to vector<16x128xf32>
    %291 = arith.mulf %290, %255 : vector<16x128xf32>
    %292 = arith.addf %287, %291 : vector<16x128xf32>
    %293 = vector.extract_strided_slice %292 {offsets = [0, 0], sizes = [3, 128], strides = [1, 1]} : vector<16x128xf32> to vector<3x128xf32>
    %c0_133 = arith.constant 0 : index
    %c0_134 = arith.constant 0 : index
    %c1_135 = arith.constant 1 : index
    %c0_136 = arith.constant 0 : index
    %294 = vector.load %arg15[%c0_133, %c0_134, %c1_135, %c0_136] : memref<2x3x4x128xf32, #tpu.memory_space<vmem>>, vector<1x3x1x128xf32>
    %295 = vector.shape_cast %294 : vector<1x3x1x128xf32> to vector<3x128xf32>
    %296 = vector.shape_cast %293 : vector<3x128xf32> to vector<1x3x1x128xf32>
    tpu.vector_store %arg15[%c0_133, %c0_134, %c1_135, %c0_136], %296 {strides = array<i32>} : memref<2x3x4x128xf32, #tpu.memory_space<vmem>>, vector<1x3x1x128xf32>,
    %297 = vector.extract_strided_slice %292 {offsets = [8, 0], sizes = [3, 128], strides = [1, 1]} : vector<16x128xf32> to vector<3x128xf32>
    %c1_137 = arith.constant 1 : index
    %c0_138 = arith.constant 0 : index
    %c1_139 = arith.constant 1 : index
    %c0_140 = arith.constant 0 : index
    %298 = vector.load %arg15[%c1_137, %c0_138, %c1_139, %c0_140] : memref<2x3x4x128xf32, #tpu.memory_space<vmem>>, vector<1x3x1x128xf32>
    %299 = vector.shape_cast %298 : vector<1x3x1x128xf32> to vector<3x128xf32>
    %300 = vector.shape_cast %297 : vector<3x128xf32> to vector<1x3x1x128xf32>
    tpu.vector_store %arg15[%c1_137, %c0_138, %c1_139, %c0_140], %300 {strides = array<i32>} : memref<2x3x4x128xf32, #tpu.memory_space<vmem>>, vector<1x3x1x128xf32>,
    %cst_141 = arith.constant dense<0xFF800000> : vector<16xf32>
    %301 = vector.multi_reduction <maximumf>, %292, %cst_141 [1] : vector<16x128xf32> to vector<16xf32>
    %302 = vector.shape_cast %301 : vector<16xf32> to vector<16x1xf32>
    %303 = vector.broadcast %302 : vector<16x1xf32> to vector<16x128xf32>
    %304 = arith.cmpf oeq, %292, %303 : vector<16x128xf32>
    %c128_i32_142 = arith.constant 128 : i32
    %305 = vector.broadcast %c128_i32_142 : i32 to vector<16x128xi32>
    %306 = arith.select %304, %26, %305 : vector<16x128xi1>, vector<16x128xi32>
    %cst_143 = arith.constant dense<2147483647> : vector<16xi32>
    %307 = vector.multi_reduction <minsi>, %306, %cst_143 [1] : vector<16x128xi32> to vector<16xi32>
    %308 = vector.shape_cast %307 : vector<16xi32> to vector<16x1xi32>
    %309 = vector.broadcast %308 : vector<16x1xi32> to vector<16x128xi32>
    %310 = arith.cmpi eq, %26, %309 : vector<16x128xi32>
    %311 = arith.extui %310 : vector<16x128xi1> to vector<16x128xi32>
    %312 = arith.sitofp %311 : vector<16x128xi32> to vector<16x128xf32>
    %cst_144 = arith.constant dense<0.000000e+00> : vector<16x32xf32>
    %313 = tpu.matmul %312, %0, %cst_144 {dimension_numbers = #tpu.dot_dimension_numbers<[1], [0], [0], [1], [0, 0, 1, 1], [], []>} : vector<16x128xf32>, vector<128x32xf32>, vector<16x32xf32> -> vector<16x32xf32>
    %cst_145 = arith.constant dense<0.000000e+00> : vector<16x384xf32>
    %314 = tpu.matmul %313, %1, %cst_145 {dimension_numbers = #tpu.dot_dimension_numbers<[1], [0], [0], [1], [0, 0, 1, 1], [], []>} : vector<16x32xf32>, vector<32x384xf32>, vector<16x384xf32> -> vector<16x384xf32>
    %315 = vector.broadcast %3 : vector<1x384xf32> to vector<16x384xf32>
    %316 = arith.addf %314, %315 : vector<16x384xf32>
    %cst_146 = arith.constant dense<0.000000e+00> : vector<16x384xf32>
    %317 = tpu.matmul %209, %2, %cst_146 {dimension_numbers = #tpu.dot_dimension_numbers<[1], [0], [0], [1], [0, 0, 1, 1], [], []>} : vector<16x32xf32>, vector<32x384xf32>, vector<16x384xf32> -> vector<16x384xf32>
    %318 = vector.broadcast %4 : vector<1x384xf32> to vector<16x384xf32>
    %319 = arith.addf %317, %318 : vector<16x384xf32>
    %320 = vector.extract_strided_slice %316 {offsets = [0, 0], sizes = [16, 32], strides = [1, 1]} : vector<16x384xf32> to vector<16x32xf32>
    %321 = vector.extract_strided_slice %319 {offsets = [0, 0], sizes = [16, 32], strides = [1, 1]} : vector<16x384xf32> to vector<16x32xf32>
    %322 = arith.addf %320, %321 : vector<16x32xf32>
    %323 = arith.negf %322 : vector<16x32xf32>
    %324 = math.exp %323 : vector<16x32xf32>
    %cst_147 = arith.constant 1.000000e+00 : f32
    %325 = vector.broadcast %cst_147 : f32 to vector<16x32xf32>
    %326 = arith.addf %325, %324 : vector<16x32xf32>
    %327 = arith.divf %325, %326 : vector<16x32xf32>
    %328 = vector.extract_strided_slice %316 {offsets = [0, 128], sizes = [16, 32], strides = [1, 1]} : vector<16x384xf32> to vector<16x32xf32>
    %329 = vector.extract_strided_slice %319 {offsets = [0, 128], sizes = [16, 32], strides = [1, 1]} : vector<16x384xf32> to vector<16x32xf32>
    %330 = arith.addf %328, %329 : vector<16x32xf32>
    %331 = arith.negf %330 : vector<16x32xf32>
    %332 = math.exp %331 : vector<16x32xf32>
    %cst_148 = arith.constant 1.000000e+00 : f32
    %333 = vector.broadcast %cst_148 : f32 to vector<16x32xf32>
    %334 = arith.addf %333, %332 : vector<16x32xf32>
    %335 = arith.divf %333, %334 : vector<16x32xf32>
    %336 = vector.extract_strided_slice %316 {offsets = [0, 256], sizes = [16, 32], strides = [1, 1]} : vector<16x384xf32> to vector<16x32xf32>
    %337 = vector.extract_strided_slice %319 {offsets = [0, 256], sizes = [16, 32], strides = [1, 1]} : vector<16x384xf32> to vector<16x32xf32>
    %338 = arith.mulf %327, %337 : vector<16x32xf32>
    %339 = arith.addf %336, %338 : vector<16x32xf32>
    %340 = math.tanh %339 : vector<16x32xf32>
    %cst_149 = arith.constant 1.000000e+00 : f32
    %341 = vector.broadcast %cst_149 : f32 to vector<16x32xf32>
    %342 = arith.subf %341, %335 : vector<16x32xf32>
    %343 = arith.mulf %342, %340 : vector<16x32xf32>
    %344 = arith.mulf %335, %209 : vector<16x32xf32>
    %345 = arith.addf %343, %344 : vector<16x32xf32>
    %346 = vector.extract_strided_slice %345 {offsets = [0, 0], sizes = [8, 32], strides = [1, 1]} : vector<16x32xf32> to vector<8x32xf32>
    %cst_150 = arith.constant dense<0.000000e+00> : vector<8x8xf32>
    %347 = tpu.matmul %346, %19, %cst_150 {dimension_numbers = #tpu.dot_dimension_numbers<[1], [1], [0], [0], [0, 0, 1, 0], [], []>} : vector<8x32xf32>, vector<8x32xf32>, vector<8x8xf32> -> vector<8x8xf32>
    %348 = vector.broadcast %23 : vector<1x8xf32> to vector<8x8xf32>
    %349 = arith.addf %347, %348 : vector<8x8xf32>
    %cst_151 = arith.constant dense<0xFF800000> : vector<8xf32>
    %350 = vector.multi_reduction <maximumf>, %349, %cst_151 [1] : vector<8x8xf32> to vector<8xf32>
    %351 = vector.shape_cast %350 : vector<8xf32> to vector<8x1xf32>
    %352 = vector.broadcast %351 : vector<8x1xf32> to vector<8x8xf32>
    %353 = arith.subf %349, %352 : vector<8x8xf32>
    %354 = math.exp %353 : vector<8x8xf32>
    %cst_152 = arith.constant dense<0.000000e+00> : vector<8xf32>
    %355 = vector.multi_reduction <add>, %354, %cst_152 [1] : vector<8x8xf32> to vector<8xf32>
    %356 = vector.shape_cast %355 : vector<8xf32> to vector<8x1xf32>
    %357 = tpu.reciprocal %356 {approx = true} : vector<8x1xf32> -> vector<8x1xf32>
    %358 = arith.mulf %356, %357 : vector<8x1xf32>
    %cst_153 = arith.constant 2.000000e+00 : f32
    %359 = vector.broadcast %cst_153 : f32 to vector<8x1xf32>
    %360 = arith.subf %359, %358 : vector<8x1xf32>
    %361 = arith.mulf %357, %360 : vector<8x1xf32>
    %362 = vector.broadcast %361 : vector<8x1xf32> to vector<8x8xf32>
    %363 = arith.mulf %354, %362 : vector<8x8xf32>
    %cst_154 = arith.constant dense<0.000000e+00> : vector<8x32xf32>
    %364 = tpu.matmul %363, %19, %cst_154 {dimension_numbers = #tpu.dot_dimension_numbers<[1], [0], [0], [1], [0, 0, 1, 1], [], []>} : vector<8x8xf32>, vector<8x32xf32>, vector<8x32xf32> -> vector<8x32xf32>
    %c0_155 = arith.constant 0 : index
    %c0_156 = arith.constant 0 : index
    %365 = vector.load %arg17[%c0_155, %c0_156] : memref<16x32xf32, #tpu.memory_space<vmem>>, vector<8x32xf32>
    tpu.vector_store %arg17[%c0_155, %c0_156], %364 {strides = array<i32>} : memref<16x32xf32, #tpu.memory_space<vmem>>, vector<8x32xf32>,
    %cst_157 = arith.constant dense<0.000000e+00> : vector<8x128xf32>
    %366 = tpu.matmul %363, %11, %cst_157 {dimension_numbers = #tpu.dot_dimension_numbers<[1], [0], [0], [1], [0, 0, 1, 1], [], []>} : vector<8x8xf32>, vector<8x128xf32>, vector<8x128xf32> -> vector<8x128xf32>
    %c0_158 = arith.constant 0 : index
    %c0_159 = arith.constant 0 : index
    %367 = vector.load %arg18[%c0_158, %c0_159] : memref<16x128xf32, #tpu.memory_space<vmem>>, vector<8x128xf32>
    tpu.vector_store %arg18[%c0_158, %c0_159], %366 {strides = array<i32>} : memref<16x128xf32, #tpu.memory_space<vmem>>, vector<8x128xf32>,
    %368 = vector.extract_strided_slice %345 {offsets = [8, 0], sizes = [8, 32], strides = [1, 1]} : vector<16x32xf32> to vector<8x32xf32>
    %cst_160 = arith.constant dense<0.000000e+00> : vector<8x8xf32>
    %369 = tpu.matmul %368, %21, %cst_160 {dimension_numbers = #tpu.dot_dimension_numbers<[1], [1], [0], [0], [0, 0, 1, 0], [], []>} : vector<8x32xf32>, vector<8x32xf32>, vector<8x8xf32> -> vector<8x8xf32>
    %370 = vector.broadcast %25 : vector<1x8xf32> to vector<8x8xf32>
    %371 = arith.addf %369, %370 : vector<8x8xf32>
    %cst_161 = arith.constant dense<0xFF800000> : vector<8xf32>
    %372 = vector.multi_reduction <maximumf>, %371, %cst_161 [1] : vector<8x8xf32> to vector<8xf32>
    %373 = vector.shape_cast %372 : vector<8xf32> to vector<8x1xf32>
    %374 = vector.broadcast %373 : vector<8x1xf32> to vector<8x8xf32>
    %375 = arith.subf %371, %374 : vector<8x8xf32>
    %376 = math.exp %375 : vector<8x8xf32>
    %cst_162 = arith.constant dense<0.000000e+00> : vector<8xf32>
    %377 = vector.multi_reduction <add>, %376, %cst_162 [1] : vector<8x8xf32> to vector<8xf32>
    %378 = vector.shape_cast %377 : vector<8xf32> to vector<8x1xf32>
    %379 = tpu.reciprocal %378 {approx = true} : vector<8x1xf32> -> vector<8x1xf32>
    %380 = arith.mulf %378, %379 : vector<8x1xf32>
    %cst_163 = arith.constant 2.000000e+00 : f32
    %381 = vector.broadcast %cst_163 : f32 to vector<8x1xf32>
    %382 = arith.subf %381, %380 : vector<8x1xf32>
    %383 = arith.mulf %379, %382 : vector<8x1xf32>
    %384 = vector.broadcast %383 : vector<8x1xf32> to vector<8x8xf32>
    %385 = arith.mulf %376, %384 : vector<8x8xf32>
    %cst_164 = arith.constant dense<0.000000e+00> : vector<8x32xf32>
    %386 = tpu.matmul %385, %21, %cst_164 {dimension_numbers = #tpu.dot_dimension_numbers<[1], [0], [0], [1], [0, 0, 1, 1], [], []>} : vector<8x8xf32>, vector<8x32xf32>, vector<8x32xf32> -> vector<8x32xf32>
    %c8_165 = arith.constant 8 : index
    %c0_166 = arith.constant 0 : index
    %387 = vector.load %arg17[%c8_165, %c0_166] : memref<16x32xf32, #tpu.memory_space<vmem>>, vector<8x32xf32>
    tpu.vector_store %arg17[%c8_165, %c0_166], %386 {strides = array<i32>} : memref<16x32xf32, #tpu.memory_space<vmem>>, vector<8x32xf32>,
    %cst_167 = arith.constant dense<0.000000e+00> : vector<8x128xf32>
    %388 = tpu.matmul %385, %17, %cst_167 {dimension_numbers = #tpu.dot_dimension_numbers<[1], [0], [0], [1], [0, 0, 1, 1], [], []>} : vector<8x8xf32>, vector<8x128xf32>, vector<8x128xf32> -> vector<8x128xf32>
    %c8_168 = arith.constant 8 : index
    %c0_169 = arith.constant 0 : index
    %389 = vector.load %arg18[%c8_168, %c0_169] : memref<16x128xf32, #tpu.memory_space<vmem>>, vector<8x128xf32>
    tpu.vector_store %arg18[%c8_168, %c0_169], %388 {strides = array<i32>} : memref<16x128xf32, #tpu.memory_space<vmem>>, vector<8x128xf32>,
    %c0_170 = arith.constant 0 : index
    %c0_171 = arith.constant 0 : index
    %390 = vector.load %arg17[%c0_170, %c0_171] : memref<16x32xf32, #tpu.memory_space<vmem>>, vector<16x32xf32>
    %c0_172 = arith.constant 0 : index
    %c0_173 = arith.constant 0 : index
    %391 = vector.load %arg18[%c0_172, %c0_173] : memref<16x128xf32, #tpu.memory_space<vmem>>, vector<16x128xf32>
    %cst_174 = arith.constant dense<0.000000e+00> : vector<16x128xf32>
    %392 = tpu.matmul %345, %0, %cst_174 {dimension_numbers = #tpu.dot_dimension_numbers<[1], [1], [0], [0], [0, 0, 1, 0], [], []>} : vector<16x32xf32>, vector<128x32xf32>, vector<16x128xf32> -> vector<16x128xf32>
    %c64_i32_175 = arith.constant 64 : i32
    %393 = vector.broadcast %c64_i32_175 : i32 to vector<16x128xi32>
    %394 = arith.cmpi slt, %26, %393 : vector<16x128xi32>
    %cst_176 = arith.constant -1.000000e+09 : f32
    %395 = vector.broadcast %cst_176 : f32 to vector<16x128xf32>
    %396 = arith.select %394, %392, %395 : vector<16x128xi1>, vector<16x128xf32>
    %cst_177 = arith.constant dense<0xFF800000> : vector<16xf32>
    %397 = vector.multi_reduction <maximumf>, %396, %cst_177 [1] : vector<16x128xf32> to vector<16xf32>
    %398 = vector.shape_cast %397 : vector<16xf32> to vector<16x1xf32>
    %399 = vector.broadcast %398 : vector<16x1xf32> to vector<16x128xf32>
    %400 = arith.subf %396, %399 : vector<16x128xf32>
    %401 = math.exp %400 : vector<16x128xf32>
    %cst_178 = arith.constant dense<0.000000e+00> : vector<16xf32>
    %402 = vector.multi_reduction <add>, %401, %cst_178 [1] : vector<16x128xf32> to vector<16xf32>
    %403 = vector.shape_cast %402 : vector<16xf32> to vector<16x1xf32>
    %404 = tpu.reciprocal %403 {approx = true} : vector<16x1xf32> -> vector<16x1xf32>
    %405 = arith.mulf %403, %404 : vector<16x1xf32>
    %cst_179 = arith.constant 2.000000e+00 : f32
    %406 = vector.broadcast %cst_179 : f32 to vector<16x1xf32>
    %407 = arith.subf %406, %405 : vector<16x1xf32>
    %408 = arith.mulf %404, %407 : vector<16x1xf32>
    %409 = vector.broadcast %408 : vector<16x1xf32> to vector<16x128xf32>
    %410 = arith.mulf %401, %409 : vector<16x128xf32>
    %411 = tpu.concatenate %313, %345, %390 in 1 : vector<16x32xf32>, vector<16x32xf32>, vector<16x32xf32> -> vector<16x96xf32>
    %c0_180 = arith.constant 0 : index
    %c0_181 = arith.constant 0 : index
    %412 = vector.load %arg11[%c0_180, %c0_181] : memref<96x1xf32, #tpu.memory_space<vmem>>, vector<96x1xf32>
    %cst_182 = arith.constant dense<0.000000e+00> : vector<16x1xf32>
    %413 = tpu.matmul %411, %412, %cst_182 {dimension_numbers = #tpu.dot_dimension_numbers<[1], [0], [0], [1], [0, 0, 1, 1], [], []>} : vector<16x96xf32>, vector<96x1xf32>, vector<16x1xf32> -> vector<16x1xf32>
    %c0_183 = arith.constant 0 : index
    %c0_184 = arith.constant 0 : index
    %414 = vector.load %arg12[%c0_183, %c0_184] : memref<1x1xf32, #tpu.memory_space<vmem>>, vector<1x1xf32>
    %415 = vector.broadcast %414 : vector<1x1xf32> to vector<16x1xf32>
    %416 = arith.addf %413, %415 : vector<16x1xf32>
    %417 = arith.negf %416 : vector<16x1xf32>
    %418 = math.exp %417 : vector<16x1xf32>
    %cst_185 = arith.constant 1.000000e+00 : f32
    %419 = vector.broadcast %cst_185 : f32 to vector<16x1xf32>
    %420 = arith.addf %419, %418 : vector<16x1xf32>
    %421 = arith.divf %419, %420 : vector<16x1xf32>
    %422 = vector.broadcast %421 : vector<16x1xf32> to vector<16x128xf32>
    %423 = arith.mulf %422, %410 : vector<16x128xf32>
    %cst_186 = arith.constant 1.000000e+00 : f32
    %424 = vector.broadcast %cst_186 : f32 to vector<16x1xf32>
    %425 = arith.subf %424, %421 : vector<16x1xf32>
    %426 = vector.broadcast %425 : vector<16x1xf32> to vector<16x128xf32>
    %427 = arith.mulf %426, %391 : vector<16x128xf32>
    %428 = arith.addf %423, %427 : vector<16x128xf32>
    %429 = vector.extract_strided_slice %428 {offsets = [0, 0], sizes = [3, 128], strides = [1, 1]} : vector<16x128xf32> to vector<3x128xf32>
    %c0_187 = arith.constant 0 : index
    %c0_188 = arith.constant 0 : index
    %c2 = arith.constant 2 : index
    %c0_189 = arith.constant 0 : index
    %430 = vector.load %arg15[%c0_187, %c0_188, %c2, %c0_189] : memref<2x3x4x128xf32, #tpu.memory_space<vmem>>, vector<1x3x1x128xf32>
    %431 = vector.shape_cast %430 : vector<1x3x1x128xf32> to vector<3x128xf32>
    %432 = vector.shape_cast %429 : vector<3x128xf32> to vector<1x3x1x128xf32>
    tpu.vector_store %arg15[%c0_187, %c0_188, %c2, %c0_189], %432 {strides = array<i32>} : memref<2x3x4x128xf32, #tpu.memory_space<vmem>>, vector<1x3x1x128xf32>,
    %433 = vector.extract_strided_slice %428 {offsets = [8, 0], sizes = [3, 128], strides = [1, 1]} : vector<16x128xf32> to vector<3x128xf32>
    %c1_190 = arith.constant 1 : index
    %c0_191 = arith.constant 0 : index
    %c2_192 = arith.constant 2 : index
    %c0_193 = arith.constant 0 : index
    %434 = vector.load %arg15[%c1_190, %c0_191, %c2_192, %c0_193] : memref<2x3x4x128xf32, #tpu.memory_space<vmem>>, vector<1x3x1x128xf32>
    %435 = vector.shape_cast %434 : vector<1x3x1x128xf32> to vector<3x128xf32>
    %436 = vector.shape_cast %433 : vector<3x128xf32> to vector<1x3x1x128xf32>
    tpu.vector_store %arg15[%c1_190, %c0_191, %c2_192, %c0_193], %436 {strides = array<i32>} : memref<2x3x4x128xf32, #tpu.memory_space<vmem>>, vector<1x3x1x128xf32>,
    %cst_194 = arith.constant dense<0xFF800000> : vector<16xf32>
    %437 = vector.multi_reduction <maximumf>, %428, %cst_194 [1] : vector<16x128xf32> to vector<16xf32>
    %438 = vector.shape_cast %437 : vector<16xf32> to vector<16x1xf32>
    %439 = vector.broadcast %438 : vector<16x1xf32> to vector<16x128xf32>
    %440 = arith.cmpf oeq, %428, %439 : vector<16x128xf32>
    %c128_i32_195 = arith.constant 128 : i32
    %441 = vector.broadcast %c128_i32_195 : i32 to vector<16x128xi32>
    %442 = arith.select %440, %26, %441 : vector<16x128xi1>, vector<16x128xi32>
    %cst_196 = arith.constant dense<2147483647> : vector<16xi32>
    %443 = vector.multi_reduction <minsi>, %442, %cst_196 [1] : vector<16x128xi32> to vector<16xi32>
    %444 = vector.shape_cast %443 : vector<16xi32> to vector<16x1xi32>
    %445 = vector.broadcast %444 : vector<16x1xi32> to vector<16x128xi32>
    %446 = arith.cmpi eq, %26, %445 : vector<16x128xi32>
    %447 = arith.extui %446 : vector<16x128xi1> to vector<16x128xi32>
    %448 = arith.sitofp %447 : vector<16x128xi32> to vector<16x128xf32>
    %cst_197 = arith.constant dense<0.000000e+00> : vector<16x32xf32>
    %449 = tpu.matmul %448, %0, %cst_197 {dimension_numbers = #tpu.dot_dimension_numbers<[1], [0], [0], [1], [0, 0, 1, 1], [], []>} : vector<16x128xf32>, vector<128x32xf32>, vector<16x32xf32> -> vector<16x32xf32>
    %cst_198 = arith.constant dense<0.000000e+00> : vector<16x384xf32>
    %450 = tpu.matmul %449, %1, %cst_198 {dimension_numbers = #tpu.dot_dimension_numbers<[1], [0], [0], [1], [0, 0, 1, 1], [], []>} : vector<16x32xf32>, vector<32x384xf32>, vector<16x384xf32> -> vector<16x384xf32>
    %451 = vector.broadcast %3 : vector<1x384xf32> to vector<16x384xf32>
    %452 = arith.addf %450, %451 : vector<16x384xf32>
    %cst_199 = arith.constant dense<0.000000e+00> : vector<16x384xf32>
    %453 = tpu.matmul %345, %2, %cst_199 {dimension_numbers = #tpu.dot_dimension_numbers<[1], [0], [0], [1], [0, 0, 1, 1], [], []>} : vector<16x32xf32>, vector<32x384xf32>, vector<16x384xf32> -> vector<16x384xf32>
    %454 = vector.broadcast %4 : vector<1x384xf32> to vector<16x384xf32>
    %455 = arith.addf %453, %454 : vector<16x384xf32>
    %456 = vector.extract_strided_slice %452 {offsets = [0, 0], sizes = [16, 32], strides = [1, 1]} : vector<16x384xf32> to vector<16x32xf32>
    %457 = vector.extract_strided_slice %455 {offsets = [0, 0], sizes = [16, 32], strides = [1, 1]} : vector<16x384xf32> to vector<16x32xf32>
    %458 = arith.addf %456, %457 : vector<16x32xf32>
    %459 = arith.negf %458 : vector<16x32xf32>
    %460 = math.exp %459 : vector<16x32xf32>
    %cst_200 = arith.constant 1.000000e+00 : f32
    %461 = vector.broadcast %cst_200 : f32 to vector<16x32xf32>
    %462 = arith.addf %461, %460 : vector<16x32xf32>
    %463 = arith.divf %461, %462 : vector<16x32xf32>
    %464 = vector.extract_strided_slice %452 {offsets = [0, 128], sizes = [16, 32], strides = [1, 1]} : vector<16x384xf32> to vector<16x32xf32>
    %465 = vector.extract_strided_slice %455 {offsets = [0, 128], sizes = [16, 32], strides = [1, 1]} : vector<16x384xf32> to vector<16x32xf32>
    %466 = arith.addf %464, %465 : vector<16x32xf32>
    %467 = arith.negf %466 : vector<16x32xf32>
    %468 = math.exp %467 : vector<16x32xf32>
    %cst_201 = arith.constant 1.000000e+00 : f32
    %469 = vector.broadcast %cst_201 : f32 to vector<16x32xf32>
    %470 = arith.addf %469, %468 : vector<16x32xf32>
    %471 = arith.divf %469, %470 : vector<16x32xf32>
    %472 = vector.extract_strided_slice %452 {offsets = [0, 256], sizes = [16, 32], strides = [1, 1]} : vector<16x384xf32> to vector<16x32xf32>
    %473 = vector.extract_strided_slice %455 {offsets = [0, 256], sizes = [16, 32], strides = [1, 1]} : vector<16x384xf32> to vector<16x32xf32>
    %474 = arith.mulf %463, %473 : vector<16x32xf32>
    %475 = arith.addf %472, %474 : vector<16x32xf32>
    %476 = math.tanh %475 : vector<16x32xf32>
    %cst_202 = arith.constant 1.000000e+00 : f32
    %477 = vector.broadcast %cst_202 : f32 to vector<16x32xf32>
    %478 = arith.subf %477, %471 : vector<16x32xf32>
    %479 = arith.mulf %478, %476 : vector<16x32xf32>
    %480 = arith.mulf %471, %345 : vector<16x32xf32>
    %481 = arith.addf %479, %480 : vector<16x32xf32>
    %482 = vector.extract_strided_slice %481 {offsets = [0, 0], sizes = [8, 32], strides = [1, 1]} : vector<16x32xf32> to vector<8x32xf32>
    %cst_203 = arith.constant dense<0.000000e+00> : vector<8x8xf32>
    %483 = tpu.matmul %482, %19, %cst_203 {dimension_numbers = #tpu.dot_dimension_numbers<[1], [1], [0], [0], [0, 0, 1, 0], [], []>} : vector<8x32xf32>, vector<8x32xf32>, vector<8x8xf32> -> vector<8x8xf32>
    %484 = vector.broadcast %23 : vector<1x8xf32> to vector<8x8xf32>
    %485 = arith.addf %483, %484 : vector<8x8xf32>
    %cst_204 = arith.constant dense<0xFF800000> : vector<8xf32>
    %486 = vector.multi_reduction <maximumf>, %485, %cst_204 [1] : vector<8x8xf32> to vector<8xf32>
    %487 = vector.shape_cast %486 : vector<8xf32> to vector<8x1xf32>
    %488 = vector.broadcast %487 : vector<8x1xf32> to vector<8x8xf32>
    %489 = arith.subf %485, %488 : vector<8x8xf32>
    %490 = math.exp %489 : vector<8x8xf32>
    %cst_205 = arith.constant dense<0.000000e+00> : vector<8xf32>
    %491 = vector.multi_reduction <add>, %490, %cst_205 [1] : vector<8x8xf32> to vector<8xf32>
    %492 = vector.shape_cast %491 : vector<8xf32> to vector<8x1xf32>
    %493 = tpu.reciprocal %492 {approx = true} : vector<8x1xf32> -> vector<8x1xf32>
    %494 = arith.mulf %492, %493 : vector<8x1xf32>
    %cst_206 = arith.constant 2.000000e+00 : f32
    %495 = vector.broadcast %cst_206 : f32 to vector<8x1xf32>
    %496 = arith.subf %495, %494 : vector<8x1xf32>
    %497 = arith.mulf %493, %496 : vector<8x1xf32>
    %498 = vector.broadcast %497 : vector<8x1xf32> to vector<8x8xf32>
    %499 = arith.mulf %490, %498 : vector<8x8xf32>
    %cst_207 = arith.constant dense<0.000000e+00> : vector<8x32xf32>
    %500 = tpu.matmul %499, %19, %cst_207 {dimension_numbers = #tpu.dot_dimension_numbers<[1], [0], [0], [1], [0, 0, 1, 1], [], []>} : vector<8x8xf32>, vector<8x32xf32>, vector<8x32xf32> -> vector<8x32xf32>
    %c0_208 = arith.constant 0 : index
    %c0_209 = arith.constant 0 : index
    %501 = vector.load %arg17[%c0_208, %c0_209] : memref<16x32xf32, #tpu.memory_space<vmem>>, vector<8x32xf32>
    tpu.vector_store %arg17[%c0_208, %c0_209], %500 {strides = array<i32>} : memref<16x32xf32, #tpu.memory_space<vmem>>, vector<8x32xf32>,
    %cst_210 = arith.constant dense<0.000000e+00> : vector<8x128xf32>
    %502 = tpu.matmul %499, %11, %cst_210 {dimension_numbers = #tpu.dot_dimension_numbers<[1], [0], [0], [1], [0, 0, 1, 1], [], []>} : vector<8x8xf32>, vector<8x128xf32>, vector<8x128xf32> -> vector<8x128xf32>
    %c0_211 = arith.constant 0 : index
    %c0_212 = arith.constant 0 : index
    %503 = vector.load %arg18[%c0_211, %c0_212] : memref<16x128xf32, #tpu.memory_space<vmem>>, vector<8x128xf32>
    tpu.vector_store %arg18[%c0_211, %c0_212], %502 {strides = array<i32>} : memref<16x128xf32, #tpu.memory_space<vmem>>, vector<8x128xf32>,
    %504 = vector.extract_strided_slice %481 {offsets = [8, 0], sizes = [8, 32], strides = [1, 1]} : vector<16x32xf32> to vector<8x32xf32>
    %cst_213 = arith.constant dense<0.000000e+00> : vector<8x8xf32>
    %505 = tpu.matmul %504, %21, %cst_213 {dimension_numbers = #tpu.dot_dimension_numbers<[1], [1], [0], [0], [0, 0, 1, 0], [], []>} : vector<8x32xf32>, vector<8x32xf32>, vector<8x8xf32> -> vector<8x8xf32>
    %506 = vector.broadcast %25 : vector<1x8xf32> to vector<8x8xf32>
    %507 = arith.addf %505, %506 : vector<8x8xf32>
    %cst_214 = arith.constant dense<0xFF800000> : vector<8xf32>
    %508 = vector.multi_reduction <maximumf>, %507, %cst_214 [1] : vector<8x8xf32> to vector<8xf32>
    %509 = vector.shape_cast %508 : vector<8xf32> to vector<8x1xf32>
    %510 = vector.broadcast %509 : vector<8x1xf32> to vector<8x8xf32>
    %511 = arith.subf %507, %510 : vector<8x8xf32>
    %512 = math.exp %511 : vector<8x8xf32>
    %cst_215 = arith.constant dense<0.000000e+00> : vector<8xf32>
    %513 = vector.multi_reduction <add>, %512, %cst_215 [1] : vector<8x8xf32> to vector<8xf32>
    %514 = vector.shape_cast %513 : vector<8xf32> to vector<8x1xf32>
    %515 = tpu.reciprocal %514 {approx = true} : vector<8x1xf32> -> vector<8x1xf32>
    %516 = arith.mulf %514, %515 : vector<8x1xf32>
    %cst_216 = arith.constant 2.000000e+00 : f32
    %517 = vector.broadcast %cst_216 : f32 to vector<8x1xf32>
    %518 = arith.subf %517, %516 : vector<8x1xf32>
    %519 = arith.mulf %515, %518 : vector<8x1xf32>
    %520 = vector.broadcast %519 : vector<8x1xf32> to vector<8x8xf32>
    %521 = arith.mulf %512, %520 : vector<8x8xf32>
    %cst_217 = arith.constant dense<0.000000e+00> : vector<8x32xf32>
    %522 = tpu.matmul %521, %21, %cst_217 {dimension_numbers = #tpu.dot_dimension_numbers<[1], [0], [0], [1], [0, 0, 1, 1], [], []>} : vector<8x8xf32>, vector<8x32xf32>, vector<8x32xf32> -> vector<8x32xf32>
    %c8_218 = arith.constant 8 : index
    %c0_219 = arith.constant 0 : index
    %523 = vector.load %arg17[%c8_218, %c0_219] : memref<16x32xf32, #tpu.memory_space<vmem>>, vector<8x32xf32>
    tpu.vector_store %arg17[%c8_218, %c0_219], %522 {strides = array<i32>} : memref<16x32xf32, #tpu.memory_space<vmem>>, vector<8x32xf32>,
    %cst_220 = arith.constant dense<0.000000e+00> : vector<8x128xf32>
    %524 = tpu.matmul %521, %17, %cst_220 {dimension_numbers = #tpu.dot_dimension_numbers<[1], [0], [0], [1], [0, 0, 1, 1], [], []>} : vector<8x8xf32>, vector<8x128xf32>, vector<8x128xf32> -> vector<8x128xf32>
    %c8_221 = arith.constant 8 : index
    %c0_222 = arith.constant 0 : index
    %525 = vector.load %arg18[%c8_221, %c0_222] : memref<16x128xf32, #tpu.memory_space<vmem>>, vector<8x128xf32>
    tpu.vector_store %arg18[%c8_221, %c0_222], %524 {strides = array<i32>} : memref<16x128xf32, #tpu.memory_space<vmem>>, vector<8x128xf32>,
    %c0_223 = arith.constant 0 : index
    %c0_224 = arith.constant 0 : index
    %526 = vector.load %arg17[%c0_223, %c0_224] : memref<16x32xf32, #tpu.memory_space<vmem>>, vector<16x32xf32>
    %c0_225 = arith.constant 0 : index
    %c0_226 = arith.constant 0 : index
    %527 = vector.load %arg18[%c0_225, %c0_226] : memref<16x128xf32, #tpu.memory_space<vmem>>, vector<16x128xf32>
    %cst_227 = arith.constant dense<0.000000e+00> : vector<16x128xf32>
    %528 = tpu.matmul %481, %0, %cst_227 {dimension_numbers = #tpu.dot_dimension_numbers<[1], [1], [0], [0], [0, 0, 1, 0], [], []>} : vector<16x32xf32>, vector<128x32xf32>, vector<16x128xf32> -> vector<16x128xf32>
    %c64_i32_228 = arith.constant 64 : i32
    %529 = vector.broadcast %c64_i32_228 : i32 to vector<16x128xi32>
    %530 = arith.cmpi slt, %26, %529 : vector<16x128xi32>
    %cst_229 = arith.constant -1.000000e+09 : f32
    %531 = vector.broadcast %cst_229 : f32 to vector<16x128xf32>
    %532 = arith.select %530, %528, %531 : vector<16x128xi1>, vector<16x128xf32>
    %cst_230 = arith.constant dense<0xFF800000> : vector<16xf32>
    %533 = vector.multi_reduction <maximumf>, %532, %cst_230 [1] : vector<16x128xf32> to vector<16xf32>
    %534 = vector.shape_cast %533 : vector<16xf32> to vector<16x1xf32>
    %535 = vector.broadcast %534 : vector<16x1xf32> to vector<16x128xf32>
    %536 = arith.subf %532, %535 : vector<16x128xf32>
    %537 = math.exp %536 : vector<16x128xf32>
    %cst_231 = arith.constant dense<0.000000e+00> : vector<16xf32>
    %538 = vector.multi_reduction <add>, %537, %cst_231 [1] : vector<16x128xf32> to vector<16xf32>
    %539 = vector.shape_cast %538 : vector<16xf32> to vector<16x1xf32>
    %540 = tpu.reciprocal %539 {approx = true} : vector<16x1xf32> -> vector<16x1xf32>
    %541 = arith.mulf %539, %540 : vector<16x1xf32>
    %cst_232 = arith.constant 2.000000e+00 : f32
    %542 = vector.broadcast %cst_232 : f32 to vector<16x1xf32>
    %543 = arith.subf %542, %541 : vector<16x1xf32>
    %544 = arith.mulf %540, %543 : vector<16x1xf32>
    %545 = vector.broadcast %544 : vector<16x1xf32> to vector<16x128xf32>
    %546 = arith.mulf %537, %545 : vector<16x128xf32>
    %547 = tpu.concatenate %449, %481, %526 in 1 : vector<16x32xf32>, vector<16x32xf32>, vector<16x32xf32> -> vector<16x96xf32>
    %c0_233 = arith.constant 0 : index
    %c0_234 = arith.constant 0 : index
    %548 = vector.load %arg11[%c0_233, %c0_234] : memref<96x1xf32, #tpu.memory_space<vmem>>, vector<96x1xf32>
    %cst_235 = arith.constant dense<0.000000e+00> : vector<16x1xf32>
    %549 = tpu.matmul %547, %548, %cst_235 {dimension_numbers = #tpu.dot_dimension_numbers<[1], [0], [0], [1], [0, 0, 1, 1], [], []>} : vector<16x96xf32>, vector<96x1xf32>, vector<16x1xf32> -> vector<16x1xf32>
    %c0_236 = arith.constant 0 : index
    %c0_237 = arith.constant 0 : index
    %550 = vector.load %arg12[%c0_236, %c0_237] : memref<1x1xf32, #tpu.memory_space<vmem>>, vector<1x1xf32>
    %551 = vector.broadcast %550 : vector<1x1xf32> to vector<16x1xf32>
    %552 = arith.addf %549, %551 : vector<16x1xf32>
    %553 = arith.negf %552 : vector<16x1xf32>
    %554 = math.exp %553 : vector<16x1xf32>
    %cst_238 = arith.constant 1.000000e+00 : f32
    %555 = vector.broadcast %cst_238 : f32 to vector<16x1xf32>
    %556 = arith.addf %555, %554 : vector<16x1xf32>
    %557 = arith.divf %555, %556 : vector<16x1xf32>
    %558 = vector.broadcast %557 : vector<16x1xf32> to vector<16x128xf32>
    %559 = arith.mulf %558, %546 : vector<16x128xf32>
    %cst_239 = arith.constant 1.000000e+00 : f32
    %560 = vector.broadcast %cst_239 : f32 to vector<16x1xf32>
    %561 = arith.subf %560, %557 : vector<16x1xf32>
    %562 = vector.broadcast %561 : vector<16x1xf32> to vector<16x128xf32>
    %563 = arith.mulf %562, %527 : vector<16x128xf32>
    %564 = arith.addf %559, %563 : vector<16x128xf32>
    %565 = vector.extract_strided_slice %564 {offsets = [0, 0], sizes = [3, 128], strides = [1, 1]} : vector<16x128xf32> to vector<3x128xf32>
    %c0_240 = arith.constant 0 : index
    %c0_241 = arith.constant 0 : index
    %c3 = arith.constant 3 : index
    %c0_242 = arith.constant 0 : index
    %566 = vector.load %arg15[%c0_240, %c0_241, %c3, %c0_242] : memref<2x3x4x128xf32, #tpu.memory_space<vmem>>, vector<1x3x1x128xf32>
    %567 = vector.shape_cast %566 : vector<1x3x1x128xf32> to vector<3x128xf32>
    %568 = vector.shape_cast %565 : vector<3x128xf32> to vector<1x3x1x128xf32>
    tpu.vector_store %arg15[%c0_240, %c0_241, %c3, %c0_242], %568 {strides = array<i32>} : memref<2x3x4x128xf32, #tpu.memory_space<vmem>>, vector<1x3x1x128xf32>,
    %569 = vector.extract_strided_slice %564 {offsets = [8, 0], sizes = [3, 128], strides = [1, 1]} : vector<16x128xf32> to vector<3x128xf32>
    %c1_243 = arith.constant 1 : index
    %c0_244 = arith.constant 0 : index
    %c3_245 = arith.constant 3 : index
    %c0_246 = arith.constant 0 : index
    %570 = vector.load %arg15[%c1_243, %c0_244, %c3_245, %c0_246] : memref<2x3x4x128xf32, #tpu.memory_space<vmem>>, vector<1x3x1x128xf32>
    %571 = vector.shape_cast %570 : vector<1x3x1x128xf32> to vector<3x128xf32>
    %572 = vector.shape_cast %569 : vector<3x128xf32> to vector<1x3x1x128xf32>
    tpu.vector_store %arg15[%c1_243, %c0_244, %c3_245, %c0_246], %572 {strides = array<i32>} : memref<2x3x4x128xf32, #tpu.memory_space<vmem>>, vector<1x3x1x128xf32>,
    return
  }
  func.func @transform_0(%arg0: i32) -> (i32, i32) {
    %c0_i32 = arith.constant 0 : i32
    %c0_i32_0 = arith.constant 0 : i32
    %c0_i32_1 = arith.constant 0 : i32
    return %c0_i32, %c0_i32_0 : i32, i32
  }
  func.func @transform_1(%arg0: i32) -> (i32, i32) {
    %c0_i32 = arith.constant 0 : i32
    %c0_i32_0 = arith.constant 0 : i32
    return %arg0, %c0_i32 : i32, i32
  }
  func.func @transform_2(%arg0: i32) -> (i32, i32, i32) {
    %c0_i32 = arith.constant 0 : i32
    %c0_i32_0 = arith.constant 0 : i32
    %c0_i32_1 = arith.constant 0 : i32
    return %arg0, %c0_i32, %c0_i32_0 : i32, i32, i32
  }
  func.func @transform_3(%arg0: i32) -> (i32, i32, i32) {
    %c0_i32 = arith.constant 0 : i32
    %c0_i32_0 = arith.constant 0 : i32
    %c0_i32_1 = arith.constant 0 : i32
    return %arg0, %c0_i32, %c0_i32_0 : i32, i32, i32
  }
  func.func @transform_4(%arg0: i32) -> (i32, i32, i32) {
    %c0_i32 = arith.constant 0 : i32
    %c0_i32_0 = arith.constant 0 : i32
    %c0_i32_1 = arith.constant 0 : i32
    return %arg0, %c0_i32, %c0_i32_0 : i32, i32, i32
  }
  func.func @transform_5(%arg0: i32) -> (i32, i32) {
    %c0_i32 = arith.constant 0 : i32
    %c0_i32_0 = arith.constant 0 : i32
    %c0_i32_1 = arith.constant 0 : i32
    return %c0_i32, %c0_i32_0 : i32, i32
  }
  func.func @transform_6(%arg0: i32) -> (i32, i32) {
    %c0_i32 = arith.constant 0 : i32
    %c0_i32_0 = arith.constant 0 : i32
    %c0_i32_1 = arith.constant 0 : i32
    return %c0_i32, %c0_i32_0 : i32, i32
  }
  func.func @transform_7(%arg0: i32) -> (i32, i32) {
    %c0_i32 = arith.constant 0 : i32
    %c0_i32_0 = arith.constant 0 : i32
    %c0_i32_1 = arith.constant 0 : i32
    return %c0_i32, %c0_i32_0 : i32, i32
  }
  func.func @transform_8(%arg0: i32) -> (i32, i32) {
    %c0_i32 = arith.constant 0 : i32
    %c0_i32_0 = arith.constant 0 : i32
    %c0_i32_1 = arith.constant 0 : i32
    return %c0_i32, %c0_i32_0 : i32, i32
  }
  func.func @transform_9(%arg0: i32) -> (i32, i32) {
    %c0_i32 = arith.constant 0 : i32
    %c0_i32_0 = arith.constant 0 : i32
    %c0_i32_1 = arith.constant 0 : i32
    return %c0_i32, %c0_i32_0 : i32, i32
  }
  func.func @transform_10(%arg0: i32) -> (i32, i32) {
    %c0_i32 = arith.constant 0 : i32
    %c0_i32_0 = arith.constant 0 : i32
    %c0_i32_1 = arith.constant 0 : i32
    return %c0_i32, %c0_i32_0 : i32, i32
  }
  func.func @transform_11(%arg0: i32) -> (i32, i32) {
    %c0_i32 = arith.constant 0 : i32
    %c0_i32_0 = arith.constant 0 : i32
    %c0_i32_1 = arith.constant 0 : i32
    return %c0_i32, %c0_i32_0 : i32, i32
  }
  func.func @transform_12(%arg0: i32) -> (i32, i32) {
    %c0_i32 = arith.constant 0 : i32
    %c0_i32_0 = arith.constant 0 : i32
    %c0_i32_1 = arith.constant 0 : i32
    return %c0_i32, %c0_i32_0 : i32, i32
  }
  func.func @transform_13(%arg0: i32) -> (i32, i32) {
    %c0_i32 = arith.constant 0 : i32
    %c0_i32_0 = arith.constant 0 : i32
    %c0_i32_1 = arith.constant 0 : i32
    return %c0_i32, %c0_i32_0 : i32, i32
  }
  func.func @transform_14(%arg0: i32) -> (i32, i32, i32, i32) {
    %c0_i32 = arith.constant 0 : i32
    %c0_i32_0 = arith.constant 0 : i32
    %c0_i32_1 = arith.constant 0 : i32
    %c0_i32_2 = arith.constant 0 : i32
    return %arg0, %c0_i32, %c0_i32_0, %c0_i32_1 : i32, i32, i32, i32
  }
  func.func @transform_15(%arg0: i32) -> (i32, i32, i32) {
    %c0_i32 = arith.constant 0 : i32
    %c0_i32_0 = arith.constant 0 : i32
    %c0_i32_1 = arith.constant 0 : i32
    return %arg0, %c0_i32, %c0_i32_0 : i32, i32, i32
  }
}

module attributes {stable_mosaic.version = 11 : i64} {
  func.func @slot_decoder_kernel(%arg0: i32, %arg1: memref<16x32xf32, #tpu.memory_space<vmem>>, %arg2: memref<16x32xf32, #tpu.memory_space<vmem>>, %arg3: memref<2x8x32xf32, #tpu.memory_space<vmem>>, %arg4: memref<2x1x8xf32, #tpu.memory_space<vmem>>, %arg5: memref<2x8x1xi32, #tpu.memory_space<vmem>>, %arg6: memref<128x32xf32, #tpu.memory_space<vmem>>, %arg7: memref<32x384xf32, #tpu.memory_space<vmem>>, %arg8: memref<32x384xf32, #tpu.memory_space<vmem>>, %arg9: memref<1x384xf32, #tpu.memory_space<vmem>>, %arg10: memref<1x384xf32, #tpu.memory_space<vmem>>, %arg11: memref<96x1xf32, #tpu.memory_space<vmem>>, %arg12: memref<1x1xf32, #tpu.memory_space<vmem>>, %arg13: memref<32x128xf32, #tpu.memory_space<vmem>>, %arg14: memref<1x128xf32, #tpu.memory_space<vmem>>, %arg15: memref<2x3x4x128xf32, #tpu.memory_space<vmem>>, %arg16: memref<2x3x128xf32, #tpu.memory_space<vmem>>, %arg17: memref<16x32xf32, #tpu.memory_space<vmem>>, %arg18: memref<16x128xf32, #tpu.memory_space<vmem>>) attributes {dimension_semantics = [#tpu.dimension_semantics<parallel>], iteration_bounds = array<i64: 1>, scalar_prefetch = 0 : i64, scratch_operands = 2 : i64, tpu.core_type = #tpu.core_type<tc>, window_params = [{pipeline_mode = #tpu.pipeline_mode<synchronous>, transform_indices = @transform_0, window_bounds = array<i64: 16, 32>}, {transform_indices = @transform_1, window_bounds = array<i64: 16, 32>}, {transform_indices = @transform_2, window_bounds = array<i64: 2, 8, 32>}, {transform_indices = @transform_3, window_bounds = array<i64: 2, 1, 8>}, {transform_indices = @transform_4, window_bounds = array<i64: 2, 8, 1>}, {pipeline_mode = #tpu.pipeline_mode<synchronous>, transform_indices = @transform_5, window_bounds = array<i64: 128, 32>}, {pipeline_mode = #tpu.pipeline_mode<synchronous>, transform_indices = @transform_6, window_bounds = array<i64: 32, 384>}, {pipeline_mode = #tpu.pipeline_mode<synchronous>, transform_indices = @transform_7, window_bounds = array<i64: 32, 384>}, {pipeline_mode = #tpu.pipeline_mode<synchronous>, transform_indices = @transform_8, window_bounds = array<i64: 1, 384>}, {pipeline_mode = #tpu.pipeline_mode<synchronous>, transform_indices = @transform_9, window_bounds = array<i64: 1, 384>}, {pipeline_mode = #tpu.pipeline_mode<synchronous>, transform_indices = @transform_10, window_bounds = array<i64: 96, 1>}, {pipeline_mode = #tpu.pipeline_mode<synchronous>, transform_indices = @transform_11, window_bounds = array<i64: 1, 1>}, {pipeline_mode = #tpu.pipeline_mode<synchronous>, transform_indices = @transform_12, window_bounds = array<i64: 32, 128>}, {pipeline_mode = #tpu.pipeline_mode<synchronous>, transform_indices = @transform_13, window_bounds = array<i64: 1, 128>}, {transform_indices = @transform_14, window_bounds = array<i64: 2, 3, 4, 128>}, {transform_indices = @transform_15, window_bounds = array<i64: 2, 3, 128>}]} {
    %c0 = arith.constant 0 : index
    %c0_0 = arith.constant 0 : index
    %0 = vector.load %arg6[%c0, %c0_0] : memref<128x32xf32, #tpu.memory_space<vmem>>, vector<128x32xf32>
    %c0_1 = arith.constant 0 : index
    %c0_2 = arith.constant 0 : index
    %1 = vector.load %arg7[%c0_1, %c0_2] : memref<32x384xf32, #tpu.memory_space<vmem>>, vector<32x384xf32>
    %c0_3 = arith.constant 0 : index
    %c0_4 = arith.constant 0 : index
    %2 = vector.load %arg8[%c0_3, %c0_4] : memref<32x384xf32, #tpu.memory_space<vmem>>, vector<32x384xf32>
    %c0_5 = arith.constant 0 : index
    %c0_6 = arith.constant 0 : index
    %3 = vector.load %arg9[%c0_5, %c0_6] : memref<1x384xf32, #tpu.memory_space<vmem>>, vector<1x384xf32>
    %c0_7 = arith.constant 0 : index
    %c0_8 = arith.constant 0 : index
    %4 = vector.load %arg10[%c0_7, %c0_8] : memref<1x384xf32, #tpu.memory_space<vmem>>, vector<1x384xf32>
    %5 = tpu.iota {dimensions = array<i32: 1>} : vector<8x128xi32>
    %c0_9 = arith.constant 0 : index
    %c0_10 = arith.constant 0 : index
    %c0_11 = arith.constant 0 : index
    %6 = vector.load %arg5[%c0_9, %c0_10, %c0_11] : memref<2x8x1xi32, #tpu.memory_space<vmem>>, vector<1x8x1xi32>
    %7 = vector.shape_cast %6 : vector<1x8x1xi32> to vector<8x1xi32>
    %8 = vector.broadcast %7 : vector<8x1xi32> to vector<8x128xi32>
    %9 = arith.cmpi eq, %8, %5 : vector<8x128xi32>
    %10 = arith.extui %9 : vector<8x128xi1> to vector<8x128xi32>
    %11 = arith.sitofp %10 : vector<8x128xi32> to vector<8x128xf32>
    %c1 = arith.constant 1 : index
    %c0_12 = arith.constant 0 : index
    %c0_13 = arith.constant 0 : index
    %12 = vector.load %arg5[%c1, %c0_12, %c0_13] : memref<2x8x1xi32, #tpu.memory_space<vmem>>, vector<1x8x1xi32>
    %13 = vector.shape_cast %12 : vector<1x8x1xi32> to vector<8x1xi32>
    %14 = vector.broadcast %13 : vector<8x1xi32> to vector<8x128xi32>
    %15 = arith.cmpi eq, %14, %5 : vector<8x128xi32>
    %16 = arith.extui %15 : vector<8x128xi1> to vector<8x128xi32>
    %17 = arith.sitofp %16 : vector<8x128xi32> to vector<8x128xf32>
    %c0_14 = arith.constant 0 : index
    %c0_15 = arith.constant 0 : index
    %c0_16 = arith.constant 0 : index
    %18 = vector.load %arg3[%c0_14, %c0_15, %c0_16] : memref<2x8x32xf32, #tpu.memory_space<vmem>>, vector<1x8x32xf32>
    %19 = vector.shape_cast %18 : vector<1x8x32xf32> to vector<8x32xf32>
    %c1_17 = arith.constant 1 : index
    %c0_18 = arith.constant 0 : index
    %c0_19 = arith.constant 0 : index
    %20 = vector.load %arg3[%c1_17, %c0_18, %c0_19] : memref<2x8x32xf32, #tpu.memory_space<vmem>>, vector<1x8x32xf32>
    %21 = vector.shape_cast %20 : vector<1x8x32xf32> to vector<8x32xf32>
    %c0_20 = arith.constant 0 : index
    %c0_21 = arith.constant 0 : index
    %c0_22 = arith.constant 0 : index
    %22 = vector.load %arg4[%c0_20, %c0_21, %c0_22] : memref<2x1x8xf32, #tpu.memory_space<vmem>>, vector<1x1x8xf32>
    %23 = vector.shape_cast %22 : vector<1x1x8xf32> to vector<1x8xf32>
    %c1_23 = arith.constant 1 : index
    %c0_24 = arith.constant 0 : index
    %c0_25 = arith.constant 0 : index
    %24 = vector.load %arg4[%c1_23, %c0_24, %c0_25] : memref<2x1x8xf32, #tpu.memory_space<vmem>>, vector<1x1x8xf32>
    %25 = vector.shape_cast %24 : vector<1x1x8xf32> to vector<1x8xf32>
    %26 = tpu.iota {dimensions = array<i32: 1>} : vector<16x128xi32>
    %c0_26 = arith.constant 0 : index
    %c0_27 = arith.constant 0 : index
    %27 = vector.load %arg1[%c0_26, %c0_27] : memref<16x32xf32, #tpu.memory_space<vmem>>, vector<16x32xf32>
    %c0_28 = arith.constant 0 : index
    %c0_29 = arith.constant 0 : index
    %28 = vector.load %arg2[%c0_28, %c0_29] : memref<16x32xf32, #tpu.memory_space<vmem>>, vector<16x32xf32>
    %cst = arith.constant dense<0.000000e+00> : vector<16x384xf32>
    %29 = tpu.matmul %27, %1, %cst {dimension_numbers = #tpu.dot_dimension_numbers<[1], [0], [0], [1], [0, 0, 1, 1], [], []>} : vector<16x32xf32>, vector<32x384xf32>, vector<16x384xf32> -> vector<16x384xf32>
    %30 = vector.broadcast %3 : vector<1x384xf32> to vector<16x384xf32>
    %31 = arith.addf %29, %30 : vector<16x384xf32>
    %cst_30 = arith.constant dense<0.000000e+00> : vector<16x384xf32>
    %32 = tpu.matmul %28, %2, %cst_30 {dimension_numbers = #tpu.dot_dimension_numbers<[1], [0], [0], [1], [0, 0, 1, 1], [], []>} : vector<16x32xf32>, vector<32x384xf32>, vector<16x384xf32> -> vector<16x384xf32>
    %33 = vector.broadcast %4 : vector<1x384xf32> to vector<16x384xf32>
    %34 = arith.addf %32, %33 : vector<16x384xf32>
    %35 = vector.extract_strided_slice %31 {offsets = [0, 0], sizes = [16, 32], strides = [1, 1]} : vector<16x384xf32> to vector<16x32xf32>
    %36 = vector.extract_strided_slice %34 {offsets = [0, 0], sizes = [16, 32], strides = [1, 1]} : vector<16x384xf32> to vector<16x32xf32>
    %37 = arith.addf %35, %36 : vector<16x32xf32>
    %38 = arith.negf %37 : vector<16x32xf32>
    %39 = math.exp %38 : vector<16x32xf32>
    %cst_31 = arith.constant 1.000000e+00 : f32
    %40 = vector.broadcast %cst_31 : f32 to vector<16x32xf32>
    %41 = arith.addf %40, %39 : vector<16x32xf32>
    %42 = arith.divf %40, %41 : vector<16x32xf32>
    %43 = vector.extract_strided_slice %31 {offsets = [0, 128], sizes = [16, 32], strides = [1, 1]} : vector<16x384xf32> to vector<16x32xf32>
    %44 = vector.extract_strided_slice %34 {offsets = [0, 128], sizes = [16, 32], strides = [1, 1]} : vector<16x384xf32> to vector<16x32xf32>
    %45 = arith.addf %43, %44 : vector<16x32xf32>
    %46 = arith.negf %45 : vector<16x32xf32>
    %47 = math.exp %46 : vector<16x32xf32>
    %cst_32 = arith.constant 1.000000e+00 : f32
    %48 = vector.broadcast %cst_32 : f32 to vector<16x32xf32>
    %49 = arith.addf %48, %47 : vector<16x32xf32>
    %50 = arith.divf %48, %49 : vector<16x32xf32>
    %51 = vector.extract_strided_slice %31 {offsets = [0, 256], sizes = [16, 32], strides = [1, 1]} : vector<16x384xf32> to vector<16x32xf32>
    %52 = vector.extract_strided_slice %34 {offsets = [0, 256], sizes = [16, 32], strides = [1, 1]} : vector<16x384xf32> to vector<16x32xf32>
    %53 = arith.mulf %42, %52 : vector<16x32xf32>
    %54 = arith.addf %51, %53 : vector<16x32xf32>
    %55 = math.tanh %54 : vector<16x32xf32>
    %cst_33 = arith.constant 1.000000e+00 : f32
    %56 = vector.broadcast %cst_33 : f32 to vector<16x32xf32>
    %57 = arith.subf %56, %50 : vector<16x32xf32>
    %58 = arith.mulf %57, %55 : vector<16x32xf32>
    %59 = arith.mulf %50, %28 : vector<16x32xf32>
    %60 = arith.addf %58, %59 : vector<16x32xf32>
    %61 = vector.extract_strided_slice %60 {offsets = [0, 0], sizes = [8, 32], strides = [1, 1]} : vector<16x32xf32> to vector<8x32xf32>
    %cst_34 = arith.constant dense<0.000000e+00> : vector<8x8xf32>
    %62 = tpu.matmul %61, %19, %cst_34 {dimension_numbers = #tpu.dot_dimension_numbers<[1], [1], [0], [0], [0, 0, 1, 0], [], []>} : vector<8x32xf32>, vector<8x32xf32>, vector<8x8xf32> -> vector<8x8xf32>
    %63 = vector.broadcast %23 : vector<1x8xf32> to vector<8x8xf32>
    %64 = arith.addf %62, %63 : vector<8x8xf32>
    %cst_35 = arith.constant dense<0xFF800000> : vector<8xf32>
    %65 = vector.multi_reduction <maximumf>, %64, %cst_35 [1] : vector<8x8xf32> to vector<8xf32>
    %66 = vector.shape_cast %65 : vector<8xf32> to vector<8x1xf32>
    %67 = vector.broadcast %66 : vector<8x1xf32> to vector<8x8xf32>
    %68 = arith.subf %64, %67 : vector<8x8xf32>
    %69 = math.exp %68 : vector<8x8xf32>
    %cst_36 = arith.constant dense<0.000000e+00> : vector<8xf32>
    %70 = vector.multi_reduction <add>, %69, %cst_36 [1] : vector<8x8xf32> to vector<8xf32>
    %71 = vector.shape_cast %70 : vector<8xf32> to vector<8x1xf32>
    %72 = tpu.reciprocal %71 {approx = true} : vector<8x1xf32> -> vector<8x1xf32>
    %73 = arith.mulf %71, %72 : vector<8x1xf32>
    %cst_37 = arith.constant 2.000000e+00 : f32
    %74 = vector.broadcast %cst_37 : f32 to vector<8x1xf32>
    %75 = arith.subf %74, %73 : vector<8x1xf32>
    %76 = arith.mulf %72, %75 : vector<8x1xf32>
    %77 = vector.broadcast %76 : vector<8x1xf32> to vector<8x8xf32>
    %78 = arith.mulf %69, %77 : vector<8x8xf32>
    %cst_38 = arith.constant dense<0.000000e+00> : vector<8x32xf32>
    %79 = tpu.matmul %78, %19, %cst_38 {dimension_numbers = #tpu.dot_dimension_numbers<[1], [0], [0], [1], [0, 0, 1, 1], [], []>} : vector<8x8xf32>, vector<8x32xf32>, vector<8x32xf32> -> vector<8x32xf32>
    %c0_39 = arith.constant 0 : index
    %c0_40 = arith.constant 0 : index
    %80 = vector.load %arg17[%c0_39, %c0_40] : memref<16x32xf32, #tpu.memory_space<vmem>>, vector<8x32xf32>
    tpu.vector_store %arg17[%c0_39, %c0_40], %79 {strides = array<i32>} : memref<16x32xf32, #tpu.memory_space<vmem>>, vector<8x32xf32>,
    %cst_41 = arith.constant dense<0.000000e+00> : vector<8x128xf32>
    %81 = tpu.matmul %78, %11, %cst_41 {dimension_numbers = #tpu.dot_dimension_numbers<[1], [0], [0], [1], [0, 0, 1, 1], [], []>} : vector<8x8xf32>, vector<8x128xf32>, vector<8x128xf32> -> vector<8x128xf32>
    %c0_42 = arith.constant 0 : index
    %c0_43 = arith.constant 0 : index
    %82 = vector.load %arg18[%c0_42, %c0_43] : memref<16x128xf32, #tpu.memory_space<vmem>>, vector<8x128xf32>
    tpu.vector_store %arg18[%c0_42, %c0_43], %81 {strides = array<i32>} : memref<16x128xf32, #tpu.memory_space<vmem>>, vector<8x128xf32>,
    %83 = vector.extract_strided_slice %60 {offsets = [8, 0], sizes = [8, 32], strides = [1, 1]} : vector<16x32xf32> to vector<8x32xf32>
    %cst_44 = arith.constant dense<0.000000e+00> : vector<8x8xf32>
    %84 = tpu.matmul %83, %21, %cst_44 {dimension_numbers = #tpu.dot_dimension_numbers<[1], [1], [0], [0], [0, 0, 1, 0], [], []>} : vector<8x32xf32>, vector<8x32xf32>, vector<8x8xf32> -> vector<8x8xf32>
    %85 = vector.broadcast %25 : vector<1x8xf32> to vector<8x8xf32>
    %86 = arith.addf %84, %85 : vector<8x8xf32>
    %cst_45 = arith.constant dense<0xFF800000> : vector<8xf32>
    %87 = vector.multi_reduction <maximumf>, %86, %cst_45 [1] : vector<8x8xf32> to vector<8xf32>
    %88 = vector.shape_cast %87 : vector<8xf32> to vector<8x1xf32>
    %89 = vector.broadcast %88 : vector<8x1xf32> to vector<8x8xf32>
    %90 = arith.subf %86, %89 : vector<8x8xf32>
    %91 = math.exp %90 : vector<8x8xf32>
    %cst_46 = arith.constant dense<0.000000e+00> : vector<8xf32>
    %92 = vector.multi_reduction <add>, %91, %cst_46 [1] : vector<8x8xf32> to vector<8xf32>
    %93 = vector.shape_cast %92 : vector<8xf32> to vector<8x1xf32>
    %94 = tpu.reciprocal %93 {approx = true} : vector<8x1xf32> -> vector<8x1xf32>
    %95 = arith.mulf %93, %94 : vector<8x1xf32>
    %cst_47 = arith.constant 2.000000e+00 : f32
    %96 = vector.broadcast %cst_47 : f32 to vector<8x1xf32>
    %97 = arith.subf %96, %95 : vector<8x1xf32>
    %98 = arith.mulf %94, %97 : vector<8x1xf32>
    %99 = vector.broadcast %98 : vector<8x1xf32> to vector<8x8xf32>
    %100 = arith.mulf %91, %99 : vector<8x8xf32>
    %cst_48 = arith.constant dense<0.000000e+00> : vector<8x32xf32>
    %101 = tpu.matmul %100, %21, %cst_48 {dimension_numbers = #tpu.dot_dimension_numbers<[1], [0], [0], [1], [0, 0, 1, 1], [], []>} : vector<8x8xf32>, vector<8x32xf32>, vector<8x32xf32> -> vector<8x32xf32>
    %c8 = arith.constant 8 : index
    %c0_49 = arith.constant 0 : index
    %102 = vector.load %arg17[%c8, %c0_49] : memref<16x32xf32, #tpu.memory_space<vmem>>, vector<8x32xf32>
    tpu.vector_store %arg17[%c8, %c0_49], %101 {strides = array<i32>} : memref<16x32xf32, #tpu.memory_space<vmem>>, vector<8x32xf32>,
    %cst_50 = arith.constant dense<0.000000e+00> : vector<8x128xf32>
    %103 = tpu.matmul %100, %17, %cst_50 {dimension_numbers = #tpu.dot_dimension_numbers<[1], [0], [0], [1], [0, 0, 1, 1], [], []>} : vector<8x8xf32>, vector<8x128xf32>, vector<8x128xf32> -> vector<8x128xf32>
    %c8_51 = arith.constant 8 : index
    %c0_52 = arith.constant 0 : index
    %104 = vector.load %arg18[%c8_51, %c0_52] : memref<16x128xf32, #tpu.memory_space<vmem>>, vector<8x128xf32>
    tpu.vector_store %arg18[%c8_51, %c0_52], %103 {strides = array<i32>} : memref<16x128xf32, #tpu.memory_space<vmem>>, vector<8x128xf32>,
    %c0_53 = arith.constant 0 : index
    %c0_54 = arith.constant 0 : index
    %105 = vector.load %arg17[%c0_53, %c0_54] : memref<16x32xf32, #tpu.memory_space<vmem>>, vector<16x32xf32>
    %c0_55 = arith.constant 0 : index
    %c0_56 = arith.constant 0 : index
    %106 = vector.load %arg18[%c0_55, %c0_56] : memref<16x128xf32, #tpu.memory_space<vmem>>, vector<16x128xf32>
    %cst_57 = arith.constant dense<0.000000e+00> : vector<16x128xf32>
    %107 = tpu.matmul %60, %0, %cst_57 {dimension_numbers = #tpu.dot_dimension_numbers<[1], [1], [0], [0], [0, 0, 1, 0], [], []>} : vector<16x32xf32>, vector<128x32xf32>, vector<16x128xf32> -> vector<16x128xf32>
    %c64_i32 = arith.constant 64 : i32
    %108 = vector.broadcast %c64_i32 : i32 to vector<16x128xi32>
    %109 = arith.cmpi slt, %26, %108 : vector<16x128xi32>
    %cst_58 = arith.constant -1.000000e+09 : f32
    %110 = vector.broadcast %cst_58 : f32 to vector<16x128xf32>
    %111 = arith.select %109, %107, %110 : vector<16x128xi1>, vector<16x128xf32>
    %cst_59 = arith.constant dense<0xFF800000> : vector<16xf32>
    %112 = vector.multi_reduction <maximumf>, %111, %cst_59 [1] : vector<16x128xf32> to vector<16xf32>
    %113 = vector.shape_cast %112 : vector<16xf32> to vector<16x1xf32>
    %114 = vector.broadcast %113 : vector<16x1xf32> to vector<16x128xf32>
    %115 = arith.subf %111, %114 : vector<16x128xf32>
    %116 = math.exp %115 : vector<16x128xf32>
    %cst_60 = arith.constant dense<0.000000e+00> : vector<16xf32>
    %117 = vector.multi_reduction <add>, %116, %cst_60 [1] : vector<16x128xf32> to vector<16xf32>
    %118 = vector.shape_cast %117 : vector<16xf32> to vector<16x1xf32>
    %119 = tpu.reciprocal %118 {approx = true} : vector<16x1xf32> -> vector<16x1xf32>
    %120 = arith.mulf %118, %119 : vector<16x1xf32>
    %cst_61 = arith.constant 2.000000e+00 : f32
    %121 = vector.broadcast %cst_61 : f32 to vector<16x1xf32>
    %122 = arith.subf %121, %120 : vector<16x1xf32>
    %123 = arith.mulf %119, %122 : vector<16x1xf32>
    %124 = vector.broadcast %123 : vector<16x1xf32> to vector<16x128xf32>
    %125 = arith.mulf %116, %124 : vector<16x128xf32>
    %126 = tpu.concatenate %27, %60, %105 in 1 : vector<16x32xf32>, vector<16x32xf32>, vector<16x32xf32> -> vector<16x96xf32>
    %c0_62 = arith.constant 0 : index
    %c0_63 = arith.constant 0 : index
    %127 = vector.load %arg11[%c0_62, %c0_63] : memref<96x1xf32, #tpu.memory_space<vmem>>, vector<96x1xf32>
    %cst_64 = arith.constant dense<0.000000e+00> : vector<16x1xf32>
    %128 = tpu.matmul %126, %127, %cst_64 {dimension_numbers = #tpu.dot_dimension_numbers<[1], [0], [0], [1], [0, 0, 1, 1], [], []>} : vector<16x96xf32>, vector<96x1xf32>, vector<16x1xf32> -> vector<16x1xf32>
    %c0_65 = arith.constant 0 : index
    %c0_66 = arith.constant 0 : index
    %129 = vector.load %arg12[%c0_65, %c0_66] : memref<1x1xf32, #tpu.memory_space<vmem>>, vector<1x1xf32>
    %130 = vector.broadcast %129 : vector<1x1xf32> to vector<16x1xf32>
    %131 = arith.addf %128, %130 : vector<16x1xf32>
    %132 = arith.negf %131 : vector<16x1xf32>
    %133 = math.exp %132 : vector<16x1xf32>
    %cst_67 = arith.constant 1.000000e+00 : f32
    %134 = vector.broadcast %cst_67 : f32 to vector<16x1xf32>
    %135 = arith.addf %134, %133 : vector<16x1xf32>
    %136 = arith.divf %134, %135 : vector<16x1xf32>
    %137 = vector.broadcast %136 : vector<16x1xf32> to vector<16x128xf32>
    %138 = arith.mulf %137, %125 : vector<16x128xf32>
    %cst_68 = arith.constant 1.000000e+00 : f32
    %139 = vector.broadcast %cst_68 : f32 to vector<16x1xf32>
    %140 = arith.subf %139, %136 : vector<16x1xf32>
    %141 = vector.broadcast %140 : vector<16x1xf32> to vector<16x128xf32>
    %142 = arith.mulf %141, %106 : vector<16x128xf32>
    %143 = arith.addf %138, %142 : vector<16x128xf32>
    %144 = vector.extract_strided_slice %143 {offsets = [0, 0], sizes = [3, 128], strides = [1, 1]} : vector<16x128xf32> to vector<3x128xf32>
    %c0_69 = arith.constant 0 : index
    %c0_70 = arith.constant 0 : index
    %c0_71 = arith.constant 0 : index
    %c0_72 = arith.constant 0 : index
    %145 = vector.load %arg15[%c0_69, %c0_70, %c0_71, %c0_72] : memref<2x3x4x128xf32, #tpu.memory_space<vmem>>, vector<1x3x1x128xf32>
    %146 = vector.shape_cast %145 : vector<1x3x1x128xf32> to vector<3x128xf32>
    %147 = vector.shape_cast %144 : vector<3x128xf32> to vector<1x3x1x128xf32>
    tpu.vector_store %arg15[%c0_69, %c0_70, %c0_71, %c0_72], %147 {strides = array<i32>} : memref<2x3x4x128xf32, #tpu.memory_space<vmem>>, vector<1x3x1x128xf32>,
    %148 = vector.extract_strided_slice %143 {offsets = [8, 0], sizes = [3, 128], strides = [1, 1]} : vector<16x128xf32> to vector<3x128xf32>
    %c1_73 = arith.constant 1 : index
    %c0_74 = arith.constant 0 : index
    %c0_75 = arith.constant 0 : index
    %c0_76 = arith.constant 0 : index
    %149 = vector.load %arg15[%c1_73, %c0_74, %c0_75, %c0_76] : memref<2x3x4x128xf32, #tpu.memory_space<vmem>>, vector<1x3x1x128xf32>
    %150 = vector.shape_cast %149 : vector<1x3x1x128xf32> to vector<3x128xf32>
    %151 = vector.shape_cast %148 : vector<3x128xf32> to vector<1x3x1x128xf32>
    tpu.vector_store %arg15[%c1_73, %c0_74, %c0_75, %c0_76], %151 {strides = array<i32>} : memref<2x3x4x128xf32, #tpu.memory_space<vmem>>, vector<1x3x1x128xf32>,
    %c0_77 = arith.constant 0 : index
    %c0_78 = arith.constant 0 : index
    %152 = vector.load %arg13[%c0_77, %c0_78] : memref<32x128xf32, #tpu.memory_space<vmem>>, vector<32x128xf32>
    %cst_79 = arith.constant dense<0.000000e+00> : vector<16x128xf32>
    %153 = tpu.matmul %105, %152, %cst_79 {dimension_numbers = #tpu.dot_dimension_numbers<[1], [0], [0], [1], [0, 0, 1, 1], [], []>} : vector<16x32xf32>, vector<32x128xf32>, vector<16x128xf32> -> vector<16x128xf32>
    %c0_80 = arith.constant 0 : index
    %c0_81 = arith.constant 0 : index
    %154 = vector.load %arg14[%c0_80, %c0_81] : memref<1x128xf32, #tpu.memory_space<vmem>>, vector<1x128xf32>
    %155 = vector.broadcast %154 : vector<1x128xf32> to vector<16x128xf32>
    %156 = arith.addf %153, %155 : vector<16x128xf32>
    %157 = vector.extract_strided_slice %156 {offsets = [0, 0], sizes = [3, 128], strides = [1, 1]} : vector<16x128xf32> to vector<3x128xf32>
    %c0_82 = arith.constant 0 : index
    %c0_83 = arith.constant 0 : index
    %c0_84 = arith.constant 0 : index
    %158 = vector.load %arg16[%c0_82, %c0_83, %c0_84] : memref<2x3x128xf32, #tpu.memory_space<vmem>>, vector<1x3x128xf32>
    %159 = vector.shape_cast %158 : vector<1x3x128xf32> to vector<3x128xf32>
    %160 = vector.shape_cast %157 : vector<3x128xf32> to vector<1x3x128xf32>
    tpu.vector_store %arg16[%c0_82, %c0_83, %c0_84], %160 {strides = array<i32>} : memref<2x3x128xf32, #tpu.memory_space<vmem>>, vector<1x3x128xf32>,
    %161 = vector.extract_strided_slice %156 {offsets = [8, 0], sizes = [3, 128], strides = [1, 1]} : vector<16x128xf32> to vector<3x128xf32>
    %c1_85 = arith.constant 1 : index
    %c0_86 = arith.constant 0 : index
    %c0_87 = arith.constant 0 : index
    %162 = vector.load %arg16[%c1_85, %c0_86, %c0_87] : memref<2x3x128xf32, #tpu.memory_space<vmem>>, vector<1x3x128xf32>
    %163 = vector.shape_cast %162 : vector<1x3x128xf32> to vector<3x128xf32>
    %164 = vector.shape_cast %161 : vector<3x128xf32> to vector<1x3x128xf32>
    tpu.vector_store %arg16[%c1_85, %c0_86, %c0_87], %164 {strides = array<i32>} : memref<2x3x128xf32, #tpu.memory_space<vmem>>, vector<1x3x128xf32>,
    %cst_88 = arith.constant dense<0xFF800000> : vector<16xf32>
    %165 = vector.multi_reduction <maximumf>, %143, %cst_88 [1] : vector<16x128xf32> to vector<16xf32>
    %166 = vector.shape_cast %165 : vector<16xf32> to vector<16x1xf32>
    %167 = vector.broadcast %166 : vector<16x1xf32> to vector<16x128xf32>
    %168 = arith.cmpf oeq, %143, %167 : vector<16x128xf32>
    %c128_i32 = arith.constant 128 : i32
    %169 = vector.broadcast %c128_i32 : i32 to vector<16x128xi32>
    %170 = arith.select %168, %26, %169 : vector<16x128xi1>, vector<16x128xi32>
    %cst_89 = arith.constant dense<2147483647> : vector<16xi32>
    %171 = vector.multi_reduction <minsi>, %170, %cst_89 [1] : vector<16x128xi32> to vector<16xi32>
    %172 = vector.shape_cast %171 : vector<16xi32> to vector<16x1xi32>
    %173 = vector.broadcast %172 : vector<16x1xi32> to vector<16x128xi32>
    %174 = arith.cmpi eq, %26, %173 : vector<16x128xi32>
    %175 = arith.extui %174 : vector<16x128xi1> to vector<16x128xi32>
    %176 = arith.sitofp %175 : vector<16x128xi32> to vector<16x128xf32>
    %cst_90 = arith.constant dense<0.000000e+00> : vector<16x32xf32>
    %177 = tpu.matmul %176, %0, %cst_90 {dimension_numbers = #tpu.dot_dimension_numbers<[1], [0], [0], [1], [0, 0, 1, 1], [], []>} : vector<16x128xf32>, vector<128x32xf32>, vector<16x32xf32> -> vector<16x32xf32>
    %cst_91 = arith.constant dense<0.000000e+00> : vector<16x384xf32>
    %178 = tpu.matmul %177, %1, %cst_91 {dimension_numbers = #tpu.dot_dimension_numbers<[1], [0], [0], [1], [0, 0, 1, 1], [], []>} : vector<16x32xf32>, vector<32x384xf32>, vector<16x384xf32> -> vector<16x384xf32>
    %179 = vector.broadcast %3 : vector<1x384xf32> to vector<16x384xf32>
    %180 = arith.addf %178, %179 : vector<16x384xf32>
    %cst_92 = arith.constant dense<0.000000e+00> : vector<16x384xf32>
    %181 = tpu.matmul %60, %2, %cst_92 {dimension_numbers = #tpu.dot_dimension_numbers<[1], [0], [0], [1], [0, 0, 1, 1], [], []>} : vector<16x32xf32>, vector<32x384xf32>, vector<16x384xf32> -> vector<16x384xf32>
    %182 = vector.broadcast %4 : vector<1x384xf32> to vector<16x384xf32>
    %183 = arith.addf %181, %182 : vector<16x384xf32>
    %184 = vector.extract_strided_slice %180 {offsets = [0, 0], sizes = [16, 32], strides = [1, 1]} : vector<16x384xf32> to vector<16x32xf32>
    %185 = vector.extract_strided_slice %183 {offsets = [0, 0], sizes = [16, 32], strides = [1, 1]} : vector<16x384xf32> to vector<16x32xf32>
    %186 = arith.addf %184, %185 : vector<16x32xf32>
    %187 = arith.negf %186 : vector<16x32xf32>
    %188 = math.exp %187 : vector<16x32xf32>
    %cst_93 = arith.constant 1.000000e+00 : f32
    %189 = vector.broadcast %cst_93 : f32 to vector<16x32xf32>
    %190 = arith.addf %189, %188 : vector<16x32xf32>
    %191 = arith.divf %189, %190 : vector<16x32xf32>
    %192 = vector.extract_strided_slice %180 {offsets = [0, 128], sizes = [16, 32], strides = [1, 1]} : vector<16x384xf32> to vector<16x32xf32>
    %193 = vector.extract_strided_slice %183 {offsets = [0, 128], sizes = [16, 32], strides = [1, 1]} : vector<16x384xf32> to vector<16x32xf32>
    %194 = arith.addf %192, %193 : vector<16x32xf32>
    %195 = arith.negf %194 : vector<16x32xf32>
    %196 = math.exp %195 : vector<16x32xf32>
    %cst_94 = arith.constant 1.000000e+00 : f32
    %197 = vector.broadcast %cst_94 : f32 to vector<16x32xf32>
    %198 = arith.addf %197, %196 : vector<16x32xf32>
    %199 = arith.divf %197, %198 : vector<16x32xf32>
    %200 = vector.extract_strided_slice %180 {offsets = [0, 256], sizes = [16, 32], strides = [1, 1]} : vector<16x384xf32> to vector<16x32xf32>
    %201 = vector.extract_strided_slice %183 {offsets = [0, 256], sizes = [16, 32], strides = [1, 1]} : vector<16x384xf32> to vector<16x32xf32>
    %202 = arith.mulf %191, %201 : vector<16x32xf32>
    %203 = arith.addf %200, %202 : vector<16x32xf32>
    %204 = math.tanh %203 : vector<16x32xf32>
    %cst_95 = arith.constant 1.000000e+00 : f32
    %205 = vector.broadcast %cst_95 : f32 to vector<16x32xf32>
    %206 = arith.subf %205, %199 : vector<16x32xf32>
    %207 = arith.mulf %206, %204 : vector<16x32xf32>
    %208 = arith.mulf %199, %60 : vector<16x32xf32>
    %209 = arith.addf %207, %208 : vector<16x32xf32>
    %210 = vector.extract_strided_slice %209 {offsets = [0, 0], sizes = [8, 32], strides = [1, 1]} : vector<16x32xf32> to vector<8x32xf32>
    %cst_96 = arith.constant dense<0.000000e+00> : vector<8x8xf32>
    %211 = tpu.matmul %210, %19, %cst_96 {dimension_numbers = #tpu.dot_dimension_numbers<[1], [1], [0], [0], [0, 0, 1, 0], [], []>} : vector<8x32xf32>, vector<8x32xf32>, vector<8x8xf32> -> vector<8x8xf32>
    %212 = vector.broadcast %23 : vector<1x8xf32> to vector<8x8xf32>
    %213 = arith.addf %211, %212 : vector<8x8xf32>
    %cst_97 = arith.constant dense<0xFF800000> : vector<8xf32>
    %214 = vector.multi_reduction <maximumf>, %213, %cst_97 [1] : vector<8x8xf32> to vector<8xf32>
    %215 = vector.shape_cast %214 : vector<8xf32> to vector<8x1xf32>
    %216 = vector.broadcast %215 : vector<8x1xf32> to vector<8x8xf32>
    %217 = arith.subf %213, %216 : vector<8x8xf32>
    %218 = math.exp %217 : vector<8x8xf32>
    %cst_98 = arith.constant dense<0.000000e+00> : vector<8xf32>
    %219 = vector.multi_reduction <add>, %218, %cst_98 [1] : vector<8x8xf32> to vector<8xf32>
    %220 = vector.shape_cast %219 : vector<8xf32> to vector<8x1xf32>
    %221 = tpu.reciprocal %220 {approx = true} : vector<8x1xf32> -> vector<8x1xf32>
    %222 = arith.mulf %220, %221 : vector<8x1xf32>
    %cst_99 = arith.constant 2.000000e+00 : f32
    %223 = vector.broadcast %cst_99 : f32 to vector<8x1xf32>
    %224 = arith.subf %223, %222 : vector<8x1xf32>
    %225 = arith.mulf %221, %224 : vector<8x1xf32>
    %226 = vector.broadcast %225 : vector<8x1xf32> to vector<8x8xf32>
    %227 = arith.mulf %218, %226 : vector<8x8xf32>
    %cst_100 = arith.constant dense<0.000000e+00> : vector<8x32xf32>
    %228 = tpu.matmul %227, %19, %cst_100 {dimension_numbers = #tpu.dot_dimension_numbers<[1], [0], [0], [1], [0, 0, 1, 1], [], []>} : vector<8x8xf32>, vector<8x32xf32>, vector<8x32xf32> -> vector<8x32xf32>
    %c0_101 = arith.constant 0 : index
    %c0_102 = arith.constant 0 : index
    %229 = vector.load %arg17[%c0_101, %c0_102] : memref<16x32xf32, #tpu.memory_space<vmem>>, vector<8x32xf32>
    tpu.vector_store %arg17[%c0_101, %c0_102], %228 {strides = array<i32>} : memref<16x32xf32, #tpu.memory_space<vmem>>, vector<8x32xf32>,
    %cst_103 = arith.constant dense<0.000000e+00> : vector<8x128xf32>
    %230 = tpu.matmul %227, %11, %cst_103 {dimension_numbers = #tpu.dot_dimension_numbers<[1], [0], [0], [1], [0, 0, 1, 1], [], []>} : vector<8x8xf32>, vector<8x128xf32>, vector<8x128xf32> -> vector<8x128xf32>
    %c0_104 = arith.constant 0 : index
    %c0_105 = arith.constant 0 : index
    %231 = vector.load %arg18[%c0_104, %c0_105] : memref<16x128xf32, #tpu.memory_space<vmem>>, vector<8x128xf32>
    tpu.vector_store %arg18[%c0_104, %c0_105], %230 {strides = array<i32>} : memref<16x128xf32, #tpu.memory_space<vmem>>, vector<8x128xf32>,
    %232 = vector.extract_strided_slice %209 {offsets = [8, 0], sizes = [8, 32], strides = [1, 1]} : vector<16x32xf32> to vector<8x32xf32>
    %cst_106 = arith.constant dense<0.000000e+00> : vector<8x8xf32>
    %233 = tpu.matmul %232, %21, %cst_106 {dimension_numbers = #tpu.dot_dimension_numbers<[1], [1], [0], [0], [0, 0, 1, 0], [], []>} : vector<8x32xf32>, vector<8x32xf32>, vector<8x8xf32> -> vector<8x8xf32>
    %234 = vector.broadcast %25 : vector<1x8xf32> to vector<8x8xf32>
    %235 = arith.addf %233, %234 : vector<8x8xf32>
    %cst_107 = arith.constant dense<0xFF800000> : vector<8xf32>
    %236 = vector.multi_reduction <maximumf>, %235, %cst_107 [1] : vector<8x8xf32> to vector<8xf32>
    %237 = vector.shape_cast %236 : vector<8xf32> to vector<8x1xf32>
    %238 = vector.broadcast %237 : vector<8x1xf32> to vector<8x8xf32>
    %239 = arith.subf %235, %238 : vector<8x8xf32>
    %240 = math.exp %239 : vector<8x8xf32>
    %cst_108 = arith.constant dense<0.000000e+00> : vector<8xf32>
    %241 = vector.multi_reduction <add>, %240, %cst_108 [1] : vector<8x8xf32> to vector<8xf32>
    %242 = vector.shape_cast %241 : vector<8xf32> to vector<8x1xf32>
    %243 = tpu.reciprocal %242 {approx = true} : vector<8x1xf32> -> vector<8x1xf32>
    %244 = arith.mulf %242, %243 : vector<8x1xf32>
    %cst_109 = arith.constant 2.000000e+00 : f32
    %245 = vector.broadcast %cst_109 : f32 to vector<8x1xf32>
    %246 = arith.subf %245, %244 : vector<8x1xf32>
    %247 = arith.mulf %243, %246 : vector<8x1xf32>
    %248 = vector.broadcast %247 : vector<8x1xf32> to vector<8x8xf32>
    %249 = arith.mulf %240, %248 : vector<8x8xf32>
    %cst_110 = arith.constant dense<0.000000e+00> : vector<8x32xf32>
    %250 = tpu.matmul %249, %21, %cst_110 {dimension_numbers = #tpu.dot_dimension_numbers<[1], [0], [0], [1], [0, 0, 1, 1], [], []>} : vector<8x8xf32>, vector<8x32xf32>, vector<8x32xf32> -> vector<8x32xf32>
    %c8_111 = arith.constant 8 : index
    %c0_112 = arith.constant 0 : index
    %251 = vector.load %arg17[%c8_111, %c0_112] : memref<16x32xf32, #tpu.memory_space<vmem>>, vector<8x32xf32>
    tpu.vector_store %arg17[%c8_111, %c0_112], %250 {strides = array<i32>} : memref<16x32xf32, #tpu.memory_space<vmem>>, vector<8x32xf32>,
    %cst_113 = arith.constant dense<0.000000e+00> : vector<8x128xf32>
    %252 = tpu.matmul %249, %17, %cst_113 {dimension_numbers = #tpu.dot_dimension_numbers<[1], [0], [0], [1], [0, 0, 1, 1], [], []>} : vector<8x8xf32>, vector<8x128xf32>, vector<8x128xf32> -> vector<8x128xf32>
    %c8_114 = arith.constant 8 : index
    %c0_115 = arith.constant 0 : index
    %253 = vector.load %arg18[%c8_114, %c0_115] : memref<16x128xf32, #tpu.memory_space<vmem>>, vector<8x128xf32>
    tpu.vector_store %arg18[%c8_114, %c0_115], %252 {strides = array<i32>} : memref<16x128xf32, #tpu.memory_space<vmem>>, vector<8x128xf32>,
    %c0_116 = arith.constant 0 : index
    %c0_117 = arith.constant 0 : index
    %254 = vector.load %arg17[%c0_116, %c0_117] : memref<16x32xf32, #tpu.memory_space<vmem>>, vector<16x32xf32>
    %c0_118 = arith.constant 0 : index
    %c0_119 = arith.constant 0 : index
    %255 = vector.load %arg18[%c0_118, %c0_119] : memref<16x128xf32, #tpu.memory_space<vmem>>, vector<16x128xf32>
    %cst_120 = arith.constant dense<0.000000e+00> : vector<16x128xf32>
    %256 = tpu.matmul %209, %0, %cst_120 {dimension_numbers = #tpu.dot_dimension_numbers<[1], [1], [0], [0], [0, 0, 1, 0], [], []>} : vector<16x32xf32>, vector<128x32xf32>, vector<16x128xf32> -> vector<16x128xf32>
    %c64_i32_121 = arith.constant 64 : i32
    %257 = vector.broadcast %c64_i32_121 : i32 to vector<16x128xi32>
    %258 = arith.cmpi slt, %26, %257 : vector<16x128xi32>
    %cst_122 = arith.constant -1.000000e+09 : f32
    %259 = vector.broadcast %cst_122 : f32 to vector<16x128xf32>
    %260 = arith.select %258, %256, %259 : vector<16x128xi1>, vector<16x128xf32>
    %cst_123 = arith.constant dense<0xFF800000> : vector<16xf32>
    %261 = vector.multi_reduction <maximumf>, %260, %cst_123 [1] : vector<16x128xf32> to vector<16xf32>
    %262 = vector.shape_cast %261 : vector<16xf32> to vector<16x1xf32>
    %263 = vector.broadcast %262 : vector<16x1xf32> to vector<16x128xf32>
    %264 = arith.subf %260, %263 : vector<16x128xf32>
    %265 = math.exp %264 : vector<16x128xf32>
    %cst_124 = arith.constant dense<0.000000e+00> : vector<16xf32>
    %266 = vector.multi_reduction <add>, %265, %cst_124 [1] : vector<16x128xf32> to vector<16xf32>
    %267 = vector.shape_cast %266 : vector<16xf32> to vector<16x1xf32>
    %268 = tpu.reciprocal %267 {approx = true} : vector<16x1xf32> -> vector<16x1xf32>
    %269 = arith.mulf %267, %268 : vector<16x1xf32>
    %cst_125 = arith.constant 2.000000e+00 : f32
    %270 = vector.broadcast %cst_125 : f32 to vector<16x1xf32>
    %271 = arith.subf %270, %269 : vector<16x1xf32>
    %272 = arith.mulf %268, %271 : vector<16x1xf32>
    %273 = vector.broadcast %272 : vector<16x1xf32> to vector<16x128xf32>
    %274 = arith.mulf %265, %273 : vector<16x128xf32>
    %275 = tpu.concatenate %177, %209, %254 in 1 : vector<16x32xf32>, vector<16x32xf32>, vector<16x32xf32> -> vector<16x96xf32>
    %c0_126 = arith.constant 0 : index
    %c0_127 = arith.constant 0 : index
    %276 = vector.load %arg11[%c0_126, %c0_127] : memref<96x1xf32, #tpu.memory_space<vmem>>, vector<96x1xf32>
    %cst_128 = arith.constant dense<0.000000e+00> : vector<16x1xf32>
    %277 = tpu.matmul %275, %276, %cst_128 {dimension_numbers = #tpu.dot_dimension_numbers<[1], [0], [0], [1], [0, 0, 1, 1], [], []>} : vector<16x96xf32>, vector<96x1xf32>, vector<16x1xf32> -> vector<16x1xf32>
    %c0_129 = arith.constant 0 : index
    %c0_130 = arith.constant 0 : index
    %278 = vector.load %arg12[%c0_129, %c0_130] : memref<1x1xf32, #tpu.memory_space<vmem>>, vector<1x1xf32>
    %279 = vector.broadcast %278 : vector<1x1xf32> to vector<16x1xf32>
    %280 = arith.addf %277, %279 : vector<16x1xf32>
    %281 = arith.negf %280 : vector<16x1xf32>
    %282 = math.exp %281 : vector<16x1xf32>
    %cst_131 = arith.constant 1.000000e+00 : f32
    %283 = vector.broadcast %cst_131 : f32 to vector<16x1xf32>
    %284 = arith.addf %283, %282 : vector<16x1xf32>
    %285 = arith.divf %283, %284 : vector<16x1xf32>
    %286 = vector.broadcast %285 : vector<16x1xf32> to vector<16x128xf32>
    %287 = arith.mulf %286, %274 : vector<16x128xf32>
    %cst_132 = arith.constant 1.000000e+00 : f32
    %288 = vector.broadcast %cst_132 : f32 to vector<16x1xf32>
    %289 = arith.subf %288, %285 : vector<16x1xf32>
    %290 = vector.broadcast %289 : vector<16x1xf32> to vector<16x128xf32>
    %291 = arith.mulf %290, %255 : vector<16x128xf32>
    %292 = arith.addf %287, %291 : vector<16x128xf32>
    %293 = vector.extract_strided_slice %292 {offsets = [0, 0], sizes = [3, 128], strides = [1, 1]} : vector<16x128xf32> to vector<3x128xf32>
    %c0_133 = arith.constant 0 : index
    %c0_134 = arith.constant 0 : index
    %c1_135 = arith.constant 1 : index
    %c0_136 = arith.constant 0 : index
    %294 = vector.load %arg15[%c0_133, %c0_134, %c1_135, %c0_136] : memref<2x3x4x128xf32, #tpu.memory_space<vmem>>, vector<1x3x1x128xf32>
    %295 = vector.shape_cast %294 : vector<1x3x1x128xf32> to vector<3x128xf32>
    %296 = vector.shape_cast %293 : vector<3x128xf32> to vector<1x3x1x128xf32>
    tpu.vector_store %arg15[%c0_133, %c0_134, %c1_135, %c0_136], %296 {strides = array<i32>} : memref<2x3x4x128xf32, #tpu.memory_space<vmem>>, vector<1x3x1x128xf32>,
    %297 = vector.extract_strided_slice %292 {offsets = [8, 0], sizes = [3, 128], strides = [1, 1]} : vector<16x128xf32> to vector<3x128xf32>
    %c1_137 = arith.constant 1 : index
    %c0_138 = arith.constant 0 : index
    %c1_139 = arith.constant 1 : index
    %c0_140 = arith.constant 0 : index
    %298 = vector.load %arg15[%c1_137, %c0_138, %c1_139, %c0_140] : memref<2x3x4x128xf32, #tpu.memory_space<vmem>>, vector<1x3x1x128xf32>
    %299 = vector.shape_cast %298 : vector<1x3x1x128xf32> to vector<3x128xf32>
    %300 = vector.shape_cast %297 : vector<3x128xf32> to vector<1x3x1x128xf32>
    tpu.vector_store %arg15[%c1_137, %c0_138, %c1_139, %c0_140], %300 {strides = array<i32>} : memref<2x3x4x128xf32, #tpu.memory_space<vmem>>, vector<1x3x1x128xf32>,
    %cst_141 = arith.constant dense<0xFF800000> : vector<16xf32>
    %301 = vector.multi_reduction <maximumf>, %292, %cst_141 [1] : vector<16x128xf32> to vector<16xf32>
    %302 = vector.shape_cast %301 : vector<16xf32> to vector<16x1xf32>
    %303 = vector.broadcast %302 : vector<16x1xf32> to vector<16x128xf32>
    %304 = arith.cmpf oeq, %292, %303 : vector<16x128xf32>
    %c128_i32_142 = arith.constant 128 : i32
    %305 = vector.broadcast %c128_i32_142 : i32 to vector<16x128xi32>
    %306 = arith.select %304, %26, %305 : vector<16x128xi1>, vector<16x128xi32>
    %cst_143 = arith.constant dense<2147483647> : vector<16xi32>
    %307 = vector.multi_reduction <minsi>, %306, %cst_143 [1] : vector<16x128xi32> to vector<16xi32>
    %308 = vector.shape_cast %307 : vector<16xi32> to vector<16x1xi32>
    %309 = vector.broadcast %308 : vector<16x1xi32> to vector<16x128xi32>
    %310 = arith.cmpi eq, %26, %309 : vector<16x128xi32>
    %311 = arith.extui %310 : vector<16x128xi1> to vector<16x128xi32>
    %312 = arith.sitofp %311 : vector<16x128xi32> to vector<16x128xf32>
    %cst_144 = arith.constant dense<0.000000e+00> : vector<16x32xf32>
    %313 = tpu.matmul %312, %0, %cst_144 {dimension_numbers = #tpu.dot_dimension_numbers<[1], [0], [0], [1], [0, 0, 1, 1], [], []>} : vector<16x128xf32>, vector<128x32xf32>, vector<16x32xf32> -> vector<16x32xf32>
    %cst_145 = arith.constant dense<0.000000e+00> : vector<16x384xf32>
    %314 = tpu.matmul %313, %1, %cst_145 {dimension_numbers = #tpu.dot_dimension_numbers<[1], [0], [0], [1], [0, 0, 1, 1], [], []>} : vector<16x32xf32>, vector<32x384xf32>, vector<16x384xf32> -> vector<16x384xf32>
    %315 = vector.broadcast %3 : vector<1x384xf32> to vector<16x384xf32>
    %316 = arith.addf %314, %315 : vector<16x384xf32>
    %cst_146 = arith.constant dense<0.000000e+00> : vector<16x384xf32>
    %317 = tpu.matmul %209, %2, %cst_146 {dimension_numbers = #tpu.dot_dimension_numbers<[1], [0], [0], [1], [0, 0, 1, 1], [], []>} : vector<16x32xf32>, vector<32x384xf32>, vector<16x384xf32> -> vector<16x384xf32>
    %318 = vector.broadcast %4 : vector<1x384xf32> to vector<16x384xf32>
    %319 = arith.addf %317, %318 : vector<16x384xf32>
    %320 = vector.extract_strided_slice %316 {offsets = [0, 0], sizes = [16, 32], strides = [1, 1]} : vector<16x384xf32> to vector<16x32xf32>
    %321 = vector.extract_strided_slice %319 {offsets = [0, 0], sizes = [16, 32], strides = [1, 1]} : vector<16x384xf32> to vector<16x32xf32>
    %322 = arith.addf %320, %321 : vector<16x32xf32>
    %323 = arith.negf %322 : vector<16x32xf32>
    %324 = math.exp %323 : vector<16x32xf32>
    %cst_147 = arith.constant 1.000000e+00 : f32
    %325 = vector.broadcast %cst_147 : f32 to vector<16x32xf32>
    %326 = arith.addf %325, %324 : vector<16x32xf32>
    %327 = arith.divf %325, %326 : vector<16x32xf32>
    %328 = vector.extract_strided_slice %316 {offsets = [0, 128], sizes = [16, 32], strides = [1, 1]} : vector<16x384xf32> to vector<16x32xf32>
    %329 = vector.extract_strided_slice %319 {offsets = [0, 128], sizes = [16, 32], strides = [1, 1]} : vector<16x384xf32> to vector<16x32xf32>
    %330 = arith.addf %328, %329 : vector<16x32xf32>
    %331 = arith.negf %330 : vector<16x32xf32>
    %332 = math.exp %331 : vector<16x32xf32>
    %cst_148 = arith.constant 1.000000e+00 : f32
    %333 = vector.broadcast %cst_148 : f32 to vector<16x32xf32>
    %334 = arith.addf %333, %332 : vector<16x32xf32>
    %335 = arith.divf %333, %334 : vector<16x32xf32>
    %336 = vector.extract_strided_slice %316 {offsets = [0, 256], sizes = [16, 32], strides = [1, 1]} : vector<16x384xf32> to vector<16x32xf32>
    %337 = vector.extract_strided_slice %319 {offsets = [0, 256], sizes = [16, 32], strides = [1, 1]} : vector<16x384xf32> to vector<16x32xf32>
    %338 = arith.mulf %327, %337 : vector<16x32xf32>
    %339 = arith.addf %336, %338 : vector<16x32xf32>
    %340 = math.tanh %339 : vector<16x32xf32>
    %cst_149 = arith.constant 1.000000e+00 : f32
    %341 = vector.broadcast %cst_149 : f32 to vector<16x32xf32>
    %342 = arith.subf %341, %335 : vector<16x32xf32>
    %343 = arith.mulf %342, %340 : vector<16x32xf32>
    %344 = arith.mulf %335, %209 : vector<16x32xf32>
    %345 = arith.addf %343, %344 : vector<16x32xf32>
    %346 = vector.extract_strided_slice %345 {offsets = [0, 0], sizes = [8, 32], strides = [1, 1]} : vector<16x32xf32> to vector<8x32xf32>
    %cst_150 = arith.constant dense<0.000000e+00> : vector<8x8xf32>
    %347 = tpu.matmul %346, %19, %cst_150 {dimension_numbers = #tpu.dot_dimension_numbers<[1], [1], [0], [0], [0, 0, 1, 0], [], []>} : vector<8x32xf32>, vector<8x32xf32>, vector<8x8xf32> -> vector<8x8xf32>
    %348 = vector.broadcast %23 : vector<1x8xf32> to vector<8x8xf32>
    %349 = arith.addf %347, %348 : vector<8x8xf32>
    %cst_151 = arith.constant dense<0xFF800000> : vector<8xf32>
    %350 = vector.multi_reduction <maximumf>, %349, %cst_151 [1] : vector<8x8xf32> to vector<8xf32>
    %351 = vector.shape_cast %350 : vector<8xf32> to vector<8x1xf32>
    %352 = vector.broadcast %351 : vector<8x1xf32> to vector<8x8xf32>
    %353 = arith.subf %349, %352 : vector<8x8xf32>
    %354 = math.exp %353 : vector<8x8xf32>
    %cst_152 = arith.constant dense<0.000000e+00> : vector<8xf32>
    %355 = vector.multi_reduction <add>, %354, %cst_152 [1] : vector<8x8xf32> to vector<8xf32>
    %356 = vector.shape_cast %355 : vector<8xf32> to vector<8x1xf32>
    %357 = tpu.reciprocal %356 {approx = true} : vector<8x1xf32> -> vector<8x1xf32>
    %358 = arith.mulf %356, %357 : vector<8x1xf32>
    %cst_153 = arith.constant 2.000000e+00 : f32
    %359 = vector.broadcast %cst_153 : f32 to vector<8x1xf32>
    %360 = arith.subf %359, %358 : vector<8x1xf32>
    %361 = arith.mulf %357, %360 : vector<8x1xf32>
    %362 = vector.broadcast %361 : vector<8x1xf32> to vector<8x8xf32>
    %363 = arith.mulf %354, %362 : vector<8x8xf32>
    %cst_154 = arith.constant dense<0.000000e+00> : vector<8x32xf32>
    %364 = tpu.matmul %363, %19, %cst_154 {dimension_numbers = #tpu.dot_dimension_numbers<[1], [0], [0], [1], [0, 0, 1, 1], [], []>} : vector<8x8xf32>, vector<8x32xf32>, vector<8x32xf32> -> vector<8x32xf32>
    %c0_155 = arith.constant 0 : index
    %c0_156 = arith.constant 0 : index
    %365 = vector.load %arg17[%c0_155, %c0_156] : memref<16x32xf32, #tpu.memory_space<vmem>>, vector<8x32xf32>
    tpu.vector_store %arg17[%c0_155, %c0_156], %364 {strides = array<i32>} : memref<16x32xf32, #tpu.memory_space<vmem>>, vector<8x32xf32>,
    %cst_157 = arith.constant dense<0.000000e+00> : vector<8x128xf32>
    %366 = tpu.matmul %363, %11, %cst_157 {dimension_numbers = #tpu.dot_dimension_numbers<[1], [0], [0], [1], [0, 0, 1, 1], [], []>} : vector<8x8xf32>, vector<8x128xf32>, vector<8x128xf32> -> vector<8x128xf32>
    %c0_158 = arith.constant 0 : index
    %c0_159 = arith.constant 0 : index
    %367 = vector.load %arg18[%c0_158, %c0_159] : memref<16x128xf32, #tpu.memory_space<vmem>>, vector<8x128xf32>
    tpu.vector_store %arg18[%c0_158, %c0_159], %366 {strides = array<i32>} : memref<16x128xf32, #tpu.memory_space<vmem>>, vector<8x128xf32>,
    %368 = vector.extract_strided_slice %345 {offsets = [8, 0], sizes = [8, 32], strides = [1, 1]} : vector<16x32xf32> to vector<8x32xf32>
    %cst_160 = arith.constant dense<0.000000e+00> : vector<8x8xf32>
    %369 = tpu.matmul %368, %21, %cst_160 {dimension_numbers = #tpu.dot_dimension_numbers<[1], [1], [0], [0], [0, 0, 1, 0], [], []>} : vector<8x32xf32>, vector<8x32xf32>, vector<8x8xf32> -> vector<8x8xf32>
    %370 = vector.broadcast %25 : vector<1x8xf32> to vector<8x8xf32>
    %371 = arith.addf %369, %370 : vector<8x8xf32>
    %cst_161 = arith.constant dense<0xFF800000> : vector<8xf32>
    %372 = vector.multi_reduction <maximumf>, %371, %cst_161 [1] : vector<8x8xf32> to vector<8xf32>
    %373 = vector.shape_cast %372 : vector<8xf32> to vector<8x1xf32>
    %374 = vector.broadcast %373 : vector<8x1xf32> to vector<8x8xf32>
    %375 = arith.subf %371, %374 : vector<8x8xf32>
    %376 = math.exp %375 : vector<8x8xf32>
    %cst_162 = arith.constant dense<0.000000e+00> : vector<8xf32>
    %377 = vector.multi_reduction <add>, %376, %cst_162 [1] : vector<8x8xf32> to vector<8xf32>
    %378 = vector.shape_cast %377 : vector<8xf32> to vector<8x1xf32>
    %379 = tpu.reciprocal %378 {approx = true} : vector<8x1xf32> -> vector<8x1xf32>
    %380 = arith.mulf %378, %379 : vector<8x1xf32>
    %cst_163 = arith.constant 2.000000e+00 : f32
    %381 = vector.broadcast %cst_163 : f32 to vector<8x1xf32>
    %382 = arith.subf %381, %380 : vector<8x1xf32>
    %383 = arith.mulf %379, %382 : vector<8x1xf32>
    %384 = vector.broadcast %383 : vector<8x1xf32> to vector<8x8xf32>
    %385 = arith.mulf %376, %384 : vector<8x8xf32>
    %cst_164 = arith.constant dense<0.000000e+00> : vector<8x32xf32>
    %386 = tpu.matmul %385, %21, %cst_164 {dimension_numbers = #tpu.dot_dimension_numbers<[1], [0], [0], [1], [0, 0, 1, 1], [], []>} : vector<8x8xf32>, vector<8x32xf32>, vector<8x32xf32> -> vector<8x32xf32>
    %c8_165 = arith.constant 8 : index
    %c0_166 = arith.constant 0 : index
    %387 = vector.load %arg17[%c8_165, %c0_166] : memref<16x32xf32, #tpu.memory_space<vmem>>, vector<8x32xf32>
    tpu.vector_store %arg17[%c8_165, %c0_166], %386 {strides = array<i32>} : memref<16x32xf32, #tpu.memory_space<vmem>>, vector<8x32xf32>,
    %cst_167 = arith.constant dense<0.000000e+00> : vector<8x128xf32>
    %388 = tpu.matmul %385, %17, %cst_167 {dimension_numbers = #tpu.dot_dimension_numbers<[1], [0], [0], [1], [0, 0, 1, 1], [], []>} : vector<8x8xf32>, vector<8x128xf32>, vector<8x128xf32> -> vector<8x128xf32>
    %c8_168 = arith.constant 8 : index
    %c0_169 = arith.constant 0 : index
    %389 = vector.load %arg18[%c8_168, %c0_169] : memref<16x128xf32, #tpu.memory_space<vmem>>, vector<8x128xf32>
    tpu.vector_store %arg18[%c8_168, %c0_169], %388 {strides = array<i32>} : memref<16x128xf32, #tpu.memory_space<vmem>>, vector<8x128xf32>,
    %c0_170 = arith.constant 0 : index
    %c0_171 = arith.constant 0 : index
    %390 = vector.load %arg17[%c0_170, %c0_171] : memref<16x32xf32, #tpu.memory_space<vmem>>, vector<16x32xf32>
    %c0_172 = arith.constant 0 : index
    %c0_173 = arith.constant 0 : index
    %391 = vector.load %arg18[%c0_172, %c0_173] : memref<16x128xf32, #tpu.memory_space<vmem>>, vector<16x128xf32>
    %cst_174 = arith.constant dense<0.000000e+00> : vector<16x128xf32>
    %392 = tpu.matmul %345, %0, %cst_174 {dimension_numbers = #tpu.dot_dimension_numbers<[1], [1], [0], [0], [0, 0, 1, 0], [], []>} : vector<16x32xf32>, vector<128x32xf32>, vector<16x128xf32> -> vector<16x128xf32>
    %c64_i32_175 = arith.constant 64 : i32
    %393 = vector.broadcast %c64_i32_175 : i32 to vector<16x128xi32>
    %394 = arith.cmpi slt, %26, %393 : vector<16x128xi32>
    %cst_176 = arith.constant -1.000000e+09 : f32
    %395 = vector.broadcast %cst_176 : f32 to vector<16x128xf32>
    %396 = arith.select %394, %392, %395 : vector<16x128xi1>, vector<16x128xf32>
    %cst_177 = arith.constant dense<0xFF800000> : vector<16xf32>
    %397 = vector.multi_reduction <maximumf>, %396, %cst_177 [1] : vector<16x128xf32> to vector<16xf32>
    %398 = vector.shape_cast %397 : vector<16xf32> to vector<16x1xf32>
    %399 = vector.broadcast %398 : vector<16x1xf32> to vector<16x128xf32>
    %400 = arith.subf %396, %399 : vector<16x128xf32>
    %401 = math.exp %400 : vector<16x128xf32>
    %cst_178 = arith.constant dense<0.000000e+00> : vector<16xf32>
    %402 = vector.multi_reduction <add>, %401, %cst_178 [1] : vector<16x128xf32> to vector<16xf32>
    %403 = vector.shape_cast %402 : vector<16xf32> to vector<16x1xf32>
    %404 = tpu.reciprocal %403 {approx = true} : vector<16x1xf32> -> vector<16x1xf32>
    %405 = arith.mulf %403, %404 : vector<16x1xf32>
    %cst_179 = arith.constant 2.000000e+00 : f32
    %406 = vector.broadcast %cst_179 : f32 to vector<16x1xf32>
    %407 = arith.subf %406, %405 : vector<16x1xf32>
    %408 = arith.mulf %404, %407 : vector<16x1xf32>
    %409 = vector.broadcast %408 : vector<16x1xf32> to vector<16x128xf32>
    %410 = arith.mulf %401, %409 : vector<16x128xf32>
    %411 = tpu.concatenate %313, %345, %390 in 1 : vector<16x32xf32>, vector<16x32xf32>, vector<16x32xf32> -> vector<16x96xf32>
    %c0_180 = arith.constant 0 : index
    %c0_181 = arith.constant 0 : index
    %412 = vector.load %arg11[%c0_180, %c0_181] : memref<96x1xf32, #tpu.memory_space<vmem>>, vector<96x1xf32>
    %cst_182 = arith.constant dense<0.000000e+00> : vector<16x1xf32>
    %413 = tpu.matmul %411, %412, %cst_182 {dimension_numbers = #tpu.dot_dimension_numbers<[1], [0], [0], [1], [0, 0, 1, 1], [], []>} : vector<16x96xf32>, vector<96x1xf32>, vector<16x1xf32> -> vector<16x1xf32>
    %c0_183 = arith.constant 0 : index
    %c0_184 = arith.constant 0 : index
    %414 = vector.load %arg12[%c0_183, %c0_184] : memref<1x1xf32, #tpu.memory_space<vmem>>, vector<1x1xf32>
    %415 = vector.broadcast %414 : vector<1x1xf32> to vector<16x1xf32>
    %416 = arith.addf %413, %415 : vector<16x1xf32>
    %417 = arith.negf %416 : vector<16x1xf32>
    %418 = math.exp %417 : vector<16x1xf32>
    %cst_185 = arith.constant 1.000000e+00 : f32
    %419 = vector.broadcast %cst_185 : f32 to vector<16x1xf32>
    %420 = arith.addf %419, %418 : vector<16x1xf32>
    %421 = arith.divf %419, %420 : vector<16x1xf32>
    %422 = vector.broadcast %421 : vector<16x1xf32> to vector<16x128xf32>
    %423 = arith.mulf %422, %410 : vector<16x128xf32>
    %cst_186 = arith.constant 1.000000e+00 : f32
    %424 = vector.broadcast %cst_186 : f32 to vector<16x1xf32>
    %425 = arith.subf %424, %421 : vector<16x1xf32>
    %426 = vector.broadcast %425 : vector<16x1xf32> to vector<16x128xf32>
    %427 = arith.mulf %426, %391 : vector<16x128xf32>
    %428 = arith.addf %423, %427 : vector<16x128xf32>
    %429 = vector.extract_strided_slice %428 {offsets = [0, 0], sizes = [3, 128], strides = [1, 1]} : vector<16x128xf32> to vector<3x128xf32>
    %c0_187 = arith.constant 0 : index
    %c0_188 = arith.constant 0 : index
    %c2 = arith.constant 2 : index
    %c0_189 = arith.constant 0 : index
    %430 = vector.load %arg15[%c0_187, %c0_188, %c2, %c0_189] : memref<2x3x4x128xf32, #tpu.memory_space<vmem>>, vector<1x3x1x128xf32>
    %431 = vector.shape_cast %430 : vector<1x3x1x128xf32> to vector<3x128xf32>
    %432 = vector.shape_cast %429 : vector<3x128xf32> to vector<1x3x1x128xf32>
    tpu.vector_store %arg15[%c0_187, %c0_188, %c2, %c0_189], %432 {strides = array<i32>} : memref<2x3x4x128xf32, #tpu.memory_space<vmem>>, vector<1x3x1x128xf32>,
    %433 = vector.extract_strided_slice %428 {offsets = [8, 0], sizes = [3, 128], strides = [1, 1]} : vector<16x128xf32> to vector<3x128xf32>
    %c1_190 = arith.constant 1 : index
    %c0_191 = arith.constant 0 : index
    %c2_192 = arith.constant 2 : index
    %c0_193 = arith.constant 0 : index
    %434 = vector.load %arg15[%c1_190, %c0_191, %c2_192, %c0_193] : memref<2x3x4x128xf32, #tpu.memory_space<vmem>>, vector<1x3x1x128xf32>
    %435 = vector.shape_cast %434 : vector<1x3x1x128xf32> to vector<3x128xf32>
    %436 = vector.shape_cast %433 : vector<3x128xf32> to vector<1x3x1x128xf32>
    tpu.vector_store %arg15[%c1_190, %c0_191, %c2_192, %c0_193], %436 {strides = array<i32>} : memref<2x3x4x128xf32, #tpu.memory_space<vmem>>, vector<1x3x1x128xf32>,
    %cst_194 = arith.constant dense<0xFF800000> : vector<16xf32>
    %437 = vector.multi_reduction <maximumf>, %428, %cst_194 [1] : vector<16x128xf32> to vector<16xf32>
    %438 = vector.shape_cast %437 : vector<16xf32> to vector<16x1xf32>
    %439 = vector.broadcast %438 : vector<16x1xf32> to vector<16x128xf32>
    %440 = arith.cmpf oeq, %428, %439 : vector<16x128xf32>
    %c128_i32_195 = arith.constant 128 : i32
    %441 = vector.broadcast %c128_i32_195 : i32 to vector<16x128xi32>
    %442 = arith.select %440, %26, %441 : vector<16x128xi1>, vector<16x128xi32>
    %cst_196 = arith.constant dense<2147483647> : vector<16xi32>
    %443 = vector.multi_reduction <minsi>, %442, %cst_196 [1] : vector<16x128xi32> to vector<16xi32>
    %444 = vector.shape_cast %443 : vector<16xi32> to vector<16x1xi32>
    %445 = vector.broadcast %444 : vector<16x1xi32> to vector<16x128xi32>
    %446 = arith.cmpi eq, %26, %445 : vector<16x128xi32>
    %447 = arith.extui %446 : vector<16x128xi1> to vector<16x128xi32>
    %448 = arith.sitofp %447 : vector<16x128xi32> to vector<16x128xf32>
    %cst_197 = arith.constant dense<0.000000e+00> : vector<16x32xf32>
    %449 = tpu.matmul %448, %0, %cst_197 {dimension_numbers = #tpu.dot_dimension_numbers<[1], [0], [0], [1], [0, 0, 1, 1], [], []>} : vector<16x128xf32>, vector<128x32xf32>, vector<16x32xf32> -> vector<16x32xf32>
    %cst_198 = arith.constant dense<0.000000e+00> : vector<16x384xf32>
    %450 = tpu.matmul %449, %1, %cst_198 {dimension_numbers = #tpu.dot_dimension_numbers<[1], [0], [0], [1], [0, 0, 1, 1], [], []>} : vector<16x32xf32>, vector<32x384xf32>, vector<16x384xf32> -> vector<16x384xf32>
    %451 = vector.broadcast %3 : vector<1x384xf32> to vector<16x384xf32>
    %452 = arith.addf %450, %451 : vector<16x384xf32>
    %cst_199 = arith.constant dense<0.000000e+00> : vector<16x384xf32>
    %453 = tpu.matmul %345, %2, %cst_199 {dimension_numbers = #tpu.dot_dimension_numbers<[1], [0], [0], [1], [0, 0, 1, 1], [], []>} : vector<16x32xf32>, vector<32x384xf32>, vector<16x384xf32> -> vector<16x384xf32>
    %454 = vector.broadcast %4 : vector<1x384xf32> to vector<16x384xf32>
    %455 = arith.addf %453, %454 : vector<16x384xf32>
    %456 = vector.extract_strided_slice %452 {offsets = [0, 0], sizes = [16, 32], strides = [1, 1]} : vector<16x384xf32> to vector<16x32xf32>
    %457 = vector.extract_strided_slice %455 {offsets = [0, 0], sizes = [16, 32], strides = [1, 1]} : vector<16x384xf32> to vector<16x32xf32>
    %458 = arith.addf %456, %457 : vector<16x32xf32>
    %459 = arith.negf %458 : vector<16x32xf32>
    %460 = math.exp %459 : vector<16x32xf32>
    %cst_200 = arith.constant 1.000000e+00 : f32
    %461 = vector.broadcast %cst_200 : f32 to vector<16x32xf32>
    %462 = arith.addf %461, %460 : vector<16x32xf32>
    %463 = arith.divf %461, %462 : vector<16x32xf32>
    %464 = vector.extract_strided_slice %452 {offsets = [0, 128], sizes = [16, 32], strides = [1, 1]} : vector<16x384xf32> to vector<16x32xf32>
    %465 = vector.extract_strided_slice %455 {offsets = [0, 128], sizes = [16, 32], strides = [1, 1]} : vector<16x384xf32> to vector<16x32xf32>
    %466 = arith.addf %464, %465 : vector<16x32xf32>
    %467 = arith.negf %466 : vector<16x32xf32>
    %468 = math.exp %467 : vector<16x32xf32>
    %cst_201 = arith.constant 1.000000e+00 : f32
    %469 = vector.broadcast %cst_201 : f32 to vector<16x32xf32>
    %470 = arith.addf %469, %468 : vector<16x32xf32>
    %471 = arith.divf %469, %470 : vector<16x32xf32>
    %472 = vector.extract_strided_slice %452 {offsets = [0, 256], sizes = [16, 32], strides = [1, 1]} : vector<16x384xf32> to vector<16x32xf32>
    %473 = vector.extract_strided_slice %455 {offsets = [0, 256], sizes = [16, 32], strides = [1, 1]} : vector<16x384xf32> to vector<16x32xf32>
    %474 = arith.mulf %463, %473 : vector<16x32xf32>
    %475 = arith.addf %472, %474 : vector<16x32xf32>
    %476 = math.tanh %475 : vector<16x32xf32>
    %cst_202 = arith.constant 1.000000e+00 : f32
    %477 = vector.broadcast %cst_202 : f32 to vector<16x32xf32>
    %478 = arith.subf %477, %471 : vector<16x32xf32>
    %479 = arith.mulf %478, %476 : vector<16x32xf32>
    %480 = arith.mulf %471, %345 : vector<16x32xf32>
    %481 = arith.addf %479, %480 : vector<16x32xf32>
    %482 = vector.extract_strided_slice %481 {offsets = [0, 0], sizes = [8, 32], strides = [1, 1]} : vector<16x32xf32> to vector<8x32xf32>
    %cst_203 = arith.constant dense<0.000000e+00> : vector<8x8xf32>
    %483 = tpu.matmul %482, %19, %cst_203 {dimension_numbers = #tpu.dot_dimension_numbers<[1], [1], [0], [0], [0, 0, 1, 0], [], []>} : vector<8x32xf32>, vector<8x32xf32>, vector<8x8xf32> -> vector<8x8xf32>
    %484 = vector.broadcast %23 : vector<1x8xf32> to vector<8x8xf32>
    %485 = arith.addf %483, %484 : vector<8x8xf32>
    %cst_204 = arith.constant dense<0xFF800000> : vector<8xf32>
    %486 = vector.multi_reduction <maximumf>, %485, %cst_204 [1] : vector<8x8xf32> to vector<8xf32>
    %487 = vector.shape_cast %486 : vector<8xf32> to vector<8x1xf32>
    %488 = vector.broadcast %487 : vector<8x1xf32> to vector<8x8xf32>
    %489 = arith.subf %485, %488 : vector<8x8xf32>
    %490 = math.exp %489 : vector<8x8xf32>
    %cst_205 = arith.constant dense<0.000000e+00> : vector<8xf32>
    %491 = vector.multi_reduction <add>, %490, %cst_205 [1] : vector<8x8xf32> to vector<8xf32>
    %492 = vector.shape_cast %491 : vector<8xf32> to vector<8x1xf32>
    %493 = tpu.reciprocal %492 {approx = true} : vector<8x1xf32> -> vector<8x1xf32>
    %494 = arith.mulf %492, %493 : vector<8x1xf32>
    %cst_206 = arith.constant 2.000000e+00 : f32
    %495 = vector.broadcast %cst_206 : f32 to vector<8x1xf32>
    %496 = arith.subf %495, %494 : vector<8x1xf32>
    %497 = arith.mulf %493, %496 : vector<8x1xf32>
    %498 = vector.broadcast %497 : vector<8x1xf32> to vector<8x8xf32>
    %499 = arith.mulf %490, %498 : vector<8x8xf32>
    %cst_207 = arith.constant dense<0.000000e+00> : vector<8x32xf32>
    %500 = tpu.matmul %499, %19, %cst_207 {dimension_numbers = #tpu.dot_dimension_numbers<[1], [0], [0], [1], [0, 0, 1, 1], [], []>} : vector<8x8xf32>, vector<8x32xf32>, vector<8x32xf32> -> vector<8x32xf32>
    %c0_208 = arith.constant 0 : index
    %c0_209 = arith.constant 0 : index
    %501 = vector.load %arg17[%c0_208, %c0_209] : memref<16x32xf32, #tpu.memory_space<vmem>>, vector<8x32xf32>
    tpu.vector_store %arg17[%c0_208, %c0_209], %500 {strides = array<i32>} : memref<16x32xf32, #tpu.memory_space<vmem>>, vector<8x32xf32>,
    %cst_210 = arith.constant dense<0.000000e+00> : vector<8x128xf32>
    %502 = tpu.matmul %499, %11, %cst_210 {dimension_numbers = #tpu.dot_dimension_numbers<[1], [0], [0], [1], [0, 0, 1, 1], [], []>} : vector<8x8xf32>, vector<8x128xf32>, vector<8x128xf32> -> vector<8x128xf32>
    %c0_211 = arith.constant 0 : index
    %c0_212 = arith.constant 0 : index
    %503 = vector.load %arg18[%c0_211, %c0_212] : memref<16x128xf32, #tpu.memory_space<vmem>>, vector<8x128xf32>
    tpu.vector_store %arg18[%c0_211, %c0_212], %502 {strides = array<i32>} : memref<16x128xf32, #tpu.memory_space<vmem>>, vector<8x128xf32>,
    %504 = vector.extract_strided_slice %481 {offsets = [8, 0], sizes = [8, 32], strides = [1, 1]} : vector<16x32xf32> to vector<8x32xf32>
    %cst_213 = arith.constant dense<0.000000e+00> : vector<8x8xf32>
    %505 = tpu.matmul %504, %21, %cst_213 {dimension_numbers = #tpu.dot_dimension_numbers<[1], [1], [0], [0], [0, 0, 1, 0], [], []>} : vector<8x32xf32>, vector<8x32xf32>, vector<8x8xf32> -> vector<8x8xf32>
    %506 = vector.broadcast %25 : vector<1x8xf32> to vector<8x8xf32>
    %507 = arith.addf %505, %506 : vector<8x8xf32>
    %cst_214 = arith.constant dense<0xFF800000> : vector<8xf32>
    %508 = vector.multi_reduction <maximumf>, %507, %cst_214 [1] : vector<8x8xf32> to vector<8xf32>
    %509 = vector.shape_cast %508 : vector<8xf32> to vector<8x1xf32>
    %510 = vector.broadcast %509 : vector<8x1xf32> to vector<8x8xf32>
    %511 = arith.subf %507, %510 : vector<8x8xf32>
    %512 = math.exp %511 : vector<8x8xf32>
    %cst_215 = arith.constant dense<0.000000e+00> : vector<8xf32>
    %513 = vector.multi_reduction <add>, %512, %cst_215 [1] : vector<8x8xf32> to vector<8xf32>
    %514 = vector.shape_cast %513 : vector<8xf32> to vector<8x1xf32>
    %515 = tpu.reciprocal %514 {approx = true} : vector<8x1xf32> -> vector<8x1xf32>
    %516 = arith.mulf %514, %515 : vector<8x1xf32>
    %cst_216 = arith.constant 2.000000e+00 : f32
    %517 = vector.broadcast %cst_216 : f32 to vector<8x1xf32>
    %518 = arith.subf %517, %516 : vector<8x1xf32>
    %519 = arith.mulf %515, %518 : vector<8x1xf32>
    %520 = vector.broadcast %519 : vector<8x1xf32> to vector<8x8xf32>
    %521 = arith.mulf %512, %520 : vector<8x8xf32>
    %cst_217 = arith.constant dense<0.000000e+00> : vector<8x32xf32>
    %522 = tpu.matmul %521, %21, %cst_217 {dimension_numbers = #tpu.dot_dimension_numbers<[1], [0], [0], [1], [0, 0, 1, 1], [], []>} : vector<8x8xf32>, vector<8x32xf32>, vector<8x32xf32> -> vector<8x32xf32>
    %c8_218 = arith.constant 8 : index
    %c0_219 = arith.constant 0 : index
    %523 = vector.load %arg17[%c8_218, %c0_219] : memref<16x32xf32, #tpu.memory_space<vmem>>, vector<8x32xf32>
    tpu.vector_store %arg17[%c8_218, %c0_219], %522 {strides = array<i32>} : memref<16x32xf32, #tpu.memory_space<vmem>>, vector<8x32xf32>,
    %cst_220 = arith.constant dense<0.000000e+00> : vector<8x128xf32>
    %524 = tpu.matmul %521, %17, %cst_220 {dimension_numbers = #tpu.dot_dimension_numbers<[1], [0], [0], [1], [0, 0, 1, 1], [], []>} : vector<8x8xf32>, vector<8x128xf32>, vector<8x128xf32> -> vector<8x128xf32>
    %c8_221 = arith.constant 8 : index
    %c0_222 = arith.constant 0 : index
    %525 = vector.load %arg18[%c8_221, %c0_222] : memref<16x128xf32, #tpu.memory_space<vmem>>, vector<8x128xf32>
    tpu.vector_store %arg18[%c8_221, %c0_222], %524 {strides = array<i32>} : memref<16x128xf32, #tpu.memory_space<vmem>>, vector<8x128xf32>,
    %c0_223 = arith.constant 0 : index
    %c0_224 = arith.constant 0 : index
    %526 = vector.load %arg17[%c0_223, %c0_224] : memref<16x32xf32, #tpu.memory_space<vmem>>, vector<16x32xf32>
    %c0_225 = arith.constant 0 : index
    %c0_226 = arith.constant 0 : index
    %527 = vector.load %arg18[%c0_225, %c0_226] : memref<16x128xf32, #tpu.memory_space<vmem>>, vector<16x128xf32>
    %cst_227 = arith.constant dense<0.000000e+00> : vector<16x128xf32>
    %528 = tpu.matmul %481, %0, %cst_227 {dimension_numbers = #tpu.dot_dimension_numbers<[1], [1], [0], [0], [0, 0, 1, 0], [], []>} : vector<16x32xf32>, vector<128x32xf32>, vector<16x128xf32> -> vector<16x128xf32>
    %c64_i32_228 = arith.constant 64 : i32
    %529 = vector.broadcast %c64_i32_228 : i32 to vector<16x128xi32>
    %530 = arith.cmpi slt, %26, %529 : vector<16x128xi32>
    %cst_229 = arith.constant -1.000000e+09 : f32
    %531 = vector.broadcast %cst_229 : f32 to vector<16x128xf32>
    %532 = arith.select %530, %528, %531 : vector<16x128xi1>, vector<16x128xf32>
    %cst_230 = arith.constant dense<0xFF800000> : vector<16xf32>
    %533 = vector.multi_reduction <maximumf>, %532, %cst_230 [1] : vector<16x128xf32> to vector<16xf32>
    %534 = vector.shape_cast %533 : vector<16xf32> to vector<16x1xf32>
    %535 = vector.broadcast %534 : vector<16x1xf32> to vector<16x128xf32>
    %536 = arith.subf %532, %535 : vector<16x128xf32>
    %537 = math.exp %536 : vector<16x128xf32>
    %cst_231 = arith.constant dense<0.000000e+00> : vector<16xf32>
    %538 = vector.multi_reduction <add>, %537, %cst_231 [1] : vector<16x128xf32> to vector<16xf32>
    %539 = vector.shape_cast %538 : vector<16xf32> to vector<16x1xf32>
    %540 = tpu.reciprocal %539 {approx = true} : vector<16x1xf32> -> vector<16x1xf32>
    %541 = arith.mulf %539, %540 : vector<16x1xf32>
    %cst_232 = arith.constant 2.000000e+00 : f32
    %542 = vector.broadcast %cst_232 : f32 to vector<16x1xf32>
    %543 = arith.subf %542, %541 : vector<16x1xf32>
    %544 = arith.mulf %540, %543 : vector<16x1xf32>
    %545 = vector.broadcast %544 : vector<16x1xf32> to vector<16x128xf32>
    %546 = arith.mulf %537, %545 : vector<16x128xf32>
    %547 = tpu.concatenate %449, %481, %526 in 1 : vector<16x32xf32>, vector<16x32xf32>, vector<16x32xf32> -> vector<16x96xf32>
    %c0_233 = arith.constant 0 : index
    %c0_234 = arith.constant 0 : index
    %548 = vector.load %arg11[%c0_233, %c0_234] : memref<96x1xf32, #tpu.memory_space<vmem>>, vector<96x1xf32>
    %cst_235 = arith.constant dense<0.000000e+00> : vector<16x1xf32>
    %549 = tpu.matmul %547, %548, %cst_235 {dimension_numbers = #tpu.dot_dimension_numbers<[1], [0], [0], [1], [0, 0, 1, 1], [], []>} : vector<16x96xf32>, vector<96x1xf32>, vector<16x1xf32> -> vector<16x1xf32>
    %c0_236 = arith.constant 0 : index
    %c0_237 = arith.constant 0 : index
    %550 = vector.load %arg12[%c0_236, %c0_237] : memref<1x1xf32, #tpu.memory_space<vmem>>, vector<1x1xf32>
    %551 = vector.broadcast %550 : vector<1x1xf32> to vector<16x1xf32>
    %552 = arith.addf %549, %551 : vector<16x1xf32>
    %553 = arith.negf %552 : vector<16x1xf32>
    %554 = math.exp %553 : vector<16x1xf32>
    %cst_238 = arith.constant 1.000000e+00 : f32
    %555 = vector.broadcast %cst_238 : f32 to vector<16x1xf32>
    %556 = arith.addf %555, %554 : vector<16x1xf32>
    %557 = arith.divf %555, %556 : vector<16x1xf32>
    %558 = vector.broadcast %557 : vector<16x1xf32> to vector<16x128xf32>
    %559 = arith.mulf %558, %546 : vector<16x128xf32>
    %cst_239 = arith.constant 1.000000e+00 : f32
    %560 = vector.broadcast %cst_239 : f32 to vector<16x1xf32>
    %561 = arith.subf %560, %557 : vector<16x1xf32>
    %562 = vector.broadcast %561 : vector<16x1xf32> to vector<16x128xf32>
    %563 = arith.mulf %562, %527 : vector<16x128xf32>
    %564 = arith.addf %559, %563 : vector<16x128xf32>
    %565 = vector.extract_strided_slice %564 {offsets = [0, 0], sizes = [3, 128], strides = [1, 1]} : vector<16x128xf32> to vector<3x128xf32>
    %c0_240 = arith.constant 0 : index
    %c0_241 = arith.constant 0 : index
    %c3 = arith.constant 3 : index
    %c0_242 = arith.constant 0 : index
    %566 = vector.load %arg15[%c0_240, %c0_241, %c3, %c0_242] : memref<2x3x4x128xf32, #tpu.memory_space<vmem>>, vector<1x3x1x128xf32>
    %567 = vector.shape_cast %566 : vector<1x3x1x128xf32> to vector<3x128xf32>
    %568 = vector.shape_cast %565 : vector<3x128xf32> to vector<1x3x1x128xf32>
    tpu.vector_store %arg15[%c0_240, %c0_241, %c3, %c0_242], %568 {strides = array<i32>} : memref<2x3x4x128xf32, #tpu.memory_space<vmem>>, vector<1x3x1x128xf32>,
    %569 = vector.extract_strided_slice %564 {offsets = [8, 0], sizes = [3, 128], strides = [1, 1]} : vector<16x128xf32> to vector<3x128xf32>
    %c1_243 = arith.constant 1 : index
    %c0_244 = arith.constant 0 : index
    %c3_245 = arith.constant 3 : index
    %c0_246 = arith.constant 0 : index
    %570 = vector.load %arg15[%c1_243, %c0_244, %c3_245, %c0_246] : memref<2x3x4x128xf32, #tpu.memory_space<vmem>>, vector<1x3x1x128xf32>
    %571 = vector.shape_cast %570 : vector<1x3x1x128xf32> to vector<3x128xf32>
    %572 = vector.shape_cast %569 : vector<3x128xf32> to vector<1x3x1x128xf32>
    tpu.vector_store %arg15[%c1_243, %c0_244, %c3_245, %c0_246], %572 {strides = array<i32>} : memref<2x3x4x128xf32, #tpu.memory_space<vmem>>, vector<1x3x1x128xf32>,
    return
  }
  func.func @transform_0(%arg0: i32) -> (i32, i32) {
    %c0_i32 = arith.constant 0 : i32
    %c0_i32_0 = arith.constant 0 : i32
    %c0_i32_1 = arith.constant 0 : i32
    return %c0_i32, %c0_i32_0 : i32, i32
  }
  func.func @transform_1(%arg0: i32) -> (i32, i32) {
    %c0_i32 = arith.constant 0 : i32
    %c0_i32_0 = arith.constant 0 : i32
    return %arg0, %c0_i32 : i32, i32
  }
  func.func @transform_2(%arg0: i32) -> (i32, i32, i32) {
    %c0_i32 = arith.constant 0 : i32
    %c0_i32_0 = arith.constant 0 : i32
    %c0_i32_1 = arith.constant 0 : i32
    return %arg0, %c0_i32, %c0_i32_0 : i32, i32, i32
  }
  func.func @transform_3(%arg0: i32) -> (i32, i32, i32) {
    %c0_i32 = arith.constant 0 : i32
    %c0_i32_0 = arith.constant 0 : i32
    %c0_i32_1 = arith.constant 0 : i32
    return %arg0, %c0_i32, %c0_i32_0 : i32, i32, i32
  }
  func.func @transform_4(%arg0: i32) -> (i32, i32, i32) {
    %c0_i32 = arith.constant 0 : i32
    %c0_i32_0 = arith.constant 0 : i32
    %c0_i32_1 = arith.constant 0 : i32
    return %arg0, %c0_i32, %c0_i32_0 : i32, i32, i32
  }
  func.func @transform_5(%arg0: i32) -> (i32, i32) {
    %c0_i32 = arith.constant 0 : i32
    %c0_i32_0 = arith.constant 0 : i32
    %c0_i32_1 = arith.constant 0 : i32
    return %c0_i32, %c0_i32_0 : i32, i32
  }
  func.func @transform_6(%arg0: i32) -> (i32, i32) {
    %c0_i32 = arith.constant 0 : i32
    %c0_i32_0 = arith.constant 0 : i32
    %c0_i32_1 = arith.constant 0 : i32
    return %c0_i32, %c0_i32_0 : i32, i32
  }
  func.func @transform_7(%arg0: i32) -> (i32, i32) {
    %c0_i32 = arith.constant 0 : i32
    %c0_i32_0 = arith.constant 0 : i32
    %c0_i32_1 = arith.constant 0 : i32
    return %c0_i32, %c0_i32_0 : i32, i32
  }
  func.func @transform_8(%arg0: i32) -> (i32, i32) {
    %c0_i32 = arith.constant 0 : i32
    %c0_i32_0 = arith.constant 0 : i32
    %c0_i32_1 = arith.constant 0 : i32
    return %c0_i32, %c0_i32_0 : i32, i32
  }
  func.func @transform_9(%arg0: i32) -> (i32, i32) {
    %c0_i32 = arith.constant 0 : i32
    %c0_i32_0 = arith.constant 0 : i32
    %c0_i32_1 = arith.constant 0 : i32
    return %c0_i32, %c0_i32_0 : i32, i32
  }
  func.func @transform_10(%arg0: i32) -> (i32, i32) {
    %c0_i32 = arith.constant 0 : i32
    %c0_i32_0 = arith.constant 0 : i32
    %c0_i32_1 = arith.constant 0 : i32
    return %c0_i32, %c0_i32_0 : i32, i32
  }
  func.func @transform_11(%arg0: i32) -> (i32, i32) {
    %c0_i32 = arith.constant 0 : i32
    %c0_i32_0 = arith.constant 0 : i32
    %c0_i32_1 = arith.constant 0 : i32
    return %c0_i32, %c0_i32_0 : i32, i32
  }
  func.func @transform_12(%arg0: i32) -> (i32, i32) {
    %c0_i32 = arith.constant 0 : i32
    %c0_i32_0 = arith.constant 0 : i32
    %c0_i32_1 = arith.constant 0 : i32
    return %c0_i32, %c0_i32_0 : i32, i32
  }
  func.func @transform_13(%arg0: i32) -> (i32, i32) {
    %c0_i32 = arith.constant 0 : i32
    %c0_i32_0 = arith.constant 0 : i32
    %c0_i32_1 = arith.constant 0 : i32
    return %c0_i32, %c0_i32_0 : i32, i32
  }
  func.func @transform_14(%arg0: i32) -> (i32, i32, i32, i32) {
    %c0_i32 = arith.constant 0 : i32
    %c0_i32_0 = arith.constant 0 : i32
    %c0_i32_1 = arith.constant 0 : i32
    %c0_i32_2 = arith.constant 0 : i32
    return %arg0, %c0_i32, %c0_i32_0, %c0_i32_1 : i32, i32, i32, i32
  }
  func.func @transform_15(%arg0: i32) -> (i32, i32, i32) {
    %c0_i32 = arith.constant 0 : i32
    %c0_i32_0 = arith.constant 0 : i32
    %c0_i32_1 = arith.constant 0 : i32
    return %arg0, %c0_i32, %c0_i32_0 : i32, i32, i32
  }
}

</mosaic_0001>

<llo_original>
// kernel: tpu_custom_call.1
$region0: #{tpu_custom_call.1}
  #allocation0 [shape = 'u32[]', space=smem, size = 0x4, offset = 0x4, fixed_abs, tag = 'smem constant byte address 0x4 - core index']
  #allocation1 [shape = 'u32[72,128]{1,0:T(1,128)}', space=vmem, size = 0x9000, scoped, tag = 'internal scratch']
  #allocation2 [shape = 'f32[16,32]{1,0:T(8,128)}', space=vmem, size = 0x2000, scoped, tag = 'scratch operand']
  #allocation3 [shape = 'f32[16,128]{1,0:T(8,128)}', space=vmem, size = 0x2000, scoped, tag = 'scratch operand']
  #allocation4 [shape = 'f32[1,1]{1,0:T(1,128)S(1)}', space=vmem, size = 0x200, scoped, tag = 'scoped memory for tpu_custom_call.1']
  %s0 = inlined_call_operand.vmem [shape: f32[16,32], index: 0, kind: input, shape index: {}]
  %s1 = inlined_call_operand.hbm [shape: f32[16,32], index: 1, kind: input, shape index: {}]
  %s2 = inlined_call_operand.hbm [shape: f32[2,8,32], index: 2, kind: input, shape index: {}]
  %s3 = inlined_call_operand.hbm [shape: f32[2,1,8], index: 3, kind: input, shape index: {}]
  %s4 = inlined_call_operand.vmem [shape: s32[2,8,1], index: 4, kind: input, shape index: {}]
  %s5 = inlined_call_operand.vmem [shape: f32[128,32], index: 5, kind: input, shape index: {}]
  %s6 = inlined_call_operand.vmem [shape: f32[32,384], index: 6, kind: input, shape index: {}]
  %s7 = inlined_call_operand.vmem [shape: f32[32,384], index: 7, kind: input, shape index: {}]
  %s8 = inlined_call_operand.vmem [shape: f32[1,384], index: 8, kind: input, shape index: {}]
  %s9 = inlined_call_operand.vmem [shape: f32[1,384], index: 9, kind: input, shape index: {}]
  %s10 = inlined_call_operand.vmem [shape: f32[96,1], index: 10, kind: input, shape index: {}]
  %s11 = inlined_call_operand.<no memory space> [shape: f32[1,1], index: 11, kind: input, shape index: {}]
  %s12 = inlined_call_operand.vmem [shape: f32[32,128], index: 12, kind: input, shape index: {}]
  %s13 = inlined_call_operand.vmem [shape: f32[1,128], index: 13, kind: input, shape index: {}]
  %s14 = inlined_call_operand.hbm [shape: f32[2,3,4,128], index: 14, kind: output, shape index: {0}]
  %s15 = inlined_call_operand.vmem [shape: f32[2,3,128], index: 15, kind: output, shape index: {1}]
  %16 = xla_tuple %s14, %s15
  %s17 = sld [smem:[#allocation0]]
  $region86: #{tpu_custom_call.1} parent=0
    _
  %s19 = ssub.s32 1, %s17
  %s20 = scalar_select 0, %s19, %s17
  %v21 = vstv %s11
  %22 = vst [vmem:[#allocation4] sm:$0x1] %v21
  $region1: #{tpu_custom_call.1} parent=0
    #allocation5 [shape = 'u8[8192]{0}', space=vmem, size = 0x2000, scoped, tag = 'input window, operand 1, single buffered']
    #allocation6 [shape = 's32[1]{0}', space=sflag, size = 0x4, scoped, tag = 'scoped memory for tpu_custom_call.1']
    #allocation7 [shape = 's32[1]{0}', space=sflag, size = 0x4, scoped, tag = 'scoped memory for tpu_custom_call.1']
    #allocation8 [shape = 'u8[8192]{0}', space=vmem, size = 0x2000, scoped, tag = 'input window, operand 2, single buffered']
    #allocation9 [shape = 's32[1]{0}', space=sflag, size = 0x4, scoped, tag = 'scoped memory for tpu_custom_call.1']
    #allocation10 [shape = 'u8[1024]{0}', space=vmem, size = 0x400, scoped, tag = 'input window, operand 3, single buffered']
    #allocation11 [shape = 'u8[12288]{0}', space=vmem, size = 0x3000, scoped, tag = 'output window, operand 0, single buffered']
    %23 = vsyncpa [#allocation6], 0
    %24 = vsyncpa [#allocation9], 0
    %25 = vsyncpa [#allocation7], 0
    // Predicated region
    $region2: #{tpu_custom_call.1} parent=1 // pred_check
      _
    $region3: #{tpu_custom_call.1} parent=1 // pred_check_branch
      %27 = sbr.rel (0) target = $region5
    $region4: #{tpu_custom_call.1} parent=1 // pred_region
      _
    $region5: #{tpu_custom_call.1} parent=1 // pred_fallthru
      _
    // Predicated region
    $region6: #{tpu_custom_call.1} parent=1 // pred_check
      _
    $region7: #{tpu_custom_call.1} parent=1 // pred_check_branch
      %29 = sbr.rel (0) target = $region9
    $region8: #{tpu_custom_call.1} parent=1 // pred_region
      %31 = vsyncadd [#allocation6], 0
      %s32 = sshll.u32 %s1, 4
      %s33 = int_to_ptr.hbm [resolvable:$true] %s32
      %s34 = sshll.u32 [#allocation5], 4
      %s35 = int_to_ptr.vmem [resolvable:$true] %s34
      %40 = dma.hbm_to_vmem [thread:$0]  %s33, 256, %s35, [#allocation6], 128, 128, 8
    $region9: #{tpu_custom_call.1} parent=1 // pred_fallthru
      _
    // Predicated region
    $region10: #{tpu_custom_call.1} parent=1 // pred_check
      _
    $region11: #{tpu_custom_call.1} parent=1 // pred_check_branch
      %42 = sbr.rel (0) target = $region13
    $region12: #{tpu_custom_call.1} parent=1 // pred_region
      %44 = vsyncadd [#allocation9], 0
      %s45 = sshll.u32 %s2, 4
      %s46 = int_to_ptr.hbm [resolvable:$true] %s45
      %s47 = sshll.u32 [#allocation8], 4
      %s48 = int_to_ptr.vmem [resolvable:$true] %s47
      %53 = dma.hbm_to_vmem [thread:$0]  %s46, 256, %s48, [#allocation9], 128, 128, 8
    $region13: #{tpu_custom_call.1} parent=1 // pred_fallthru
      _
    // Predicated region
    $region14: #{tpu_custom_call.1} parent=1 // pred_check
      _
    $region15: #{tpu_custom_call.1} parent=1 // pred_check_branch
      %55 = sbr.rel (0) target = $region17
    $region16: #{tpu_custom_call.1} parent=1 // pred_region
      %57 = vsyncadd [#allocation9], 0
      %s58 = sshll.u32 %s3, 4
      %s59 = int_to_ptr.hbm [resolvable:$true] %s58
      %s60 = sshll.u32 [#allocation10], 4
      %s61 = int_to_ptr.vmem [resolvable:$true] %s60
      %66 = dma.hbm_to_vmem [thread:$0]  %s59, 32, %s61, [#allocation9], 16, 16, 1
    $region17: #{tpu_custom_call.1} parent=1 // pred_fallthru
      _
    // Predicated region
    $region18: #{tpu_custom_call.1} parent=1 // pred_check
      _
    $region19: #{tpu_custom_call.1} parent=1 // pred_check_branch
      %68 = sbr.rel (0) target = $region21
    $region20: #{tpu_custom_call.1} parent=1 // pred_region
      _
    $region21: #{tpu_custom_call.1} parent=1 // pred_fallthru
      _
    // Predicated region
    $region22: #{tpu_custom_call.1} parent=1 // pred_check
      _
    $region23: #{tpu_custom_call.1} parent=1 // pred_check_branch
      %70 = sbr.rel (0) target = $region25
    $region24: #{tpu_custom_call.1} parent=1 // pred_region
      _
    $region25: #{tpu_custom_call.1} parent=1 // pred_fallthru
      _
    // Predicated region
    $region26: #{tpu_custom_call.1} parent=1 // pred_check
      _
    $region27: #{tpu_custom_call.1} parent=1 // pred_check_branch
      %72 = sbr.rel (0) target = $region29
    $region28: #{tpu_custom_call.1} parent=1 // pred_region
      _
    $region29: #{tpu_custom_call.1} parent=1 // pred_fallthru
      _
    // Predicated region
    $region30: #{tpu_custom_call.1} parent=1 // pred_check
      _
    $region31: #{tpu_custom_call.1} parent=1 // pred_check_branch
      %74 = sbr.rel (0) target = $region33
    $region32: #{tpu_custom_call.1} parent=1 // pred_region
      _
    $region33: #{tpu_custom_call.1} parent=1 // pred_fallthru
      _
    // Predicated region
    $region34: #{tpu_custom_call.1} parent=1 // pred_check
      _
    $region35: #{tpu_custom_call.1} parent=1 // pred_check_branch
      %76 = sbr.rel (0) target = $region37
    $region36: #{tpu_custom_call.1} parent=1 // pred_region
      _
    $region37: #{tpu_custom_call.1} parent=1 // pred_fallthru
      _
    // Predicated region
    $region38: #{tpu_custom_call.1} parent=1 // pred_check
      _
    $region39: #{tpu_custom_call.1} parent=1 // pred_check_branch
      %78 = sbr.rel (0) target = $region41
    $region40: #{tpu_custom_call.1} parent=1 // pred_region
      _
    $region41: #{tpu_custom_call.1} parent=1 // pred_fallthru
      _
    // Predicated region
    $region42: #{tpu_custom_call.1} parent=1 // pred_check
      _
    $region43: #{tpu_custom_call.1} parent=1 // pred_check_branch
      %80 = sbr.rel (0) target = $region45
    $region44: #{tpu_custom_call.1} parent=1 // pred_region
      _
    $region45: #{tpu_custom_call.1} parent=1 // pred_fallthru
      _
    // Predicated region
    $region46: #{tpu_custom_call.1} parent=1 // pred_check
      _
    $region47: #{tpu_custom_call.1} parent=1 // pred_check_branch
      %82 = sbr.rel (0) target = $region49
    $region48: #{tpu_custom_call.1} parent=1 // pred_region
      _
    $region49: #{tpu_custom_call.1} parent=1 // pred_fallthru
      _
    // Predicated region
    $region50: #{tpu_custom_call.1} parent=1 // pred_check
      _
    $region51: #{tpu_custom_call.1} parent=1 // pred_check_branch
      %84 = sbr.rel (0) target = $region53
    $region52: #{tpu_custom_call.1} parent=1 // pred_region
      _
    $region53: #{tpu_custom_call.1} parent=1 // pred_fallthru
      _
    // Predicated region
    $region54: #{tpu_custom_call.1} parent=1 // pred_check
      _
    $region55: #{tpu_custom_call.1} parent=1 // pred_check_branch
      %86 = sbr.rel (0) target = $region57
    $region56: #{tpu_custom_call.1} parent=1 // pred_region
      _
    $region57: #{tpu_custom_call.1} parent=1 // pred_fallthru
      _
    // Predicated region
    $region58: #{tpu_custom_call.1} parent=1 // pred_check
      _
    $region59: #{tpu_custom_call.1} parent=1 // pred_check_branch
      %88 = sbr.rel (0) target = $region61
    $region60: #{tpu_custom_call.1} parent=1 // pred_region
      %90 = dma.done [#allocation6], 256
    $region61: #{tpu_custom_call.1} parent=1 // pred_fallthru
      _
    // Predicated region
    $region62: #{tpu_custom_call.1} parent=1 // pred_check
      _
    $region63: #{tpu_custom_call.1} parent=1 // pred_check_branch
      %92 = sbr.rel (0) target = $region65
    $region64: #{tpu_custom_call.1} parent=1 // pred_region
      %94 = dma.done [#allocation9], 256
    $region65: #{tpu_custom_call.1} parent=1 // pred_fallthru
      _
    // Predicated region
    $region66: #{tpu_custom_call.1} parent=1 // pred_check
      _
    $region67: #{tpu_custom_call.1} parent=1 // pred_check_branch
      %96 = sbr.rel (0) target = $region69
    $region68: #{tpu_custom_call.1} parent=1 // pred_region
      %98 = dma.done [#allocation9], 32
    $region69: #{tpu_custom_call.1} parent=1 // pred_fallthru
      _
    %v99 = vld [vmem:[%s5] sm:$0xff]
    %v100 = vld [vmem:[%s5 + $0x8] sm:$0xff]
    %v101 = vld [vmem:[%s5 + $0x10] sm:$0xff]
    %v102 = vld [vmem:[%s5 + $0x18] sm:$0xff]
    %v103 = vld [vmem:[%s5 + $0x20] sm:$0xff]
    %v104 = vld [vmem:[%s5 + $0x28] sm:$0xff]
    %v105 = vld [vmem:[%s5 + $0x30] sm:$0xff]
    %v106 = vld [vmem:[%s5 + $0x38] sm:$0xff]
    %v107 = vld [vmem:[%s5 + $0x40] sm:$0xff]
    %v108 = vld [vmem:[%s5 + $0x48] sm:$0xff]
    %v109 = vld [vmem:[%s5 + $0x50] sm:$0xff]
    %v110 = vld [vmem:[%s5 + $0x58] sm:$0xff]
    %v111 = vld [vmem:[%s5 + $0x60] sm:$0xff]
    %v112 = vld [vmem:[%s5 + $0x68] sm:$0xff]
    %v113 = vld [vmem:[%s5 + $0x70] sm:$0xff]
    %v114 = vld [vmem:[%s5 + $0x78] sm:$0xff]
    %v115 = vld [vmem:[%s6] sm:$0xff]
    %v116 = vld [vmem:[%s6 + $0x8] sm:$0xff]
    %v117 = vld [vmem:[%s6 + $0x10] sm:$0xff]
    %v118 = vld [vmem:[%s6 + $0x18] sm:$0xff]
    %v119 = vld [vmem:[%s6 + $0x20] sm:$0xff]
    %v120 = vld [vmem:[%s6 + $0x28] sm:$0xff]
    %v121 = vld [vmem:[%s6 + $0x30] sm:$0xff]
    %v122 = vld [vmem:[%s6 + $0x38] sm:$0xff]
    %v123 = vld [vmem:[%s6 + $0x40] sm:$0xff]
    %v124 = vld [vmem:[%s6 + $0x48] sm:$0xff]
    %v125 = vld [vmem:[%s6 + $0x50] sm:$0xff]
    %v126 = vld [vmem:[%s6 + $0x58] sm:$0xff]
    %v127 = vld [vmem:[%s7] sm:$0xff]
    %v128 = vld [vmem:[%s7 + $0x8] sm:$0xff]
    %v129 = vld [vmem:[%s7 + $0x10] sm:$0xff]
    %v130 = vld [vmem:[%s7 + $0x18] sm:$0xff]
    %v131 = vld [vmem:[%s7 + $0x20] sm:$0xff]
    %v132 = vld [vmem:[%s7 + $0x28] sm:$0xff]
    %v133 = vld [vmem:[%s7 + $0x30] sm:$0xff]
    %v134 = vld [vmem:[%s7 + $0x38] sm:$0xff]
    %v135 = vld [vmem:[%s7 + $0x40] sm:$0xff]
    %v136 = vld [vmem:[%s7 + $0x48] sm:$0xff]
    %v137 = vld [vmem:[%s7 + $0x50] sm:$0xff]
    %v138 = vld [vmem:[%s7 + $0x58] sm:$0xff]
    %v139 = vld [vmem:[%s8] sm:$0x7]
    %v140 = vld [vmem:[%s9] sm:$0x7]
    %v141 = vlaneseq
    %v142 = vand.u32 %v141, 127
    %v143 = vld [vmem:[%s4] sm:$0xff]
    %144 = vset.pattern.permute.xlu0 0
    %145 = vperm.xlu0 %144, %v143
    %v146 = vpop.permute.xlu0 %145
    %vm147 = vcmp.eq.s32.totalorder %v146, %v142
    %v148 = vsel %vm147, 1, 0
    %v149 = vcvt.s32.f32 %v148
    %s150 = scalar_lea.vmem %s4, 8
    %v151 = vld [vmem:[%s150] sm:$0xff]
    %152 = vset.pattern.permute.xlu0 0
    %153 = vperm.xlu0 %152, %v151
    %v154 = vpop.permute.xlu0 %153
    %vm155 = vcmp.eq.s32.totalorder %v154, %v142
    %v156 = vsel %vm155, 1, 0
    %v157 = vcvt.s32.f32 %v156
    %v158 = vld [vmem:[#allocation8] sm:$0xff]
    %s159 = scalar_lea.vmem [#allocation8], 8
    %v160 = vld [vmem:[%s159] sm:$0xff]
    %v161 = vld [vmem:[#allocation10] sm:$0x1]
    %s162 = scalar_lea.vmem [#allocation10], 1
    %v163 = vld [vmem:[%s162] sm:$0x1]
    %v164 = vld [vmem:[%s0] sm:$0xff]
    %v165 = vld [vmem:[%s0 + $0x8] sm:$0xff]
    %v166 = vld [vmem:[#allocation5] sm:$0xff]
    %v167 = vld [vmem:[#allocation5 + $0x8] sm:$0xff]
    %v169 = vperm.slane %v139, 0
    %v170 = vperm.slane %v139, 1
    %v171 = vperm.slane %v139, 2
    %vm175 = vcmask 261120
    %v177 = vsel %vm175, %v164, 0
    %v180 = vsel %vm175, %v165, 0
    %182 = vmatpush.msra.mxu0 0.0
    %183 = vmatpush.msra.mxu0 0.0
    %184 = vmatpush.msra.mxu0 0.0
    %185 = vmatpush.msra.mxu0 0.0
    %186 = vmatpush.msra.mxu0 0.0
    %187 = vmatpush.msra.mxu0 0.0
    %188 = vmatpush.msra.mxu0 0.0
    %189 = vmatpush.msra.mxu0 0.0
    %190 = vmatpush.msra.mxu0 0.0
    %191 = vmatpush.msra.mxu0 0.0
    %192 = vmatpush.msra.mxu0 0.0
    %193 = vmatpush.msra.mxu0 0.0
    %194 = vmatpush.msra.mxu0 %v124
    %195 = vmatpush.msra.mxu0 %v121
    %196 = vmatpush.msra.mxu0 %v118
    %197 = vmatpush.msra.mxu0 %v115
    %198 = vmatmul.f32.gmra.mxu0 %v177
    %v199 = vpop.f32.mrf.mxu0
    %v200 = vadd.f32 %v169, %v199
    %201 = vmatmul.f32.gmra.mxu0 %v180
    %v202 = vpop.f32.mrf.mxu0
    %v203 = vadd.f32 %v169, %v202
    %204 = vdwg.mxu0
    %205 = vmatpush.msra.mxu0 0.0
    %206 = vmatpush.msra.mxu0 0.0
    %207 = vmatpush.msra.mxu0 0.0
    %208 = vmatpush.msra.mxu0 0.0
    %209 = vmatpush.msra.mxu0 0.0
    %210 = vmatpush.msra.mxu0 0.0
    %211 = vmatpush.msra.mxu0 0.0
    %212 = vmatpush.msra.mxu0 0.0
    %213 = vmatpush.msra.mxu0 0.0
    %214 = vmatpush.msra.mxu0 0.0
    %215 = vmatpush.msra.mxu0 0.0
    %216 = vmatpush.msra.mxu0 0.0
    %217 = vmatpush.msra.mxu0 %v125
    %218 = vmatpush.msra.mxu0 %v122
    %219 = vmatpush.msra.mxu0 %v119
    %220 = vmatpush.msra.mxu0 %v116
    %221 = vmatmul.f32.gmra.mxu0 %v177
    %v222 = vpop.f32.mrf.mxu0
    %v223 = vadd.f32 %v170, %v222
    %224 = vmatmul.f32.gmra.mxu0 %v180
    %v225 = vpop.f32.mrf.mxu0
    %v226 = vadd.f32 %v170, %v225
    %227 = vdwg.mxu0
    %228 = vmatpush.msra.mxu0 0.0
    %229 = vmatpush.msra.mxu0 0.0
    %230 = vmatpush.msra.mxu0 0.0
    %231 = vmatpush.msra.mxu0 0.0
    %232 = vmatpush.msra.mxu0 0.0
    %233 = vmatpush.msra.mxu0 0.0
    %234 = vmatpush.msra.mxu0 0.0
    %235 = vmatpush.msra.mxu0 0.0
    %236 = vmatpush.msra.mxu0 0.0
    %237 = vmatpush.msra.mxu0 0.0
    %238 = vmatpush.msra.mxu0 0.0
    %239 = vmatpush.msra.mxu0 0.0
    %240 = vmatpush.msra.mxu0 %v126
    %241 = vmatpush.msra.mxu0 %v123
    %242 = vmatpush.msra.mxu0 %v120
    %243 = vmatpush.msra.mxu0 %v117
    %244 = vmatmul.f32.gmra.mxu0 %v177
    %v245 = vpop.f32.mrf.mxu0
    %v246 = vadd.f32 %v171, %v245
    %247 = vmatmul.f32.gmra.mxu0 %v180
    %v248 = vpop.f32.mrf.mxu0
    %v249 = vadd.f32 %v171, %v248
    %250 = vdwg.mxu0
    %v252 = vperm.slane %v140, 0
    %v253 = vperm.slane %v140, 1
    %v254 = vperm.slane %v140, 2
    %v259 = vsel %vm175, %v166, 0
    %v262 = vsel %vm175, %v167, 0
    %264 = vmatpush.msra.mxu0 0.0
    %265 = vmatpush.msra.mxu0 0.0
    %266 = vmatpush.msra.mxu0 0.0
    %267 = vmatpush.msra.mxu0 0.0
    %268 = vmatpush.msra.mxu0 0.0
    %269 = vmatpush.msra.mxu0 0.0
    %270 = vmatpush.msra.mxu0 0.0
    %271 = vmatpush.msra.mxu0 0.0
    %272 = vmatpush.msra.mxu0 0.0
    %273 = vmatpush.msra.mxu0 0.0
    %274 = vmatpush.msra.mxu0 0.0
    %275 = vmatpush.msra.mxu0 0.0
    %276 = vmatpush.msra.mxu0 %v136
    %277 = vmatpush.msra.mxu0 %v133
    %278 = vmatpush.msra.mxu0 %v130
    %279 = vmatpush.msra.mxu0 %v127
    %280 = vmatmul.f32.gmra.mxu0 %v259
    %v281 = vpop.f32.mrf.mxu0
    %v282 = vadd.f32 %v252, %v281
    %283 = vmatmul.f32.gmra.mxu0 %v262
    %v284 = vpop.f32.mrf.mxu0
    %v285 = vadd.f32 %v252, %v284
    %286 = vdwg.mxu0
    %287 = vmatpush.msra.mxu0 0.0
    %288 = vmatpush.msra.mxu0 0.0
    %289 = vmatpush.msra.mxu0 0.0
    %290 = vmatpush.msra.mxu0 0.0
    %291 = vmatpush.msra.mxu0 0.0
    %292 = vmatpush.msra.mxu0 0.0
    %293 = vmatpush.msra.mxu0 0.0
    %294 = vmatpush.msra.mxu0 0.0
    %295 = vmatpush.msra.mxu0 0.0
    %296 = vmatpush.msra.mxu0 0.0
    %297 = vmatpush.msra.mxu0 0.0
    %298 = vmatpush.msra.mxu0 0.0
    %299 = vmatpush.msra.mxu0 %v137
    %300 = vmatpush.msra.mxu0 %v134
    %301 = vmatpush.msra.mxu0 %v131
    %302 = vmatpush.msra.mxu0 %v128
    %303 = vmatmul.f32.gmra.mxu0 %v259
    %v304 = vpop.f32.mrf.mxu0
    %v305 = vadd.f32 %v253, %v304
    %306 = vmatmul.f32.gmra.mxu0 %v262
    %v307 = vpop.f32.mrf.mxu0
    %v308 = vadd.f32 %v253, %v307
    %309 = vdwg.mxu0
    %310 = vmatpush.msra.mxu0 0.0
    %311 = vmatpush.msra.mxu0 0.0
    %312 = vmatpush.msra.mxu0 0.0
    %313 = vmatpush.msra.mxu0 0.0
    %314 = vmatpush.msra.mxu0 0.0
    %315 = vmatpush.msra.mxu0 0.0
    %316 = vmatpush.msra.mxu0 0.0
    %317 = vmatpush.msra.mxu0 0.0
    %318 = vmatpush.msra.mxu0 0.0
    %319 = vmatpush.msra.mxu0 0.0
    %320 = vmatpush.msra.mxu0 0.0
    %321 = vmatpush.msra.mxu0 0.0
    %322 = vmatpush.msra.mxu0 %v138
    %323 = vmatpush.msra.mxu0 %v135
    %324 = vmatpush.msra.mxu0 %v132
    %325 = vmatpush.msra.mxu0 %v129
    %326 = vmatmul.f32.gmra.mxu0 %v259
    %v327 = vpop.f32.mrf.mxu0
    %v328 = vadd.f32 %v254, %v327
    %329 = vmatmul.f32.gmra.mxu0 %v262
    %v330 = vpop.f32.mrf.mxu0
    %v331 = vadd.f32 %v254, %v330
    %332 = vdwg.mxu0
    %v333 = vadd.f32 %v200, %v282
    %v334 = vadd.f32 %v203, %v285
    %v335 = vxor.u32 %v333, 2147483648
    %v336 = vxor.u32 %v334, 2147483648
    %v337 = vmul.f32 %v335, 1.442695
    %v338 = vpow.pop %v337
    %v339 = vmul.f32 %v336, 1.442695
    %v340 = vpow.pop %v339
    %v341 = vadd.f32 %v338, 1.0
    %v342 = vadd.f32 %v340, 1.0
    %v343 = vrcp.pop %v341
    %v344 = vmul.f32 %v341, %v343
    %v345 = vsub.f32 1.0, %v344
    %v346 = vmul.f32 %v343, %v345
    %v347 = vadd.f32 %v343, %v346
    %vm348 = vweird.f32 %v341
    %vm349 = vweird.f32 %v343
    %vm350 = vmor %vm348, %vm349
    %v351 = vsel %vm350, %v343, %v347
    %v352 = vand.u32 2147483647, %v341
    %vm353 = vcmp.eq.f32.partialorder %v352, 8.507059e+37
    %v354 = vand.u32 %v341, 2147483648
    %v355 = vor.u32 1.1754944e-38, %v354
    %v356 = vsel %vm353, %v355, %v351
    %v357 = vmul.f32 1.0, %v356
    %v358 = vrcp.pop %v342
    %v359 = vmul.f32 %v342, %v358
    %v360 = vsub.f32 1.0, %v359
    %v361 = vmul.f32 %v358, %v360
    %v362 = vadd.f32 %v358, %v361
    %vm363 = vweird.f32 %v342
    %vm364 = vweird.f32 %v358
    %vm365 = vmor %vm363, %vm364
    %v366 = vsel %vm365, %v358, %v362
    %v367 = vand.u32 2147483647, %v342
    %vm368 = vcmp.eq.f32.partialorder %v367, 8.507059e+37
    %v369 = vand.u32 %v342, 2147483648
    %v370 = vor.u32 1.1754944e-38, %v369
    %v371 = vsel %vm368, %v370, %v366
    %v372 = vmul.f32 1.0, %v371
    %v373 = vadd.f32 %v223, %v305
    %v374 = vadd.f32 %v226, %v308
    %v375 = vxor.u32 %v373, 2147483648
    %v376 = vxor.u32 %v374, 2147483648
    %v377 = vmul.f32 %v375, 1.442695
    %v378 = vpow.pop %v377
    %v379 = vmul.f32 %v376, 1.442695
    %v380 = vpow.pop %v379
    %v381 = vadd.f32 %v378, 1.0
    %v382 = vadd.f32 %v380, 1.0
    %v383 = vrcp.pop %v381
    %v384 = vmul.f32 %v381, %v383
    %v385 = vsub.f32 1.0, %v384
    %v386 = vmul.f32 %v383, %v385
    %v387 = vadd.f32 %v383, %v386
    %vm388 = vweird.f32 %v381
    %vm389 = vweird.f32 %v383
    %vm390 = vmor %vm388, %vm389
    %v391 = vsel %vm390, %v383, %v387
    %v392 = vand.u32 2147483647, %v381
    %vm393 = vcmp.eq.f32.partialorder %v392, 8.507059e+37
    %v394 = vand.u32 %v381, 2147483648
    %v395 = vor.u32 1.1754944e-38, %v394
    %v396 = vsel %vm393, %v395, %v391
    %v397 = vmul.f32 1.0, %v396
    %v398 = vrcp.pop %v382
    %v399 = vmul.f32 %v382, %v398
    %v400 = vsub.f32 1.0, %v399
    %v401 = vmul.f32 %v398, %v400
    %v402 = vadd.f32 %v398, %v401
    %vm403 = vweird.f32 %v382
    %vm404 = vweird.f32 %v398
    %vm405 = vmor %vm403, %vm404
    %v406 = vsel %vm405, %v398, %v402
    %v407 = vand.u32 2147483647, %v382
    %vm408 = vcmp.eq.f32.partialorder %v407, 8.507059e+37
    %v409 = vand.u32 %v382, 2147483648
    %v410 = vor.u32 1.1754944e-38, %v409
    %v411 = vsel %vm408, %v410, %v406
    %v412 = vmul.f32 1.0, %v411
    %v413 = vmul.f32 %v357, %v328
    %v414 = vmul.f32 %v372, %v331
    %v415 = vadd.f32 %v246, %v413
    %v416 = vadd.f32 %v249, %v414
    %v417 = vtanh.pop %v415
    %v418 = vtanh.pop %v416
    %v419 = vsub.f32 1.0, %v397
    %v420 = vsub.f32 1.0, %v412
    %v421 = vmul.f32 %v419, %v417
    %v422 = vmul.f32 %v420, %v418
    %v423 = vmul.f32 %v397, %v166
    %v424 = vmul.f32 %v412, %v167
    %v425 = vadd.f32 %v421, %v423
    %v426 = vadd.f32 %v422, %v424
    %v428 = vperm.slane %v161, 0
    %v431 = vsel %vm175, %v425, 0
    %v434 = vsel %vm175, %v158, 0
    %436 = vmatpush.xpose.msra.mxu0 0.0
    %437 = vmatpush.xpose.msra.mxu0 0.0
    %438 = vmatpush.xpose.msra.mxu0 0.0
    %439 = vmatpush.xpose.msra.mxu0 0.0
    %440 = vmatpush.xpose.msra.mxu0 0.0
    %441 = vmatpush.xpose.msra.mxu0 0.0
    %442 = vmatpush.xpose.msra.mxu0 0.0
    %443 = vmatpush.xpose.msra.mxu0 0.0
    %444 = vmatpush.xpose.msra.mxu0 0.0
    %445 = vmatpush.xpose.msra.mxu0 0.0
    %446 = vmatpush.xpose.msra.mxu0 0.0
    %447 = vmatpush.xpose.msra.mxu0 0.0
    %448 = vmatpush.xpose.msra.mxu0 0.0
    %449 = vmatpush.xpose.msra.mxu0 0.0
    %450 = vmatpush.xpose.msra.mxu0 0.0
    %451 = vmatpush.xpose.msra.mxu0 %v434
    %452 = vmatmul.f32.gmra.mxu0 %v431
    %v453 = vpop.f32.mrf.mxu0
    %v454 = vadd.f32 %v428, %v453
    %455 = vdwg.mxu0
    %vm456 = vcmask 64512
    %v457 = vsel %vm456, %v454, -inf
    %458 = vmax.xlane.f32.xlu0 %v457
    %v459 = vpop.xlane.xlu0 %458
    %v460 = vsub.f32 %v454, %v459
    %v461 = vmul.f32 %v460, 1.442695
    %v462 = vpow.pop %v461
    %v463 = vsel %vm456, %v462, 0.0
    %464 = vadd.xlane.f32.xlu0 %v463
    %v465 = vpop.xlane.xlu0 %464
    %v466 = vrcp.pop %v465
    %v467 = vmul.f32 %v465, %v466
    %v468 = vsub.f32 2.0, %v467
    %v469 = vmul.f32 %v466, %v468
    %v470 = vmul.f32 %v462, %v469
    %v472 = vsel %vm456, %v470, 0
    %474 = vmatpush.msra.mxu0 0.0
    %475 = vmatpush.msra.mxu0 0.0
    %476 = vmatpush.msra.mxu0 0.0
    %477 = vmatpush.msra.mxu0 0.0
    %478 = vmatpush.msra.mxu0 0.0
    %479 = vmatpush.msra.mxu0 0.0
    %480 = vmatpush.msra.mxu0 0.0
    %481 = vmatpush.msra.mxu0 0.0
    %482 = vmatpush.msra.mxu0 0.0
    %483 = vmatpush.msra.mxu0 0.0
    %484 = vmatpush.msra.mxu0 0.0
    %485 = vmatpush.msra.mxu0 0.0
    %486 = vmatpush.msra.mxu0 0.0
    %487 = vmatpush.msra.mxu0 0.0
    %488 = vmatpush.msra.mxu0 0.0
    %489 = vmatpush.msra.mxu0 %v158
    %490 = vmatmul.f32.gmra.mxu0 %v472
    %v491 = vpop.f32.mrf.mxu0
    %v492 = vadd.f32 0.0, %v491
    %493 = vdwg.mxu0
    %494 = vst.msk [vmem:[#allocation2] sm:$0xff] %vm175, %v492
    %495 = vmatpush.msra.mxu0 0.0
    %496 = vmatpush.msra.mxu0 0.0
    %497 = vmatpush.msra.mxu0 0.0
    %498 = vmatpush.msra.mxu0 0.0
    %499 = vmatpush.msra.mxu0 0.0
    %500 = vmatpush.msra.mxu0 0.0
    %501 = vmatpush.msra.mxu0 0.0
    %502 = vmatpush.msra.mxu0 0.0
    %503 = vmatpush.msra.mxu0 0.0
    %504 = vmatpush.msra.mxu0 0.0
    %505 = vmatpush.msra.mxu0 0.0
    %506 = vmatpush.msra.mxu0 0.0
    %507 = vmatpush.msra.mxu0 0.0
    %508 = vmatpush.msra.mxu0 0.0
    %509 = vmatpush.msra.mxu0 0.0
    %510 = vmatpush.msra.mxu0 %v149
    %511 = vmatmul.f32.gmra.mxu0 %v472
    %v512 = vpop.f32.mrf.mxu0
    %v513 = vadd.f32 0.0, %v512
    %514 = vdwg.mxu0
    %515 = vst [vmem:[#allocation3] sm:$0xff] %v513
    %v517 = vperm.slane %v163, 0
    %v520 = vsel %vm175, %v426, 0
    %v523 = vsel %vm175, %v160, 0
    %525 = vmatpush.xpose.msra.mxu0 0.0
    %526 = vmatpush.xpose.msra.mxu0 0.0
    %527 = vmatpush.xpose.msra.mxu0 0.0
    %528 = vmatpush.xpose.msra.mxu0 0.0
    %529 = vmatpush.xpose.msra.mxu0 0.0
    %530 = vmatpush.xpose.msra.mxu0 0.0
    %531 = vmatpush.xpose.msra.mxu0 0.0
    %532 = vmatpush.xpose.msra.mxu0 0.0
    %533 = vmatpush.xpose.msra.mxu0 0.0
    %534 = vmatpush.xpose.msra.mxu0 0.0
    %535 = vmatpush.xpose.msra.mxu0 0.0
    %536 = vmatpush.xpose.msra.mxu0 0.0
    %537 = vmatpush.xpose.msra.mxu0 0.0
    %538 = vmatpush.xpose.msra.mxu0 0.0
    %539 = vmatpush.xpose.msra.mxu0 0.0
    %540 = vmatpush.xpose.msra.mxu0 %v523
    %541 = vmatmul.f32.gmra.mxu0 %v520
    %v542 = vpop.f32.mrf.mxu0
    %v543 = vadd.f32 %v517, %v542
    %544 = vdwg.mxu0
    %v545 = vsel %vm456, %v543, -inf
    %546 = vmax.xlane.f32.xlu0 %v545
    %v547 = vpop.xlane.xlu0 %546
    %v548 = vsub.f32 %v543, %v547
    %v549 = vmul.f32 %v548, 1.442695
    %v550 = vpow.pop %v549
    %v551 = vsel %vm456, %v550, 0.0
    %552 = vadd.xlane.f32.xlu0 %v551
    %v553 = vpop.xlane.xlu0 %552
    %v554 = vrcp.pop %v553
    %v555 = vmul.f32 %v553, %v554
    %v556 = vsub.f32 2.0, %v555
    %v557 = vmul.f32 %v554, %v556
    %v558 = vmul.f32 %v550, %v557
    %v560 = vsel %vm456, %v558, 0
    %562 = vmatpush.msra.mxu0 0.0
    %563 = vmatpush.msra.mxu0 0.0
    %564 = vmatpush.msra.mxu0 0.0
    %565 = vmatpush.msra.mxu0 0.0
    %566 = vmatpush.msra.mxu0 0.0
    %567 = vmatpush.msra.mxu0 0.0
    %568 = vmatpush.msra.mxu0 0.0
    %569 = vmatpush.msra.mxu0 0.0
    %570 = vmatpush.msra.mxu0 0.0
    %571 = vmatpush.msra.mxu0 0.0
    %572 = vmatpush.msra.mxu0 0.0
    %573 = vmatpush.msra.mxu0 0.0
    %574 = vmatpush.msra.mxu0 0.0
    %575 = vmatpush.msra.mxu0 0.0
    %576 = vmatpush.msra.mxu0 0.0
    %577 = vmatpush.msra.mxu0 %v160
    %578 = vmatmul.f32.gmra.mxu0 %v560
    %v579 = vpop.f32.mrf.mxu0
    %v580 = vadd.f32 0.0, %v579
    %581 = vdwg.mxu0
    %582 = vst.msk [vmem:[#allocation2 + $0x8] sm:$0xff] %vm175, %v580
    %583 = vmatpush.msra.mxu0 0.0
    %584 = vmatpush.msra.mxu0 0.0
    %585 = vmatpush.msra.mxu0 0.0
    %586 = vmatpush.msra.mxu0 0.0
    %587 = vmatpush.msra.mxu0 0.0
    %588 = vmatpush.msra.mxu0 0.0
    %589 = vmatpush.msra.mxu0 0.0
    %590 = vmatpush.msra.mxu0 0.0
    %591 = vmatpush.msra.mxu0 0.0
    %592 = vmatpush.msra.mxu0 0.0
    %593 = vmatpush.msra.mxu0 0.0
    %594 = vmatpush.msra.mxu0 0.0
    %595 = vmatpush.msra.mxu0 0.0
    %596 = vmatpush.msra.mxu0 0.0
    %597 = vmatpush.msra.mxu0 0.0
    %598 = vmatpush.msra.mxu0 %v157
    %599 = vmatmul.f32.gmra.mxu0 %v560
    %v600 = vpop.f32.mrf.mxu0
    %v601 = vadd.f32 0.0, %v600
    %602 = vdwg.mxu0
    %603 = vst [vmem:[#allocation3 + $0x8] sm:$0xff] %v601
    %v604 = vld [vmem:[#allocation2] sm:$0xff]
    %v605 = vld [vmem:[#allocation2 + $0x8] sm:$0xff]
    %v606 = vld [vmem:[#allocation3] sm:$0xff]
    %v607 = vld [vmem:[#allocation3 + $0x8] sm:$0xff]
    %v609 = vsel %vm175, %v99, 0
    %v612 = vsel %vm175, %v100, 0
    %v615 = vsel %vm175, %v101, 0
    %v618 = vsel %vm175, %v102, 0
    %v621 = vsel %vm175, %v103, 0
    %v624 = vsel %vm175, %v104, 0
    %v627 = vsel %vm175, %v105, 0
    %v630 = vsel %vm175, %v106, 0
    %v633 = vsel %vm175, %v107, 0
    %v636 = vsel %vm175, %v108, 0
    %v639 = vsel %vm175, %v109, 0
    %v642 = vsel %vm175, %v110, 0
    %v645 = vsel %vm175, %v111, 0
    %v648 = vsel %vm175, %v112, 0
    %v651 = vsel %vm175, %v113, 0
    %v654 = vsel %vm175, %v114, 0
    %656 = vmatpush.xpose.msra.mxu0 %v654
    %657 = vmatpush.xpose.msra.mxu0 %v651
    %658 = vmatpush.xpose.msra.mxu0 %v648
    %659 = vmatpush.xpose.msra.mxu0 %v645
    %660 = vmatpush.xpose.msra.mxu0 %v642
    %661 = vmatpush.xpose.msra.mxu0 %v639
    %662 = vmatpush.xpose.msra.mxu0 %v636
    %663 = vmatpush.xpose.msra.mxu0 %v633
    %664 = vmatpush.xpose.msra.mxu0 %v630
    %665 = vmatpush.xpose.msra.mxu0 %v627
    %666 = vmatpush.xpose.msra.mxu0 %v624
    %667 = vmatpush.xpose.msra.mxu0 %v621
    %668 = vmatpush.xpose.msra.mxu0 %v618
    %669 = vmatpush.xpose.msra.mxu0 %v615
    %670 = vmatpush.xpose.msra.mxu0 %v612
    %671 = vmatpush.xpose.msra.mxu0 %v609
    %672 = vmatmul.f32.gmra.mxu0 %v431
    %v673 = vpop.f32.mrf.mxu0
    %v674 = vadd.f32 0.0, %v673
    %675 = vmatmul.f32.gmra.mxu0 %v520
    %v676 = vpop.f32.mrf.mxu0
    %v677 = vadd.f32 0.0, %v676
    %678 = vdwg.mxu0
    %vm679 = vcmp.lt.s32.totalorder %v142, 64
    %v680 = vsel %vm679, %v674, -1e+09
    %v681 = vsel %vm679, %v677, -1e+09
    %682 = vmax.xlane.f32.xlu0 %v680
    %v683 = vpop.xlane.xlu0 %682
    %684 = vmax.xlane.f32.xlu0 %v681
    %v685 = vpop.xlane.xlu0 %684
    %v686 = vsub.f32 %v680, %v683
    %v687 = vsub.f32 %v681, %v685
    %v688 = vmul.f32 %v686, 1.442695
    %v689 = vpow.pop %v688
    %v690 = vmul.f32 %v687, 1.442695
    %v691 = vpow.pop %v690
    %692 = vadd.xlane.f32.xlu0 %v689
    %v693 = vpop.xlane.xlu0 %692
    %694 = vadd.xlane.f32.xlu0 %v691
    %v695 = vpop.xlane.xlu0 %694
    %v696 = vrcp.pop %v693
    %v697 = vrcp.pop %v695
    %v698 = vmul.f32 %v693, %v696
    %v699 = vmul.f32 %v695, %v697
    %v700 = vsub.f32 2.0, %v698
    %v701 = vsub.f32 2.0, %v699
    %v702 = vmul.f32 %v696, %v700
    %v703 = vmul.f32 %v697, %v701
    %v704 = vmul.f32 %v689, %v702
    %v705 = vmul.f32 %v691, %v703
    %706 = vrot.lane.b32.xlu0 %v425, 32
    %v707 = vpop.permute.xlu0 %706
    %708 = vrot.lane.b32.xlu0 %v426, 32
    %v709 = vpop.permute.xlu0 %708
    %714 = vrot.lane.b32.xlu0 %v604, 64
    %v715 = vpop.permute.xlu0 %714
    %716 = vrot.lane.b32.xlu0 %v605, 64
    %v717 = vpop.permute.xlu0 %716
    %v720 = vsel %vm175, %v164, %v707
    %v721 = vsel %vm175, %v165, %v709
    %vm722 = vcmask 523264
    %v723 = vsel %vm722, %v720, %v715
    %v724 = vsel %vm722, %v721, %v717
    %v725 = vld [vmem:[%s10] sm:$0xff]
    %v726 = vld [vmem:[%s10 + $0x8] sm:$0xff]
    %v727 = vld [vmem:[%s10 + $0x10] sm:$0xff]
    %v728 = vld [vmem:[%s10 + $0x18] sm:$0xff]
    %v729 = vld [vmem:[%s10 + $0x20] sm:$0xff]
    %v730 = vld [vmem:[%s10 + $0x28] sm:$0xff]
    %v731 = vld [vmem:[%s10 + $0x30] sm:$0xff]
    %v732 = vld [vmem:[%s10 + $0x38] sm:$0xff]
    %v733 = vld [vmem:[%s10 + $0x40] sm:$0xff]
    %v734 = vld [vmem:[%s10 + $0x48] sm:$0xff]
    %v735 = vld [vmem:[%s10 + $0x50] sm:$0xff]
    %v736 = vld [vmem:[%s10 + $0x58] sm:$0xff]
    %v737 = vld [vmem:[#allocation4] sm:$0x1]
    %v739 = vperm.slane %v737, 0
    %vm741 = vcmask 785408
    %v743 = vsel %vm741, %v723, 0
    %v746 = vsel %vm741, %v724, 0
    %748 = vmatpush.msra.mxu0 0.0
    %749 = vmatpush.msra.mxu0 0.0
    %750 = vmatpush.msra.mxu0 0.0
    %751 = vmatpush.msra.mxu0 0.0
    %752 = vmatpush.msra.mxu0 %v736
    %753 = vmatpush.msra.mxu0 %v735
    %754 = vmatpush.msra.mxu0 %v734
    %755 = vmatpush.msra.mxu0 %v733
    %756 = vmatpush.msra.mxu0 %v732
    %757 = vmatpush.msra.mxu0 %v731
    %758 = vmatpush.msra.mxu0 %v730
    %759 = vmatpush.msra.mxu0 %v729
    %760 = vmatpush.msra.mxu0 %v728
    %761 = vmatpush.msra.mxu0 %v727
    %762 = vmatpush.msra.mxu0 %v726
    %763 = vmatpush.msra.mxu0 %v725
    %764 = vmatmul.f32.gmra.mxu0 %v743
    %v765 = vpop.f32.mrf.mxu0
    %v766 = vadd.f32 %v739, %v765
    %767 = vmatmul.f32.gmra.mxu0 %v746
    %v768 = vpop.f32.mrf.mxu0
    %v769 = vadd.f32 %v739, %v768
    %770 = vdwg.mxu0
    %v771 = vxor.u32 %v766, 2147483648
    %v772 = vxor.u32 %v769, 2147483648
    %v773 = vmul.f32 %v771, 1.442695
    %v774 = vpow.pop %v773
    %v775 = vmul.f32 %v772, 1.442695
    %v776 = vpow.pop %v775
    %v777 = vadd.f32 %v774, 1.0
    %v778 = vadd.f32 %v776, 1.0
    %v779 = vrcp.pop %v777
    %v780 = vmul.f32 %v777, %v779
    %v781 = vsub.f32 1.0, %v780
    %v782 = vmul.f32 %v779, %v781
    %v783 = vadd.f32 %v779, %v782
    %vm784 = vweird.f32 %v777
    %vm785 = vweird.f32 %v779
    %vm786 = vmor %vm784, %vm785
    %v787 = vsel %vm786, %v779, %v783
    %v788 = vand.u32 2147483647, %v777
    %vm789 = vcmp.eq.f32.partialorder %v788, 8.507059e+37
    %v790 = vand.u32 %v777, 2147483648
    %v791 = vor.u32 1.1754944e-38, %v790
    %v792 = vsel %vm789, %v791, %v787
    %v793 = vmul.f32 1.0, %v792
    %v794 = vrcp.pop %v778
    %v795 = vmul.f32 %v778, %v794
    %v796 = vsub.f32 1.0, %v795
    %v797 = vmul.f32 %v794, %v796
    %v798 = vadd.f32 %v794, %v797
    %vm799 = vweird.f32 %v778
    %vm800 = vweird.f32 %v794
    %vm801 = vmor %vm799, %vm800
    %v802 = vsel %vm801, %v794, %v798
    %v803 = vand.u32 2147483647, %v778
    %vm804 = vcmp.eq.f32.partialorder %v803, 8.507059e+37
    %v805 = vand.u32 %v778, 2147483648
    %v806 = vor.u32 1.1754944e-38, %v805
    %v807 = vsel %vm804, %v806, %v802
    %v808 = vmul.f32 1.0, %v807
    %810 = vset.pattern.permute.xlu0 0
    %811 = vperm.xlu0 %810, %v793
    %v812 = vpop.permute.xlu0 %811
    %815 = vset.pattern.permute.xlu0 0
    %816 = vperm.xlu0 %815, %v808
    %v817 = vpop.permute.xlu0 %816
    %v819 = vmul.f32 %v812, %v704
    %v820 = vmul.f32 %v817, %v705
    %v821 = vsub.f32 1.0, %v793
    %v822 = vsub.f32 1.0, %v808
    %824 = vset.pattern.permute.xlu0 0
    %825 = vperm.xlu0 %824, %v821
    %v826 = vpop.permute.xlu0 %825
    %829 = vset.pattern.permute.xlu0 0
    %830 = vperm.xlu0 %829, %v822
    %v831 = vpop.permute.xlu0 %830
    %v833 = vmul.f32 %v826, %v606
    %v834 = vmul.f32 %v831, %v607
    %v835 = vadd.f32 %v819, %v833
    %v836 = vadd.f32 %v820, %v834
    %v838 = vrot.slane %v835, 1
    %v839 = vrot.slane %v835, 2
    %842 = vst [vmem:[#allocation11] sm:$0x1] %v835
    %843 = vst [vmem:[#allocation11 + $0x4] sm:$0x1] %v838
    %844 = vst [vmem:[#allocation11 + $0x8] sm:$0x1] %v839
    %v846 = vrot.slane %v836, 1
    %v847 = vrot.slane %v836, 2
    %s850 = scalar_lea.vmem [#allocation11], 12
    %851 = vst [vmem:[%s850] sm:$0x1] %v836
    %852 = vst [vmem:[%s850 + $0x4] sm:$0x1] %v846
    %853 = vst [vmem:[%s850 + $0x8] sm:$0x1] %v847
    %v854 = vld [vmem:[%s12] sm:$0xff]
    %v855 = vld [vmem:[%s12 + $0x8] sm:$0xff]
    %v856 = vld [vmem:[%s12 + $0x10] sm:$0xff]
    %v857 = vld [vmem:[%s12 + $0x18] sm:$0xff]
    %v858 = vld [vmem:[%s13] sm:$0x1]
    %v860 = vperm.slane %v858, 0
    %v862 = vsel %vm175, %v604, 0
    %v864 = vsel %vm175, %v605, 0
    %866 = vmatpush.msra.mxu0 0.0
    %867 = vmatpush.msra.mxu0 0.0
    %868 = vmatpush.msra.mxu0 0.0
    %869 = vmatpush.msra.mxu0 0.0
    %870 = vmatpush.msra.mxu0 0.0
    %871 = vmatpush.msra.mxu0 0.0
    %872 = vmatpush.msra.mxu0 0.0
    %873 = vmatpush.msra.mxu0 0.0
    %874 = vmatpush.msra.mxu0 0.0
    %875 = vmatpush.msra.mxu0 0.0
    %876 = vmatpush.msra.mxu0 0.0
    %877 = vmatpush.msra.mxu0 0.0
    %878 = vmatpush.msra.mxu0 %v857
    %879 = vmatpush.msra.mxu0 %v856
    %880 = vmatpush.msra.mxu0 %v855
    %881 = vmatpush.msra.mxu0 %v854
    %882 = vmatmul.f32.gmra.mxu0 %v862
    %v883 = vpop.f32.mrf.mxu0
    %v884 = vadd.f32 %v860, %v883
    %885 = vmatmul.f32.gmra.mxu0 %v864
    %v886 = vpop.f32.mrf.mxu0
    %v887 = vadd.f32 %v860, %v886
    %888 = vdwg.mxu0
    %889 = vst [vmem:[%s15] sm:$0x7] %v884
    %s890 = scalar_lea.vmem %s15, 4
    %891 = vst [vmem:[%s890] sm:$0x7] %v887
    %892 = vmax.xlane.f32.xlu0 %v835
    %v893 = vpop.xlane.xlu0 %892
    %894 = vmax.xlane.f32.xlu0 %v836
    %v895 = vpop.xlane.xlu0 %894
    %vm896 = vcmp.eq.f32.partialorder %v835, %v893
    %vm897 = vcmp.eq.f32.partialorder %v836, %v895
    %v898 = vsel %vm896, %v142, 128
    %v899 = vsel %vm897, %v142, 128
    %v900 = vand.u32 %v898, 65535
    %v901 = vshra.s32 %v898, 16
    %v902 = vcvt.s32.f32 %v900
    %v903 = vcvt.s32.f32 %v901
    %904 = vmin.xlane.f32.xlu0 %v903
    %v905 = vpop.xlane.xlu0 %904
    %vm906 = vcmp.eq.f32.partialorder %v903, %v905
    %v907 = vsel %vm906, %v902, inf
    %908 = vmin.xlane.f32.xlu0 %v907
    %v909 = vpop.xlane.xlu0 %908
    %v910 = vcvt.f32.s32 %v909
    %v911 = vcvt.f32.s32 %v905
    %v912 = vshll.u32 %v911, 16
    %v913 = vadd.s32 %v912, %v910
    %v914 = vand.u32 %v899, 65535
    %v915 = vshra.s32 %v899, 16
    %v916 = vcvt.s32.f32 %v914
    %v917 = vcvt.s32.f32 %v915
    %918 = vmin.xlane.f32.xlu0 %v917
    %v919 = vpop.xlane.xlu0 %918
    %vm920 = vcmp.eq.f32.partialorder %v917, %v919
    %v921 = vsel %vm920, %v916, inf
    %922 = vmin.xlane.f32.xlu0 %v921
    %v923 = vpop.xlane.xlu0 %922
    %v924 = vcvt.f32.s32 %v923
    %v925 = vcvt.f32.s32 %v919
    %v926 = vshll.u32 %v925, 16
    %v927 = vadd.s32 %v926, %v924
    %vm928 = vcmp.eq.s32.totalorder %v142, %v913
    %vm929 = vcmp.eq.s32.totalorder %v142, %v927
    %v930 = vsel %vm928, 1, 0
    %v931 = vsel %vm929, 1, 0
    %v932 = vcvt.s32.f32 %v930
    %v933 = vcvt.s32.f32 %v931
    %934 = vmatpush.msra.mxu0 %v114
    %935 = vmatpush.msra.mxu0 %v113
    %936 = vmatpush.msra.mxu0 %v112
    %937 = vmatpush.msra.mxu0 %v111
    %938 = vmatpush.msra.mxu0 %v110
    %939 = vmatpush.msra.mxu0 %v109
    %940 = vmatpush.msra.mxu0 %v108
    %941 = vmatpush.msra.mxu0 %v107
    %942 = vmatpush.msra.mxu0 %v106
    %943 = vmatpush.msra.mxu0 %v105
    %944 = vmatpush.msra.mxu0 %v104
    %945 = vmatpush.msra.mxu0 %v103
    %946 = vmatpush.msra.mxu0 %v102
    %947 = vmatpush.msra.mxu0 %v101
    %948 = vmatpush.msra.mxu0 %v100
    %949 = vmatpush.msra.mxu0 %v99
    %950 = vmatmul.f32.gmra.mxu0 %v932
    %v951 = vpop.f32.mrf.mxu0
    %v952 = vadd.f32 0.0, %v951
    %953 = vmatmul.f32.gmra.mxu0 %v933
    %v954 = vpop.f32.mrf.mxu0
    %v955 = vadd.f32 0.0, %v954
    %956 = vdwg.mxu0
    %v958 = vsel %vm175, %v952, 0
    %v961 = vsel %vm175, %v955, 0
    %963 = vmatpush.msra.mxu0 0.0
    %964 = vmatpush.msra.mxu0 0.0
    %965 = vmatpush.msra.mxu0 0.0
    %966 = vmatpush.msra.mxu0 0.0
    %967 = vmatpush.msra.mxu0 0.0
    %968 = vmatpush.msra.mxu0 0.0
    %969 = vmatpush.msra.mxu0 0.0
    %970 = vmatpush.msra.mxu0 0.0
    %971 = vmatpush.msra.mxu0 0.0
    %972 = vmatpush.msra.mxu0 0.0
    %973 = vmatpush.msra.mxu0 0.0
    %974 = vmatpush.msra.mxu0 0.0
    %975 = vmatpush.msra.mxu0 %v124
    %976 = vmatpush.msra.mxu0 %v121
    %977 = vmatpush.msra.mxu0 %v118
    %978 = vmatpush.msra.mxu0 %v115
    %979 = vmatmul.f32.gmra.mxu0 %v958
    %v980 = vpop.f32.mrf.mxu0
    %v981 = vadd.f32 %v169, %v980
    %982 = vmatmul.f32.gmra.mxu0 %v961
    %v983 = vpop.f32.mrf.mxu0
    %v984 = vadd.f32 %v169, %v983
    %985 = vdwg.mxu0
    %986 = vmatpush.msra.mxu0 0.0
    %987 = vmatpush.msra.mxu0 0.0
    %988 = vmatpush.msra.mxu0 0.0
    %989 = vmatpush.msra.mxu0 0.0
    %990 = vmatpush.msra.mxu0 0.0
    %991 = vmatpush.msra.mxu0 0.0
    %992 = vmatpush.msra.mxu0 0.0
    %993 = vmatpush.msra.mxu0 0.0
    %994 = vmatpush.msra.mxu0 0.0
    %995 = vmatpush.msra.mxu0 0.0
    %996 = vmatpush.msra.mxu0 0.0
    %997 = vmatpush.msra.mxu0 0.0
    %998 = vmatpush.msra.mxu0 %v125
    %999 = vmatpush.msra.mxu0 %v122
    %1000 = vmatpush.msra.mxu0 %v119
    %1001 = vmatpush.msra.mxu0 %v116
    %1002 = vmatmul.f32.gmra.mxu0 %v958
    %v1003 = vpop.f32.mrf.mxu0
    %v1004 = vadd.f32 %v170, %v1003
    %1005 = vmatmul.f32.gmra.mxu0 %v961
    %v1006 = vpop.f32.mrf.mxu0
    %v1007 = vadd.f32 %v170, %v1006
    %1008 = vdwg.mxu0
    %1009 = vmatpush.msra.mxu0 0.0
    %1010 = vmatpush.msra.mxu0 0.0
    %1011 = vmatpush.msra.mxu0 0.0
    %1012 = vmatpush.msra.mxu0 0.0
    %1013 = vmatpush.msra.mxu0 0.0
    %1014 = vmatpush.msra.mxu0 0.0
    %1015 = vmatpush.msra.mxu0 0.0
    %1016 = vmatpush.msra.mxu0 0.0
    %1017 = vmatpush.msra.mxu0 0.0
    %1018 = vmatpush.msra.mxu0 0.0
    %1019 = vmatpush.msra.mxu0 0.0
    %1020 = vmatpush.msra.mxu0 0.0
    %1021 = vmatpush.msra.mxu0 %v126
    %1022 = vmatpush.msra.mxu0 %v123
    %1023 = vmatpush.msra.mxu0 %v120
    %1024 = vmatpush.msra.mxu0 %v117
    %1025 = vmatmul.f32.gmra.mxu0 %v958
    %v1026 = vpop.f32.mrf.mxu0
    %v1027 = vadd.f32 %v171, %v1026
    %1028 = vmatmul.f32.gmra.mxu0 %v961
    %v1029 = vpop.f32.mrf.mxu0
    %v1030 = vadd.f32 %v171, %v1029
    %1031 = vdwg.mxu0
    %1032 = vmatpush.msra.mxu0 0.0
    %1033 = vmatpush.msra.mxu0 0.0
    %1034 = vmatpush.msra.mxu0 0.0
    %1035 = vmatpush.msra.mxu0 0.0
    %1036 = vmatpush.msra.mxu0 0.0
    %1037 = vmatpush.msra.mxu0 0.0
    %1038 = vmatpush.msra.mxu0 0.0
    %1039 = vmatpush.msra.mxu0 0.0
    %1040 = vmatpush.msra.mxu0 0.0
    %1041 = vmatpush.msra.mxu0 0.0
    %1042 = vmatpush.msra.mxu0 0.0
    %1043 = vmatpush.msra.mxu0 0.0
    %1044 = vmatpush.msra.mxu0 %v136
    %1045 = vmatpush.msra.mxu0 %v133
    %1046 = vmatpush.msra.mxu0 %v130
    %1047 = vmatpush.msra.mxu0 %v127
    %1048 = vmatmul.f32.gmra.mxu0 %v431
    %v1049 = vpop.f32.mrf.mxu0
    %v1050 = vadd.f32 %v252, %v1049
    %1051 = vmatmul.f32.gmra.mxu0 %v520
    %v1052 = vpop.f32.mrf.mxu0
    %v1053 = vadd.f32 %v252, %v1052
    %1054 = vdwg.mxu0
    %1055 = vmatpush.msra.mxu0 0.0
    %1056 = vmatpush.msra.mxu0 0.0
    %1057 = vmatpush.msra.mxu0 0.0
    %1058 = vmatpush.msra.mxu0 0.0
    %1059 = vmatpush.msra.mxu0 0.0
    %1060 = vmatpush.msra.mxu0 0.0
    %1061 = vmatpush.msra.mxu0 0.0
    %1062 = vmatpush.msra.mxu0 0.0
    %1063 = vmatpush.msra.mxu0 0.0
    %1064 = vmatpush.msra.mxu0 0.0
    %1065 = vmatpush.msra.mxu0 0.0
    %1066 = vmatpush.msra.mxu0 0.0
    %1067 = vmatpush.msra.mxu0 %v137
    %1068 = vmatpush.msra.mxu0 %v134
    %1069 = vmatpush.msra.mxu0 %v131
    %1070 = vmatpush.msra.mxu0 %v128
    %1071 = vmatmul.f32.gmra.mxu0 %v431
    %v1072 = vpop.f32.mrf.mxu0
    %v1073 = vadd.f32 %v253, %v1072
    %1074 = vmatmul.f32.gmra.mxu0 %v520
    %v1075 = vpop.f32.mrf.mxu0
    %v1076 = vadd.f32 %v253, %v1075
    %1077 = vdwg.mxu0
    %1078 = vmatpush.msra.mxu0 0.0
    %1079 = vmatpush.msra.mxu0 0.0
    %1080 = vmatpush.msra.mxu0 0.0
    %1081 = vmatpush.msra.mxu0 0.0
    %1082 = vmatpush.msra.mxu0 0.0
    %1083 = vmatpush.msra.mxu0 0.0
    %1084 = vmatpush.msra.mxu0 0.0
    %1085 = vmatpush.msra.mxu0 0.0
    %1086 = vmatpush.msra.mxu0 0.0
    %1087 = vmatpush.msra.mxu0 0.0
    %1088 = vmatpush.msra.mxu0 0.0
    %1089 = vmatpush.msra.mxu0 0.0
    %1090 = vmatpush.msra.mxu0 %v138
    %1091 = vmatpush.msra.mxu0 %v135
    %1092 = vmatpush.msra.mxu0 %v132
    %1093 = vmatpush.msra.mxu0 %v129
    %1094 = vmatmul.f32.gmra.mxu0 %v431
    %v1095 = vpop.f32.mrf.mxu0
    %v1096 = vadd.f32 %v254, %v1095
    %1097 = vmatmul.f32.gmra.mxu0 %v520
    %v1098 = vpop.f32.mrf.mxu0
    %v1099 = vadd.f32 %v254, %v1098
    %1100 = vdwg.mxu0
    %v1101 = vadd.f32 %v981, %v1050
    %v1102 = vadd.f32 %v984, %v1053
    %v1103 = vxor.u32 %v1101, 2147483648
    %v1104 = vxor.u32 %v1102, 2147483648
    %v1105 = vmul.f32 %v1103, 1.442695
    %v1106 = vpow.pop %v1105
    %v1107 = vmul.f32 %v1104, 1.442695
    %v1108 = vpow.pop %v1107
    %v1109 = vadd.f32 %v1106, 1.0
    %v1110 = vadd.f32 %v1108, 1.0
    %v1111 = vrcp.pop %v1109
    %v1112 = vmul.f32 %v1109, %v1111
    %v1113 = vsub.f32 1.0, %v1112
    %v1114 = vmul.f32 %v1111, %v1113
    %v1115 = vadd.f32 %v1111, %v1114
    %vm1116 = vweird.f32 %v1109
    %vm1117 = vweird.f32 %v1111
    %vm1118 = vmor %vm1116, %vm1117
    %v1119 = vsel %vm1118, %v1111, %v1115
    %v1120 = vand.u32 2147483647, %v1109
    %vm1121 = vcmp.eq.f32.partialorder %v1120, 8.507059e+37
    %v1122 = vand.u32 %v1109, 2147483648
    %v1123 = vor.u32 1.1754944e-38, %v1122
    %v1124 = vsel %vm1121, %v1123, %v1119
    %v1125 = vmul.f32 1.0, %v1124
    %v1126 = vrcp.pop %v1110
    %v1127 = vmul.f32 %v1110, %v1126
    %v1128 = vsub.f32 1.0, %v1127
    %v1129 = vmul.f32 %v1126, %v1128
    %v1130 = vadd.f32 %v1126, %v1129
    %vm1131 = vweird.f32 %v1110
    %vm1132 = vweird.f32 %v1126
    %vm1133 = vmor %vm1131, %vm1132
    %v1134 = vsel %vm1133, %v1126, %v1130
    %v1135 = vand.u32 2147483647, %v1110
    %vm1136 = vcmp.eq.f32.partialorder %v1135, 8.507059e+37
    %v1137 = vand.u32 %v1110, 2147483648
    %v1138 = vor.u32 1.1754944e-38, %v1137
    %v1139 = vsel %vm1136, %v1138, %v1134
    %v1140 = vmul.f32 1.0, %v1139
    %v1141 = vadd.f32 %v1004, %v1073
    %v1142 = vadd.f32 %v1007, %v1076
    %v1143 = vxor.u32 %v1141, 2147483648
    %v1144 = vxor.u32 %v1142, 2147483648
    %v1145 = vmul.f32 %v1143, 1.442695
    %v1146 = vpow.pop %v1145
    %v1147 = vmul.f32 %v1144, 1.442695
    %v1148 = vpow.pop %v1147
    %v1149 = vadd.f32 %v1146, 1.0
    %v1150 = vadd.f32 %v1148, 1.0
    %v1151 = vrcp.pop %v1149
    %v1152 = vmul.f32 %v1149, %v1151
    %v1153 = vsub.f32 1.0, %v1152
    %v1154 = vmul.f32 %v1151, %v1153
    %v1155 = vadd.f32 %v1151, %v1154
    %vm1156 = vweird.f32 %v1149
    %vm1157 = vweird.f32 %v1151
    %vm1158 = vmor %vm1156, %vm1157
    %v1159 = vsel %vm1158, %v1151, %v1155
    %v1160 = vand.u32 2147483647, %v1149
    %vm1161 = vcmp.eq.f32.partialorder %v1160, 8.507059e+37
    %v1162 = vand.u32 %v1149, 2147483648
    %v1163 = vor.u32 1.1754944e-38, %v1162
    %v1164 = vsel %vm1161, %v1163, %v1159
    %v1165 = vmul.f32 1.0, %v1164
    %v1166 = vrcp.pop %v1150
    %v1167 = vmul.f32 %v1150, %v1166
    %v1168 = vsub.f32 1.0, %v1167
    %v1169 = vmul.f32 %v1166, %v1168
    %v1170 = vadd.f32 %v1166, %v1169
    %vm1171 = vweird.f32 %v1150
    %vm1172 = vweird.f32 %v1166
    %vm1173 = vmor %vm1171, %vm1172
    %v1174 = vsel %vm1173, %v1166, %v1170
    %v1175 = vand.u32 2147483647, %v1150
    %vm1176 = vcmp.eq.f32.partialorder %v1175, 8.507059e+37
    %v1177 = vand.u32 %v1150, 2147483648
    %v1178 = vor.u32 1.1754944e-38, %v1177
    %v1179 = vsel %vm1176, %v1178, %v1174
    %v1180 = vmul.f32 1.0, %v1179
    %v1181 = vmul.f32 %v1125, %v1096
    %v1182 = vmul.f32 %v1140, %v1099
    %v1183 = vadd.f32 %v1027, %v1181
    %v1184 = vadd.f32 %v1030, %v1182
    %v1185 = vtanh.pop %v1183
    %v1186 = vtanh.pop %v1184
    %v1187 = vsub.f32 1.0, %v1165
    %v1188 = vsub.f32 1.0, %v1180
    %v1189 = vmul.f32 %v1187, %v1185
    %v1190 = vmul.f32 %v1188, %v1186
    %v1191 = vmul.f32 %v1165, %v425
    %v1192 = vmul.f32 %v1180, %v426
    %v1193 = vadd.f32 %v1189, %v1191
    %v1194 = vadd.f32 %v1190, %v1192
    %v1196 = vsel %vm175, %v1193, 0
    %1198 = vmatpush.xpose.msra.mxu0 0.0
    %1199 = vmatpush.xpose.msra.mxu0 0.0
    %1200 = vmatpush.xpose.msra.mxu0 0.0
    %1201 = vmatpush.xpose.msra.mxu0 0.0
    %1202 = vmatpush.xpose.msra.mxu0 0.0
    %1203 = vmatpush.xpose.msra.mxu0 0.0
    %1204 = vmatpush.xpose.msra.mxu0 0.0
    %1205 = vmatpush.xpose.msra.mxu0 0.0
    %1206 = vmatpush.xpose.msra.mxu0 0.0
    %1207 = vmatpush.xpose.msra.mxu0 0.0
    %1208 = vmatpush.xpose.msra.mxu0 0.0
    %1209 = vmatpush.xpose.msra.mxu0 0.0
    %1210 = vmatpush.xpose.msra.mxu0 0.0
    %1211 = vmatpush.xpose.msra.mxu0 0.0
    %1212 = vmatpush.xpose.msra.mxu0 0.0
    %1213 = vmatpush.xpose.msra.mxu0 %v434
    %1214 = vmatmul.f32.gmra.mxu0 %v1196
    %v1215 = vpop.f32.mrf.mxu0
    %v1216 = vadd.f32 %v428, %v1215
    %1217 = vdwg.mxu0
    %v1218 = vsel %vm456, %v1216, -inf
    %1219 = vmax.xlane.f32.xlu0 %v1218
    %v1220 = vpop.xlane.xlu0 %1219
    %v1221 = vsub.f32 %v1216, %v1220
    %v1222 = vmul.f32 %v1221, 1.442695
    %v1223 = vpow.pop %v1222
    %v1224 = vsel %vm456, %v1223, 0.0
    %1225 = vadd.xlane.f32.xlu0 %v1224
    %v1226 = vpop.xlane.xlu0 %1225
    %v1227 = vrcp.pop %v1226
    %v1228 = vmul.f32 %v1226, %v1227
    %v1229 = vsub.f32 2.0, %v1228
    %v1230 = vmul.f32 %v1227, %v1229
    %v1231 = vmul.f32 %v1223, %v1230
    %v1233 = vsel %vm456, %v1231, 0
    %1235 = vmatpush.msra.mxu0 0.0
    %1236 = vmatpush.msra.mxu0 0.0
    %1237 = vmatpush.msra.mxu0 0.0
    %1238 = vmatpush.msra.mxu0 0.0
    %1239 = vmatpush.msra.mxu0 0.0
    %1240 = vmatpush.msra.mxu0 0.0
    %1241 = vmatpush.msra.mxu0 0.0
    %1242 = vmatpush.msra.mxu0 0.0
    %1243 = vmatpush.msra.mxu0 0.0
    %1244 = vmatpush.msra.mxu0 0.0
    %1245 = vmatpush.msra.mxu0 0.0
    %1246 = vmatpush.msra.mxu0 0.0
    %1247 = vmatpush.msra.mxu0 0.0
    %1248 = vmatpush.msra.mxu0 0.0
    %1249 = vmatpush.msra.mxu0 0.0
    %1250 = vmatpush.msra.mxu0 %v158
    %1251 = vmatmul.f32.gmra.mxu0 %v1233
    %v1252 = vpop.f32.mrf.mxu0
    %v1253 = vadd.f32 0.0, %v1252
    %1254 = vdwg.mxu0
    %1255 = vst.msk [vmem:[#allocation2] sm:$0xff] %vm175, %v1253
    %1256 = vmatpush.msra.mxu0 0.0
    %1257 = vmatpush.msra.mxu0 0.0
    %1258 = vmatpush.msra.mxu0 0.0
    %1259 = vmatpush.msra.mxu0 0.0
    %1260 = vmatpush.msra.mxu0 0.0
    %1261 = vmatpush.msra.mxu0 0.0
    %1262 = vmatpush.msra.mxu0 0.0
    %1263 = vmatpush.msra.mxu0 0.0
    %1264 = vmatpush.msra.mxu0 0.0
    %1265 = vmatpush.msra.mxu0 0.0
    %1266 = vmatpush.msra.mxu0 0.0
    %1267 = vmatpush.msra.mxu0 0.0
    %1268 = vmatpush.msra.mxu0 0.0
    %1269 = vmatpush.msra.mxu0 0.0
    %1270 = vmatpush.msra.mxu0 0.0
    %1271 = vmatpush.msra.mxu0 %v149
    %1272 = vmatmul.f32.gmra.mxu0 %v1233
    %v1273 = vpop.f32.mrf.mxu0
    %v1274 = vadd.f32 0.0, %v1273
    %1275 = vdwg.mxu0
    %1276 = vst [vmem:[#allocation3] sm:$0xff] %v1274
    %v1278 = vsel %vm175, %v1194, 0
    %1280 = vmatpush.xpose.msra.mxu0 0.0
    %1281 = vmatpush.xpose.msra.mxu0 0.0
    %1282 = vmatpush.xpose.msra.mxu0 0.0
    %1283 = vmatpush.xpose.msra.mxu0 0.0
    %1284 = vmatpush.xpose.msra.mxu0 0.0
    %1285 = vmatpush.xpose.msra.mxu0 0.0
    %1286 = vmatpush.xpose.msra.mxu0 0.0
    %1287 = vmatpush.xpose.msra.mxu0 0.0
    %1288 = vmatpush.xpose.msra.mxu0 0.0
    %1289 = vmatpush.xpose.msra.mxu0 0.0
    %1290 = vmatpush.xpose.msra.mxu0 0.0
    %1291 = vmatpush.xpose.msra.mxu0 0.0
    %1292 = vmatpush.xpose.msra.mxu0 0.0
    %1293 = vmatpush.xpose.msra.mxu0 0.0
    %1294 = vmatpush.xpose.msra.mxu0 0.0
    %1295 = vmatpush.xpose.msra.mxu0 %v523
    %1296 = vmatmul.f32.gmra.mxu0 %v1278
    %v1297 = vpop.f32.mrf.mxu0
    %v1298 = vadd.f32 %v517, %v1297
    %1299 = vdwg.mxu0
    %v1300 = vsel %vm456, %v1298, -inf
    %1301 = vmax.xlane.f32.xlu0 %v1300
    %v1302 = vpop.xlane.xlu0 %1301
    %v1303 = vsub.f32 %v1298, %v1302
    %v1304 = vmul.f32 %v1303, 1.442695
    %v1305 = vpow.pop %v1304
    %v1306 = vsel %vm456, %v1305, 0.0
    %1307 = vadd.xlane.f32.xlu0 %v1306
    %v1308 = vpop.xlane.xlu0 %1307
    %v1309 = vrcp.pop %v1308
    %v1310 = vmul.f32 %v1308, %v1309
    %v1311 = vsub.f32 2.0, %v1310
    %v1312 = vmul.f32 %v1309, %v1311
    %v1313 = vmul.f32 %v1305, %v1312
    %v1315 = vsel %vm456, %v1313, 0
    %1317 = vmatpush.msra.mxu0 0.0
    %1318 = vmatpush.msra.mxu0 0.0
    %1319 = vmatpush.msra.mxu0 0.0
    %1320 = vmatpush.msra.mxu0 0.0
    %1321 = vmatpush.msra.mxu0 0.0
    %1322 = vmatpush.msra.mxu0 0.0
    %1323 = vmatpush.msra.mxu0 0.0
    %1324 = vmatpush.msra.mxu0 0.0
    %1325 = vmatpush.msra.mxu0 0.0
    %1326 = vmatpush.msra.mxu0 0.0
    %1327 = vmatpush.msra.mxu0 0.0
    %1328 = vmatpush.msra.mxu0 0.0
    %1329 = vmatpush.msra.mxu0 0.0
    %1330 = vmatpush.msra.mxu0 0.0
    %1331 = vmatpush.msra.mxu0 0.0
    %1332 = vmatpush.msra.mxu0 %v160
    %1333 = vmatmul.f32.gmra.mxu0 %v1315
    %v1334 = vpop.f32.mrf.mxu0
    %v1335 = vadd.f32 0.0, %v1334
    %1336 = vdwg.mxu0
    %1337 = vst.msk [vmem:[#allocation2 + $0x8] sm:$0xff] %vm175, %v1335
    %1338 = vmatpush.msra.mxu0 0.0
    %1339 = vmatpush.msra.mxu0 0.0
    %1340 = vmatpush.msra.mxu0 0.0
    %1341 = vmatpush.msra.mxu0 0.0
    %1342 = vmatpush.msra.mxu0 0.0
    %1343 = vmatpush.msra.mxu0 0.0
    %1344 = vmatpush.msra.mxu0 0.0
    %1345 = vmatpush.msra.mxu0 0.0
    %1346 = vmatpush.msra.mxu0 0.0
    %1347 = vmatpush.msra.mxu0 0.0
    %1348 = vmatpush.msra.mxu0 0.0
    %1349 = vmatpush.msra.mxu0 0.0
    %1350 = vmatpush.msra.mxu0 0.0
    %1351 = vmatpush.msra.mxu0 0.0
    %1352 = vmatpush.msra.mxu0 0.0
    %1353 = vmatpush.msra.mxu0 %v157
    %1354 = vmatmul.f32.gmra.mxu0 %v1315
    %v1355 = vpop.f32.mrf.mxu0
    %v1356 = vadd.f32 0.0, %v1355
    %1357 = vdwg.mxu0
    %1358 = vst [vmem:[#allocation3 + $0x8] sm:$0xff] %v1356
    %v1359 = vld [vmem:[#allocation2] sm:$0xff]
    %v1360 = vld [vmem:[#allocation2 + $0x8] sm:$0xff]
    %v1361 = vld [vmem:[#allocation3] sm:$0xff]
    %v1362 = vld [vmem:[#allocation3 + $0x8] sm:$0xff]
    %1363 = vmatpush.xpose.msra.mxu0 %v654
    %1364 = vmatpush.xpose.msra.mxu0 %v651
    %1365 = vmatpush.xpose.msra.mxu0 %v648
    %1366 = vmatpush.xpose.msra.mxu0 %v645
    %1367 = vmatpush.xpose.msra.mxu0 %v642
    %1368 = vmatpush.xpose.msra.mxu0 %v639
    %1369 = vmatpush.xpose.msra.mxu0 %v636
    %1370 = vmatpush.xpose.msra.mxu0 %v633
    %1371 = vmatpush.xpose.msra.mxu0 %v630
    %1372 = vmatpush.xpose.msra.mxu0 %v627
    %1373 = vmatpush.xpose.msra.mxu0 %v624
    %1374 = vmatpush.xpose.msra.mxu0 %v621
    %1375 = vmatpush.xpose.msra.mxu0 %v618
    %1376 = vmatpush.xpose.msra.mxu0 %v615
    %1377 = vmatpush.xpose.msra.mxu0 %v612
    %1378 = vmatpush.xpose.msra.mxu0 %v609
    %1379 = vmatmul.f32.gmra.mxu0 %v1196
    %v1380 = vpop.f32.mrf.mxu0
    %v1381 = vadd.f32 0.0, %v1380
    %1382 = vmatmul.f32.gmra.mxu0 %v1278
    %v1383 = vpop.f32.mrf.mxu0
    %v1384 = vadd.f32 0.0, %v1383
    %1385 = vdwg.mxu0
    %v1386 = vsel %vm679, %v1381, -1e+09
    %v1387 = vsel %vm679, %v1384, -1e+09
    %1388 = vmax.xlane.f32.xlu0 %v1386
    %v1389 = vpop.xlane.xlu0 %1388
    %1390 = vmax.xlane.f32.xlu0 %v1387
    %v1391 = vpop.xlane.xlu0 %1390
    %v1392 = vsub.f32 %v1386, %v1389
    %v1393 = vsub.f32 %v1387, %v1391
    %v1394 = vmul.f32 %v1392, 1.442695
    %v1395 = vpow.pop %v1394
    %v1396 = vmul.f32 %v1393, 1.442695
    %v1397 = vpow.pop %v1396
    %1398 = vadd.xlane.f32.xlu0 %v1395
    %v1399 = vpop.xlane.xlu0 %1398
    %1400 = vadd.xlane.f32.xlu0 %v1397
    %v1401 = vpop.xlane.xlu0 %1400
    %v1402 = vrcp.pop %v1399
    %v1403 = vrcp.pop %v1401
    %v1404 = vmul.f32 %v1399, %v1402
    %v1405 = vmul.f32 %v1401, %v1403
    %v1406 = vsub.f32 2.0, %v1404
    %v1407 = vsub.f32 2.0, %v1405
    %v1408 = vmul.f32 %v1402, %v1406
    %v1409 = vmul.f32 %v1403, %v1407
    %v1410 = vmul.f32 %v1395, %v1408
    %v1411 = vmul.f32 %v1397, %v1409
    %1412 = vrot.lane.b32.xlu0 %v1193, 32
    %v1413 = vpop.permute.xlu0 %1412
    %1414 = vrot.lane.b32.xlu0 %v1194, 32
    %v1415 = vpop.permute.xlu0 %1414
    %1420 = vrot.lane.b32.xlu0 %v1359, 64
    %v1421 = vpop.permute.xlu0 %1420
    %1422 = vrot.lane.b32.xlu0 %v1360, 64
    %v1423 = vpop.permute.xlu0 %1422
    %v1426 = vsel %vm175, %v952, %v1413
    %v1427 = vsel %vm175, %v955, %v1415
    %v1428 = vsel %vm722, %v1426, %v1421
    %v1429 = vsel %vm722, %v1427, %v1423
    %v1430 = vld [vmem:[%s10] sm:$0xff]
    %v1431 = vld [vmem:[%s10 + $0x8] sm:$0xff]
    %v1432 = vld [vmem:[%s10 + $0x10] sm:$0xff]
    %v1433 = vld [vmem:[%s10 + $0x18] sm:$0xff]
    %v1434 = vld [vmem:[%s10 + $0x20] sm:$0xff]
    %v1435 = vld [vmem:[%s10 + $0x28] sm:$0xff]
    %v1436 = vld [vmem:[%s10 + $0x30] sm:$0xff]
    %v1437 = vld [vmem:[%s10 + $0x38] sm:$0xff]
    %v1438 = vld [vmem:[%s10 + $0x40] sm:$0xff]
    %v1439 = vld [vmem:[%s10 + $0x48] sm:$0xff]
    %v1440 = vld [vmem:[%s10 + $0x50] sm:$0xff]
    %v1441 = vld [vmem:[%s10 + $0x58] sm:$0xff]
    %v1442 = vld [vmem:[#allocation4] sm:$0x1]
    %v1444 = vperm.slane %v1442, 0
    %v1447 = vsel %vm741, %v1428, 0
    %v1450 = vsel %vm741, %v1429, 0
    %1452 = vmatpush.msra.mxu0 0.0
    %1453 = vmatpush.msra.mxu0 0.0
    %1454 = vmatpush.msra.mxu0 0.0
    %1455 = vmatpush.msra.mxu0 0.0
    %1456 = vmatpush.msra.mxu0 %v1441
    %1457 = vmatpush.msra.mxu0 %v1440
    %1458 = vmatpush.msra.mxu0 %v1439
    %1459 = vmatpush.msra.mxu0 %v1438
    %1460 = vmatpush.msra.mxu0 %v1437
    %1461 = vmatpush.msra.mxu0 %v1436
    %1462 = vmatpush.msra.mxu0 %v1435
    %1463 = vmatpush.msra.mxu0 %v1434
    %1464 = vmatpush.msra.mxu0 %v1433
    %1465 = vmatpush.msra.mxu0 %v1432
    %1466 = vmatpush.msra.mxu0 %v1431
    %1467 = vmatpush.msra.mxu0 %v1430
    %1468 = vmatmul.f32.gmra.mxu0 %v1447
    %v1469 = vpop.f32.mrf.mxu0
    %v1470 = vadd.f32 %v1444, %v1469
    %1471 = vmatmul.f32.gmra.mxu0 %v1450
    %v1472 = vpop.f32.mrf.mxu0
    %v1473 = vadd.f32 %v1444, %v1472
    %1474 = vdwg.mxu0
    %v1475 = vxor.u32 %v1470, 2147483648
    %v1476 = vxor.u32 %v1473, 2147483648
    %v1477 = vmul.f32 %v1475, 1.442695
    %v1478 = vpow.pop %v1477
    %v1479 = vmul.f32 %v1476, 1.442695
    %v1480 = vpow.pop %v1479
    %v1481 = vadd.f32 %v1478, 1.0
    %v1482 = vadd.f32 %v1480, 1.0
    %v1483 = vrcp.pop %v1481
    %v1484 = vmul.f32 %v1481, %v1483
    %v1485 = vsub.f32 1.0, %v1484
    %v1486 = vmul.f32 %v1483, %v1485
    %v1487 = vadd.f32 %v1483, %v1486
    %vm1488 = vweird.f32 %v1481
    %vm1489 = vweird.f32 %v1483
    %vm1490 = vmor %vm1488, %vm1489
    %v1491 = vsel %vm1490, %v1483, %v1487
    %v1492 = vand.u32 2147483647, %v1481
    %vm1493 = vcmp.eq.f32.partialorder %v1492, 8.507059e+37
    %v1494 = vand.u32 %v1481, 2147483648
    %v1495 = vor.u32 1.1754944e-38, %v1494
    %v1496 = vsel %vm1493, %v1495, %v1491
    %v1497 = vmul.f32 1.0, %v1496
    %v1498 = vrcp.pop %v1482
    %v1499 = vmul.f32 %v1482, %v1498
    %v1500 = vsub.f32 1.0, %v1499
    %v1501 = vmul.f32 %v1498, %v1500
    %v1502 = vadd.f32 %v1498, %v1501
    %vm1503 = vweird.f32 %v1482
    %vm1504 = vweird.f32 %v1498
    %vm1505 = vmor %vm1503, %vm1504
    %v1506 = vsel %vm1505, %v1498, %v1502
    %v1507 = vand.u32 2147483647, %v1482
    %vm1508 = vcmp.eq.f32.partialorder %v1507, 8.507059e+37
    %v1509 = vand.u32 %v1482, 2147483648
    %v1510 = vor.u32 1.1754944e-38, %v1509
    %v1511 = vsel %vm1508, %v1510, %v1506
    %v1512 = vmul.f32 1.0, %v1511
    %1514 = vset.pattern.permute.xlu0 0
    %1515 = vperm.xlu0 %1514, %v1497
    %v1516 = vpop.permute.xlu0 %1515
    %1519 = vset.pattern.permute.xlu0 0
    %1520 = vperm.xlu0 %1519, %v1512
    %v1521 = vpop.permute.xlu0 %1520
    %v1523 = vmul.f32 %v1516, %v1410
    %v1524 = vmul.f32 %v1521, %v1411
    %v1525 = vsub.f32 1.0, %v1497
    %v1526 = vsub.f32 1.0, %v1512
    %1528 = vset.pattern.permute.xlu0 0
    %1529 = vperm.xlu0 %1528, %v1525
    %v1530 = vpop.permute.xlu0 %1529
    %1533 = vset.pattern.permute.xlu0 0
    %1534 = vperm.xlu0 %1533, %v1526
    %v1535 = vpop.permute.xlu0 %1534
    %v1537 = vmul.f32 %v1530, %v1361
    %v1538 = vmul.f32 %v1535, %v1362
    %v1539 = vadd.f32 %v1523, %v1537
    %v1540 = vadd.f32 %v1524, %v1538
    %v1542 = vrot.slane %v1539, 1
    %v1543 = vrot.slane %v1539, 2
    %1546 = vst [vmem:[#allocation11 + $0x1] sm:$0x1] %v1539
    %1547 = vst [vmem:[#allocation11 + $0x5] sm:$0x1] %v1542
    %1548 = vst [vmem:[#allocation11 + $0x9] sm:$0x1] %v1543
    %v1550 = vrot.slane %v1540, 1
    %v1551 = vrot.slane %v1540, 2
    %1554 = vst [vmem:[%s850 + $0x1] sm:$0x1] %v1540
    %1555 = vst [vmem:[%s850 + $0x5] sm:$0x1] %v1550
    %1556 = vst [vmem:[%s850 + $0x9] sm:$0x1] %v1551
    %1557 = vmax.xlane.f32.xlu0 %v1539
    %v1558 = vpop.xlane.xlu0 %1557
    %1559 = vmax.xlane.f32.xlu0 %v1540
    %v1560 = vpop.xlane.xlu0 %1559
    %vm1561 = vcmp.eq.f32.partialorder %v1539, %v1558
    %vm1562 = vcmp.eq.f32.partialorder %v1540, %v1560
    %v1563 = vsel %vm1561, %v142, 128
    %v1564 = vsel %vm1562, %v142, 128
    %v1565 = vand.u32 %v1563, 65535
    %v1566 = vshra.s32 %v1563, 16
    %v1567 = vcvt.s32.f32 %v1565
    %v1568 = vcvt.s32.f32 %v1566
    %1569 = vmin.xlane.f32.xlu0 %v1568
    %v1570 = vpop.xlane.xlu0 %1569
    %vm1571 = vcmp.eq.f32.partialorder %v1568, %v1570
    %v1572 = vsel %vm1571, %v1567, inf
    %1573 = vmin.xlane.f32.xlu0 %v1572
    %v1574 = vpop.xlane.xlu0 %1573
    %v1575 = vcvt.f32.s32 %v1574
    %v1576 = vcvt.f32.s32 %v1570
    %v1577 = vshll.u32 %v1576, 16
    %v1578 = vadd.s32 %v1577, %v1575
    %v1579 = vand.u32 %v1564, 65535
    %v1580 = vshra.s32 %v1564, 16
    %v1581 = vcvt.s32.f32 %v1579
    %v1582 = vcvt.s32.f32 %v1580
    %1583 = vmin.xlane.f32.xlu0 %v1582
    %v1584 = vpop.xlane.xlu0 %1583
    %vm1585 = vcmp.eq.f32.partialorder %v1582, %v1584
    %v1586 = vsel %vm1585, %v1581, inf
    %1587 = vmin.xlane.f32.xlu0 %v1586
    %v1588 = vpop.xlane.xlu0 %1587
    %v1589 = vcvt.f32.s32 %v1588
    %v1590 = vcvt.f32.s32 %v1584
    %v1591 = vshll.u32 %v1590, 16
    %v1592 = vadd.s32 %v1591, %v1589
    %vm1593 = vcmp.eq.s32.totalorder %v142, %v1578
    %vm1594 = vcmp.eq.s32.totalorder %v142, %v1592
    %v1595 = vsel %vm1593, 1, 0
    %v1596 = vsel %vm1594, 1, 0
    %v1597 = vcvt.s32.f32 %v1595
    %v1598 = vcvt.s32.f32 %v1596
    %1599 = vmatpush.msra.mxu0 %v114
    %1600 = vmatpush.msra.mxu0 %v113
    %1601 = vmatpush.msra.mxu0 %v112
    %1602 = vmatpush.msra.mxu0 %v111
    %1603 = vmatpush.msra.mxu0 %v110
    %1604 = vmatpush.msra.mxu0 %v109
    %1605 = vmatpush.msra.mxu0 %v108
    %1606 = vmatpush.msra.mxu0 %v107
    %1607 = vmatpush.msra.mxu0 %v106
    %1608 = vmatpush.msra.mxu0 %v105
    %1609 = vmatpush.msra.mxu0 %v104
    %1610 = vmatpush.msra.mxu0 %v103
    %1611 = vmatpush.msra.mxu0 %v102
    %1612 = vmatpush.msra.mxu0 %v101
    %1613 = vmatpush.msra.mxu0 %v100
    %1614 = vmatpush.msra.mxu0 %v99
    %1615 = vmatmul.f32.gmra.mxu0 %v1597
    %v1616 = vpop.f32.mrf.mxu0
    %v1617 = vadd.f32 0.0, %v1616
    %1618 = vmatmul.f32.gmra.mxu0 %v1598
    %v1619 = vpop.f32.mrf.mxu0
    %v1620 = vadd.f32 0.0, %v1619
    %1621 = vdwg.mxu0
    %v1623 = vsel %vm175, %v1617, 0
    %v1626 = vsel %vm175, %v1620, 0
    %1628 = vmatpush.msra.mxu0 0.0
    %1629 = vmatpush.msra.mxu0 0.0
    %1630 = vmatpush.msra.mxu0 0.0
    %1631 = vmatpush.msra.mxu0 0.0
    %1632 = vmatpush.msra.mxu0 0.0
    %1633 = vmatpush.msra.mxu0 0.0
    %1634 = vmatpush.msra.mxu0 0.0
    %1635 = vmatpush.msra.mxu0 0.0
    %1636 = vmatpush.msra.mxu0 0.0
    %1637 = vmatpush.msra.mxu0 0.0
    %1638 = vmatpush.msra.mxu0 0.0
    %1639 = vmatpush.msra.mxu0 0.0
    %1640 = vmatpush.msra.mxu0 %v124
    %1641 = vmatpush.msra.mxu0 %v121
    %1642 = vmatpush.msra.mxu0 %v118
    %1643 = vmatpush.msra.mxu0 %v115
    %1644 = vmatmul.f32.gmra.mxu0 %v1623
    %v1645 = vpop.f32.mrf.mxu0
    %v1646 = vadd.f32 %v169, %v1645
    %1647 = vmatmul.f32.gmra.mxu0 %v1626
    %v1648 = vpop.f32.mrf.mxu0
    %v1649 = vadd.f32 %v169, %v1648
    %1650 = vdwg.mxu0
    %1651 = vmatpush.msra.mxu0 0.0
    %1652 = vmatpush.msra.mxu0 0.0
    %1653 = vmatpush.msra.mxu0 0.0
    %1654 = vmatpush.msra.mxu0 0.0
    %1655 = vmatpush.msra.mxu0 0.0
    %1656 = vmatpush.msra.mxu0 0.0
    %1657 = vmatpush.msra.mxu0 0.0
    %1658 = vmatpush.msra.mxu0 0.0
    %1659 = vmatpush.msra.mxu0 0.0
    %1660 = vmatpush.msra.mxu0 0.0
    %1661 = vmatpush.msra.mxu0 0.0
    %1662 = vmatpush.msra.mxu0 0.0
    %1663 = vmatpush.msra.mxu0 %v125
    %1664 = vmatpush.msra.mxu0 %v122
    %1665 = vmatpush.msra.mxu0 %v119
    %1666 = vmatpush.msra.mxu0 %v116
    %1667 = vmatmul.f32.gmra.mxu0 %v1623
    %v1668 = vpop.f32.mrf.mxu0
    %v1669 = vadd.f32 %v170, %v1668
    %1670 = vmatmul.f32.gmra.mxu0 %v1626
    %v1671 = vpop.f32.mrf.mxu0
    %v1672 = vadd.f32 %v170, %v1671
    %1673 = vdwg.mxu0
    %1674 = vmatpush.msra.mxu0 0.0
    %1675 = vmatpush.msra.mxu0 0.0
    %1676 = vmatpush.msra.mxu0 0.0
    %1677 = vmatpush.msra.mxu0 0.0
    %1678 = vmatpush.msra.mxu0 0.0
    %1679 = vmatpush.msra.mxu0 0.0
    %1680 = vmatpush.msra.mxu0 0.0
    %1681 = vmatpush.msra.mxu0 0.0
    %1682 = vmatpush.msra.mxu0 0.0
    %1683 = vmatpush.msra.mxu0 0.0
    %1684 = vmatpush.msra.mxu0 0.0
    %1685 = vmatpush.msra.mxu0 0.0
    %1686 = vmatpush.msra.mxu0 %v126
    %1687 = vmatpush.msra.mxu0 %v123
    %1688 = vmatpush.msra.mxu0 %v120
    %1689 = vmatpush.msra.mxu0 %v117
    %1690 = vmatmul.f32.gmra.mxu0 %v1623
    %v1691 = vpop.f32.mrf.mxu0
    %v1692 = vadd.f32 %v171, %v1691
    %1693 = vmatmul.f32.gmra.mxu0 %v1626
    %v1694 = vpop.f32.mrf.mxu0
    %v1695 = vadd.f32 %v171, %v1694
    %1696 = vdwg.mxu0
    %1697 = vmatpush.msra.mxu0 0.0
    %1698 = vmatpush.msra.mxu0 0.0
    %1699 = vmatpush.msra.mxu0 0.0
    %1700 = vmatpush.msra.mxu0 0.0
    %1701 = vmatpush.msra.mxu0 0.0
    %1702 = vmatpush.msra.mxu0 0.0
    %1703 = vmatpush.msra.mxu0 0.0
    %1704 = vmatpush.msra.mxu0 0.0
    %1705 = vmatpush.msra.mxu0 0.0
    %1706 = vmatpush.msra.mxu0 0.0
    %1707 = vmatpush.msra.mxu0 0.0
    %1708 = vmatpush.msra.mxu0 0.0
    %1709 = vmatpush.msra.mxu0 %v136
    %1710 = vmatpush.msra.mxu0 %v133
    %1711 = vmatpush.msra.mxu0 %v130
    %1712 = vmatpush.msra.mxu0 %v127
    %1713 = vmatmul.f32.gmra.mxu0 %v1196
    %v1714 = vpop.f32.mrf.mxu0
    %v1715 = vadd.f32 %v252, %v1714
    %1716 = vmatmul.f32.gmra.mxu0 %v1278
    %v1717 = vpop.f32.mrf.mxu0
    %v1718 = vadd.f32 %v252, %v1717
    %1719 = vdwg.mxu0
    %1720 = vmatpush.msra.mxu0 0.0
    %1721 = vmatpush.msra.mxu0 0.0
    %1722 = vmatpush.msra.mxu0 0.0
    %1723 = vmatpush.msra.mxu0 0.0
    %1724 = vmatpush.msra.mxu0 0.0
    %1725 = vmatpush.msra.mxu0 0.0
    %1726 = vmatpush.msra.mxu0 0.0
    %1727 = vmatpush.msra.mxu0 0.0
    %1728 = vmatpush.msra.mxu0 0.0
    %1729 = vmatpush.msra.mxu0 0.0
    %1730 = vmatpush.msra.mxu0 0.0
    %1731 = vmatpush.msra.mxu0 0.0
    %1732 = vmatpush.msra.mxu0 %v137
    %1733 = vmatpush.msra.mxu0 %v134
    %1734 = vmatpush.msra.mxu0 %v131
    %1735 = vmatpush.msra.mxu0 %v128
    %1736 = vmatmul.f32.gmra.mxu0 %v1196
    %v1737 = vpop.f32.mrf.mxu0
    %v1738 = vadd.f32 %v253, %v1737
    %1739 = vmatmul.f32.gmra.mxu0 %v1278
    %v1740 = vpop.f32.mrf.mxu0
    %v1741 = vadd.f32 %v253, %v1740
    %1742 = vdwg.mxu0
    %1743 = vmatpush.msra.mxu0 0.0
    %1744 = vmatpush.msra.mxu0 0.0
    %1745 = vmatpush.msra.mxu0 0.0
    %1746 = vmatpush.msra.mxu0 0.0
    %1747 = vmatpush.msra.mxu0 0.0
    %1748 = vmatpush.msra.mxu0 0.0
    %1749 = vmatpush.msra.mxu0 0.0
    %1750 = vmatpush.msra.mxu0 0.0
    %1751 = vmatpush.msra.mxu0 0.0
    %1752 = vmatpush.msra.mxu0 0.0
    %1753 = vmatpush.msra.mxu0 0.0
    %1754 = vmatpush.msra.mxu0 0.0
    %1755 = vmatpush.msra.mxu0 %v138
    %1756 = vmatpush.msra.mxu0 %v135
    %1757 = vmatpush.msra.mxu0 %v132
    %1758 = vmatpush.msra.mxu0 %v129
    %1759 = vmatmul.f32.gmra.mxu0 %v1196
    %v1760 = vpop.f32.mrf.mxu0
    %v1761 = vadd.f32 %v254, %v1760
    %1762 = vmatmul.f32.gmra.mxu0 %v1278
    %v1763 = vpop.f32.mrf.mxu0
    %v1764 = vadd.f32 %v254, %v1763
    %1765 = vdwg.mxu0
    %v1766 = vadd.f32 %v1646, %v1715
    %v1767 = vadd.f32 %v1649, %v1718
    %v1768 = vxor.u32 %v1766, 2147483648
    %v1769 = vxor.u32 %v1767, 2147483648
    %v1770 = vmul.f32 %v1768, 1.442695
    %v1771 = vpow.pop %v1770
    %v1772 = vmul.f32 %v1769, 1.442695
    %v1773 = vpow.pop %v1772
    %v1774 = vadd.f32 %v1771, 1.0
    %v1775 = vadd.f32 %v1773, 1.0
    %v1776 = vrcp.pop %v1774
    %v1777 = vmul.f32 %v1774, %v1776
    %v1778 = vsub.f32 1.0, %v1777
    %v1779 = vmul.f32 %v1776, %v1778
    %v1780 = vadd.f32 %v1776, %v1779
    %vm1781 = vweird.f32 %v1774
    %vm1782 = vweird.f32 %v1776
    %vm1783 = vmor %vm1781, %vm1782
    %v1784 = vsel %vm1783, %v1776, %v1780
    %v1785 = vand.u32 2147483647, %v1774
    %vm1786 = vcmp.eq.f32.partialorder %v1785, 8.507059e+37
    %v1787 = vand.u32 %v1774, 2147483648
    %v1788 = vor.u32 1.1754944e-38, %v1787
    %v1789 = vsel %vm1786, %v1788, %v1784
    %v1790 = vmul.f32 1.0, %v1789
    %v1791 = vrcp.pop %v1775
    %v1792 = vmul.f32 %v1775, %v1791
    %v1793 = vsub.f32 1.0, %v1792
    %v1794 = vmul.f32 %v1791, %v1793
    %v1795 = vadd.f32 %v1791, %v1794
    %vm1796 = vweird.f32 %v1775
    %vm1797 = vweird.f32 %v1791
    %vm1798 = vmor %vm1796, %vm1797
    %v1799 = vsel %vm1798, %v1791, %v1795
    %v1800 = vand.u32 2147483647, %v1775
    %vm1801 = vcmp.eq.f32.partialorder %v1800, 8.507059e+37
    %v1802 = vand.u32 %v1775, 2147483648
    %v1803 = vor.u32 1.1754944e-38, %v1802
    %v1804 = vsel %vm1801, %v1803, %v1799
    %v1805 = vmul.f32 1.0, %v1804
    %v1806 = vadd.f32 %v1669, %v1738
    %v1807 = vadd.f32 %v1672, %v1741
    %v1808 = vxor.u32 %v1806, 2147483648
    %v1809 = vxor.u32 %v1807, 2147483648
    %v1810 = vmul.f32 %v1808, 1.442695
    %v1811 = vpow.pop %v1810
    %v1812 = vmul.f32 %v1809, 1.442695
    %v1813 = vpow.pop %v1812
    %v1814 = vadd.f32 %v1811, 1.0
    %v1815 = vadd.f32 %v1813, 1.0
    %v1816 = vrcp.pop %v1814
    %v1817 = vmul.f32 %v1814, %v1816
    %v1818 = vsub.f32 1.0, %v1817
    %v1819 = vmul.f32 %v1816, %v1818
    %v1820 = vadd.f32 %v1816, %v1819
    %vm1821 = vweird.f32 %v1814
    %vm1822 = vweird.f32 %v1816
    %vm1823 = vmor %vm1821, %vm1822
    %v1824 = vsel %vm1823, %v1816, %v1820
    %v1825 = vand.u32 2147483647, %v1814
    %vm1826 = vcmp.eq.f32.partialorder %v1825, 8.507059e+37
    %v1827 = vand.u32 %v1814, 2147483648
    %v1828 = vor.u32 1.1754944e-38, %v1827
    %v1829 = vsel %vm1826, %v1828, %v1824
    %v1830 = vmul.f32 1.0, %v1829
    %v1831 = vrcp.pop %v1815
    %v1832 = vmul.f32 %v1815, %v1831
    %v1833 = vsub.f32 1.0, %v1832
    %v1834 = vmul.f32 %v1831, %v1833
    %v1835 = vadd.f32 %v1831, %v1834
    %vm1836 = vweird.f32 %v1815
    %vm1837 = vweird.f32 %v1831
    %vm1838 = vmor %vm1836, %vm1837
    %v1839 = vsel %vm1838, %v1831, %v1835
    %v1840 = vand.u32 2147483647, %v1815
    %vm1841 = vcmp.eq.f32.partialorder %v1840, 8.507059e+37
    %v1842 = vand.u32 %v1815, 2147483648
    %v1843 = vor.u32 1.1754944e-38, %v1842
    %v1844 = vsel %vm1841, %v1843, %v1839
    %v1845 = vmul.f32 1.0, %v1844
    %v1846 = vmul.f32 %v1790, %v1761
    %v1847 = vmul.f32 %v1805, %v1764
    %v1848 = vadd.f32 %v1692, %v1846
    %v1849 = vadd.f32 %v1695, %v1847
    %v1850 = vtanh.pop %v1848
    %v1851 = vtanh.pop %v1849
    %v1852 = vsub.f32 1.0, %v1830
    %v1853 = vsub.f32 1.0, %v1845
    %v1854 = vmul.f32 %v1852, %v1850
    %v1855 = vmul.f32 %v1853, %v1851
    %v1856 = vmul.f32 %v1830, %v1193
    %v1857 = vmul.f32 %v1845, %v1194
    %v1858 = vadd.f32 %v1854, %v1856
    %v1859 = vadd.f32 %v1855, %v1857
    %v1861 = vsel %vm175, %v1858, 0
    %1863 = vmatpush.xpose.msra.mxu0 0.0
    %1864 = vmatpush.xpose.msra.mxu0 0.0
    %1865 = vmatpush.xpose.msra.mxu0 0.0
    %1866 = vmatpush.xpose.msra.mxu0 0.0
    %1867 = vmatpush.xpose.msra.mxu0 0.0
    %1868 = vmatpush.xpose.msra.mxu0 0.0
    %1869 = vmatpush.xpose.msra.mxu0 0.0
    %1870 = vmatpush.xpose.msra.mxu0 0.0
    %1871 = vmatpush.xpose.msra.mxu0 0.0
    %1872 = vmatpush.xpose.msra.mxu0 0.0
    %1873 = vmatpush.xpose.msra.mxu0 0.0
    %1874 = vmatpush.xpose.msra.mxu0 0.0
    %1875 = vmatpush.xpose.msra.mxu0 0.0
    %1876 = vmatpush.xpose.msra.mxu0 0.0
    %1877 = vmatpush.xpose.msra.mxu0 0.0
    %1878 = vmatpush.xpose.msra.mxu0 %v434
    %1879 = vmatmul.f32.gmra.mxu0 %v1861
    %v1880 = vpop.f32.mrf.mxu0
    %v1881 = vadd.f32 %v428, %v1880
    %1882 = vdwg.mxu0
    %v1883 = vsel %vm456, %v1881, -inf
    %1884 = vmax.xlane.f32.xlu0 %v1883
    %v1885 = vpop.xlane.xlu0 %1884
    %v1886 = vsub.f32 %v1881, %v1885
    %v1887 = vmul.f32 %v1886, 1.442695
    %v1888 = vpow.pop %v1887
    %v1889 = vsel %vm456, %v1888, 0.0
    %1890 = vadd.xlane.f32.xlu0 %v1889
    %v1891 = vpop.xlane.xlu0 %1890
    %v1892 = vrcp.pop %v1891
    %v1893 = vmul.f32 %v1891, %v1892
    %v1894 = vsub.f32 2.0, %v1893
    %v1895 = vmul.f32 %v1892, %v1894
    %v1896 = vmul.f32 %v1888, %v1895
    %v1898 = vsel %vm456, %v1896, 0
    %1900 = vmatpush.msra.mxu0 0.0
    %1901 = vmatpush.msra.mxu0 0.0
    %1902 = vmatpush.msra.mxu0 0.0
    %1903 = vmatpush.msra.mxu0 0.0
    %1904 = vmatpush.msra.mxu0 0.0
    %1905 = vmatpush.msra.mxu0 0.0
    %1906 = vmatpush.msra.mxu0 0.0
    %1907 = vmatpush.msra.mxu0 0.0
    %1908 = vmatpush.msra.mxu0 0.0
    %1909 = vmatpush.msra.mxu0 0.0
    %1910 = vmatpush.msra.mxu0 0.0
    %1911 = vmatpush.msra.mxu0 0.0
    %1912 = vmatpush.msra.mxu0 0.0
    %1913 = vmatpush.msra.mxu0 0.0
    %1914 = vmatpush.msra.mxu0 0.0
    %1915 = vmatpush.msra.mxu0 %v158
    %1916 = vmatmul.f32.gmra.mxu0 %v1898
    %v1917 = vpop.f32.mrf.mxu0
    %v1918 = vadd.f32 0.0, %v1917
    %1919 = vdwg.mxu0
    %1920 = vst.msk [vmem:[#allocation2] sm:$0xff] %vm175, %v1918
    %1921 = vmatpush.msra.mxu0 0.0
    %1922 = vmatpush.msra.mxu0 0.0
    %1923 = vmatpush.msra.mxu0 0.0
    %1924 = vmatpush.msra.mxu0 0.0
    %1925 = vmatpush.msra.mxu0 0.0
    %1926 = vmatpush.msra.mxu0 0.0
    %1927 = vmatpush.msra.mxu0 0.0
    %1928 = vmatpush.msra.mxu0 0.0
    %1929 = vmatpush.msra.mxu0 0.0
    %1930 = vmatpush.msra.mxu0 0.0
    %1931 = vmatpush.msra.mxu0 0.0
    %1932 = vmatpush.msra.mxu0 0.0
    %1933 = vmatpush.msra.mxu0 0.0
    %1934 = vmatpush.msra.mxu0 0.0
    %1935 = vmatpush.msra.mxu0 0.0
    %1936 = vmatpush.msra.mxu0 %v149
    %1937 = vmatmul.f32.gmra.mxu0 %v1898
    %v1938 = vpop.f32.mrf.mxu0
    %v1939 = vadd.f32 0.0, %v1938
    %1940 = vdwg.mxu0
    %1941 = vst [vmem:[#allocation3] sm:$0xff] %v1939
    %v1943 = vsel %vm175, %v1859, 0
    %1945 = vmatpush.xpose.msra.mxu0 0.0
    %1946 = vmatpush.xpose.msra.mxu0 0.0
    %1947 = vmatpush.xpose.msra.mxu0 0.0
    %1948 = vmatpush.xpose.msra.mxu0 0.0
    %1949 = vmatpush.xpose.msra.mxu0 0.0
    %1950 = vmatpush.xpose.msra.mxu0 0.0
    %1951 = vmatpush.xpose.msra.mxu0 0.0
    %1952 = vmatpush.xpose.msra.mxu0 0.0
    %1953 = vmatpush.xpose.msra.mxu0 0.0
    %1954 = vmatpush.xpose.msra.mxu0 0.0
    %1955 = vmatpush.xpose.msra.mxu0 0.0
    %1956 = vmatpush.xpose.msra.mxu0 0.0
    %1957 = vmatpush.xpose.msra.mxu0 0.0
    %1958 = vmatpush.xpose.msra.mxu0 0.0
    %1959 = vmatpush.xpose.msra.mxu0 0.0
    %1960 = vmatpush.xpose.msra.mxu0 %v523
    %1961 = vmatmul.f32.gmra.mxu0 %v1943
    %v1962 = vpop.f32.mrf.mxu0
    %v1963 = vadd.f32 %v517, %v1962
    %1964 = vdwg.mxu0
    %v1965 = vsel %vm456, %v1963, -inf
    %1966 = vmax.xlane.f32.xlu0 %v1965
    %v1967 = vpop.xlane.xlu0 %1966
    %v1968 = vsub.f32 %v1963, %v1967
    %v1969 = vmul.f32 %v1968, 1.442695
    %v1970 = vpow.pop %v1969
    %v1971 = vsel %vm456, %v1970, 0.0
    %1972 = vadd.xlane.f32.xlu0 %v1971
    %v1973 = vpop.xlane.xlu0 %1972
    %v1974 = vrcp.pop %v1973
    %v1975 = vmul.f32 %v1973, %v1974
    %v1976 = vsub.f32 2.0, %v1975
    %v1977 = vmul.f32 %v1974, %v1976
    %v1978 = vmul.f32 %v1970, %v1977
    %v1980 = vsel %vm456, %v1978, 0
    %1982 = vmatpush.msra.mxu0 0.0
    %1983 = vmatpush.msra.mxu0 0.0
    %1984 = vmatpush.msra.mxu0 0.0
    %1985 = vmatpush.msra.mxu0 0.0
    %1986 = vmatpush.msra.mxu0 0.0
    %1987 = vmatpush.msra.mxu0 0.0
    %1988 = vmatpush.msra.mxu0 0.0
    %1989 = vmatpush.msra.mxu0 0.0
    %1990 = vmatpush.msra.mxu0 0.0
    %1991 = vmatpush.msra.mxu0 0.0
    %1992 = vmatpush.msra.mxu0 0.0
    %1993 = vmatpush.msra.mxu0 0.0
    %1994 = vmatpush.msra.mxu0 0.0
    %1995 = vmatpush.msra.mxu0 0.0
    %1996 = vmatpush.msra.mxu0 0.0
    %1997 = vmatpush.msra.mxu0 %v160
    %1998 = vmatmul.f32.gmra.mxu0 %v1980
    %v1999 = vpop.f32.mrf.mxu0
    %v2000 = vadd.f32 0.0, %v1999
    %2001 = vdwg.mxu0
    %2002 = vst.msk [vmem:[#allocation2 + $0x8] sm:$0xff] %vm175, %v2000
    %2003 = vmatpush.msra.mxu0 0.0
    %2004 = vmatpush.msra.mxu0 0.0
    %2005 = vmatpush.msra.mxu0 0.0
    %2006 = vmatpush.msra.mxu0 0.0
    %2007 = vmatpush.msra.mxu0 0.0
    %2008 = vmatpush.msra.mxu0 0.0
    %2009 = vmatpush.msra.mxu0 0.0
    %2010 = vmatpush.msra.mxu0 0.0
    %2011 = vmatpush.msra.mxu0 0.0
    %2012 = vmatpush.msra.mxu0 0.0
    %2013 = vmatpush.msra.mxu0 0.0
    %2014 = vmatpush.msra.mxu0 0.0
    %2015 = vmatpush.msra.mxu0 0.0
    %2016 = vmatpush.msra.mxu0 0.0
    %2017 = vmatpush.msra.mxu0 0.0
    %2018 = vmatpush.msra.mxu0 %v157
    %2019 = vmatmul.f32.gmra.mxu0 %v1980
    %v2020 = vpop.f32.mrf.mxu0
    %v2021 = vadd.f32 0.0, %v2020
    %2022 = vdwg.mxu0
    %2023 = vst [vmem:[#allocation3 + $0x8] sm:$0xff] %v2021
    %v2024 = vld [vmem:[#allocation2] sm:$0xff]
    %v2025 = vld [vmem:[#allocation2 + $0x8] sm:$0xff]
    %v2026 = vld [vmem:[#allocation3] sm:$0xff]
    %v2027 = vld [vmem:[#allocation3 + $0x8] sm:$0xff]
    %2028 = vmatpush.xpose.msra.mxu0 %v654
    %2029 = vmatpush.xpose.msra.mxu0 %v651
    %2030 = vmatpush.xpose.msra.mxu0 %v648
    %2031 = vmatpush.xpose.msra.mxu0 %v645
    %2032 = vmatpush.xpose.msra.mxu0 %v642
    %2033 = vmatpush.xpose.msra.mxu0 %v639
    %2034 = vmatpush.xpose.msra.mxu0 %v636
    %2035 = vmatpush.xpose.msra.mxu0 %v633
    %2036 = vmatpush.xpose.msra.mxu0 %v630
    %2037 = vmatpush.xpose.msra.mxu0 %v627
    %2038 = vmatpush.xpose.msra.mxu0 %v624
    %2039 = vmatpush.xpose.msra.mxu0 %v621
    %2040 = vmatpush.xpose.msra.mxu0 %v618
    %2041 = vmatpush.xpose.msra.mxu0 %v615
    %2042 = vmatpush.xpose.msra.mxu0 %v612
    %2043 = vmatpush.xpose.msra.mxu0 %v609
    %2044 = vmatmul.f32.gmra.mxu0 %v1861
    %v2045 = vpop.f32.mrf.mxu0
    %v2046 = vadd.f32 0.0, %v2045
    %2047 = vmatmul.f32.gmra.mxu0 %v1943
    %v2048 = vpop.f32.mrf.mxu0
    %v2049 = vadd.f32 0.0, %v2048
    %2050 = vdwg.mxu0
    %v2051 = vsel %vm679, %v2046, -1e+09
    %v2052 = vsel %vm679, %v2049, -1e+09
    %2053 = vmax.xlane.f32.xlu0 %v2051
    %v2054 = vpop.xlane.xlu0 %2053
    %2055 = vmax.xlane.f32.xlu0 %v2052
    %v2056 = vpop.xlane.xlu0 %2055
    %v2057 = vsub.f32 %v2051, %v2054
    %v2058 = vsub.f32 %v2052, %v2056
    %v2059 = vmul.f32 %v2057, 1.442695
    %v2060 = vpow.pop %v2059
    %v2061 = vmul.f32 %v2058, 1.442695
    %v2062 = vpow.pop %v2061
    %2063 = vadd.xlane.f32.xlu0 %v2060
    %v2064 = vpop.xlane.xlu0 %2063
    %2065 = vadd.xlane.f32.xlu0 %v2062
    %v2066 = vpop.xlane.xlu0 %2065
    %v2067 = vrcp.pop %v2064
    %v2068 = vrcp.pop %v2066
    %v2069 = vmul.f32 %v2064, %v2067
    %v2070 = vmul.f32 %v2066, %v2068
    %v2071 = vsub.f32 2.0, %v2069
    %v2072 = vsub.f32 2.0, %v2070
    %v2073 = vmul.f32 %v2067, %v2071
    %v2074 = vmul.f32 %v2068, %v2072
    %v2075 = vmul.f32 %v2060, %v2073
    %v2076 = vmul.f32 %v2062, %v2074
    %2077 = vrot.lane.b32.xlu0 %v1858, 32
    %v2078 = vpop.permute.xlu0 %2077
    %2079 = vrot.lane.b32.xlu0 %v1859, 32
    %v2080 = vpop.permute.xlu0 %2079
    %2085 = vrot.lane.b32.xlu0 %v2024, 64
    %v2086 = vpop.permute.xlu0 %2085
    %2087 = vrot.lane.b32.xlu0 %v2025, 64
    %v2088 = vpop.permute.xlu0 %2087
    %v2091 = vsel %vm175, %v1617, %v2078
    %v2092 = vsel %vm175, %v1620, %v2080
    %v2093 = vsel %vm722, %v2091, %v2086
    %v2094 = vsel %vm722, %v2092, %v2088
    %v2095 = vld [vmem:[%s10] sm:$0xff]
    %v2096 = vld [vmem:[%s10 + $0x8] sm:$0xff]
    %v2097 = vld [vmem:[%s10 + $0x10] sm:$0xff]
    %v2098 = vld [vmem:[%s10 + $0x18] sm:$0xff]
    %v2099 = vld [vmem:[%s10 + $0x20] sm:$0xff]
    %v2100 = vld [vmem:[%s10 + $0x28] sm:$0xff]
    %v2101 = vld [vmem:[%s10 + $0x30] sm:$0xff]
    %v2102 = vld [vmem:[%s10 + $0x38] sm:$0xff]
    %v2103 = vld [vmem:[%s10 + $0x40] sm:$0xff]
    %v2104 = vld [vmem:[%s10 + $0x48] sm:$0xff]
    %v2105 = vld [vmem:[%s10 + $0x50] sm:$0xff]
    %v2106 = vld [vmem:[%s10 + $0x58] sm:$0xff]
    %v2107 = vld [vmem:[#allocation4] sm:$0x1]
    %v2109 = vperm.slane %v2107, 0
    %v2112 = vsel %vm741, %v2093, 0
    %v2115 = vsel %vm741, %v2094, 0
    %2117 = vmatpush.msra.mxu0 0.0
    %2118 = vmatpush.msra.mxu0 0.0
    %2119 = vmatpush.msra.mxu0 0.0
    %2120 = vmatpush.msra.mxu0 0.0
    %2121 = vmatpush.msra.mxu0 %v2106
    %2122 = vmatpush.msra.mxu0 %v2105
    %2123 = vmatpush.msra.mxu0 %v2104
    %2124 = vmatpush.msra.mxu0 %v2103
    %2125 = vmatpush.msra.mxu0 %v2102
    %2126 = vmatpush.msra.mxu0 %v2101
    %2127 = vmatpush.msra.mxu0 %v2100
    %2128 = vmatpush.msra.mxu0 %v2099
    %2129 = vmatpush.msra.mxu0 %v2098
    %2130 = vmatpush.msra.mxu0 %v2097
    %2131 = vmatpush.msra.mxu0 %v2096
    %2132 = vmatpush.msra.mxu0 %v2095
    %2133 = vmatmul.f32.gmra.mxu0 %v2112
    %v2134 = vpop.f32.mrf.mxu0
    %v2135 = vadd.f32 %v2109, %v2134
    %2136 = vmatmul.f32.gmra.mxu0 %v2115
    %v2137 = vpop.f32.mrf.mxu0
    %v2138 = vadd.f32 %v2109, %v2137
    %2139 = vdwg.mxu0
    %v2140 = vxor.u32 %v2135, 2147483648
    %v2141 = vxor.u32 %v2138, 2147483648
    %v2142 = vmul.f32 %v2140, 1.442695
    %v2143 = vpow.pop %v2142
    %v2144 = vmul.f32 %v2141, 1.442695
    %v2145 = vpow.pop %v2144
    %v2146 = vadd.f32 %v2143, 1.0
    %v2147 = vadd.f32 %v2145, 1.0
    %v2148 = vrcp.pop %v2146
    %v2149 = vmul.f32 %v2146, %v2148
    %v2150 = vsub.f32 1.0, %v2149
    %v2151 = vmul.f32 %v2148, %v2150
    %v2152 = vadd.f32 %v2148, %v2151
    %vm2153 = vweird.f32 %v2146
    %vm2154 = vweird.f32 %v2148
    %vm2155 = vmor %vm2153, %vm2154
    %v2156 = vsel %vm2155, %v2148, %v2152
    %v2157 = vand.u32 2147483647, %v2146
    %vm2158 = vcmp.eq.f32.partialorder %v2157, 8.507059e+37
    %v2159 = vand.u32 %v2146, 2147483648
    %v2160 = vor.u32 1.1754944e-38, %v2159
    %v2161 = vsel %vm2158, %v2160, %v2156
    %v2162 = vmul.f32 1.0, %v2161
    %v2163 = vrcp.pop %v2147
    %v2164 = vmul.f32 %v2147, %v2163
    %v2165 = vsub.f32 1.0, %v2164
    %v2166 = vmul.f32 %v2163, %v2165
    %v2167 = vadd.f32 %v2163, %v2166
    %vm2168 = vweird.f32 %v2147
    %vm2169 = vweird.f32 %v2163
    %vm2170 = vmor %vm2168, %vm2169
    %v2171 = vsel %vm2170, %v2163, %v2167
    %v2172 = vand.u32 2147483647, %v2147
    %vm2173 = vcmp.eq.f32.partialorder %v2172, 8.507059e+37
    %v2174 = vand.u32 %v2147, 2147483648
    %v2175 = vor.u32 1.1754944e-38, %v2174
    %v2176 = vsel %vm2173, %v2175, %v2171
    %v2177 = vmul.f32 1.0, %v2176
    %2179 = vset.pattern.permute.xlu0 0
    %2180 = vperm.xlu0 %2179, %v2162
    %v2181 = vpop.permute.xlu0 %2180
    %2184 = vset.pattern.permute.xlu0 0
    %2185 = vperm.xlu0 %2184, %v2177
    %v2186 = vpop.permute.xlu0 %2185
    %v2188 = vmul.f32 %v2181, %v2075
    %v2189 = vmul.f32 %v2186, %v2076
    %v2190 = vsub.f32 1.0, %v2162
    %v2191 = vsub.f32 1.0, %v2177
    %2193 = vset.pattern.permute.xlu0 0
    %2194 = vperm.xlu0 %2193, %v2190
    %v2195 = vpop.permute.xlu0 %2194
    %2198 = vset.pattern.permute.xlu0 0
    %2199 = vperm.xlu0 %2198, %v2191
    %v2200 = vpop.permute.xlu0 %2199
    %v2202 = vmul.f32 %v2195, %v2026
    %v2203 = vmul.f32 %v2200, %v2027
    %v2204 = vadd.f32 %v2188, %v2202
    %v2205 = vadd.f32 %v2189, %v2203
    %v2207 = vrot.slane %v2204, 1
    %v2208 = vrot.slane %v2204, 2
    %2211 = vst [vmem:[#allocation11 + $0x2] sm:$0x1] %v2204
    %2212 = vst [vmem:[#allocation11 + $0x6] sm:$0x1] %v2207
    %2213 = vst [vmem:[#allocation11 + $0xa] sm:$0x1] %v2208
    %v2215 = vrot.slane %v2205, 1
    %v2216 = vrot.slane %v2205, 2
    %2219 = vst [vmem:[%s850 + $0x2] sm:$0x1] %v2205
    %2220 = vst [vmem:[%s850 + $0x6] sm:$0x1] %v2215
    %2221 = vst [vmem:[%s850 + $0xa] sm:$0x1] %v2216
    %2222 = vmax.xlane.f32.xlu0 %v2204
    %v2223 = vpop.xlane.xlu0 %2222
    %2224 = vmax.xlane.f32.xlu0 %v2205
    %v2225 = vpop.xlane.xlu0 %2224
    %vm2226 = vcmp.eq.f32.partialorder %v2204, %v2223
    %vm2227 = vcmp.eq.f32.partialorder %v2205, %v2225
    %v2228 = vsel %vm2226, %v142, 128
    %v2229 = vsel %vm2227, %v142, 128
    %v2230 = vand.u32 %v2228, 65535
    %v2231 = vshra.s32 %v2228, 16
    %v2232 = vcvt.s32.f32 %v2230
    %v2233 = vcvt.s32.f32 %v2231
    %2234 = vmin.xlane.f32.xlu0 %v2233
    %v2235 = vpop.xlane.xlu0 %2234
    %vm2236 = vcmp.eq.f32.partialorder %v2233, %v2235
    %v2237 = vsel %vm2236, %v2232, inf
    %2238 = vmin.xlane.f32.xlu0 %v2237
    %v2239 = vpop.xlane.xlu0 %2238
    %v2240 = vcvt.f32.s32 %v2239
    %v2241 = vcvt.f32.s32 %v2235
    %v2242 = vshll.u32 %v2241, 16
    %v2243 = vadd.s32 %v2242, %v2240
    %v2244 = vand.u32 %v2229, 65535
    %v2245 = vshra.s32 %v2229, 16
    %v2246 = vcvt.s32.f32 %v2244
    %v2247 = vcvt.s32.f32 %v2245
    %2248 = vmin.xlane.f32.xlu0 %v2247
    %v2249 = vpop.xlane.xlu0 %2248
    %vm2250 = vcmp.eq.f32.partialorder %v2247, %v2249
    %v2251 = vsel %vm2250, %v2246, inf
    %2252 = vmin.xlane.f32.xlu0 %v2251
    %v2253 = vpop.xlane.xlu0 %2252
    %v2254 = vcvt.f32.s32 %v2253
    %v2255 = vcvt.f32.s32 %v2249
    %v2256 = vshll.u32 %v2255, 16
    %v2257 = vadd.s32 %v2256, %v2254
    %vm2258 = vcmp.eq.s32.totalorder %v142, %v2243
    %vm2259 = vcmp.eq.s32.totalorder %v142, %v2257
    %v2260 = vsel %vm2258, 1, 0
    %v2261 = vsel %vm2259, 1, 0
    %v2262 = vcvt.s32.f32 %v2260
    %v2263 = vcvt.s32.f32 %v2261
    %2264 = vmatpush.msra.mxu0 %v114
    %2265 = vmatpush.msra.mxu0 %v113
    %2266 = vmatpush.msra.mxu0 %v112
    %2267 = vmatpush.msra.mxu0 %v111
    %2268 = vmatpush.msra.mxu0 %v110
    %2269 = vmatpush.msra.mxu0 %v109
    %2270 = vmatpush.msra.mxu0 %v108
    %2271 = vmatpush.msra.mxu0 %v107
    %2272 = vmatpush.msra.mxu0 %v106
    %2273 = vmatpush.msra.mxu0 %v105
    %2274 = vmatpush.msra.mxu0 %v104
    %2275 = vmatpush.msra.mxu0 %v103
    %2276 = vmatpush.msra.mxu0 %v102
    %2277 = vmatpush.msra.mxu0 %v101
    %2278 = vmatpush.msra.mxu0 %v100
    %2279 = vmatpush.msra.mxu0 %v99
    %2280 = vmatmul.f32.gmra.mxu0 %v2262
    %v2281 = vpop.f32.mrf.mxu0
    %v2282 = vadd.f32 0.0, %v2281
    %2283 = vmatmul.f32.gmra.mxu0 %v2263
    %v2284 = vpop.f32.mrf.mxu0
    %v2285 = vadd.f32 0.0, %v2284
    %2286 = vdwg.mxu0
    %v2288 = vsel %vm175, %v2282, 0
    %v2291 = vsel %vm175, %v2285, 0
    %2293 = vmatpush.msra.mxu0 0.0
    %2294 = vmatpush.msra.mxu0 0.0
    %2295 = vmatpush.msra.mxu0 0.0
    %2296 = vmatpush.msra.mxu0 0.0
    %2297 = vmatpush.msra.mxu0 0.0
    %2298 = vmatpush.msra.mxu0 0.0
    %2299 = vmatpush.msra.mxu0 0.0
    %2300 = vmatpush.msra.mxu0 0.0
    %2301 = vmatpush.msra.mxu0 0.0
    %2302 = vmatpush.msra.mxu0 0.0
    %2303 = vmatpush.msra.mxu0 0.0
    %2304 = vmatpush.msra.mxu0 0.0
    %2305 = vmatpush.msra.mxu0 %v124
    %2306 = vmatpush.msra.mxu0 %v121
    %2307 = vmatpush.msra.mxu0 %v118
    %2308 = vmatpush.msra.mxu0 %v115
    %2309 = vmatmul.f32.gmra.mxu0 %v2288
    %v2310 = vpop.f32.mrf.mxu0
    %v2311 = vadd.f32 %v169, %v2310
    %2312 = vmatmul.f32.gmra.mxu0 %v2291
    %v2313 = vpop.f32.mrf.mxu0
    %v2314 = vadd.f32 %v169, %v2313
    %2315 = vdwg.mxu0
    %2316 = vmatpush.msra.mxu0 0.0
    %2317 = vmatpush.msra.mxu0 0.0
    %2318 = vmatpush.msra.mxu0 0.0
    %2319 = vmatpush.msra.mxu0 0.0
    %2320 = vmatpush.msra.mxu0 0.0
    %2321 = vmatpush.msra.mxu0 0.0
    %2322 = vmatpush.msra.mxu0 0.0
    %2323 = vmatpush.msra.mxu0 0.0
    %2324 = vmatpush.msra.mxu0 0.0
    %2325 = vmatpush.msra.mxu0 0.0
    %2326 = vmatpush.msra.mxu0 0.0
    %2327 = vmatpush.msra.mxu0 0.0
    %2328 = vmatpush.msra.mxu0 %v125
    %2329 = vmatpush.msra.mxu0 %v122
    %2330 = vmatpush.msra.mxu0 %v119
    %2331 = vmatpush.msra.mxu0 %v116
    %2332 = vmatmul.f32.gmra.mxu0 %v2288
    %v2333 = vpop.f32.mrf.mxu0
    %v2334 = vadd.f32 %v170, %v2333
    %2335 = vmatmul.f32.gmra.mxu0 %v2291
    %v2336 = vpop.f32.mrf.mxu0
    %v2337 = vadd.f32 %v170, %v2336
    %2338 = vdwg.mxu0
    %2339 = vmatpush.msra.mxu0 0.0
    %2340 = vmatpush.msra.mxu0 0.0
    %2341 = vmatpush.msra.mxu0 0.0
    %2342 = vmatpush.msra.mxu0 0.0
    %2343 = vmatpush.msra.mxu0 0.0
    %2344 = vmatpush.msra.mxu0 0.0
    %2345 = vmatpush.msra.mxu0 0.0
    %2346 = vmatpush.msra.mxu0 0.0
    %2347 = vmatpush.msra.mxu0 0.0
    %2348 = vmatpush.msra.mxu0 0.0
    %2349 = vmatpush.msra.mxu0 0.0
    %2350 = vmatpush.msra.mxu0 0.0
    %2351 = vmatpush.msra.mxu0 %v126
    %2352 = vmatpush.msra.mxu0 %v123
    %2353 = vmatpush.msra.mxu0 %v120
    %2354 = vmatpush.msra.mxu0 %v117
    %2355 = vmatmul.f32.gmra.mxu0 %v2288
    %v2356 = vpop.f32.mrf.mxu0
    %v2357 = vadd.f32 %v171, %v2356
    %2358 = vmatmul.f32.gmra.mxu0 %v2291
    %v2359 = vpop.f32.mrf.mxu0
    %v2360 = vadd.f32 %v171, %v2359
    %2361 = vdwg.mxu0
    %2362 = vmatpush.msra.mxu0 0.0
    %2363 = vmatpush.msra.mxu0 0.0
    %2364 = vmatpush.msra.mxu0 0.0
    %2365 = vmatpush.msra.mxu0 0.0
    %2366 = vmatpush.msra.mxu0 0.0
    %2367 = vmatpush.msra.mxu0 0.0
    %2368 = vmatpush.msra.mxu0 0.0
    %2369 = vmatpush.msra.mxu0 0.0
    %2370 = vmatpush.msra.mxu0 0.0
    %2371 = vmatpush.msra.mxu0 0.0
    %2372 = vmatpush.msra.mxu0 0.0
    %2373 = vmatpush.msra.mxu0 0.0
    %2374 = vmatpush.msra.mxu0 %v136
    %2375 = vmatpush.msra.mxu0 %v133
    %2376 = vmatpush.msra.mxu0 %v130
    %2377 = vmatpush.msra.mxu0 %v127
    %2378 = vmatmul.f32.gmra.mxu0 %v1861
    %v2379 = vpop.f32.mrf.mxu0
    %v2380 = vadd.f32 %v252, %v2379
    %2381 = vmatmul.f32.gmra.mxu0 %v1943
    %v2382 = vpop.f32.mrf.mxu0
    %v2383 = vadd.f32 %v252, %v2382
    %2384 = vdwg.mxu0
    %2385 = vmatpush.msra.mxu0 0.0
    %2386 = vmatpush.msra.mxu0 0.0
    %2387 = vmatpush.msra.mxu0 0.0
    %2388 = vmatpush.msra.mxu0 0.0
    %2389 = vmatpush.msra.mxu0 0.0
    %2390 = vmatpush.msra.mxu0 0.0
    %2391 = vmatpush.msra.mxu0 0.0
    %2392 = vmatpush.msra.mxu0 0.0
    %2393 = vmatpush.msra.mxu0 0.0
    %2394 = vmatpush.msra.mxu0 0.0
    %2395 = vmatpush.msra.mxu0 0.0
    %2396 = vmatpush.msra.mxu0 0.0
    %2397 = vmatpush.msra.mxu0 %v137
    %2398 = vmatpush.msra.mxu0 %v134
    %2399 = vmatpush.msra.mxu0 %v131
    %2400 = vmatpush.msra.mxu0 %v128
    %2401 = vmatmul.f32.gmra.mxu0 %v1861
    %v2402 = vpop.f32.mrf.mxu0
    %v2403 = vadd.f32 %v253, %v2402
    %2404 = vmatmul.f32.gmra.mxu0 %v1943
    %v2405 = vpop.f32.mrf.mxu0
    %v2406 = vadd.f32 %v253, %v2405
    %2407 = vdwg.mxu0
    %2408 = vmatpush.msra.mxu0 0.0
    %2409 = vmatpush.msra.mxu0 0.0
    %2410 = vmatpush.msra.mxu0 0.0
    %2411 = vmatpush.msra.mxu0 0.0
    %2412 = vmatpush.msra.mxu0 0.0
    %2413 = vmatpush.msra.mxu0 0.0
    %2414 = vmatpush.msra.mxu0 0.0
    %2415 = vmatpush.msra.mxu0 0.0
    %2416 = vmatpush.msra.mxu0 0.0
    %2417 = vmatpush.msra.mxu0 0.0
    %2418 = vmatpush.msra.mxu0 0.0
    %2419 = vmatpush.msra.mxu0 0.0
    %2420 = vmatpush.msra.mxu0 %v138
    %2421 = vmatpush.msra.mxu0 %v135
    %2422 = vmatpush.msra.mxu0 %v132
    %2423 = vmatpush.msra.mxu0 %v129
    %2424 = vmatmul.f32.gmra.mxu0 %v1861
    %v2425 = vpop.f32.mrf.mxu0
    %v2426 = vadd.f32 %v254, %v2425
    %2427 = vmatmul.f32.gmra.mxu0 %v1943
    %v2428 = vpop.f32.mrf.mxu0
    %v2429 = vadd.f32 %v254, %v2428
    %2430 = vdwg.mxu0
    %v2431 = vadd.f32 %v2311, %v2380
    %v2432 = vadd.f32 %v2314, %v2383
    %v2433 = vxor.u32 %v2431, 2147483648
    %v2434 = vxor.u32 %v2432, 2147483648
    %v2435 = vmul.f32 %v2433, 1.442695
    %v2436 = vpow.pop %v2435
    %v2437 = vmul.f32 %v2434, 1.442695
    %v2438 = vpow.pop %v2437
    %v2439 = vadd.f32 %v2436, 1.0
    %v2440 = vadd.f32 %v2438, 1.0
    %v2441 = vrcp.pop %v2439
    %v2442 = vmul.f32 %v2439, %v2441
    %v2443 = vsub.f32 1.0, %v2442
    %v2444 = vmul.f32 %v2441, %v2443
    %v2445 = vadd.f32 %v2441, %v2444
    %vm2446 = vweird.f32 %v2439
    %vm2447 = vweird.f32 %v2441
    %vm2448 = vmor %vm2446, %vm2447
    %v2449 = vsel %vm2448, %v2441, %v2445
    %v2450 = vand.u32 2147483647, %v2439
    %vm2451 = vcmp.eq.f32.partialorder %v2450, 8.507059e+37
    %v2452 = vand.u32 %v2439, 2147483648
    %v2453 = vor.u32 1.1754944e-38, %v2452
    %v2454 = vsel %vm2451, %v2453, %v2449
    %v2455 = vmul.f32 1.0, %v2454
    %v2456 = vrcp.pop %v2440
    %v2457 = vmul.f32 %v2440, %v2456
    %v2458 = vsub.f32 1.0, %v2457
    %v2459 = vmul.f32 %v2456, %v2458
    %v2460 = vadd.f32 %v2456, %v2459
    %vm2461 = vweird.f32 %v2440
    %vm2462 = vweird.f32 %v2456
    %vm2463 = vmor %vm2461, %vm2462
    %v2464 = vsel %vm2463, %v2456, %v2460
    %v2465 = vand.u32 2147483647, %v2440
    %vm2466 = vcmp.eq.f32.partialorder %v2465, 8.507059e+37
    %v2467 = vand.u32 %v2440, 2147483648
    %v2468 = vor.u32 1.1754944e-38, %v2467
    %v2469 = vsel %vm2466, %v2468, %v2464
    %v2470 = vmul.f32 1.0, %v2469
    %v2471 = vadd.f32 %v2334, %v2403
    %v2472 = vadd.f32 %v2337, %v2406
    %v2473 = vxor.u32 %v2471, 2147483648
    %v2474 = vxor.u32 %v2472, 2147483648
    %v2475 = vmul.f32 %v2473, 1.442695
    %v2476 = vpow.pop %v2475
    %v2477 = vmul.f32 %v2474, 1.442695
    %v2478 = vpow.pop %v2477
    %v2479 = vadd.f32 %v2476, 1.0
    %v2480 = vadd.f32 %v2478, 1.0
    %v2481 = vrcp.pop %v2479
    %v2482 = vmul.f32 %v2479, %v2481
    %v2483 = vsub.f32 1.0, %v2482
    %v2484 = vmul.f32 %v2481, %v2483
    %v2485 = vadd.f32 %v2481, %v2484
    %vm2486 = vweird.f32 %v2479
    %vm2487 = vweird.f32 %v2481
    %vm2488 = vmor %vm2486, %vm2487
    %v2489 = vsel %vm2488, %v2481, %v2485
    %v2490 = vand.u32 2147483647, %v2479
    %vm2491 = vcmp.eq.f32.partialorder %v2490, 8.507059e+37
    %v2492 = vand.u32 %v2479, 2147483648
    %v2493 = vor.u32 1.1754944e-38, %v2492
    %v2494 = vsel %vm2491, %v2493, %v2489
    %v2495 = vmul.f32 1.0, %v2494
    %v2496 = vrcp.pop %v2480
    %v2497 = vmul.f32 %v2480, %v2496
    %v2498 = vsub.f32 1.0, %v2497
    %v2499 = vmul.f32 %v2496, %v2498
    %v2500 = vadd.f32 %v2496, %v2499
    %vm2501 = vweird.f32 %v2480
    %vm2502 = vweird.f32 %v2496
    %vm2503 = vmor %vm2501, %vm2502
    %v2504 = vsel %vm2503, %v2496, %v2500
    %v2505 = vand.u32 2147483647, %v2480
    %vm2506 = vcmp.eq.f32.partialorder %v2505, 8.507059e+37
    %v2507 = vand.u32 %v2480, 2147483648
    %v2508 = vor.u32 1.1754944e-38, %v2507
    %v2509 = vsel %vm2506, %v2508, %v2504
    %v2510 = vmul.f32 1.0, %v2509
    %v2511 = vmul.f32 %v2455, %v2426
    %v2512 = vmul.f32 %v2470, %v2429
    %v2513 = vadd.f32 %v2357, %v2511
    %v2514 = vadd.f32 %v2360, %v2512
    %v2515 = vtanh.pop %v2513
    %v2516 = vtanh.pop %v2514
    %v2517 = vsub.f32 1.0, %v2495
    %v2518 = vsub.f32 1.0, %v2510
    %v2519 = vmul.f32 %v2517, %v2515
    %v2520 = vmul.f32 %v2518, %v2516
    %v2521 = vmul.f32 %v2495, %v1858
    %v2522 = vmul.f32 %v2510, %v1859
    %v2523 = vadd.f32 %v2519, %v2521
    %v2524 = vadd.f32 %v2520, %v2522
    %v2526 = vsel %vm175, %v2523, 0
    %2528 = vmatpush.xpose.msra.mxu0 0.0
    %2529 = vmatpush.xpose.msra.mxu0 0.0
    %2530 = vmatpush.xpose.msra.mxu0 0.0
    %2531 = vmatpush.xpose.msra.mxu0 0.0
    %2532 = vmatpush.xpose.msra.mxu0 0.0
    %2533 = vmatpush.xpose.msra.mxu0 0.0
    %2534 = vmatpush.xpose.msra.mxu0 0.0
    %2535 = vmatpush.xpose.msra.mxu0 0.0
    %2536 = vmatpush.xpose.msra.mxu0 0.0
    %2537 = vmatpush.xpose.msra.mxu0 0.0
    %2538 = vmatpush.xpose.msra.mxu0 0.0
    %2539 = vmatpush.xpose.msra.mxu0 0.0
    %2540 = vmatpush.xpose.msra.mxu0 0.0
    %2541 = vmatpush.xpose.msra.mxu0 0.0
    %2542 = vmatpush.xpose.msra.mxu0 0.0
    %2543 = vmatpush.xpose.msra.mxu0 %v434
    %2544 = vmatmul.f32.gmra.mxu0 %v2526
    %v2545 = vpop.f32.mrf.mxu0
    %v2546 = vadd.f32 %v428, %v2545
    %2547 = vdwg.mxu0
    %v2548 = vsel %vm456, %v2546, -inf
    %2549 = vmax.xlane.f32.xlu0 %v2548
    %v2550 = vpop.xlane.xlu0 %2549
    %v2551 = vsub.f32 %v2546, %v2550
    %v2552 = vmul.f32 %v2551, 1.442695
    %v2553 = vpow.pop %v2552
    %v2554 = vsel %vm456, %v2553, 0.0
    %2555 = vadd.xlane.f32.xlu0 %v2554
    %v2556 = vpop.xlane.xlu0 %2555
    %v2557 = vrcp.pop %v2556
    %v2558 = vmul.f32 %v2556, %v2557
    %v2559 = vsub.f32 2.0, %v2558
    %v2560 = vmul.f32 %v2557, %v2559
    %v2561 = vmul.f32 %v2553, %v2560
    %v2563 = vsel %vm456, %v2561, 0
    %2565 = vmatpush.msra.mxu0 0.0
    %2566 = vmatpush.msra.mxu0 0.0
    %2567 = vmatpush.msra.mxu0 0.0
    %2568 = vmatpush.msra.mxu0 0.0
    %2569 = vmatpush.msra.mxu0 0.0
    %2570 = vmatpush.msra.mxu0 0.0
    %2571 = vmatpush.msra.mxu0 0.0
    %2572 = vmatpush.msra.mxu0 0.0
    %2573 = vmatpush.msra.mxu0 0.0
    %2574 = vmatpush.msra.mxu0 0.0
    %2575 = vmatpush.msra.mxu0 0.0
    %2576 = vmatpush.msra.mxu0 0.0
    %2577 = vmatpush.msra.mxu0 0.0
    %2578 = vmatpush.msra.mxu0 0.0
    %2579 = vmatpush.msra.mxu0 0.0
    %2580 = vmatpush.msra.mxu0 %v158
    %2581 = vmatmul.f32.gmra.mxu0 %v2563
    %v2582 = vpop.f32.mrf.mxu0
    %v2583 = vadd.f32 0.0, %v2582
    %2584 = vdwg.mxu0
    %2585 = vst.msk [vmem:[#allocation2] sm:$0xff] %vm175, %v2583
    %2586 = vmatpush.msra.mxu0 0.0
    %2587 = vmatpush.msra.mxu0 0.0
    %2588 = vmatpush.msra.mxu0 0.0
    %2589 = vmatpush.msra.mxu0 0.0
    %2590 = vmatpush.msra.mxu0 0.0
    %2591 = vmatpush.msra.mxu0 0.0
    %2592 = vmatpush.msra.mxu0 0.0
    %2593 = vmatpush.msra.mxu0 0.0
    %2594 = vmatpush.msra.mxu0 0.0
    %2595 = vmatpush.msra.mxu0 0.0
    %2596 = vmatpush.msra.mxu0 0.0
    %2597 = vmatpush.msra.mxu0 0.0
    %2598 = vmatpush.msra.mxu0 0.0
    %2599 = vmatpush.msra.mxu0 0.0
    %2600 = vmatpush.msra.mxu0 0.0
    %2601 = vmatpush.msra.mxu0 %v149
    %2602 = vmatmul.f32.gmra.mxu0 %v2563
    %v2603 = vpop.f32.mrf.mxu0
    %v2604 = vadd.f32 0.0, %v2603
    %2605 = vdwg.mxu0
    %2606 = vst [vmem:[#allocation3] sm:$0xff] %v2604
    %v2608 = vsel %vm175, %v2524, 0
    %2610 = vmatpush.xpose.msra.mxu0 0.0
    %2611 = vmatpush.xpose.msra.mxu0 0.0
    %2612 = vmatpush.xpose.msra.mxu0 0.0
    %2613 = vmatpush.xpose.msra.mxu0 0.0
    %2614 = vmatpush.xpose.msra.mxu0 0.0
    %2615 = vmatpush.xpose.msra.mxu0 0.0
    %2616 = vmatpush.xpose.msra.mxu0 0.0
    %2617 = vmatpush.xpose.msra.mxu0 0.0
    %2618 = vmatpush.xpose.msra.mxu0 0.0
    %2619 = vmatpush.xpose.msra.mxu0 0.0
    %2620 = vmatpush.xpose.msra.mxu0 0.0
    %2621 = vmatpush.xpose.msra.mxu0 0.0
    %2622 = vmatpush.xpose.msra.mxu0 0.0
    %2623 = vmatpush.xpose.msra.mxu0 0.0
    %2624 = vmatpush.xpose.msra.mxu0 0.0
    %2625 = vmatpush.xpose.msra.mxu0 %v523
    %2626 = vmatmul.f32.gmra.mxu0 %v2608
    %v2627 = vpop.f32.mrf.mxu0
    %v2628 = vadd.f32 %v517, %v2627
    %2629 = vdwg.mxu0
    %v2630 = vsel %vm456, %v2628, -inf
    %2631 = vmax.xlane.f32.xlu0 %v2630
    %v2632 = vpop.xlane.xlu0 %2631
    %v2633 = vsub.f32 %v2628, %v2632
    %v2634 = vmul.f32 %v2633, 1.442695
    %v2635 = vpow.pop %v2634
    %v2636 = vsel %vm456, %v2635, 0.0
    %2637 = vadd.xlane.f32.xlu0 %v2636
    %v2638 = vpop.xlane.xlu0 %2637
    %v2639 = vrcp.pop %v2638
    %v2640 = vmul.f32 %v2638, %v2639
    %v2641 = vsub.f32 2.0, %v2640
    %v2642 = vmul.f32 %v2639, %v2641
    %v2643 = vmul.f32 %v2635, %v2642
    %v2645 = vsel %vm456, %v2643, 0
    %2647 = vmatpush.msra.mxu0 0.0
    %2648 = vmatpush.msra.mxu0 0.0
    %2649 = vmatpush.msra.mxu0 0.0
    %2650 = vmatpush.msra.mxu0 0.0
    %2651 = vmatpush.msra.mxu0 0.0
    %2652 = vmatpush.msra.mxu0 0.0
    %2653 = vmatpush.msra.mxu0 0.0
    %2654 = vmatpush.msra.mxu0 0.0
    %2655 = vmatpush.msra.mxu0 0.0
    %2656 = vmatpush.msra.mxu0 0.0
    %2657 = vmatpush.msra.mxu0 0.0
    %2658 = vmatpush.msra.mxu0 0.0
    %2659 = vmatpush.msra.mxu0 0.0
    %2660 = vmatpush.msra.mxu0 0.0
    %2661 = vmatpush.msra.mxu0 0.0
    %2662 = vmatpush.msra.mxu0 %v160
    %2663 = vmatmul.f32.gmra.mxu0 %v2645
    %v2664 = vpop.f32.mrf.mxu0
    %v2665 = vadd.f32 0.0, %v2664
    %2666 = vdwg.mxu0
    %2667 = vst.msk [vmem:[#allocation2 + $0x8] sm:$0xff] %vm175, %v2665
    %2668 = vmatpush.msra.mxu0 0.0
    %2669 = vmatpush.msra.mxu0 0.0
    %2670 = vmatpush.msra.mxu0 0.0
    %2671 = vmatpush.msra.mxu0 0.0
    %2672 = vmatpush.msra.mxu0 0.0
    %2673 = vmatpush.msra.mxu0 0.0
    %2674 = vmatpush.msra.mxu0 0.0
    %2675 = vmatpush.msra.mxu0 0.0
    %2676 = vmatpush.msra.mxu0 0.0
    %2677 = vmatpush.msra.mxu0 0.0
    %2678 = vmatpush.msra.mxu0 0.0
    %2679 = vmatpush.msra.mxu0 0.0
    %2680 = vmatpush.msra.mxu0 0.0
    %2681 = vmatpush.msra.mxu0 0.0
    %2682 = vmatpush.msra.mxu0 0.0
    %2683 = vmatpush.msra.mxu0 %v157
    %2684 = vmatmul.f32.gmra.mxu0 %v2645
    %v2685 = vpop.f32.mrf.mxu0
    %v2686 = vadd.f32 0.0, %v2685
    %2687 = vdwg.mxu0
    %2688 = vst [vmem:[#allocation3 + $0x8] sm:$0xff] %v2686
    %v2689 = vld [vmem:[#allocation2] sm:$0xff]
    %v2690 = vld [vmem:[#allocation2 + $0x8] sm:$0xff]
    %v2691 = vld [vmem:[#allocation3] sm:$0xff]
    %v2692 = vld [vmem:[#allocation3 + $0x8] sm:$0xff]
    %2693 = vmatpush.xpose.msra.mxu0 %v654
    %2694 = vmatpush.xpose.msra.mxu0 %v651
    %2695 = vmatpush.xpose.msra.mxu0 %v648
    %2696 = vmatpush.xpose.msra.mxu0 %v645
    %2697 = vmatpush.xpose.msra.mxu0 %v642
    %2698 = vmatpush.xpose.msra.mxu0 %v639
    %2699 = vmatpush.xpose.msra.mxu0 %v636
    %2700 = vmatpush.xpose.msra.mxu0 %v633
    %2701 = vmatpush.xpose.msra.mxu0 %v630
    %2702 = vmatpush.xpose.msra.mxu0 %v627
    %2703 = vmatpush.xpose.msra.mxu0 %v624
    %2704 = vmatpush.xpose.msra.mxu0 %v621
    %2705 = vmatpush.xpose.msra.mxu0 %v618
    %2706 = vmatpush.xpose.msra.mxu0 %v615
    %2707 = vmatpush.xpose.msra.mxu0 %v612
    %2708 = vmatpush.xpose.msra.mxu0 %v609
    %2709 = vmatmul.f32.gmra.mxu0 %v2526
    %v2710 = vpop.f32.mrf.mxu0
    %v2711 = vadd.f32 0.0, %v2710
    %2712 = vmatmul.f32.gmra.mxu0 %v2608
    %v2713 = vpop.f32.mrf.mxu0
    %v2714 = vadd.f32 0.0, %v2713
    %2715 = vdwg.mxu0
    %v2716 = vsel %vm679, %v2711, -1e+09
    %v2717 = vsel %vm679, %v2714, -1e+09
    %2718 = vmax.xlane.f32.xlu0 %v2716
    %v2719 = vpop.xlane.xlu0 %2718
    %2720 = vmax.xlane.f32.xlu0 %v2717
    %v2721 = vpop.xlane.xlu0 %2720
    %v2722 = vsub.f32 %v2716, %v2719
    %v2723 = vsub.f32 %v2717, %v2721
    %v2724 = vmul.f32 %v2722, 1.442695
    %v2725 = vpow.pop %v2724
    %v2726 = vmul.f32 %v2723, 1.442695
    %v2727 = vpow.pop %v2726
    %2728 = vadd.xlane.f32.xlu0 %v2725
    %v2729 = vpop.xlane.xlu0 %2728
    %2730 = vadd.xlane.f32.xlu0 %v2727
    %v2731 = vpop.xlane.xlu0 %2730
    %v2732 = vrcp.pop %v2729
    %v2733 = vrcp.pop %v2731
    %v2734 = vmul.f32 %v2729, %v2732
    %v2735 = vmul.f32 %v2731, %v2733
    %v2736 = vsub.f32 2.0, %v2734
    %v2737 = vsub.f32 2.0, %v2735
    %v2738 = vmul.f32 %v2732, %v2736
    %v2739 = vmul.f32 %v2733, %v2737
    %v2740 = vmul.f32 %v2725, %v2738
    %v2741 = vmul.f32 %v2727, %v2739
    %2742 = vrot.lane.b32.xlu0 %v2523, 32
    %v2743 = vpop.permute.xlu0 %2742
    %2744 = vrot.lane.b32.xlu0 %v2524, 32
    %v2745 = vpop.permute.xlu0 %2744
    %2750 = vrot.lane.b32.xlu0 %v2689, 64
    %v2751 = vpop.permute.xlu0 %2750
    %2752 = vrot.lane.b32.xlu0 %v2690, 64
    %v2753 = vpop.permute.xlu0 %2752
    %v2756 = vsel %vm175, %v2282, %v2743
    %v2757 = vsel %vm175, %v2285, %v2745
    %v2758 = vsel %vm722, %v2756, %v2751
    %v2759 = vsel %vm722, %v2757, %v2753
    %v2760 = vld [vmem:[%s10] sm:$0xff]
    %v2761 = vld [vmem:[%s10 + $0x8] sm:$0xff]
    %v2762 = vld [vmem:[%s10 + $0x10] sm:$0xff]
    %v2763 = vld [vmem:[%s10 + $0x18] sm:$0xff]
    %v2764 = vld [vmem:[%s10 + $0x20] sm:$0xff]
    %v2765 = vld [vmem:[%s10 + $0x28] sm:$0xff]
    %v2766 = vld [vmem:[%s10 + $0x30] sm:$0xff]
    %v2767 = vld [vmem:[%s10 + $0x38] sm:$0xff]
    %v2768 = vld [vmem:[%s10 + $0x40] sm:$0xff]
    %v2769 = vld [vmem:[%s10 + $0x48] sm:$0xff]
    %v2770 = vld [vmem:[%s10 + $0x50] sm:$0xff]
    %v2771 = vld [vmem:[%s10 + $0x58] sm:$0xff]
    %v2772 = vld [vmem:[#allocation4] sm:$0x1]
    %v2774 = vperm.slane %v2772, 0
    %v2777 = vsel %vm741, %v2758, 0
    %v2780 = vsel %vm741, %v2759, 0
    %2782 = vmatpush.msra.mxu0 0.0
    %2783 = vmatpush.msra.mxu0 0.0
    %2784 = vmatpush.msra.mxu0 0.0
    %2785 = vmatpush.msra.mxu0 0.0
    %2786 = vmatpush.msra.mxu0 %v2771
    %2787 = vmatpush.msra.mxu0 %v2770
    %2788 = vmatpush.msra.mxu0 %v2769
    %2789 = vmatpush.msra.mxu0 %v2768
    %2790 = vmatpush.msra.mxu0 %v2767
    %2791 = vmatpush.msra.mxu0 %v2766
    %2792 = vmatpush.msra.mxu0 %v2765
    %2793 = vmatpush.msra.mxu0 %v2764
    %2794 = vmatpush.msra.mxu0 %v2763
    %2795 = vmatpush.msra.mxu0 %v2762
    %2796 = vmatpush.msra.mxu0 %v2761
    %2797 = vmatpush.msra.mxu0 %v2760
    %2798 = vmatmul.f32.gmra.mxu0 %v2777
    %v2799 = vpop.f32.mrf.mxu0
    %v2800 = vadd.f32 %v2774, %v2799
    %2801 = vmatmul.f32.gmra.mxu0 %v2780
    %v2802 = vpop.f32.mrf.mxu0
    %v2803 = vadd.f32 %v2774, %v2802
    %2804 = vdwg.mxu0
    %v2805 = vxor.u32 %v2800, 2147483648
    %v2806 = vxor.u32 %v2803, 2147483648
    %v2807 = vmul.f32 %v2805, 1.442695
    %v2808 = vpow.pop %v2807
    %v2809 = vmul.f32 %v2806, 1.442695
    %v2810 = vpow.pop %v2809
    %v2811 = vadd.f32 %v2808, 1.0
    %v2812 = vadd.f32 %v2810, 1.0
    %v2813 = vrcp.pop %v2811
    %v2814 = vmul.f32 %v2811, %v2813
    %v2815 = vsub.f32 1.0, %v2814
    %v2816 = vmul.f32 %v2813, %v2815
    %v2817 = vadd.f32 %v2813, %v2816
    %vm2818 = vweird.f32 %v2811
    %vm2819 = vweird.f32 %v2813
    %vm2820 = vmor %vm2818, %vm2819
    %v2821 = vsel %vm2820, %v2813, %v2817
    %v2822 = vand.u32 2147483647, %v2811
    %vm2823 = vcmp.eq.f32.partialorder %v2822, 8.507059e+37
    %v2824 = vand.u32 %v2811, 2147483648
    %v2825 = vor.u32 1.1754944e-38, %v2824
    %v2826 = vsel %vm2823, %v2825, %v2821
    %v2827 = vmul.f32 1.0, %v2826
    %v2828 = vrcp.pop %v2812
    %v2829 = vmul.f32 %v2812, %v2828
    %v2830 = vsub.f32 1.0, %v2829
    %v2831 = vmul.f32 %v2828, %v2830
    %v2832 = vadd.f32 %v2828, %v2831
    %vm2833 = vweird.f32 %v2812
    %vm2834 = vweird.f32 %v2828
    %vm2835 = vmor %vm2833, %vm2834
    %v2836 = vsel %vm2835, %v2828, %v2832
    %v2837 = vand.u32 2147483647, %v2812
    %vm2838 = vcmp.eq.f32.partialorder %v2837, 8.507059e+37
    %v2839 = vand.u32 %v2812, 2147483648
    %v2840 = vor.u32 1.1754944e-38, %v2839
    %v2841 = vsel %vm2838, %v2840, %v2836
    %v2842 = vmul.f32 1.0, %v2841
    %2844 = vset.pattern.permute.xlu0 0
    %2845 = vperm.xlu0 %2844, %v2827
    %v2846 = vpop.permute.xlu0 %2845
    %2849 = vset.pattern.permute.xlu0 0
    %2850 = vperm.xlu0 %2849, %v2842
    %v2851 = vpop.permute.xlu0 %2850
    %v2853 = vmul.f32 %v2846, %v2740
    %v2854 = vmul.f32 %v2851, %v2741
    %v2855 = vsub.f32 1.0, %v2827
    %v2856 = vsub.f32 1.0, %v2842
    %2858 = vset.pattern.permute.xlu0 0
    %2859 = vperm.xlu0 %2858, %v2855
    %v2860 = vpop.permute.xlu0 %2859
    %2863 = vset.pattern.permute.xlu0 0
    %2864 = vperm.xlu0 %2863, %v2856
    %v2865 = vpop.permute.xlu0 %2864
    %v2867 = vmul.f32 %v2860, %v2691
    %v2868 = vmul.f32 %v2865, %v2692
    %v2869 = vadd.f32 %v2853, %v2867
    %v2870 = vadd.f32 %v2854, %v2868
    %v2872 = vrot.slane %v2869, 1
    %v2873 = vrot.slane %v2869, 2
    %2876 = vst [vmem:[#allocation11 + $0x3] sm:$0x1] %v2869
    %2877 = vst [vmem:[#allocation11 + $0x7] sm:$0x1] %v2872
    %2878 = vst [vmem:[#allocation11 + $0xb] sm:$0x1] %v2873
    %v2880 = vrot.slane %v2870, 1
    %v2881 = vrot.slane %v2870, 2
    %2884 = vst [vmem:[%s850 + $0x3] sm:$0x1] %v2870
    %2885 = vst [vmem:[%s850 + $0x7] sm:$0x1] %v2880
    %2886 = vst [vmem:[%s850 + $0xb] sm:$0x1] %v2881
    // Predicated region
    $region70: #{tpu_custom_call.1} parent=1 // pred_check
      _
    $region71: #{tpu_custom_call.1} parent=1 // pred_check_branch
      %2888 = sbr.rel (0) target = $region73
    $region72: #{tpu_custom_call.1} parent=1 // pred_region
      %2890 = vsyncadd [#allocation7], 0
      %s2891 = sshll.u32 [#allocation11], 4
      %s2892 = int_to_ptr.vmem [resolvable:$true] %s2891
      %s2893 = sshll.u32 %s14, 4
      %s2894 = int_to_ptr.hbm [resolvable:$true] %s2893
      %2899 = dma.vmem_to_hbm [thread:$0]  %s2892, 384, %s2894, [#allocation7], 64, 64, 4
    $region73: #{tpu_custom_call.1} parent=1 // pred_fallthru
      _
    // Predicated region
    $region74: #{tpu_custom_call.1} parent=1 // pred_check
      _
    $region75: #{tpu_custom_call.1} parent=1 // pred_check_branch
      %2901 = sbr.rel (0) target = $region77
    $region76: #{tpu_custom_call.1} parent=1 // pred_region
      _
    $region77: #{tpu_custom_call.1} parent=1 // pred_fallthru
      _
    // Predicated region
    $region78: #{tpu_custom_call.1} parent=1 // pred_check
      _
    $region79: #{tpu_custom_call.1} parent=1 // pred_check_branch
      %2903 = sbr.rel (0) target = $region81
    $region80: #{tpu_custom_call.1} parent=1 // pred_region
      %2905 = dma.done [#allocation7], 384
    $region81: #{tpu_custom_call.1} parent=1 // pred_fallthru
      _
    // Predicated region
    $region82: #{tpu_custom_call.1} parent=1 // pred_check
      _
    $region83: #{tpu_custom_call.1} parent=1 // pred_check_branch
      %2907 = sbr.rel (0) target = $region85
    $region84: #{tpu_custom_call.1} parent=1 // pred_region
      _
    $region85: #{tpu_custom_call.1} parent=1 // pred_fallthru
      _
    %2908 = vsyncpa [#allocation6], 1
    %2909 = vsyncpa [#allocation9], 1
    %2910 = vsyncpa [#allocation7], 1

// kernel: tpu_custom_call.1
$region0: #{tpu_custom_call.1}
  #allocation0 [shape = 'u32[]', space=smem, size = 0x4, offset = 0x4, fixed_abs, tag = 'smem constant byte address 0x4 - core index']
  #allocation1 [shape = 'u32[72,128]{1,0:T(1,128)}', space=vmem, size = 0x9000, scoped, tag = 'internal scratch']
  #allocation2 [shape = 'f32[16,32]{1,0:T(8,128)}', space=vmem, size = 0x2000, scoped, tag = 'scratch operand']
  #allocation3 [shape = 'f32[16,128]{1,0:T(8,128)}', space=vmem, size = 0x2000, scoped, tag = 'scratch operand']
  #allocation4 [shape = 'f32[1,1]{1,0:T(1,128)S(1)}', space=vmem, size = 0x200, scoped, tag = 'scoped memory for tpu_custom_call.1']
  %s0 = inlined_call_operand.vmem [shape: f32[16,32], index: 0, kind: input, shape index: {}]
  %s1 = inlined_call_operand.hbm [shape: f32[16,32], index: 1, kind: input, shape index: {}]
  %s2 = inlined_call_operand.hbm [shape: f32[2,8,32], index: 2, kind: input, shape index: {}]
  %s3 = inlined_call_operand.hbm [shape: f32[2,1,8], index: 3, kind: input, shape index: {}]
  %s4 = inlined_call_operand.vmem [shape: s32[2,8,1], index: 4, kind: input, shape index: {}]
  %s5 = inlined_call_operand.vmem [shape: f32[128,32], index: 5, kind: input, shape index: {}]
  %s6 = inlined_call_operand.vmem [shape: f32[32,384], index: 6, kind: input, shape index: {}]
  %s7 = inlined_call_operand.vmem [shape: f32[32,384], index: 7, kind: input, shape index: {}]
  %s8 = inlined_call_operand.vmem [shape: f32[1,384], index: 8, kind: input, shape index: {}]
  %s9 = inlined_call_operand.vmem [shape: f32[1,384], index: 9, kind: input, shape index: {}]
  %s10 = inlined_call_operand.vmem [shape: f32[96,1], index: 10, kind: input, shape index: {}]
  %s11 = inlined_call_operand.<no memory space> [shape: f32[1,1], index: 11, kind: input, shape index: {}]
  %s12 = inlined_call_operand.vmem [shape: f32[32,128], index: 12, kind: input, shape index: {}]
  %s13 = inlined_call_operand.vmem [shape: f32[1,128], index: 13, kind: input, shape index: {}]
  %s14 = inlined_call_operand.hbm [shape: f32[2,3,4,128], index: 14, kind: output, shape index: {0}]
  %s15 = inlined_call_operand.vmem [shape: f32[2,3,128], index: 15, kind: output, shape index: {1}]
  %16 = xla_tuple %s14, %s15
  %s17 = sld [smem:[#allocation0]]
  $region86: #{tpu_custom_call.1} parent=0
    _
  %s19 = ssub.s32 1, %s17
  %s20 = scalar_select 0, %s19, %s17
  %v21 = vstv %s11
  %22 = vst [vmem:[#allocation4] sm:$0x1] %v21
  $region1: #{tpu_custom_call.1} parent=0
    #allocation5 [shape = 'u8[8192]{0}', space=vmem, size = 0x2000, scoped, tag = 'input window, operand 1, single buffered']
    #allocation6 [shape = 's32[1]{0}', space=sflag, size = 0x4, scoped, tag = 'scoped memory for tpu_custom_call.1']
    #allocation7 [shape = 's32[1]{0}', space=sflag, size = 0x4, scoped, tag = 'scoped memory for tpu_custom_call.1']
    #allocation8 [shape = 'u8[8192]{0}', space=vmem, size = 0x2000, scoped, tag = 'input window, operand 2, single buffered']
    #allocation9 [shape = 's32[1]{0}', space=sflag, size = 0x4, scoped, tag = 'scoped memory for tpu_custom_call.1']
    #allocation10 [shape = 'u8[1024]{0}', space=vmem, size = 0x400, scoped, tag = 'input window, operand 3, single buffered']
    #allocation11 [shape = 'u8[12288]{0}', space=vmem, size = 0x3000, scoped, tag = 'output window, operand 0, single buffered']
    %23 = vsyncpa [#allocation6], 0
    %24 = vsyncpa [#allocation9], 0
    %25 = vsyncpa [#allocation7], 0
    // Predicated region
    $region2: #{tpu_custom_call.1} parent=1 // pred_check
      _
    $region3: #{tpu_custom_call.1} parent=1 // pred_check_branch
      %27 = sbr.rel (0) target = $region5
    $region4: #{tpu_custom_call.1} parent=1 // pred_region
      _
    $region5: #{tpu_custom_call.1} parent=1 // pred_fallthru
      _
    // Predicated region
    $region6: #{tpu_custom_call.1} parent=1 // pred_check
      _
    $region7: #{tpu_custom_call.1} parent=1 // pred_check_branch
      %29 = sbr.rel (0) target = $region9
    $region8: #{tpu_custom_call.1} parent=1 // pred_region
      %31 = vsyncadd [#allocation6], 0
      %s32 = sshll.u32 %s1, 4
      %s33 = int_to_ptr.hbm [resolvable:$true] %s32
      %s34 = sshll.u32 [#allocation5], 4
      %s35 = int_to_ptr.vmem [resolvable:$true] %s34
      %40 = dma.hbm_to_vmem [thread:$0]  %s33, 256, %s35, [#allocation6], 128, 128, 8
    $region9: #{tpu_custom_call.1} parent=1 // pred_fallthru
      _
    // Predicated region
    $region10: #{tpu_custom_call.1} parent=1 // pred_check
      _
    $region11: #{tpu_custom_call.1} parent=1 // pred_check_branch
      %42 = sbr.rel (0) target = $region13
    $region12: #{tpu_custom_call.1} parent=1 // pred_region
      %44 = vsyncadd [#allocation9], 0
      %s45 = sshll.u32 %s2, 4
      %s46 = int_to_ptr.hbm [resolvable:$true] %s45
      %s47 = sshll.u32 [#allocation8], 4
      %s48 = int_to_ptr.vmem [resolvable:$true] %s47
      %53 = dma.hbm_to_vmem [thread:$0]  %s46, 256, %s48, [#allocation9], 128, 128, 8
    $region13: #{tpu_custom_call.1} parent=1 // pred_fallthru
      _
    // Predicated region
    $region14: #{tpu_custom_call.1} parent=1 // pred_check
      _
    $region15: #{tpu_custom_call.1} parent=1 // pred_check_branch
      %55 = sbr.rel (0) target = $region17
    $region16: #{tpu_custom_call.1} parent=1 // pred_region
      %57 = vsyncadd [#allocation9], 0
      %s58 = sshll.u32 %s3, 4
      %s59 = int_to_ptr.hbm [resolvable:$true] %s58
      %s60 = sshll.u32 [#allocation10], 4
      %s61 = int_to_ptr.vmem [resolvable:$true] %s60
      %66 = dma.hbm_to_vmem [thread:$0]  %s59, 32, %s61, [#allocation9], 16, 16, 1
    $region17: #{tpu_custom_call.1} parent=1 // pred_fallthru
      _
    // Predicated region
    $region18: #{tpu_custom_call.1} parent=1 // pred_check
      _
    $region19: #{tpu_custom_call.1} parent=1 // pred_check_branch
      %68 = sbr.rel (0) target = $region21
    $region20: #{tpu_custom_call.1} parent=1 // pred_region
      _
    $region21: #{tpu_custom_call.1} parent=1 // pred_fallthru
      _
    // Predicated region
    $region22: #{tpu_custom_call.1} parent=1 // pred_check
      _
    $region23: #{tpu_custom_call.1} parent=1 // pred_check_branch
      %70 = sbr.rel (0) target = $region25
    $region24: #{tpu_custom_call.1} parent=1 // pred_region
      _
    $region25: #{tpu_custom_call.1} parent=1 // pred_fallthru
      _
    // Predicated region
    $region26: #{tpu_custom_call.1} parent=1 // pred_check
      _
    $region27: #{tpu_custom_call.1} parent=1 // pred_check_branch
      %72 = sbr.rel (0) target = $region29
    $region28: #{tpu_custom_call.1} parent=1 // pred_region
      _
    $region29: #{tpu_custom_call.1} parent=1 // pred_fallthru
      _
    // Predicated region
    $region30: #{tpu_custom_call.1} parent=1 // pred_check
      _
    $region31: #{tpu_custom_call.1} parent=1 // pred_check_branch
      %74 = sbr.rel (0) target = $region33
    $region32: #{tpu_custom_call.1} parent=1 // pred_region
      _
    $region33: #{tpu_custom_call.1} parent=1 // pred_fallthru
      _
    // Predicated region
    $region34: #{tpu_custom_call.1} parent=1 // pred_check
      _
    $region35: #{tpu_custom_call.1} parent=1 // pred_check_branch
      %76 = sbr.rel (0) target = $region37
    $region36: #{tpu_custom_call.1} parent=1 // pred_region
      _
    $region37: #{tpu_custom_call.1} parent=1 // pred_fallthru
      _
    // Predicated region
    $region38: #{tpu_custom_call.1} parent=1 // pred_check
      _
    $region39: #{tpu_custom_call.1} parent=1 // pred_check_branch
      %78 = sbr.rel (0) target = $region41
    $region40: #{tpu_custom_call.1} parent=1 // pred_region
      _
    $region41: #{tpu_custom_call.1} parent=1 // pred_fallthru
      _
    // Predicated region
    $region42: #{tpu_custom_call.1} parent=1 // pred_check
      _
    $region43: #{tpu_custom_call.1} parent=1 // pred_check_branch
      %80 = sbr.rel (0) target = $region45
    $region44: #{tpu_custom_call.1} parent=1 // pred_region
      _
    $region45: #{tpu_custom_call.1} parent=1 // pred_fallthru
      _
    // Predicated region
    $region46: #{tpu_custom_call.1} parent=1 // pred_check
      _
    $region47: #{tpu_custom_call.1} parent=1 // pred_check_branch
      %82 = sbr.rel (0) target = $region49
    $region48: #{tpu_custom_call.1} parent=1 // pred_region
      _
    $region49: #{tpu_custom_call.1} parent=1 // pred_fallthru
      _
    // Predicated region
    $region50: #{tpu_custom_call.1} parent=1 // pred_check
      _
    $region51: #{tpu_custom_call.1} parent=1 // pred_check_branch
      %84 = sbr.rel (0) target = $region53
    $region52: #{tpu_custom_call.1} parent=1 // pred_region
      _
    $region53: #{tpu_custom_call.1} parent=1 // pred_fallthru
      _
    // Predicated region
    $region54: #{tpu_custom_call.1} parent=1 // pred_check
      _
    $region55: #{tpu_custom_call.1} parent=1 // pred_check_branch
      %86 = sbr.rel (0) target = $region57
    $region56: #{tpu_custom_call.1} parent=1 // pred_region
      _
    $region57: #{tpu_custom_call.1} parent=1 // pred_fallthru
      _
    // Predicated region
    $region58: #{tpu_custom_call.1} parent=1 // pred_check
      _
    $region59: #{tpu_custom_call.1} parent=1 // pred_check_branch
      %88 = sbr.rel (0) target = $region61
    $region60: #{tpu_custom_call.1} parent=1 // pred_region
      %90 = dma.done [#allocation6], 256
    $region61: #{tpu_custom_call.1} parent=1 // pred_fallthru
      _
    // Predicated region
    $region62: #{tpu_custom_call.1} parent=1 // pred_check
      _
    $region63: #{tpu_custom_call.1} parent=1 // pred_check_branch
      %92 = sbr.rel (0) target = $region65
    $region64: #{tpu_custom_call.1} parent=1 // pred_region
      %94 = dma.done [#allocation9], 256
    $region65: #{tpu_custom_call.1} parent=1 // pred_fallthru
      _
    // Predicated region
    $region66: #{tpu_custom_call.1} parent=1 // pred_check
      _
    $region67: #{tpu_custom_call.1} parent=1 // pred_check_branch
      %96 = sbr.rel (0) target = $region69
    $region68: #{tpu_custom_call.1} parent=1 // pred_region
      %98 = dma.done [#allocation9], 32
    $region69: #{tpu_custom_call.1} parent=1 // pred_fallthru
      _
    %v99 = vld [vmem:[%s5] sm:$0xff]
    %v100 = vld [vmem:[%s5 + $0x8] sm:$0xff]
    %v101 = vld [vmem:[%s5 + $0x10] sm:$0xff]
    %v102 = vld [vmem:[%s5 + $0x18] sm:$0xff]
    %v103 = vld [vmem:[%s5 + $0x20] sm:$0xff]
    %v104 = vld [vmem:[%s5 + $0x28] sm:$0xff]
    %v105 = vld [vmem:[%s5 + $0x30] sm:$0xff]
    %v106 = vld [vmem:[%s5 + $0x38] sm:$0xff]
    %v107 = vld [vmem:[%s5 + $0x40] sm:$0xff]
    %v108 = vld [vmem:[%s5 + $0x48] sm:$0xff]
    %v109 = vld [vmem:[%s5 + $0x50] sm:$0xff]
    %v110 = vld [vmem:[%s5 + $0x58] sm:$0xff]
    %v111 = vld [vmem:[%s5 + $0x60] sm:$0xff]
    %v112 = vld [vmem:[%s5 + $0x68] sm:$0xff]
    %v113 = vld [vmem:[%s5 + $0x70] sm:$0xff]
    %v114 = vld [vmem:[%s5 + $0x78] sm:$0xff]
    %v115 = vld [vmem:[%s6] sm:$0xff]
    %v116 = vld [vmem:[%s6 + $0x8] sm:$0xff]
    %v117 = vld [vmem:[%s6 + $0x10] sm:$0xff]
    %v118 = vld [vmem:[%s6 + $0x18] sm:$0xff]
    %v119 = vld [vmem:[%s6 + $0x20] sm:$0xff]
    %v120 = vld [vmem:[%s6 + $0x28] sm:$0xff]
    %v121 = vld [vmem:[%s6 + $0x30] sm:$0xff]
    %v122 = vld [vmem:[%s6 + $0x38] sm:$0xff]
    %v123 = vld [vmem:[%s6 + $0x40] sm:$0xff]
    %v124 = vld [vmem:[%s6 + $0x48] sm:$0xff]
    %v125 = vld [vmem:[%s6 + $0x50] sm:$0xff]
    %v126 = vld [vmem:[%s6 + $0x58] sm:$0xff]
    %v127 = vld [vmem:[%s7] sm:$0xff]
    %v128 = vld [vmem:[%s7 + $0x8] sm:$0xff]
    %v129 = vld [vmem:[%s7 + $0x10] sm:$0xff]
    %v130 = vld [vmem:[%s7 + $0x18] sm:$0xff]
    %v131 = vld [vmem:[%s7 + $0x20] sm:$0xff]
    %v132 = vld [vmem:[%s7 + $0x28] sm:$0xff]
    %v133 = vld [vmem:[%s7 + $0x30] sm:$0xff]
    %v134 = vld [vmem:[%s7 + $0x38] sm:$0xff]
    %v135 = vld [vmem:[%s7 + $0x40] sm:$0xff]
    %v136 = vld [vmem:[%s7 + $0x48] sm:$0xff]
    %v137 = vld [vmem:[%s7 + $0x50] sm:$0xff]
    %v138 = vld [vmem:[%s7 + $0x58] sm:$0xff]
    %v139 = vld [vmem:[%s8] sm:$0x7]
    %v140 = vld [vmem:[%s9] sm:$0x7]
    %v141 = vlaneseq
    %v142 = vand.u32 %v141, 127
    %v143 = vld [vmem:[%s4] sm:$0xff]
    %144 = vset.pattern.permute.xlu0 0
    %145 = vperm.xlu0 %144, %v143
    %v146 = vpop.permute.xlu0 %145
    %vm147 = vcmp.eq.s32.totalorder %v146, %v142
    %v148 = vsel %vm147, 1, 0
    %v149 = vcvt.s32.f32 %v148
    %s150 = scalar_lea.vmem %s4, 8
    %v151 = vld [vmem:[%s150] sm:$0xff]
    %152 = vset.pattern.permute.xlu0 0
    %153 = vperm.xlu0 %152, %v151
    %v154 = vpop.permute.xlu0 %153
    %vm155 = vcmp.eq.s32.totalorder %v154, %v142
    %v156 = vsel %vm155, 1, 0
    %v157 = vcvt.s32.f32 %v156
    %v158 = vld [vmem:[#allocation8] sm:$0xff]
    %s159 = scalar_lea.vmem [#allocation8], 8
    %v160 = vld [vmem:[%s159] sm:$0xff]
    %v161 = vld [vmem:[#allocation10] sm:$0x1]
    %s162 = scalar_lea.vmem [#allocation10], 1
    %v163 = vld [vmem:[%s162] sm:$0x1]
    %v164 = vld [vmem:[%s0] sm:$0xff]
    %v165 = vld [vmem:[%s0 + $0x8] sm:$0xff]
    %v166 = vld [vmem:[#allocation5] sm:$0xff]
    %v167 = vld [vmem:[#allocation5 + $0x8] sm:$0xff]
    %v169 = vperm.slane %v139, 0
    %v170 = vperm.slane %v139, 1
    %v171 = vperm.slane %v139, 2
    %vm175 = vcmask 261120
    %v177 = vsel %vm175, %v164, 0
    %v180 = vsel %vm175, %v165, 0
    %182 = vmatpush.msra.mxu0 0.0
    %183 = vmatpush.msra.mxu0 0.0
    %184 = vmatpush.msra.mxu0 0.0
    %185 = vmatpush.msra.mxu0 0.0
    %186 = vmatpush.msra.mxu0 0.0
    %187 = vmatpush.msra.mxu0 0.0
    %188 = vmatpush.msra.mxu0 0.0
    %189 = vmatpush.msra.mxu0 0.0
    %190 = vmatpush.msra.mxu0 0.0
    %191 = vmatpush.msra.mxu0 0.0
    %192 = vmatpush.msra.mxu0 0.0
    %193 = vmatpush.msra.mxu0 0.0
    %194 = vmatpush.msra.mxu0 %v124
    %195 = vmatpush.msra.mxu0 %v121
    %196 = vmatpush.msra.mxu0 %v118
    %197 = vmatpush.msra.mxu0 %v115
    %198 = vmatmul.f32.gmra.mxu0 %v177
    %v199 = vpop.f32.mrf.mxu0
    %v200 = vadd.f32 %v169, %v199
    %201 = vmatmul.f32.gmra.mxu0 %v180
    %v202 = vpop.f32.mrf.mxu0
    %v203 = vadd.f32 %v169, %v202
    %204 = vdwg.mxu0
    %205 = vmatpush.msra.mxu0 0.0
    %206 = vmatpush.msra.mxu0 0.0
    %207 = vmatpush.msra.mxu0 0.0
    %208 = vmatpush.msra.mxu0 0.0
    %209 = vmatpush.msra.mxu0 0.0
    %210 = vmatpush.msra.mxu0 0.0
    %211 = vmatpush.msra.mxu0 0.0
    %212 = vmatpush.msra.mxu0 0.0
    %213 = vmatpush.msra.mxu0 0.0
    %214 = vmatpush.msra.mxu0 0.0
    %215 = vmatpush.msra.mxu0 0.0
    %216 = vmatpush.msra.mxu0 0.0
    %217 = vmatpush.msra.mxu0 %v125
    %218 = vmatpush.msra.mxu0 %v122
    %219 = vmatpush.msra.mxu0 %v119
    %220 = vmatpush.msra.mxu0 %v116
    %221 = vmatmul.f32.gmra.mxu0 %v177
    %v222 = vpop.f32.mrf.mxu0
    %v223 = vadd.f32 %v170, %v222
    %224 = vmatmul.f32.gmra.mxu0 %v180
    %v225 = vpop.f32.mrf.mxu0
    %v226 = vadd.f32 %v170, %v225
    %227 = vdwg.mxu0
    %228 = vmatpush.msra.mxu0 0.0
    %229 = vmatpush.msra.mxu0 0.0
    %230 = vmatpush.msra.mxu0 0.0
    %231 = vmatpush.msra.mxu0 0.0
    %232 = vmatpush.msra.mxu0 0.0
    %233 = vmatpush.msra.mxu0 0.0
    %234 = vmatpush.msra.mxu0 0.0
    %235 = vmatpush.msra.mxu0 0.0
    %236 = vmatpush.msra.mxu0 0.0
    %237 = vmatpush.msra.mxu0 0.0
    %238 = vmatpush.msra.mxu0 0.0
    %239 = vmatpush.msra.mxu0 0.0
    %240 = vmatpush.msra.mxu0 %v126
    %241 = vmatpush.msra.mxu0 %v123
    %242 = vmatpush.msra.mxu0 %v120
    %243 = vmatpush.msra.mxu0 %v117
    %244 = vmatmul.f32.gmra.mxu0 %v177
    %v245 = vpop.f32.mrf.mxu0
    %v246 = vadd.f32 %v171, %v245
    %247 = vmatmul.f32.gmra.mxu0 %v180
    %v248 = vpop.f32.mrf.mxu0
    %v249 = vadd.f32 %v171, %v248
    %250 = vdwg.mxu0
    %v252 = vperm.slane %v140, 0
    %v253 = vperm.slane %v140, 1
    %v254 = vperm.slane %v140, 2
    %v259 = vsel %vm175, %v166, 0
    %v262 = vsel %vm175, %v167, 0
    %264 = vmatpush.msra.mxu0 0.0
    %265 = vmatpush.msra.mxu0 0.0
    %266 = vmatpush.msra.mxu0 0.0
    %267 = vmatpush.msra.mxu0 0.0
    %268 = vmatpush.msra.mxu0 0.0
    %269 = vmatpush.msra.mxu0 0.0
    %270 = vmatpush.msra.mxu0 0.0
    %271 = vmatpush.msra.mxu0 0.0
    %272 = vmatpush.msra.mxu0 0.0
    %273 = vmatpush.msra.mxu0 0.0
    %274 = vmatpush.msra.mxu0 0.0
    %275 = vmatpush.msra.mxu0 0.0
    %276 = vmatpush.msra.mxu0 %v136
    %277 = vmatpush.msra.mxu0 %v133
    %278 = vmatpush.msra.mxu0 %v130
    %279 = vmatpush.msra.mxu0 %v127
    %280 = vmatmul.f32.gmra.mxu0 %v259
    %v281 = vpop.f32.mrf.mxu0
    %v282 = vadd.f32 %v252, %v281
    %283 = vmatmul.f32.gmra.mxu0 %v262
    %v284 = vpop.f32.mrf.mxu0
    %v285 = vadd.f32 %v252, %v284
    %286 = vdwg.mxu0
    %287 = vmatpush.msra.mxu0 0.0
    %288 = vmatpush.msra.mxu0 0.0
    %289 = vmatpush.msra.mxu0 0.0
    %290 = vmatpush.msra.mxu0 0.0
    %291 = vmatpush.msra.mxu0 0.0
    %292 = vmatpush.msra.mxu0 0.0
    %293 = vmatpush.msra.mxu0 0.0
    %294 = vmatpush.msra.mxu0 0.0
    %295 = vmatpush.msra.mxu0 0.0
    %296 = vmatpush.msra.mxu0 0.0
    %297 = vmatpush.msra.mxu0 0.0
    %298 = vmatpush.msra.mxu0 0.0
    %299 = vmatpush.msra.mxu0 %v137
    %300 = vmatpush.msra.mxu0 %v134
    %301 = vmatpush.msra.mxu0 %v131
    %302 = vmatpush.msra.mxu0 %v128
    %303 = vmatmul.f32.gmra.mxu0 %v259
    %v304 = vpop.f32.mrf.mxu0
    %v305 = vadd.f32 %v253, %v304
    %306 = vmatmul.f32.gmra.mxu0 %v262
    %v307 = vpop.f32.mrf.mxu0
    %v308 = vadd.f32 %v253, %v307
    %309 = vdwg.mxu0
    %310 = vmatpush.msra.mxu0 0.0
    %311 = vmatpush.msra.mxu0 0.0
    %312 = vmatpush.msra.mxu0 0.0
    %313 = vmatpush.msra.mxu0 0.0
    %314 = vmatpush.msra.mxu0 0.0
    %315 = vmatpush.msra.mxu0 0.0
    %316 = vmatpush.msra.mxu0 0.0
    %317 = vmatpush.msra.mxu0 0.0
    %318 = vmatpush.msra.mxu0 0.0
    %319 = vmatpush.msra.mxu0 0.0
    %320 = vmatpush.msra.mxu0 0.0
    %321 = vmatpush.msra.mxu0 0.0
    %322 = vmatpush.msra.mxu0 %v138
    %323 = vmatpush.msra.mxu0 %v135
    %324 = vmatpush.msra.mxu0 %v132
    %325 = vmatpush.msra.mxu0 %v129
    %326 = vmatmul.f32.gmra.mxu0 %v259
    %v327 = vpop.f32.mrf.mxu0
    %v328 = vadd.f32 %v254, %v327
    %329 = vmatmul.f32.gmra.mxu0 %v262
    %v330 = vpop.f32.mrf.mxu0
    %v331 = vadd.f32 %v254, %v330
    %332 = vdwg.mxu0
    %v333 = vadd.f32 %v200, %v282
    %v334 = vadd.f32 %v203, %v285
    %v335 = vxor.u32 %v333, 2147483648
    %v336 = vxor.u32 %v334, 2147483648
    %v337 = vmul.f32 %v335, 1.442695
    %v338 = vpow.pop %v337
    %v339 = vmul.f32 %v336, 1.442695
    %v340 = vpow.pop %v339
    %v341 = vadd.f32 %v338, 1.0
    %v342 = vadd.f32 %v340, 1.0
    %v343 = vrcp.pop %v341
    %v344 = vmul.f32 %v341, %v343
    %v345 = vsub.f32 1.0, %v344
    %v346 = vmul.f32 %v343, %v345
    %v347 = vadd.f32 %v343, %v346
    %vm348 = vweird.f32 %v341
    %vm349 = vweird.f32 %v343
    %vm350 = vmor %vm348, %vm349
    %v351 = vsel %vm350, %v343, %v347
    %v352 = vand.u32 2147483647, %v341
    %vm353 = vcmp.eq.f32.partialorder %v352, 8.507059e+37
    %v354 = vand.u32 %v341, 2147483648
    %v355 = vor.u32 1.1754944e-38, %v354
    %v356 = vsel %vm353, %v355, %v351
    %v357 = vmul.f32 1.0, %v356
    %v358 = vrcp.pop %v342
    %v359 = vmul.f32 %v342, %v358
    %v360 = vsub.f32 1.0, %v359
    %v361 = vmul.f32 %v358, %v360
    %v362 = vadd.f32 %v358, %v361
    %vm363 = vweird.f32 %v342
    %vm364 = vweird.f32 %v358
    %vm365 = vmor %vm363, %vm364
    %v366 = vsel %vm365, %v358, %v362
    %v367 = vand.u32 2147483647, %v342
    %vm368 = vcmp.eq.f32.partialorder %v367, 8.507059e+37
    %v369 = vand.u32 %v342, 2147483648
    %v370 = vor.u32 1.1754944e-38, %v369
    %v371 = vsel %vm368, %v370, %v366
    %v372 = vmul.f32 1.0, %v371
    %v373 = vadd.f32 %v223, %v305
    %v374 = vadd.f32 %v226, %v308
    %v375 = vxor.u32 %v373, 2147483648
    %v376 = vxor.u32 %v374, 2147483648
    %v377 = vmul.f32 %v375, 1.442695
    %v378 = vpow.pop %v377
    %v379 = vmul.f32 %v376, 1.442695
    %v380 = vpow.pop %v379
    %v381 = vadd.f32 %v378, 1.0
    %v382 = vadd.f32 %v380, 1.0
    %v383 = vrcp.pop %v381
    %v384 = vmul.f32 %v381, %v383
    %v385 = vsub.f32 1.0, %v384
    %v386 = vmul.f32 %v383, %v385
    %v387 = vadd.f32 %v383, %v386
    %vm388 = vweird.f32 %v381
    %vm389 = vweird.f32 %v383
    %vm390 = vmor %vm388, %vm389
    %v391 = vsel %vm390, %v383, %v387
    %v392 = vand.u32 2147483647, %v381
    %vm393 = vcmp.eq.f32.partialorder %v392, 8.507059e+37
    %v394 = vand.u32 %v381, 2147483648
    %v395 = vor.u32 1.1754944e-38, %v394
    %v396 = vsel %vm393, %v395, %v391
    %v397 = vmul.f32 1.0, %v396
    %v398 = vrcp.pop %v382
    %v399 = vmul.f32 %v382, %v398
    %v400 = vsub.f32 1.0, %v399
    %v401 = vmul.f32 %v398, %v400
    %v402 = vadd.f32 %v398, %v401
    %vm403 = vweird.f32 %v382
    %vm404 = vweird.f32 %v398
    %vm405 = vmor %vm403, %vm404
    %v406 = vsel %vm405, %v398, %v402
    %v407 = vand.u32 2147483647, %v382
    %vm408 = vcmp.eq.f32.partialorder %v407, 8.507059e+37
    %v409 = vand.u32 %v382, 2147483648
    %v410 = vor.u32 1.1754944e-38, %v409
    %v411 = vsel %vm408, %v410, %v406
    %v412 = vmul.f32 1.0, %v411
    %v413 = vmul.f32 %v357, %v328
    %v414 = vmul.f32 %v372, %v331
    %v415 = vadd.f32 %v246, %v413
    %v416 = vadd.f32 %v249, %v414
    %v417 = vtanh.pop %v415
    %v418 = vtanh.pop %v416
    %v419 = vsub.f32 1.0, %v397
    %v420 = vsub.f32 1.0, %v412
    %v421 = vmul.f32 %v419, %v417
    %v422 = vmul.f32 %v420, %v418
    %v423 = vmul.f32 %v397, %v166
    %v424 = vmul.f32 %v412, %v167
    %v425 = vadd.f32 %v421, %v423
    %v426 = vadd.f32 %v422, %v424
    %v428 = vperm.slane %v161, 0
    %v431 = vsel %vm175, %v425, 0
    %v434 = vsel %vm175, %v158, 0
    %436 = vmatpush.xpose.msra.mxu0 0.0
    %437 = vmatpush.xpose.msra.mxu0 0.0
    %438 = vmatpush.xpose.msra.mxu0 0.0
    %439 = vmatpush.xpose.msra.mxu0 0.0
    %440 = vmatpush.xpose.msra.mxu0 0.0
    %441 = vmatpush.xpose.msra.mxu0 0.0
    %442 = vmatpush.xpose.msra.mxu0 0.0
    %443 = vmatpush.xpose.msra.mxu0 0.0
    %444 = vmatpush.xpose.msra.mxu0 0.0
    %445 = vmatpush.xpose.msra.mxu0 0.0
    %446 = vmatpush.xpose.msra.mxu0 0.0
    %447 = vmatpush.xpose.msra.mxu0 0.0
    %448 = vmatpush.xpose.msra.mxu0 0.0
    %449 = vmatpush.xpose.msra.mxu0 0.0
    %450 = vmatpush.xpose.msra.mxu0 0.0
    %451 = vmatpush.xpose.msra.mxu0 %v434
    %452 = vmatmul.f32.gmra.mxu0 %v431
    %v453 = vpop.f32.mrf.mxu0
    %v454 = vadd.f32 %v428, %v453
    %455 = vdwg.mxu0
    %vm456 = vcmask 64512
    %v457 = vsel %vm456, %v454, -inf
    %458 = vmax.xlane.f32.xlu0 %v457
    %v459 = vpop.xlane.xlu0 %458
    %v460 = vsub.f32 %v454, %v459
    %v461 = vmul.f32 %v460, 1.442695
    %v462 = vpow.pop %v461
    %v463 = vsel %vm456, %v462, 0.0
    %464 = vadd.xlane.f32.xlu0 %v463
    %v465 = vpop.xlane.xlu0 %464
    %v466 = vrcp.pop %v465
    %v467 = vmul.f32 %v465, %v466
    %v468 = vsub.f32 2.0, %v467
    %v469 = vmul.f32 %v466, %v468
    %v470 = vmul.f32 %v462, %v469
    %v472 = vsel %vm456, %v470, 0
    %474 = vmatpush.msra.mxu0 0.0
    %475 = vmatpush.msra.mxu0 0.0
    %476 = vmatpush.msra.mxu0 0.0
    %477 = vmatpush.msra.mxu0 0.0
    %478 = vmatpush.msra.mxu0 0.0
    %479 = vmatpush.msra.mxu0 0.0
    %480 = vmatpush.msra.mxu0 0.0
    %481 = vmatpush.msra.mxu0 0.0
    %482 = vmatpush.msra.mxu0 0.0
    %483 = vmatpush.msra.mxu0 0.0
    %484 = vmatpush.msra.mxu0 0.0
    %485 = vmatpush.msra.mxu0 0.0
    %486 = vmatpush.msra.mxu0 0.0
    %487 = vmatpush.msra.mxu0 0.0
    %488 = vmatpush.msra.mxu0 0.0
    %489 = vmatpush.msra.mxu0 %v158
    %490 = vmatmul.f32.gmra.mxu0 %v472
    %v491 = vpop.f32.mrf.mxu0
    %v492 = vadd.f32 0.0, %v491
    %493 = vdwg.mxu0
    %494 = vst.msk [vmem:[#allocation2] sm:$0xff] %vm175, %v492
    %495 = vmatpush.msra.mxu0 0.0
    %496 = vmatpush.msra.mxu0 0.0
    %497 = vmatpush.msra.mxu0 0.0
    %498 = vmatpush.msra.mxu0 0.0
    %499 = vmatpush.msra.mxu0 0.0
    %500 = vmatpush.msra.mxu0 0.0
    %501 = vmatpush.msra.mxu0 0.0
    %502 = vmatpush.msra.mxu0 0.0
    %503 = vmatpush.msra.mxu0 0.0
    %504 = vmatpush.msra.mxu0 0.0
    %505 = vmatpush.msra.mxu0 0.0
    %506 = vmatpush.msra.mxu0 0.0
    %507 = vmatpush.msra.mxu0 0.0
    %508 = vmatpush.msra.mxu0 0.0
    %509 = vmatpush.msra.mxu0 0.0
    %510 = vmatpush.msra.mxu0 %v149
    %511 = vmatmul.f32.gmra.mxu0 %v472
    %v512 = vpop.f32.mrf.mxu0
    %v513 = vadd.f32 0.0, %v512
    %514 = vdwg.mxu0
    %515 = vst [vmem:[#allocation3] sm:$0xff] %v513
    %v517 = vperm.slane %v163, 0
    %v520 = vsel %vm175, %v426, 0
    %v523 = vsel %vm175, %v160, 0
    %525 = vmatpush.xpose.msra.mxu0 0.0
    %526 = vmatpush.xpose.msra.mxu0 0.0
    %527 = vmatpush.xpose.msra.mxu0 0.0
    %528 = vmatpush.xpose.msra.mxu0 0.0
    %529 = vmatpush.xpose.msra.mxu0 0.0
    %530 = vmatpush.xpose.msra.mxu0 0.0
    %531 = vmatpush.xpose.msra.mxu0 0.0
    %532 = vmatpush.xpose.msra.mxu0 0.0
    %533 = vmatpush.xpose.msra.mxu0 0.0
    %534 = vmatpush.xpose.msra.mxu0 0.0
    %535 = vmatpush.xpose.msra.mxu0 0.0
    %536 = vmatpush.xpose.msra.mxu0 0.0
    %537 = vmatpush.xpose.msra.mxu0 0.0
    %538 = vmatpush.xpose.msra.mxu0 0.0
    %539 = vmatpush.xpose.msra.mxu0 0.0
    %540 = vmatpush.xpose.msra.mxu0 %v523
    %541 = vmatmul.f32.gmra.mxu0 %v520
    %v542 = vpop.f32.mrf.mxu0
    %v543 = vadd.f32 %v517, %v542
    %544 = vdwg.mxu0
    %v545 = vsel %vm456, %v543, -inf
    %546 = vmax.xlane.f32.xlu0 %v545
    %v547 = vpop.xlane.xlu0 %546
    %v548 = vsub.f32 %v543, %v547
    %v549 = vmul.f32 %v548, 1.442695
    %v550 = vpow.pop %v549
    %v551 = vsel %vm456, %v550, 0.0
    %552 = vadd.xlane.f32.xlu0 %v551
    %v553 = vpop.xlane.xlu0 %552
    %v554 = vrcp.pop %v553
    %v555 = vmul.f32 %v553, %v554
    %v556 = vsub.f32 2.0, %v555
    %v557 = vmul.f32 %v554, %v556
    %v558 = vmul.f32 %v550, %v557
    %v560 = vsel %vm456, %v558, 0
    %562 = vmatpush.msra.mxu0 0.0
    %563 = vmatpush.msra.mxu0 0.0
    %564 = vmatpush.msra.mxu0 0.0
    %565 = vmatpush.msra.mxu0 0.0
    %566 = vmatpush.msra.mxu0 0.0
    %567 = vmatpush.msra.mxu0 0.0
    %568 = vmatpush.msra.mxu0 0.0
    %569 = vmatpush.msra.mxu0 0.0
    %570 = vmatpush.msra.mxu0 0.0
    %571 = vmatpush.msra.mxu0 0.0
    %572 = vmatpush.msra.mxu0 0.0
    %573 = vmatpush.msra.mxu0 0.0
    %574 = vmatpush.msra.mxu0 0.0
    %575 = vmatpush.msra.mxu0 0.0
    %576 = vmatpush.msra.mxu0 0.0
    %577 = vmatpush.msra.mxu0 %v160
    %578 = vmatmul.f32.gmra.mxu0 %v560
    %v579 = vpop.f32.mrf.mxu0
    %v580 = vadd.f32 0.0, %v579
    %581 = vdwg.mxu0
    %582 = vst.msk [vmem:[#allocation2 + $0x8] sm:$0xff] %vm175, %v580
    %583 = vmatpush.msra.mxu0 0.0
    %584 = vmatpush.msra.mxu0 0.0
    %585 = vmatpush.msra.mxu0 0.0
    %586 = vmatpush.msra.mxu0 0.0
    %587 = vmatpush.msra.mxu0 0.0
    %588 = vmatpush.msra.mxu0 0.0
    %589 = vmatpush.msra.mxu0 0.0
    %590 = vmatpush.msra.mxu0 0.0
    %591 = vmatpush.msra.mxu0 0.0
    %592 = vmatpush.msra.mxu0 0.0
    %593 = vmatpush.msra.mxu0 0.0
    %594 = vmatpush.msra.mxu0 0.0
    %595 = vmatpush.msra.mxu0 0.0
    %596 = vmatpush.msra.mxu0 0.0
    %597 = vmatpush.msra.mxu0 0.0
    %598 = vmatpush.msra.mxu0 %v157
    %599 = vmatmul.f32.gmra.mxu0 %v560
    %v600 = vpop.f32.mrf.mxu0
    %v601 = vadd.f32 0.0, %v600
    %602 = vdwg.mxu0
    %603 = vst [vmem:[#allocation3 + $0x8] sm:$0xff] %v601
    %v604 = vld [vmem:[#allocation2] sm:$0xff]
    %v605 = vld [vmem:[#allocation2 + $0x8] sm:$0xff]
    %v606 = vld [vmem:[#allocation3] sm:$0xff]
    %v607 = vld [vmem:[#allocation3 + $0x8] sm:$0xff]
    %v609 = vsel %vm175, %v99, 0
    %v612 = vsel %vm175, %v100, 0
    %v615 = vsel %vm175, %v101, 0
    %v618 = vsel %vm175, %v102, 0
    %v621 = vsel %vm175, %v103, 0
    %v624 = vsel %vm175, %v104, 0
    %v627 = vsel %vm175, %v105, 0
    %v630 = vsel %vm175, %v106, 0
    %v633 = vsel %vm175, %v107, 0
    %v636 = vsel %vm175, %v108, 0
    %v639 = vsel %vm175, %v109, 0
    %v642 = vsel %vm175, %v110, 0
    %v645 = vsel %vm175, %v111, 0
    %v648 = vsel %vm175, %v112, 0
    %v651 = vsel %vm175, %v113, 0
    %v654 = vsel %vm175, %v114, 0
    %656 = vmatpush.xpose.msra.mxu0 %v654
    %657 = vmatpush.xpose.msra.mxu0 %v651
    %658 = vmatpush.xpose.msra.mxu0 %v648
    %659 = vmatpush.xpose.msra.mxu0 %v645
    %660 = vmatpush.xpose.msra.mxu0 %v642
    %661 = vmatpush.xpose.msra.mxu0 %v639
    %662 = vmatpush.xpose.msra.mxu0 %v636
    %663 = vmatpush.xpose.msra.mxu0 %v633
    %664 = vmatpush.xpose.msra.mxu0 %v630
    %665 = vmatpush.xpose.msra.mxu0 %v627
    %666 = vmatpush.xpose.msra.mxu0 %v624
    %667 = vmatpush.xpose.msra.mxu0 %v621
    %668 = vmatpush.xpose.msra.mxu0 %v618
    %669 = vmatpush.xpose.msra.mxu0 %v615
    %670 = vmatpush.xpose.msra.mxu0 %v612
    %671 = vmatpush.xpose.msra.mxu0 %v609
    %672 = vmatmul.f32.gmra.mxu0 %v431
    %v673 = vpop.f32.mrf.mxu0
    %v674 = vadd.f32 0.0, %v673
    %675 = vmatmul.f32.gmra.mxu0 %v520
    %v676 = vpop.f32.mrf.mxu0
    %v677 = vadd.f32 0.0, %v676
    %678 = vdwg.mxu0
    %vm679 = vcmp.lt.s32.totalorder %v142, 64
    %v680 = vsel %vm679, %v674, -1e+09
    %v681 = vsel %vm679, %v677, -1e+09
    %682 = vmax.xlane.f32.xlu0 %v680
    %v683 = vpop.xlane.xlu0 %682
    %684 = vmax.xlane.f32.xlu0 %v681
    %v685 = vpop.xlane.xlu0 %684
    %v686 = vsub.f32 %v680, %v683
    %v687 = vsub.f32 %v681, %v685
    %v688 = vmul.f32 %v686, 1.442695
    %v689 = vpow.pop %v688
    %v690 = vmul.f32 %v687, 1.442695
    %v691 = vpow.pop %v690
    %692 = vadd.xlane.f32.xlu0 %v689
    %v693 = vpop.xlane.xlu0 %692
    %694 = vadd.xlane.f32.xlu0 %v691
    %v695 = vpop.xlane.xlu0 %694
    %v696 = vrcp.pop %v693
    %v697 = vrcp.pop %v695
    %v698 = vmul.f32 %v693, %v696
    %v699 = vmul.f32 %v695, %v697
    %v700 = vsub.f32 2.0, %v698
    %v701 = vsub.f32 2.0, %v699
    %v702 = vmul.f32 %v696, %v700
    %v703 = vmul.f32 %v697, %v701
    %v704 = vmul.f32 %v689, %v702
    %v705 = vmul.f32 %v691, %v703
    %706 = vrot.lane.b32.xlu0 %v425, 32
    %v707 = vpop.permute.xlu0 %706
    %708 = vrot.lane.b32.xlu0 %v426, 32
    %v709 = vpop.permute.xlu0 %708
    %714 = vrot.lane.b32.xlu0 %v604, 64
    %v715 = vpop.permute.xlu0 %714
    %716 = vrot.lane.b32.xlu0 %v605, 64
    %v717 = vpop.permute.xlu0 %716
    %v720 = vsel %vm175, %v164, %v707
    %v721 = vsel %vm175, %v165, %v709
    %vm722 = vcmask 523264
    %v723 = vsel %vm722, %v720, %v715
    %v724 = vsel %vm722, %v721, %v717
    %v725 = vld [vmem:[%s10] sm:$0xff]
    %v726 = vld [vmem:[%s10 + $0x8] sm:$0xff]
    %v727 = vld [vmem:[%s10 + $0x10] sm:$0xff]
    %v728 = vld [vmem:[%s10 + $0x18] sm:$0xff]
    %v729 = vld [vmem:[%s10 + $0x20] sm:$0xff]
    %v730 = vld [vmem:[%s10 + $0x28] sm:$0xff]
    %v731 = vld [vmem:[%s10 + $0x30] sm:$0xff]
    %v732 = vld [vmem:[%s10 + $0x38] sm:$0xff]
    %v733 = vld [vmem:[%s10 + $0x40] sm:$0xff]
    %v734 = vld [vmem:[%s10 + $0x48] sm:$0xff]
    %v735 = vld [vmem:[%s10 + $0x50] sm:$0xff]
    %v736 = vld [vmem:[%s10 + $0x58] sm:$0xff]
    %v737 = vld [vmem:[#allocation4] sm:$0x1]
    %v739 = vperm.slane %v737, 0
    %vm741 = vcmask 785408
    %v743 = vsel %vm741, %v723, 0
    %v746 = vsel %vm741, %v724, 0
    %748 = vmatpush.msra.mxu0 0.0
    %749 = vmatpush.msra.mxu0 0.0
    %750 = vmatpush.msra.mxu0 0.0
    %751 = vmatpush.msra.mxu0 0.0
    %752 = vmatpush.msra.mxu0 %v736
    %753 = vmatpush.msra.mxu0 %v735
    %754 = vmatpush.msra.mxu0 %v734
    %755 = vmatpush.msra.mxu0 %v733
    %756 = vmatpush.msra.mxu0 %v732
    %757 = vmatpush.msra.mxu0 %v731
    %758 = vmatpush.msra.mxu0 %v730
    %759 = vmatpush.msra.mxu0 %v729
    %760 = vmatpush.msra.mxu0 %v728
    %761 = vmatpush.msra.mxu0 %v727
    %762 = vmatpush.msra.mxu0 %v726
    %763 = vmatpush.msra.mxu0 %v725
    %764 = vmatmul.f32.gmra.mxu0 %v743
    %v765 = vpop.f32.mrf.mxu0
    %v766 = vadd.f32 %v739, %v765
    %767 = vmatmul.f32.gmra.mxu0 %v746
    %v768 = vpop.f32.mrf.mxu0
    %v769 = vadd.f32 %v739, %v768
    %770 = vdwg.mxu0
    %v771 = vxor.u32 %v766, 2147483648
    %v772 = vxor.u32 %v769, 2147483648
    %v773 = vmul.f32 %v771, 1.442695
    %v774 = vpow.pop %v773
    %v775 = vmul.f32 %v772, 1.442695
    %v776 = vpow.pop %v775
    %v777 = vadd.f32 %v774, 1.0
    %v778 = vadd.f32 %v776, 1.0
    %v779 = vrcp.pop %v777
    %v780 = vmul.f32 %v777, %v779
    %v781 = vsub.f32 1.0, %v780
    %v782 = vmul.f32 %v779, %v781
    %v783 = vadd.f32 %v779, %v782
    %vm784 = vweird.f32 %v777
    %vm785 = vweird.f32 %v779
    %vm786 = vmor %vm784, %vm785
    %v787 = vsel %vm786, %v779, %v783
    %v788 = vand.u32 2147483647, %v777
    %vm789 = vcmp.eq.f32.partialorder %v788, 8.507059e+37
    %v790 = vand.u32 %v777, 2147483648
    %v791 = vor.u32 1.1754944e-38, %v790
    %v792 = vsel %vm789, %v791, %v787
    %v793 = vmul.f32 1.0, %v792
    %v794 = vrcp.pop %v778
    %v795 = vmul.f32 %v778, %v794
    %v796 = vsub.f32 1.0, %v795
    %v797 = vmul.f32 %v794, %v796
    %v798 = vadd.f32 %v794, %v797
    %vm799 = vweird.f32 %v778
    %vm800 = vweird.f32 %v794
    %vm801 = vmor %vm799, %vm800
    %v802 = vsel %vm801, %v794, %v798
    %v803 = vand.u32 2147483647, %v778
    %vm804 = vcmp.eq.f32.partialorder %v803, 8.507059e+37
    %v805 = vand.u32 %v778, 2147483648
    %v806 = vor.u32 1.1754944e-38, %v805
    %v807 = vsel %vm804, %v806, %v802
    %v808 = vmul.f32 1.0, %v807
    %810 = vset.pattern.permute.xlu0 0
    %811 = vperm.xlu0 %810, %v793
    %v812 = vpop.permute.xlu0 %811
    %815 = vset.pattern.permute.xlu0 0
    %816 = vperm.xlu0 %815, %v808
    %v817 = vpop.permute.xlu0 %816
    %v819 = vmul.f32 %v812, %v704
    %v820 = vmul.f32 %v817, %v705
    %v821 = vsub.f32 1.0, %v793
    %v822 = vsub.f32 1.0, %v808
    %824 = vset.pattern.permute.xlu0 0
    %825 = vperm.xlu0 %824, %v821
    %v826 = vpop.permute.xlu0 %825
    %829 = vset.pattern.permute.xlu0 0
    %830 = vperm.xlu0 %829, %v822
    %v831 = vpop.permute.xlu0 %830
    %v833 = vmul.f32 %v826, %v606
    %v834 = vmul.f32 %v831, %v607
    %v835 = vadd.f32 %v819, %v833
    %v836 = vadd.f32 %v820, %v834
    %v838 = vrot.slane %v835, 1
    %v839 = vrot.slane %v835, 2
    %842 = vst [vmem:[#allocation11] sm:$0x1] %v835
    %843 = vst [vmem:[#allocation11 + $0x4] sm:$0x1] %v838
    %844 = vst [vmem:[#allocation11 + $0x8] sm:$0x1] %v839
    %v846 = vrot.slane %v836, 1
    %v847 = vrot.slane %v836, 2
    %s850 = scalar_lea.vmem [#allocation11], 12
    %851 = vst [vmem:[%s850] sm:$0x1] %v836
    %852 = vst [vmem:[%s850 + $0x4] sm:$0x1] %v846
    %853 = vst [vmem:[%s850 + $0x8] sm:$0x1] %v847
    %v854 = vld [vmem:[%s12] sm:$0xff]
    %v855 = vld [vmem:[%s12 + $0x8] sm:$0xff]
    %v856 = vld [vmem:[%s12 + $0x10] sm:$0xff]
    %v857 = vld [vmem:[%s12 + $0x18] sm:$0xff]
    %v858 = vld [vmem:[%s13] sm:$0x1]
    %v860 = vperm.slane %v858, 0
    %v862 = vsel %vm175, %v604, 0
    %v864 = vsel %vm175, %v605, 0
    %866 = vmatpush.msra.mxu0 0.0
    %867 = vmatpush.msra.mxu0 0.0
    %868 = vmatpush.msra.mxu0 0.0
    %869 = vmatpush.msra.mxu0 0.0
    %870 = vmatpush.msra.mxu0 0.0
    %871 = vmatpush.msra.mxu0 0.0
    %872 = vmatpush.msra.mxu0 0.0
    %873 = vmatpush.msra.mxu0 0.0
    %874 = vmatpush.msra.mxu0 0.0
    %875 = vmatpush.msra.mxu0 0.0
    %876 = vmatpush.msra.mxu0 0.0
    %877 = vmatpush.msra.mxu0 0.0
    %878 = vmatpush.msra.mxu0 %v857
    %879 = vmatpush.msra.mxu0 %v856
    %880 = vmatpush.msra.mxu0 %v855
    %881 = vmatpush.msra.mxu0 %v854
    %882 = vmatmul.f32.gmra.mxu0 %v862
    %v883 = vpop.f32.mrf.mxu0
    %v884 = vadd.f32 %v860, %v883
    %885 = vmatmul.f32.gmra.mxu0 %v864
    %v886 = vpop.f32.mrf.mxu0
    %v887 = vadd.f32 %v860, %v886
    %888 = vdwg.mxu0
    %889 = vst [vmem:[%s15] sm:$0x7] %v884
    %s890 = scalar_lea.vmem %s15, 4
    %891 = vst [vmem:[%s890] sm:$0x7] %v887
    %892 = vmax.xlane.f32.xlu0 %v835
    %v893 = vpop.xlane.xlu0 %892
    %894 = vmax.xlane.f32.xlu0 %v836
    %v895 = vpop.xlane.xlu0 %894
    %vm896 = vcmp.eq.f32.partialorder %v835, %v893
    %vm897 = vcmp.eq.f32.partialorder %v836, %v895
    %v898 = vsel %vm896, %v142, 128
    %v899 = vsel %vm897, %v142, 128
    %v900 = vand.u32 %v898, 65535
    %v901 = vshra.s32 %v898, 16
    %v902 = vcvt.s32.f32 %v900
    %v903 = vcvt.s32.f32 %v901
    %904 = vmin.xlane.f32.xlu0 %v903
    %v905 = vpop.xlane.xlu0 %904
    %vm906 = vcmp.eq.f32.partialorder %v903, %v905
    %v907 = vsel %vm906, %v902, inf
    %908 = vmin.xlane.f32.xlu0 %v907
    %v909 = vpop.xlane.xlu0 %908
    %v910 = vcvt.f32.s32 %v909
    %v911 = vcvt.f32.s32 %v905
    %v912 = vshll.u32 %v911, 16
    %v913 = vadd.s32 %v912, %v910
    %v914 = vand.u32 %v899, 65535
    %v915 = vshra.s32 %v899, 16
    %v916 = vcvt.s32.f32 %v914
    %v917 = vcvt.s32.f32 %v915
    %918 = vmin.xlane.f32.xlu0 %v917
    %v919 = vpop.xlane.xlu0 %918
    %vm920 = vcmp.eq.f32.partialorder %v917, %v919
    %v921 = vsel %vm920, %v916, inf
    %922 = vmin.xlane.f32.xlu0 %v921
    %v923 = vpop.xlane.xlu0 %922
    %v924 = vcvt.f32.s32 %v923
    %v925 = vcvt.f32.s32 %v919
    %v926 = vshll.u32 %v925, 16
    %v927 = vadd.s32 %v926, %v924
    %vm928 = vcmp.eq.s32.totalorder %v142, %v913
    %vm929 = vcmp.eq.s32.totalorder %v142, %v927
    %v930 = vsel %vm928, 1, 0
    %v931 = vsel %vm929, 1, 0
    %v932 = vcvt.s32.f32 %v930
    %v933 = vcvt.s32.f32 %v931
    %934 = vmatpush.msra.mxu0 %v114
    %935 = vmatpush.msra.mxu0 %v113
    %936 = vmatpush.msra.mxu0 %v112
    %937 = vmatpush.msra.mxu0 %v111
    %938 = vmatpush.msra.mxu0 %v110
    %939 = vmatpush.msra.mxu0 %v109
    %940 = vmatpush.msra.mxu0 %v108
    %941 = vmatpush.msra.mxu0 %v107
    %942 = vmatpush.msra.mxu0 %v106
    %943 = vmatpush.msra.mxu0 %v105
    %944 = vmatpush.msra.mxu0 %v104
    %945 = vmatpush.msra.mxu0 %v103
    %946 = vmatpush.msra.mxu0 %v102
    %947 = vmatpush.msra.mxu0 %v101
    %948 = vmatpush.msra.mxu0 %v100
    %949 = vmatpush.msra.mxu0 %v99
    %950 = vmatmul.f32.gmra.mxu0 %v932
    %v951 = vpop.f32.mrf.mxu0
    %v952 = vadd.f32 0.0, %v951
    %953 = vmatmul.f32.gmra.mxu0 %v933
    %v954 = vpop.f32.mrf.mxu0
    %v955 = vadd.f32 0.0, %v954
    %956 = vdwg.mxu0
    %v958 = vsel %vm175, %v952, 0
    %v961 = vsel %vm175, %v955, 0
    %963 = vmatpush.msra.mxu0 0.0
    %964 = vmatpush.msra.mxu0 0.0
    %965 = vmatpush.msra.mxu0 0.0
    %966 = vmatpush.msra.mxu0 0.0
    %967 = vmatpush.msra.mxu0 0.0
    %968 = vmatpush.msra.mxu0 0.0
    %969 = vmatpush.msra.mxu0 0.0
    %970 = vmatpush.msra.mxu0 0.0
    %971 = vmatpush.msra.mxu0 0.0
    %972 = vmatpush.msra.mxu0 0.0
    %973 = vmatpush.msra.mxu0 0.0
    %974 = vmatpush.msra.mxu0 0.0
    %975 = vmatpush.msra.mxu0 %v124
    %976 = vmatpush.msra.mxu0 %v121
    %977 = vmatpush.msra.mxu0 %v118
    %978 = vmatpush.msra.mxu0 %v115
    %979 = vmatmul.f32.gmra.mxu0 %v958
    %v980 = vpop.f32.mrf.mxu0
    %v981 = vadd.f32 %v169, %v980
    %982 = vmatmul.f32.gmra.mxu0 %v961
    %v983 = vpop.f32.mrf.mxu0
    %v984 = vadd.f32 %v169, %v983
    %985 = vdwg.mxu0
    %986 = vmatpush.msra.mxu0 0.0
    %987 = vmatpush.msra.mxu0 0.0
    %988 = vmatpush.msra.mxu0 0.0
    %989 = vmatpush.msra.mxu0 0.0
    %990 = vmatpush.msra.mxu0 0.0
    %991 = vmatpush.msra.mxu0 0.0
    %992 = vmatpush.msra.mxu0 0.0
    %993 = vmatpush.msra.mxu0 0.0
    %994 = vmatpush.msra.mxu0 0.0
    %995 = vmatpush.msra.mxu0 0.0
    %996 = vmatpush.msra.mxu0 0.0
    %997 = vmatpush.msra.mxu0 0.0
    %998 = vmatpush.msra.mxu0 %v125
    %999 = vmatpush.msra.mxu0 %v122
    %1000 = vmatpush.msra.mxu0 %v119
    %1001 = vmatpush.msra.mxu0 %v116
    %1002 = vmatmul.f32.gmra.mxu0 %v958
    %v1003 = vpop.f32.mrf.mxu0
    %v1004 = vadd.f32 %v170, %v1003
    %1005 = vmatmul.f32.gmra.mxu0 %v961
    %v1006 = vpop.f32.mrf.mxu0
    %v1007 = vadd.f32 %v170, %v1006
    %1008 = vdwg.mxu0
    %1009 = vmatpush.msra.mxu0 0.0
    %1010 = vmatpush.msra.mxu0 0.0
    %1011 = vmatpush.msra.mxu0 0.0
    %1012 = vmatpush.msra.mxu0 0.0
    %1013 = vmatpush.msra.mxu0 0.0
    %1014 = vmatpush.msra.mxu0 0.0
    %1015 = vmatpush.msra.mxu0 0.0
    %1016 = vmatpush.msra.mxu0 0.0
    %1017 = vmatpush.msra.mxu0 0.0
    %1018 = vmatpush.msra.mxu0 0.0
    %1019 = vmatpush.msra.mxu0 0.0
    %1020 = vmatpush.msra.mxu0 0.0
    %1021 = vmatpush.msra.mxu0 %v126
    %1022 = vmatpush.msra.mxu0 %v123
    %1023 = vmatpush.msra.mxu0 %v120
    %1024 = vmatpush.msra.mxu0 %v117
    %1025 = vmatmul.f32.gmra.mxu0 %v958
    %v1026 = vpop.f32.mrf.mxu0
    %v1027 = vadd.f32 %v171, %v1026
    %1028 = vmatmul.f32.gmra.mxu0 %v961
    %v1029 = vpop.f32.mrf.mxu0
    %v1030 = vadd.f32 %v171, %v1029
    %1031 = vdwg.mxu0
    %1032 = vmatpush.msra.mxu0 0.0
    %1033 = vmatpush.msra.mxu0 0.0
    %1034 = vmatpush.msra.mxu0 0.0
    %1035 = vmatpush.msra.mxu0 0.0
    %1036 = vmatpush.msra.mxu0 0.0
    %1037 = vmatpush.msra.mxu0 0.0
    %1038 = vmatpush.msra.mxu0 0.0
    %1039 = vmatpush.msra.mxu0 0.0
    %1040 = vmatpush.msra.mxu0 0.0
    %1041 = vmatpush.msra.mxu0 0.0
    %1042 = vmatpush.msra.mxu0 0.0
    %1043 = vmatpush.msra.mxu0 0.0
    %1044 = vmatpush.msra.mxu0 %v136
    %1045 = vmatpush.msra.mxu0 %v133
    %1046 = vmatpush.msra.mxu0 %v130
    %1047 = vmatpush.msra.mxu0 %v127
    %1048 = vmatmul.f32.gmra.mxu0 %v431
    %v1049 = vpop.f32.mrf.mxu0
    %v1050 = vadd.f32 %v252, %v1049
    %1051 = vmatmul.f32.gmra.mxu0 %v520
    %v1052 = vpop.f32.mrf.mxu0
    %v1053 = vadd.f32 %v252, %v1052
    %1054 = vdwg.mxu0
    %1055 = vmatpush.msra.mxu0 0.0
    %1056 = vmatpush.msra.mxu0 0.0
    %1057 = vmatpush.msra.mxu0 0.0
    %1058 = vmatpush.msra.mxu0 0.0
    %1059 = vmatpush.msra.mxu0 0.0
    %1060 = vmatpush.msra.mxu0 0.0
    %1061 = vmatpush.msra.mxu0 0.0
    %1062 = vmatpush.msra.mxu0 0.0
    %1063 = vmatpush.msra.mxu0 0.0
    %1064 = vmatpush.msra.mxu0 0.0
    %1065 = vmatpush.msra.mxu0 0.0
    %1066 = vmatpush.msra.mxu0 0.0
    %1067 = vmatpush.msra.mxu0 %v137
    %1068 = vmatpush.msra.mxu0 %v134
    %1069 = vmatpush.msra.mxu0 %v131
    %1070 = vmatpush.msra.mxu0 %v128
    %1071 = vmatmul.f32.gmra.mxu0 %v431
    %v1072 = vpop.f32.mrf.mxu0
    %v1073 = vadd.f32 %v253, %v1072
    %1074 = vmatmul.f32.gmra.mxu0 %v520
    %v1075 = vpop.f32.mrf.mxu0
    %v1076 = vadd.f32 %v253, %v1075
    %1077 = vdwg.mxu0
    %1078 = vmatpush.msra.mxu0 0.0
    %1079 = vmatpush.msra.mxu0 0.0
    %1080 = vmatpush.msra.mxu0 0.0
    %1081 = vmatpush.msra.mxu0 0.0
    %1082 = vmatpush.msra.mxu0 0.0
    %1083 = vmatpush.msra.mxu0 0.0
    %1084 = vmatpush.msra.mxu0 0.0
    %1085 = vmatpush.msra.mxu0 0.0
    %1086 = vmatpush.msra.mxu0 0.0
    %1087 = vmatpush.msra.mxu0 0.0
    %1088 = vmatpush.msra.mxu0 0.0
    %1089 = vmatpush.msra.mxu0 0.0
    %1090 = vmatpush.msra.mxu0 %v138
    %1091 = vmatpush.msra.mxu0 %v135
    %1092 = vmatpush.msra.mxu0 %v132
    %1093 = vmatpush.msra.mxu0 %v129
    %1094 = vmatmul.f32.gmra.mxu0 %v431
    %v1095 = vpop.f32.mrf.mxu0
    %v1096 = vadd.f32 %v254, %v1095
    %1097 = vmatmul.f32.gmra.mxu0 %v520
    %v1098 = vpop.f32.mrf.mxu0
    %v1099 = vadd.f32 %v254, %v1098
    %1100 = vdwg.mxu0
    %v1101 = vadd.f32 %v981, %v1050
    %v1102 = vadd.f32 %v984, %v1053
    %v1103 = vxor.u32 %v1101, 2147483648
    %v1104 = vxor.u32 %v1102, 2147483648
    %v1105 = vmul.f32 %v1103, 1.442695
    %v1106 = vpow.pop %v1105
    %v1107 = vmul.f32 %v1104, 1.442695
    %v1108 = vpow.pop %v1107
    %v1109 = vadd.f32 %v1106, 1.0
    %v1110 = vadd.f32 %v1108, 1.0
    %v1111 = vrcp.pop %v1109
    %v1112 = vmul.f32 %v1109, %v1111
    %v1113 = vsub.f32 1.0, %v1112
    %v1114 = vmul.f32 %v1111, %v1113
    %v1115 = vadd.f32 %v1111, %v1114
    %vm1116 = vweird.f32 %v1109
    %vm1117 = vweird.f32 %v1111
    %vm1118 = vmor %vm1116, %vm1117
    %v1119 = vsel %vm1118, %v1111, %v1115
    %v1120 = vand.u32 2147483647, %v1109
    %vm1121 = vcmp.eq.f32.partialorder %v1120, 8.507059e+37
    %v1122 = vand.u32 %v1109, 2147483648
    %v1123 = vor.u32 1.1754944e-38, %v1122
    %v1124 = vsel %vm1121, %v1123, %v1119
    %v1125 = vmul.f32 1.0, %v1124
    %v1126 = vrcp.pop %v1110
    %v1127 = vmul.f32 %v1110, %v1126
    %v1128 = vsub.f32 1.0, %v1127
    %v1129 = vmul.f32 %v1126, %v1128
    %v1130 = vadd.f32 %v1126, %v1129
    %vm1131 = vweird.f32 %v1110
    %vm1132 = vweird.f32 %v1126
    %vm1133 = vmor %vm1131, %vm1132
    %v1134 = vsel %vm1133, %v1126, %v1130
    %v1135 = vand.u32 2147483647, %v1110
    %vm1136 = vcmp.eq.f32.partialorder %v1135, 8.507059e+37
    %v1137 = vand.u32 %v1110, 2147483648
    %v1138 = vor.u32 1.1754944e-38, %v1137
    %v1139 = vsel %vm1136, %v1138, %v1134
    %v1140 = vmul.f32 1.0, %v1139
    %v1141 = vadd.f32 %v1004, %v1073
    %v1142 = vadd.f32 %v1007, %v1076
    %v1143 = vxor.u32 %v1141, 2147483648
    %v1144 = vxor.u32 %v1142, 2147483648
    %v1145 = vmul.f32 %v1143, 1.442695
    %v1146 = vpow.pop %v1145
    %v1147 = vmul.f32 %v1144, 1.442695
    %v1148 = vpow.pop %v1147
    %v1149 = vadd.f32 %v1146, 1.0
    %v1150 = vadd.f32 %v1148, 1.0
    %v1151 = vrcp.pop %v1149
    %v1152 = vmul.f32 %v1149, %v1151
    %v1153 = vsub.f32 1.0, %v1152
    %v1154 = vmul.f32 %v1151, %v1153
    %v1155 = vadd.f32 %v1151, %v1154
    %vm1156 = vweird.f32 %v1149
    %vm1157 = vweird.f32 %v1151
    %vm1158 = vmor %vm1156, %vm1157
    %v1159 = vsel %vm1158, %v1151, %v1155
    %v1160 = vand.u32 2147483647, %v1149
    %vm1161 = vcmp.eq.f32.partialorder %v1160, 8.507059e+37
    %v1162 = vand.u32 %v1149, 2147483648
    %v1163 = vor.u32 1.1754944e-38, %v1162
    %v1164 = vsel %vm1161, %v1163, %v1159
    %v1165 = vmul.f32 1.0, %v1164
    %v1166 = vrcp.pop %v1150
    %v1167 = vmul.f32 %v1150, %v1166
    %v1168 = vsub.f32 1.0, %v1167
    %v1169 = vmul.f32 %v1166, %v1168
    %v1170 = vadd.f32 %v1166, %v1169
    %vm1171 = vweird.f32 %v1150
    %vm1172 = vweird.f32 %v1166
    %vm1173 = vmor %vm1171, %vm1172
    %v1174 = vsel %vm1173, %v1166, %v1170
    %v1175 = vand.u32 2147483647, %v1150
    %vm1176 = vcmp.eq.f32.partialorder %v1175, 8.507059e+37
    %v1177 = vand.u32 %v1150, 2147483648
    %v1178 = vor.u32 1.1754944e-38, %v1177
    %v1179 = vsel %vm1176, %v1178, %v1174
    %v1180 = vmul.f32 1.0, %v1179
    %v1181 = vmul.f32 %v1125, %v1096
    %v1182 = vmul.f32 %v1140, %v1099
    %v1183 = vadd.f32 %v1027, %v1181
    %v1184 = vadd.f32 %v1030, %v1182
    %v1185 = vtanh.pop %v1183
    %v1186 = vtanh.pop %v1184
    %v1187 = vsub.f32 1.0, %v1165
    %v1188 = vsub.f32 1.0, %v1180
    %v1189 = vmul.f32 %v1187, %v1185
    %v1190 = vmul.f32 %v1188, %v1186
    %v1191 = vmul.f32 %v1165, %v425
    %v1192 = vmul.f32 %v1180, %v426
    %v1193 = vadd.f32 %v1189, %v1191
    %v1194 = vadd.f32 %v1190, %v1192
    %v1196 = vsel %vm175, %v1193, 0
    %1198 = vmatpush.xpose.msra.mxu0 0.0
    %1199 = vmatpush.xpose.msra.mxu0 0.0
    %1200 = vmatpush.xpose.msra.mxu0 0.0
    %1201 = vmatpush.xpose.msra.mxu0 0.0
    %1202 = vmatpush.xpose.msra.mxu0 0.0
    %1203 = vmatpush.xpose.msra.mxu0 0.0
    %1204 = vmatpush.xpose.msra.mxu0 0.0
    %1205 = vmatpush.xpose.msra.mxu0 0.0
    %1206 = vmatpush.xpose.msra.mxu0 0.0
    %1207 = vmatpush.xpose.msra.mxu0 0.0
    %1208 = vmatpush.xpose.msra.mxu0 0.0
    %1209 = vmatpush.xpose.msra.mxu0 0.0
    %1210 = vmatpush.xpose.msra.mxu0 0.0
    %1211 = vmatpush.xpose.msra.mxu0 0.0
    %1212 = vmatpush.xpose.msra.mxu0 0.0
    %1213 = vmatpush.xpose.msra.mxu0 %v434
    %1214 = vmatmul.f32.gmra.mxu0 %v1196
    %v1215 = vpop.f32.mrf.mxu0
    %v1216 = vadd.f32 %v428, %v1215
    %1217 = vdwg.mxu0
    %v1218 = vsel %vm456, %v1216, -inf
    %1219 = vmax.xlane.f32.xlu0 %v1218
    %v1220 = vpop.xlane.xlu0 %1219
    %v1221 = vsub.f32 %v1216, %v1220
    %v1222 = vmul.f32 %v1221, 1.442695
    %v1223 = vpow.pop %v1222
    %v1224 = vsel %vm456, %v1223, 0.0
    %1225 = vadd.xlane.f32.xlu0 %v1224
    %v1226 = vpop.xlane.xlu0 %1225
    %v1227 = vrcp.pop %v1226
    %v1228 = vmul.f32 %v1226, %v1227
    %v1229 = vsub.f32 2.0, %v1228
    %v1230 = vmul.f32 %v1227, %v1229
    %v1231 = vmul.f32 %v1223, %v1230
    %v1233 = vsel %vm456, %v1231, 0
    %1235 = vmatpush.msra.mxu0 0.0
    %1236 = vmatpush.msra.mxu0 0.0
    %1237 = vmatpush.msra.mxu0 0.0
    %1238 = vmatpush.msra.mxu0 0.0
    %1239 = vmatpush.msra.mxu0 0.0
    %1240 = vmatpush.msra.mxu0 0.0
    %1241 = vmatpush.msra.mxu0 0.0
    %1242 = vmatpush.msra.mxu0 0.0
    %1243 = vmatpush.msra.mxu0 0.0
    %1244 = vmatpush.msra.mxu0 0.0
    %1245 = vmatpush.msra.mxu0 0.0
    %1246 = vmatpush.msra.mxu0 0.0
    %1247 = vmatpush.msra.mxu0 0.0
    %1248 = vmatpush.msra.mxu0 0.0
    %1249 = vmatpush.msra.mxu0 0.0
    %1250 = vmatpush.msra.mxu0 %v158
    %1251 = vmatmul.f32.gmra.mxu0 %v1233
    %v1252 = vpop.f32.mrf.mxu0
    %v1253 = vadd.f32 0.0, %v1252
    %1254 = vdwg.mxu0
    %1255 = vst.msk [vmem:[#allocation2] sm:$0xff] %vm175, %v1253
    %1256 = vmatpush.msra.mxu0 0.0
    %1257 = vmatpush.msra.mxu0 0.0
    %1258 = vmatpush.msra.mxu0 0.0
    %1259 = vmatpush.msra.mxu0 0.0
    %1260 = vmatpush.msra.mxu0 0.0
    %1261 = vmatpush.msra.mxu0 0.0
    %1262 = vmatpush.msra.mxu0 0.0
    %1263 = vmatpush.msra.mxu0 0.0
    %1264 = vmatpush.msra.mxu0 0.0
    %1265 = vmatpush.msra.mxu0 0.0
    %1266 = vmatpush.msra.mxu0 0.0
    %1267 = vmatpush.msra.mxu0 0.0
    %1268 = vmatpush.msra.mxu0 0.0
    %1269 = vmatpush.msra.mxu0 0.0
    %1270 = vmatpush.msra.mxu0 0.0
    %1271 = vmatpush.msra.mxu0 %v149
    %1272 = vmatmul.f32.gmra.mxu0 %v1233
    %v1273 = vpop.f32.mrf.mxu0
    %v1274 = vadd.f32 0.0, %v1273
    %1275 = vdwg.mxu0
    %1276 = vst [vmem:[#allocation3] sm:$0xff] %v1274
    %v1278 = vsel %vm175, %v1194, 0
    %1280 = vmatpush.xpose.msra.mxu0 0.0
    %1281 = vmatpush.xpose.msra.mxu0 0.0
    %1282 = vmatpush.xpose.msra.mxu0 0.0
    %1283 = vmatpush.xpose.msra.mxu0 0.0
    %1284 = vmatpush.xpose.msra.mxu0 0.0
    %1285 = vmatpush.xpose.msra.mxu0 0.0
    %1286 = vmatpush.xpose.msra.mxu0 0.0
    %1287 = vmatpush.xpose.msra.mxu0 0.0
    %1288 = vmatpush.xpose.msra.mxu0 0.0
    %1289 = vmatpush.xpose.msra.mxu0 0.0
    %1290 = vmatpush.xpose.msra.mxu0 0.0
    %1291 = vmatpush.xpose.msra.mxu0 0.0
    %1292 = vmatpush.xpose.msra.mxu0 0.0
    %1293 = vmatpush.xpose.msra.mxu0 0.0
    %1294 = vmatpush.xpose.msra.mxu0 0.0
    %1295 = vmatpush.xpose.msra.mxu0 %v523
    %1296 = vmatmul.f32.gmra.mxu0 %v1278
    %v1297 = vpop.f32.mrf.mxu0
    %v1298 = vadd.f32 %v517, %v1297
    %1299 = vdwg.mxu0
    %v1300 = vsel %vm456, %v1298, -inf
    %1301 = vmax.xlane.f32.xlu0 %v1300
    %v1302 = vpop.xlane.xlu0 %1301
    %v1303 = vsub.f32 %v1298, %v1302
    %v1304 = vmul.f32 %v1303, 1.442695
    %v1305 = vpow.pop %v1304
    %v1306 = vsel %vm456, %v1305, 0.0
    %1307 = vadd.xlane.f32.xlu0 %v1306
    %v1308 = vpop.xlane.xlu0 %1307
    %v1309 = vrcp.pop %v1308
    %v1310 = vmul.f32 %v1308, %v1309
    %v1311 = vsub.f32 2.0, %v1310
    %v1312 = vmul.f32 %v1309, %v1311
    %v1313 = vmul.f32 %v1305, %v1312
    %v1315 = vsel %vm456, %v1313, 0
    %1317 = vmatpush.msra.mxu0 0.0
    %1318 = vmatpush.msra.mxu0 0.0
    %1319 = vmatpush.msra.mxu0 0.0
    %1320 = vmatpush.msra.mxu0 0.0
    %1321 = vmatpush.msra.mxu0 0.0
    %1322 = vmatpush.msra.mxu0 0.0
    %1323 = vmatpush.msra.mxu0 0.0
    %1324 = vmatpush.msra.mxu0 0.0
    %1325 = vmatpush.msra.mxu0 0.0
    %1326 = vmatpush.msra.mxu0 0.0
    %1327 = vmatpush.msra.mxu0 0.0
    %1328 = vmatpush.msra.mxu0 0.0
    %1329 = vmatpush.msra.mxu0 0.0
    %1330 = vmatpush.msra.mxu0 0.0
    %1331 = vmatpush.msra.mxu0 0.0
    %1332 = vmatpush.msra.mxu0 %v160
    %1333 = vmatmul.f32.gmra.mxu0 %v1315
    %v1334 = vpop.f32.mrf.mxu0
    %v1335 = vadd.f32 0.0, %v1334
    %1336 = vdwg.mxu0
    %1337 = vst.msk [vmem:[#allocation2 + $0x8] sm:$0xff] %vm175, %v1335
    %1338 = vmatpush.msra.mxu0 0.0
    %1339 = vmatpush.msra.mxu0 0.0
    %1340 = vmatpush.msra.mxu0 0.0
    %1341 = vmatpush.msra.mxu0 0.0
    %1342 = vmatpush.msra.mxu0 0.0
    %1343 = vmatpush.msra.mxu0 0.0
    %1344 = vmatpush.msra.mxu0 0.0
    %1345 = vmatpush.msra.mxu0 0.0
    %1346 = vmatpush.msra.mxu0 0.0
    %1347 = vmatpush.msra.mxu0 0.0
    %1348 = vmatpush.msra.mxu0 0.0
    %1349 = vmatpush.msra.mxu0 0.0
    %1350 = vmatpush.msra.mxu0 0.0
    %1351 = vmatpush.msra.mxu0 0.0
    %1352 = vmatpush.msra.mxu0 0.0
    %1353 = vmatpush.msra.mxu0 %v157
    %1354 = vmatmul.f32.gmra.mxu0 %v1315
    %v1355 = vpop.f32.mrf.mxu0
    %v1356 = vadd.f32 0.0, %v1355
    %1357 = vdwg.mxu0
    %1358 = vst [vmem:[#allocation3 + $0x8] sm:$0xff] %v1356
    %v1359 = vld [vmem:[#allocation2] sm:$0xff]
    %v1360 = vld [vmem:[#allocation2 + $0x8] sm:$0xff]
    %v1361 = vld [vmem:[#allocation3] sm:$0xff]
    %v1362 = vld [vmem:[#allocation3 + $0x8] sm:$0xff]
    %1363 = vmatpush.xpose.msra.mxu0 %v654
    %1364 = vmatpush.xpose.msra.mxu0 %v651
    %1365 = vmatpush.xpose.msra.mxu0 %v648
    %1366 = vmatpush.xpose.msra.mxu0 %v645
    %1367 = vmatpush.xpose.msra.mxu0 %v642
    %1368 = vmatpush.xpose.msra.mxu0 %v639
    %1369 = vmatpush.xpose.msra.mxu0 %v636
    %1370 = vmatpush.xpose.msra.mxu0 %v633
    %1371 = vmatpush.xpose.msra.mxu0 %v630
    %1372 = vmatpush.xpose.msra.mxu0 %v627
    %1373 = vmatpush.xpose.msra.mxu0 %v624
    %1374 = vmatpush.xpose.msra.mxu0 %v621
    %1375 = vmatpush.xpose.msra.mxu0 %v618
    %1376 = vmatpush.xpose.msra.mxu0 %v615
    %1377 = vmatpush.xpose.msra.mxu0 %v612
    %1378 = vmatpush.xpose.msra.mxu0 %v609
    %1379 = vmatmul.f32.gmra.mxu0 %v1196
    %v1380 = vpop.f32.mrf.mxu0
    %v1381 = vadd.f32 0.0, %v1380
    %1382 = vmatmul.f32.gmra.mxu0 %v1278
    %v1383 = vpop.f32.mrf.mxu0
    %v1384 = vadd.f32 0.0, %v1383
    %1385 = vdwg.mxu0
    %v1386 = vsel %vm679, %v1381, -1e+09
    %v1387 = vsel %vm679, %v1384, -1e+09
    %1388 = vmax.xlane.f32.xlu0 %v1386
    %v1389 = vpop.xlane.xlu0 %1388
    %1390 = vmax.xlane.f32.xlu0 %v1387
    %v1391 = vpop.xlane.xlu0 %1390
    %v1392 = vsub.f32 %v1386, %v1389
    %v1393 = vsub.f32 %v1387, %v1391
    %v1394 = vmul.f32 %v1392, 1.442695
    %v1395 = vpow.pop %v1394
    %v1396 = vmul.f32 %v1393, 1.442695
    %v1397 = vpow.pop %v1396
    %1398 = vadd.xlane.f32.xlu0 %v1395
    %v1399 = vpop.xlane.xlu0 %1398
    %1400 = vadd.xlane.f32.xlu0 %v1397
    %v1401 = vpop.xlane.xlu0 %1400
    %v1402 = vrcp.pop %v1399
    %v1403 = vrcp.pop %v1401
    %v1404 = vmul.f32 %v1399, %v1402
    %v1405 = vmul.f32 %v1401, %v1403
    %v1406 = vsub.f32 2.0, %v1404
    %v1407 = vsub.f32 2.0, %v1405
    %v1408 = vmul.f32 %v1402, %v1406
    %v1409 = vmul.f32 %v1403, %v1407
    %v1410 = vmul.f32 %v1395, %v1408
    %v1411 = vmul.f32 %v1397, %v1409
    %1412 = vrot.lane.b32.xlu0 %v1193, 32
    %v1413 = vpop.permute.xlu0 %1412
    %1414 = vrot.lane.b32.xlu0 %v1194, 32
    %v1415 = vpop.permute.xlu0 %1414
    %1420 = vrot.lane.b32.xlu0 %v1359, 64
    %v1421 = vpop.permute.xlu0 %1420
    %1422 = vrot.lane.b32.xlu0 %v1360, 64
    %v1423 = vpop.permute.xlu0 %1422
    %v1426 = vsel %vm175, %v952, %v1413
    %v1427 = vsel %vm175, %v955, %v1415
    %v1428 = vsel %vm722, %v1426, %v1421
    %v1429 = vsel %vm722, %v1427, %v1423
    %v1430 = vld [vmem:[%s10] sm:$0xff]
    %v1431 = vld [vmem:[%s10 + $0x8] sm:$0xff]
    %v1432 = vld [vmem:[%s10 + $0x10] sm:$0xff]
    %v1433 = vld [vmem:[%s10 + $0x18] sm:$0xff]
    %v1434 = vld [vmem:[%s10 + $0x20] sm:$0xff]
    %v1435 = vld [vmem:[%s10 + $0x28] sm:$0xff]
    %v1436 = vld [vmem:[%s10 + $0x30] sm:$0xff]
    %v1437 = vld [vmem:[%s10 + $0x38] sm:$0xff]
    %v1438 = vld [vmem:[%s10 + $0x40] sm:$0xff]
    %v1439 = vld [vmem:[%s10 + $0x48] sm:$0xff]
    %v1440 = vld [vmem:[%s10 + $0x50] sm:$0xff]
    %v1441 = vld [vmem:[%s10 + $0x58] sm:$0xff]
    %v1442 = vld [vmem:[#allocation4] sm:$0x1]
    %v1444 = vperm.slane %v1442, 0
    %v1447 = vsel %vm741, %v1428, 0
    %v1450 = vsel %vm741, %v1429, 0
    %1452 = vmatpush.msra.mxu0 0.0
    %1453 = vmatpush.msra.mxu0 0.0
    %1454 = vmatpush.msra.mxu0 0.0
    %1455 = vmatpush.msra.mxu0 0.0
    %1456 = vmatpush.msra.mxu0 %v1441
    %1457 = vmatpush.msra.mxu0 %v1440
    %1458 = vmatpush.msra.mxu0 %v1439
    %1459 = vmatpush.msra.mxu0 %v1438
    %1460 = vmatpush.msra.mxu0 %v1437
    %1461 = vmatpush.msra.mxu0 %v1436
    %1462 = vmatpush.msra.mxu0 %v1435
    %1463 = vmatpush.msra.mxu0 %v1434
    %1464 = vmatpush.msra.mxu0 %v1433
    %1465 = vmatpush.msra.mxu0 %v1432
    %1466 = vmatpush.msra.mxu0 %v1431
    %1467 = vmatpush.msra.mxu0 %v1430
    %1468 = vmatmul.f32.gmra.mxu0 %v1447
    %v1469 = vpop.f32.mrf.mxu0
    %v1470 = vadd.f32 %v1444, %v1469
    %1471 = vmatmul.f32.gmra.mxu0 %v1450
    %v1472 = vpop.f32.mrf.mxu0
    %v1473 = vadd.f32 %v1444, %v1472
    %1474 = vdwg.mxu0
    %v1475 = vxor.u32 %v1470, 2147483648
    %v1476 = vxor.u32 %v1473, 2147483648
    %v1477 = vmul.f32 %v1475, 1.442695
    %v1478 = vpow.pop %v1477
    %v1479 = vmul.f32 %v1476, 1.442695
    %v1480 = vpow.pop %v1479
    %v1481 = vadd.f32 %v1478, 1.0
    %v1482 = vadd.f32 %v1480, 1.0
    %v1483 = vrcp.pop %v1481
    %v1484 = vmul.f32 %v1481, %v1483
    %v1485 = vsub.f32 1.0, %v1484
    %v1486 = vmul.f32 %v1483, %v1485
    %v1487 = vadd.f32 %v1483, %v1486
    %vm1488 = vweird.f32 %v1481
    %vm1489 = vweird.f32 %v1483
    %vm1490 = vmor %vm1488, %vm1489
    %v1491 = vsel %vm1490, %v1483, %v1487
    %v1492 = vand.u32 2147483647, %v1481
    %vm1493 = vcmp.eq.f32.partialorder %v1492, 8.507059e+37
    %v1494 = vand.u32 %v1481, 2147483648
    %v1495 = vor.u32 1.1754944e-38, %v1494
    %v1496 = vsel %vm1493, %v1495, %v1491
    %v1497 = vmul.f32 1.0, %v1496
    %v1498 = vrcp.pop %v1482
    %v1499 = vmul.f32 %v1482, %v1498
    %v1500 = vsub.f32 1.0, %v1499
    %v1501 = vmul.f32 %v1498, %v1500
    %v1502 = vadd.f32 %v1498, %v1501
    %vm1503 = vweird.f32 %v1482
    %vm1504 = vweird.f32 %v1498
    %vm1505 = vmor %vm1503, %vm1504
    %v1506 = vsel %vm1505, %v1498, %v1502
    %v1507 = vand.u32 2147483647, %v1482
    %vm1508 = vcmp.eq.f32.partialorder %v1507, 8.507059e+37
    %v1509 = vand.u32 %v1482, 2147483648
    %v1510 = vor.u32 1.1754944e-38, %v1509
    %v1511 = vsel %vm1508, %v1510, %v1506
    %v1512 = vmul.f32 1.0, %v1511
    %1514 = vset.pattern.permute.xlu0 0
    %1515 = vperm.xlu0 %1514, %v1497
    %v1516 = vpop.permute.xlu0 %1515
    %1519 = vset.pattern.permute.xlu0 0
    %1520 = vperm.xlu0 %1519, %v1512
    %v1521 = vpop.permute.xlu0 %1520
    %v1523 = vmul.f32 %v1516, %v1410
    %v1524 = vmul.f32 %v1521, %v1411
    %v1525 = vsub.f32 1.0, %v1497
    %v1526 = vsub.f32 1.0, %v1512
    %1528 = vset.pattern.permute.xlu0 0
    %1529 = vperm.xlu0 %1528, %v1525
    %v1530 = vpop.permute.xlu0 %1529
    %1533 = vset.pattern.permute.xlu0 0
    %1534 = vperm.xlu0 %1533, %v1526
    %v1535 = vpop.permute.xlu0 %1534
    %v1537 = vmul.f32 %v1530, %v1361
    %v1538 = vmul.f32 %v1535, %v1362
    %v1539 = vadd.f32 %v1523, %v1537
    %v1540 = vadd.f32 %v1524, %v1538
    %v1542 = vrot.slane %v1539, 1
    %v1543 = vrot.slane %v1539, 2
    %1546 = vst [vmem:[#allocation11 + $0x1] sm:$0x1] %v1539
    %1547 = vst [vmem:[#allocation11 + $0x5] sm:$0x1] %v1542
    %1548 = vst [vmem:[#allocation11 + $0x9] sm:$0x1] %v1543
    %v1550 = vrot.slane %v1540, 1
    %v1551 = vrot.slane %v1540, 2
    %1554 = vst [vmem:[%s850 + $0x1] sm:$0x1] %v1540
    %1555 = vst [vmem:[%s850 + $0x5] sm:$0x1] %v1550
    %1556 = vst [vmem:[%s850 + $0x9] sm:$0x1] %v1551
    %1557 = vmax.xlane.f32.xlu0 %v1539
    %v1558 = vpop.xlane.xlu0 %1557
    %1559 = vmax.xlane.f32.xlu0 %v1540
    %v1560 = vpop.xlane.xlu0 %1559
    %vm1561 = vcmp.eq.f32.partialorder %v1539, %v1558
    %vm1562 = vcmp.eq.f32.partialorder %v1540, %v1560
    %v1563 = vsel %vm1561, %v142, 128
    %v1564 = vsel %vm1562, %v142, 128
    %v1565 = vand.u32 %v1563, 65535
    %v1566 = vshra.s32 %v1563, 16
    %v1567 = vcvt.s32.f32 %v1565
    %v1568 = vcvt.s32.f32 %v1566
    %1569 = vmin.xlane.f32.xlu0 %v1568
    %v1570 = vpop.xlane.xlu0 %1569
    %vm1571 = vcmp.eq.f32.partialorder %v1568, %v1570
    %v1572 = vsel %vm1571, %v1567, inf
    %1573 = vmin.xlane.f32.xlu0 %v1572
    %v1574 = vpop.xlane.xlu0 %1573
    %v1575 = vcvt.f32.s32 %v1574
    %v1576 = vcvt.f32.s32 %v1570
    %v1577 = vshll.u32 %v1576, 16
    %v1578 = vadd.s32 %v1577, %v1575
    %v1579 = vand.u32 %v1564, 65535
    %v1580 = vshra.s32 %v1564, 16
    %v1581 = vcvt.s32.f32 %v1579
    %v1582 = vcvt.s32.f32 %v1580
    %1583 = vmin.xlane.f32.xlu0 %v1582
    %v1584 = vpop.xlane.xlu0 %1583
    %vm1585 = vcmp.eq.f32.partialorder %v1582, %v1584
    %v1586 = vsel %vm1585, %v1581, inf
    %1587 = vmin.xlane.f32.xlu0 %v1586
    %v1588 = vpop.xlane.xlu0 %1587
    %v1589 = vcvt.f32.s32 %v1588
    %v1590 = vcvt.f32.s32 %v1584
    %v1591 = vshll.u32 %v1590, 16
    %v1592 = vadd.s32 %v1591, %v1589
    %vm1593 = vcmp.eq.s32.totalorder %v142, %v1578
    %vm1594 = vcmp.eq.s32.totalorder %v142, %v1592
    %v1595 = vsel %vm1593, 1, 0
    %v1596 = vsel %vm1594, 1, 0
    %v1597 = vcvt.s32.f32 %v1595
    %v1598 = vcvt.s32.f32 %v1596
    %1599 = vmatpush.msra.mxu0 %v114
    %1600 = vmatpush.msra.mxu0 %v113
    %1601 = vmatpush.msra.mxu0 %v112
    %1602 = vmatpush.msra.mxu0 %v111
    %1603 = vmatpush.msra.mxu0 %v110
    %1604 = vmatpush.msra.mxu0 %v109
    %1605 = vmatpush.msra.mxu0 %v108
    %1606 = vmatpush.msra.mxu0 %v107
    %1607 = vmatpush.msra.mxu0 %v106
    %1608 = vmatpush.msra.mxu0 %v105
    %1609 = vmatpush.msra.mxu0 %v104
    %1610 = vmatpush.msra.mxu0 %v103
    %1611 = vmatpush.msra.mxu0 %v102
    %1612 = vmatpush.msra.mxu0 %v101
    %1613 = vmatpush.msra.mxu0 %v100
    %1614 = vmatpush.msra.mxu0 %v99
    %1615 = vmatmul.f32.gmra.mxu0 %v1597
    %v1616 = vpop.f32.mrf.mxu0
    %v1617 = vadd.f32 0.0, %v1616
    %1618 = vmatmul.f32.gmra.mxu0 %v1598
    %v1619 = vpop.f32.mrf.mxu0
    %v1620 = vadd.f32 0.0, %v1619
    %1621 = vdwg.mxu0
    %v1623 = vsel %vm175, %v1617, 0
    %v1626 = vsel %vm175, %v1620, 0
    %1628 = vmatpush.msra.mxu0 0.0
    %1629 = vmatpush.msra.mxu0 0.0
    %1630 = vmatpush.msra.mxu0 0.0
    %1631 = vmatpush.msra.mxu0 0.0
    %1632 = vmatpush.msra.mxu0 0.0
    %1633 = vmatpush.msra.mxu0 0.0
    %1634 = vmatpush.msra.mxu0 0.0
    %1635 = vmatpush.msra.mxu0 0.0
    %1636 = vmatpush.msra.mxu0 0.0
    %1637 = vmatpush.msra.mxu0 0.0
    %1638 = vmatpush.msra.mxu0 0.0
    %1639 = vmatpush.msra.mxu0 0.0
    %1640 = vmatpush.msra.mxu0 %v124
    %1641 = vmatpush.msra.mxu0 %v121
    %1642 = vmatpush.msra.mxu0 %v118
    %1643 = vmatpush.msra.mxu0 %v115
    %1644 = vmatmul.f32.gmra.mxu0 %v1623
    %v1645 = vpop.f32.mrf.mxu0
    %v1646 = vadd.f32 %v169, %v1645
    %1647 = vmatmul.f32.gmra.mxu0 %v1626
    %v1648 = vpop.f32.mrf.mxu0
    %v1649 = vadd.f32 %v169, %v1648
    %1650 = vdwg.mxu0
    %1651 = vmatpush.msra.mxu0 0.0
    %1652 = vmatpush.msra.mxu0 0.0
    %1653 = vmatpush.msra.mxu0 0.0
    %1654 = vmatpush.msra.mxu0 0.0
    %1655 = vmatpush.msra.mxu0 0.0
    %1656 = vmatpush.msra.mxu0 0.0
    %1657 = vmatpush.msra.mxu0 0.0
    %1658 = vmatpush.msra.mxu0 0.0
    %1659 = vmatpush.msra.mxu0 0.0
    %1660 = vmatpush.msra.mxu0 0.0
    %1661 = vmatpush.msra.mxu0 0.0
    %1662 = vmatpush.msra.mxu0 0.0
    %1663 = vmatpush.msra.mxu0 %v125
    %1664 = vmatpush.msra.mxu0 %v122
    %1665 = vmatpush.msra.mxu0 %v119
    %1666 = vmatpush.msra.mxu0 %v116
    %1667 = vmatmul.f32.gmra.mxu0 %v1623
    %v1668 = vpop.f32.mrf.mxu0
    %v1669 = vadd.f32 %v170, %v1668
    %1670 = vmatmul.f32.gmra.mxu0 %v1626
    %v1671 = vpop.f32.mrf.mxu0
    %v1672 = vadd.f32 %v170, %v1671
    %1673 = vdwg.mxu0
    %1674 = vmatpush.msra.mxu0 0.0
    %1675 = vmatpush.msra.mxu0 0.0
    %1676 = vmatpush.msra.mxu0 0.0
    %1677 = vmatpush.msra.mxu0 0.0
    %1678 = vmatpush.msra.mxu0 0.0
    %1679 = vmatpush.msra.mxu0 0.0
    %1680 = vmatpush.msra.mxu0 0.0
    %1681 = vmatpush.msra.mxu0 0.0
    %1682 = vmatpush.msra.mxu0 0.0
    %1683 = vmatpush.msra.mxu0 0.0
    %1684 = vmatpush.msra.mxu0 0.0
    %1685 = vmatpush.msra.mxu0 0.0
    %1686 = vmatpush.msra.mxu0 %v126
    %1687 = vmatpush.msra.mxu0 %v123
    %1688 = vmatpush.msra.mxu0 %v120
    %1689 = vmatpush.msra.mxu0 %v117
    %1690 = vmatmul.f32.gmra.mxu0 %v1623
    %v1691 = vpop.f32.mrf.mxu0
    %v1692 = vadd.f32 %v171, %v1691
    %1693 = vmatmul.f32.gmra.mxu0 %v1626
    %v1694 = vpop.f32.mrf.mxu0
    %v1695 = vadd.f32 %v171, %v1694
    %1696 = vdwg.mxu0
    %1697 = vmatpush.msra.mxu0 0.0
    %1698 = vmatpush.msra.mxu0 0.0
    %1699 = vmatpush.msra.mxu0 0.0
    %1700 = vmatpush.msra.mxu0 0.0
    %1701 = vmatpush.msra.mxu0 0.0
    %1702 = vmatpush.msra.mxu0 0.0
    %1703 = vmatpush.msra.mxu0 0.0
    %1704 = vmatpush.msra.mxu0 0.0
    %1705 = vmatpush.msra.mxu0 0.0
    %1706 = vmatpush.msra.mxu0 0.0
    %1707 = vmatpush.msra.mxu0 0.0
    %1708 = vmatpush.msra.mxu0 0.0
    %1709 = vmatpush.msra.mxu0 %v136
    %1710 = vmatpush.msra.mxu0 %v133
    %1711 = vmatpush.msra.mxu0 %v130
    %1712 = vmatpush.msra.mxu0 %v127
    %1713 = vmatmul.f32.gmra.mxu0 %v1196
    %v1714 = vpop.f32.mrf.mxu0
    %v1715 = vadd.f32 %v252, %v1714
    %1716 = vmatmul.f32.gmra.mxu0 %v1278
    %v1717 = vpop.f32.mrf.mxu0
    %v1718 = vadd.f32 %v252, %v1717
    %1719 = vdwg.mxu0
    %1720 = vmatpush.msra.mxu0 0.0
    %1721 = vmatpush.msra.mxu0 0.0
    %1722 = vmatpush.msra.mxu0 0.0
    %1723 = vmatpush.msra.mxu0 0.0
    %1724 = vmatpush.msra.mxu0 0.0
    %1725 = vmatpush.msra.mxu0 0.0
    %1726 = vmatpush.msra.mxu0 0.0
    %1727 = vmatpush.msra.mxu0 0.0
    %1728 = vmatpush.msra.mxu0 0.0
    %1729 = vmatpush.msra.mxu0 0.0
    %1730 = vmatpush.msra.mxu0 0.0
    %1731 = vmatpush.msra.mxu0 0.0
    %1732 = vmatpush.msra.mxu0 %v137
    %1733 = vmatpush.msra.mxu0 %v134
    %1734 = vmatpush.msra.mxu0 %v131
    %1735 = vmatpush.msra.mxu0 %v128
    %1736 = vmatmul.f32.gmra.mxu0 %v1196
    %v1737 = vpop.f32.mrf.mxu0
    %v1738 = vadd.f32 %v253, %v1737
    %1739 = vmatmul.f32.gmra.mxu0 %v1278
    %v1740 = vpop.f32.mrf.mxu0
    %v1741 = vadd.f32 %v253, %v1740
    %1742 = vdwg.mxu0
    %1743 = vmatpush.msra.mxu0 0.0
    %1744 = vmatpush.msra.mxu0 0.0
    %1745 = vmatpush.msra.mxu0 0.0
    %1746 = vmatpush.msra.mxu0 0.0
    %1747 = vmatpush.msra.mxu0 0.0
    %1748 = vmatpush.msra.mxu0 0.0
    %1749 = vmatpush.msra.mxu0 0.0
    %1750 = vmatpush.msra.mxu0 0.0
    %1751 = vmatpush.msra.mxu0 0.0
    %1752 = vmatpush.msra.mxu0 0.0
    %1753 = vmatpush.msra.mxu0 0.0
    %1754 = vmatpush.msra.mxu0 0.0
    %1755 = vmatpush.msra.mxu0 %v138
    %1756 = vmatpush.msra.mxu0 %v135
    %1757 = vmatpush.msra.mxu0 %v132
    %1758 = vmatpush.msra.mxu0 %v129
    %1759 = vmatmul.f32.gmra.mxu0 %v1196
    %v1760 = vpop.f32.mrf.mxu0
    %v1761 = vadd.f32 %v254, %v1760
    %1762 = vmatmul.f32.gmra.mxu0 %v1278
    %v1763 = vpop.f32.mrf.mxu0
    %v1764 = vadd.f32 %v254, %v1763
    %1765 = vdwg.mxu0
    %v1766 = vadd.f32 %v1646, %v1715
    %v1767 = vadd.f32 %v1649, %v1718
    %v1768 = vxor.u32 %v1766, 2147483648
    %v1769 = vxor.u32 %v1767, 2147483648
    %v1770 = vmul.f32 %v1768, 1.442695
    %v1771 = vpow.pop %v1770
    %v1772 = vmul.f32 %v1769, 1.442695
    %v1773 = vpow.pop %v1772
    %v1774 = vadd.f32 %v1771, 1.0
    %v1775 = vadd.f32 %v1773, 1.0
    %v1776 = vrcp.pop %v1774
    %v1777 = vmul.f32 %v1774, %v1776
    %v1778 = vsub.f32 1.0, %v1777
    %v1779 = vmul.f32 %v1776, %v1778
    %v1780 = vadd.f32 %v1776, %v1779
    %vm1781 = vweird.f32 %v1774
    %vm1782 = vweird.f32 %v1776
    %vm1783 = vmor %vm1781, %vm1782
    %v1784 = vsel %vm1783, %v1776, %v1780
    %v1785 = vand.u32 2147483647, %v1774
    %vm1786 = vcmp.eq.f32.partialorder %v1785, 8.507059e+37
    %v1787 = vand.u32 %v1774, 2147483648
    %v1788 = vor.u32 1.1754944e-38, %v1787
    %v1789 = vsel %vm1786, %v1788, %v1784
    %v1790 = vmul.f32 1.0, %v1789
    %v1791 = vrcp.pop %v1775
    %v1792 = vmul.f32 %v1775, %v1791
    %v1793 = vsub.f32 1.0, %v1792
    %v1794 = vmul.f32 %v1791, %v1793
    %v1795 = vadd.f32 %v1791, %v1794
    %vm1796 = vweird.f32 %v1775
    %vm1797 = vweird.f32 %v1791
    %vm1798 = vmor %vm1796, %vm1797
    %v1799 = vsel %vm1798, %v1791, %v1795
    %v1800 = vand.u32 2147483647, %v1775
    %vm1801 = vcmp.eq.f32.partialorder %v1800, 8.507059e+37
    %v1802 = vand.u32 %v1775, 2147483648
    %v1803 = vor.u32 1.1754944e-38, %v1802
    %v1804 = vsel %vm1801, %v1803, %v1799
    %v1805 = vmul.f32 1.0, %v1804
    %v1806 = vadd.f32 %v1669, %v1738
    %v1807 = vadd.f32 %v1672, %v1741
    %v1808 = vxor.u32 %v1806, 2147483648
    %v1809 = vxor.u32 %v1807, 2147483648
    %v1810 = vmul.f32 %v1808, 1.442695
    %v1811 = vpow.pop %v1810
    %v1812 = vmul.f32 %v1809, 1.442695
    %v1813 = vpow.pop %v1812
    %v1814 = vadd.f32 %v1811, 1.0
    %v1815 = vadd.f32 %v1813, 1.0
    %v1816 = vrcp.pop %v1814
    %v1817 = vmul.f32 %v1814, %v1816
    %v1818 = vsub.f32 1.0, %v1817
    %v1819 = vmul.f32 %v1816, %v1818
    %v1820 = vadd.f32 %v1816, %v1819
    %vm1821 = vweird.f32 %v1814
    %vm1822 = vweird.f32 %v1816
    %vm1823 = vmor %vm1821, %vm1822
    %v1824 = vsel %vm1823, %v1816, %v1820
    %v1825 = vand.u32 2147483647, %v1814
    %vm1826 = vcmp.eq.f32.partialorder %v1825, 8.507059e+37
    %v1827 = vand.u32 %v1814, 2147483648
    %v1828 = vor.u32 1.1754944e-38, %v1827
    %v1829 = vsel %vm1826, %v1828, %v1824
    %v1830 = vmul.f32 1.0, %v1829
    %v1831 = vrcp.pop %v1815
    %v1832 = vmul.f32 %v1815, %v1831
    %v1833 = vsub.f32 1.0, %v1832
    %v1834 = vmul.f32 %v1831, %v1833
    %v1835 = vadd.f32 %v1831, %v1834
    %vm1836 = vweird.f32 %v1815
    %vm1837 = vweird.f32 %v1831
    %vm1838 = vmor %vm1836, %vm1837
    %v1839 = vsel %vm1838, %v1831, %v1835
    %v1840 = vand.u32 2147483647, %v1815
    %vm1841 = vcmp.eq.f32.partialorder %v1840, 8.507059e+37
    %v1842 = vand.u32 %v1815, 2147483648
    %v1843 = vor.u32 1.1754944e-38, %v1842
    %v1844 = vsel %vm1841, %v1843, %v1839
    %v1845 = vmul.f32 1.0, %v1844
    %v1846 = vmul.f32 %v1790, %v1761
    %v1847 = vmul.f32 %v1805, %v1764
    %v1848 = vadd.f32 %v1692, %v1846
    %v1849 = vadd.f32 %v1695, %v1847
    %v1850 = vtanh.pop %v1848
    %v1851 = vtanh.pop %v1849
    %v1852 = vsub.f32 1.0, %v1830
    %v1853 = vsub.f32 1.0, %v1845
    %v1854 = vmul.f32 %v1852, %v1850
    %v1855 = vmul.f32 %v1853, %v1851
    %v1856 = vmul.f32 %v1830, %v1193
    %v1857 = vmul.f32 %v1845, %v1194
    %v1858 = vadd.f32 %v1854, %v1856
    %v1859 = vadd.f32 %v1855, %v1857
    %v1861 = vsel %vm175, %v1858, 0
    %1863 = vmatpush.xpose.msra.mxu0 0.0
    %1864 = vmatpush.xpose.msra.mxu0 0.0
    %1865 = vmatpush.xpose.msra.mxu0 0.0
    %1866 = vmatpush.xpose.msra.mxu0 0.0
    %1867 = vmatpush.xpose.msra.mxu0 0.0
    %1868 = vmatpush.xpose.msra.mxu0 0.0
    %1869 = vmatpush.xpose.msra.mxu0 0.0
    %1870 = vmatpush.xpose.msra.mxu0 0.0
    %1871 = vmatpush.xpose.msra.mxu0 0.0
    %1872 = vmatpush.xpose.msra.mxu0 0.0
    %1873 = vmatpush.xpose.msra.mxu0 0.0
    %1874 = vmatpush.xpose.msra.mxu0 0.0
    %1875 = vmatpush.xpose.msra.mxu0 0.0
    %1876 = vmatpush.xpose.msra.mxu0 0.0
    %1877 = vmatpush.xpose.msra.mxu0 0.0
    %1878 = vmatpush.xpose.msra.mxu0 %v434
    %1879 = vmatmul.f32.gmra.mxu0 %v1861
    %v1880 = vpop.f32.mrf.mxu0
    %v1881 = vadd.f32 %v428, %v1880
    %1882 = vdwg.mxu0
    %v1883 = vsel %vm456, %v1881, -inf
    %1884 = vmax.xlane.f32.xlu0 %v1883
    %v1885 = vpop.xlane.xlu0 %1884
    %v1886 = vsub.f32 %v1881, %v1885
    %v1887 = vmul.f32 %v1886, 1.442695
    %v1888 = vpow.pop %v1887
    %v1889 = vsel %vm456, %v1888, 0.0
    %1890 = vadd.xlane.f32.xlu0 %v1889
    %v1891 = vpop.xlane.xlu0 %1890
    %v1892 = vrcp.pop %v1891
    %v1893 = vmul.f32 %v1891, %v1892
    %v1894 = vsub.f32 2.0, %v1893
    %v1895 = vmul.f32 %v1892, %v1894
    %v1896 = vmul.f32 %v1888, %v1895
    %v1898 = vsel %vm456, %v1896, 0
    %1900 = vmatpush.msra.mxu0 0.0
    %1901 = vmatpush.msra.mxu0 0.0
    %1902 = vmatpush.msra.mxu0 0.0
    %1903 = vmatpush.msra.mxu0 0.0
    %1904 = vmatpush.msra.mxu0 0.0
    %1905 = vmatpush.msra.mxu0 0.0
    %1906 = vmatpush.msra.mxu0 0.0
    %1907 = vmatpush.msra.mxu0 0.0
    %1908 = vmatpush.msra.mxu0 0.0
    %1909 = vmatpush.msra.mxu0 0.0
    %1910 = vmatpush.msra.mxu0 0.0
    %1911 = vmatpush.msra.mxu0 0.0
    %1912 = vmatpush.msra.mxu0 0.0
    %1913 = vmatpush.msra.mxu0 0.0
    %1914 = vmatpush.msra.mxu0 0.0
    %1915 = vmatpush.msra.mxu0 %v158
    %1916 = vmatmul.f32.gmra.mxu0 %v1898
    %v1917 = vpop.f32.mrf.mxu0
    %v1918 = vadd.f32 0.0, %v1917
    %1919 = vdwg.mxu0
    %1920 = vst.msk [vmem:[#allocation2] sm:$0xff] %vm175, %v1918
    %1921 = vmatpush.msra.mxu0 0.0
    %1922 = vmatpush.msra.mxu0 0.0
    %1923 = vmatpush.msra.mxu0 0.0
    %1924 = vmatpush.msra.mxu0 0.0
    %1925 = vmatpush.msra.mxu0 0.0
    %1926 = vmatpush.msra.mxu0 0.0
    %1927 = vmatpush.msra.mxu0 0.0
    %1928 = vmatpush.msra.mxu0 0.0
    %1929 = vmatpush.msra.mxu0 0.0
    %1930 = vmatpush.msra.mxu0 0.0
    %1931 = vmatpush.msra.mxu0 0.0
    %1932 = vmatpush.msra.mxu0 0.0
    %1933 = vmatpush.msra.mxu0 0.0
    %1934 = vmatpush.msra.mxu0 0.0
    %1935 = vmatpush.msra.mxu0 0.0
    %1936 = vmatpush.msra.mxu0 %v149
    %1937 = vmatmul.f32.gmra.mxu0 %v1898
    %v1938 = vpop.f32.mrf.mxu0
    %v1939 = vadd.f32 0.0, %v1938
    %1940 = vdwg.mxu0
    %1941 = vst [vmem:[#allocation3] sm:$0xff] %v1939
    %v1943 = vsel %vm175, %v1859, 0
    %1945 = vmatpush.xpose.msra.mxu0 0.0
    %1946 = vmatpush.xpose.msra.mxu0 0.0
    %1947 = vmatpush.xpose.msra.mxu0 0.0
    %1948 = vmatpush.xpose.msra.mxu0 0.0
    %1949 = vmatpush.xpose.msra.mxu0 0.0
    %1950 = vmatpush.xpose.msra.mxu0 0.0
    %1951 = vmatpush.xpose.msra.mxu0 0.0
    %1952 = vmatpush.xpose.msra.mxu0 0.0
    %1953 = vmatpush.xpose.msra.mxu0 0.0
    %1954 = vmatpush.xpose.msra.mxu0 0.0
    %1955 = vmatpush.xpose.msra.mxu0 0.0
    %1956 = vmatpush.xpose.msra.mxu0 0.0
    %1957 = vmatpush.xpose.msra.mxu0 0.0
    %1958 = vmatpush.xpose.msra.mxu0 0.0
    %1959 = vmatpush.xpose.msra.mxu0 0.0
    %1960 = vmatpush.xpose.msra.mxu0 %v523
    %1961 = vmatmul.f32.gmra.mxu0 %v1943
    %v1962 = vpop.f32.mrf.mxu0
    %v1963 = vadd.f32 %v517, %v1962
    %1964 = vdwg.mxu0
    %v1965 = vsel %vm456, %v1963, -inf
    %1966 = vmax.xlane.f32.xlu0 %v1965
    %v1967 = vpop.xlane.xlu0 %1966
    %v1968 = vsub.f32 %v1963, %v1967
    %v1969 = vmul.f32 %v1968, 1.442695
    %v1970 = vpow.pop %v1969
    %v1971 = vsel %vm456, %v1970, 0.0
    %1972 = vadd.xlane.f32.xlu0 %v1971
    %v1973 = vpop.xlane.xlu0 %1972
    %v1974 = vrcp.pop %v1973
    %v1975 = vmul.f32 %v1973, %v1974
    %v1976 = vsub.f32 2.0, %v1975
    %v1977 = vmul.f32 %v1974, %v1976
    %v1978 = vmul.f32 %v1970, %v1977
    %v1980 = vsel %vm456, %v1978, 0
    %1982 = vmatpush.msra.mxu0 0.0
    %1983 = vmatpush.msra.mxu0 0.0
    %1984 = vmatpush.msra.mxu0 0.0
    %1985 = vmatpush.msra.mxu0 0.0
    %1986 = vmatpush.msra.mxu0 0.0
    %1987 = vmatpush.msra.mxu0 0.0
    %1988 = vmatpush.msra.mxu0 0.0
    %1989 = vmatpush.msra.mxu0 0.0
    %1990 = vmatpush.msra.mxu0 0.0
    %1991 = vmatpush.msra.mxu0 0.0
    %1992 = vmatpush.msra.mxu0 0.0
    %1993 = vmatpush.msra.mxu0 0.0
    %1994 = vmatpush.msra.mxu0 0.0
    %1995 = vmatpush.msra.mxu0 0.0
    %1996 = vmatpush.msra.mxu0 0.0
    %1997 = vmatpush.msra.mxu0 %v160
    %1998 = vmatmul.f32.gmra.mxu0 %v1980
    %v1999 = vpop.f32.mrf.mxu0
    %v2000 = vadd.f32 0.0, %v1999
    %2001 = vdwg.mxu0
    %2002 = vst.msk [vmem:[#allocation2 + $0x8] sm:$0xff] %vm175, %v2000
    %2003 = vmatpush.msra.mxu0 0.0
    %2004 = vmatpush.msra.mxu0 0.0
    %2005 = vmatpush.msra.mxu0 0.0
    %2006 = vmatpush.msra.mxu0 0.0
    %2007 = vmatpush.msra.mxu0 0.0
    %2008 = vmatpush.msra.mxu0 0.0
    %2009 = vmatpush.msra.mxu0 0.0
    %2010 = vmatpush.msra.mxu0 0.0
    %2011 = vmatpush.msra.mxu0 0.0
    %2012 = vmatpush.msra.mxu0 0.0
    %2013 = vmatpush.msra.mxu0 0.0
    %2014 = vmatpush.msra.mxu0 0.0
    %2015 = vmatpush.msra.mxu0 0.0
    %2016 = vmatpush.msra.mxu0 0.0
    %2017 = vmatpush.msra.mxu0 0.0
    %2018 = vmatpush.msra.mxu0 %v157
    %2019 = vmatmul.f32.gmra.mxu0 %v1980
    %v2020 = vpop.f32.mrf.mxu0
    %v2021 = vadd.f32 0.0, %v2020
    %2022 = vdwg.mxu0
    %2023 = vst [vmem:[#allocation3 + $0x8] sm:$0xff] %v2021
    %v2024 = vld [vmem:[#allocation2] sm:$0xff]
    %v2025 = vld [vmem:[#allocation2 + $0x8] sm:$0xff]
    %v2026 = vld [vmem:[#allocation3] sm:$0xff]
    %v2027 = vld [vmem:[#allocation3 + $0x8] sm:$0xff]
    %2028 = vmatpush.xpose.msra.mxu0 %v654
    %2029 = vmatpush.xpose.msra.mxu0 %v651
    %2030 = vmatpush.xpose.msra.mxu0 %v648
    %2031 = vmatpush.xpose.msra.mxu0 %v645
    %2032 = vmatpush.xpose.msra.mxu0 %v642
    %2033 = vmatpush.xpose.msra.mxu0 %v639
    %2034 = vmatpush.xpose.msra.mxu0 %v636
    %2035 = vmatpush.xpose.msra.mxu0 %v633
    %2036 = vmatpush.xpose.msra.mxu0 %v630
    %2037 = vmatpush.xpose.msra.mxu0 %v627
    %2038 = vmatpush.xpose.msra.mxu0 %v624
    %2039 = vmatpush.xpose.msra.mxu0 %v621
    %2040 = vmatpush.xpose.msra.mxu0 %v618
    %2041 = vmatpush.xpose.msra.mxu0 %v615
    %2042 = vmatpush.xpose.msra.mxu0 %v612
    %2043 = vmatpush.xpose.msra.mxu0 %v609
    %2044 = vmatmul.f32.gmra.mxu0 %v1861
    %v2045 = vpop.f32.mrf.mxu0
    %v2046 = vadd.f32 0.0, %v2045
    %2047 = vmatmul.f32.gmra.mxu0 %v1943
    %v2048 = vpop.f32.mrf.mxu0
    %v2049 = vadd.f32 0.0, %v2048
    %2050 = vdwg.mxu0
    %v2051 = vsel %vm679, %v2046, -1e+09
    %v2052 = vsel %vm679, %v2049, -1e+09
    %2053 = vmax.xlane.f32.xlu0 %v2051
    %v2054 = vpop.xlane.xlu0 %2053
    %2055 = vmax.xlane.f32.xlu0 %v2052
    %v2056 = vpop.xlane.xlu0 %2055
    %v2057 = vsub.f32 %v2051, %v2054
    %v2058 = vsub.f32 %v2052, %v2056
    %v2059 = vmul.f32 %v2057, 1.442695
    %v2060 = vpow.pop %v2059
    %v2061 = vmul.f32 %v2058, 1.442695
    %v2062 = vpow.pop %v2061
    %2063 = vadd.xlane.f32.xlu0 %v2060
    %v2064 = vpop.xlane.xlu0 %2063
    %2065 = vadd.xlane.f32.xlu0 %v2062
    %v2066 = vpop.xlane.xlu0 %2065
    %v2067 = vrcp.pop %v2064
    %v2068 = vrcp.pop %v2066
    %v2069 = vmul.f32 %v2064, %v2067
    %v2070 = vmul.f32 %v2066, %v2068
    %v2071 = vsub.f32 2.0, %v2069
    %v2072 = vsub.f32 2.0, %v2070
    %v2073 = vmul.f32 %v2067, %v2071
    %v2074 = vmul.f32 %v2068, %v2072
    %v2075 = vmul.f32 %v2060, %v2073
    %v2076 = vmul.f32 %v2062, %v2074
    %2077 = vrot.lane.b32.xlu0 %v1858, 32
    %v2078 = vpop.permute.xlu0 %2077
    %2079 = vrot.lane.b32.xlu0 %v1859, 32
    %v2080 = vpop.permute.xlu0 %2079
    %2085 = vrot.lane.b32.xlu0 %v2024, 64
    %v2086 = vpop.permute.xlu0 %2085
    %2087 = vrot.lane.b32.xlu0 %v2025, 64
    %v2088 = vpop.permute.xlu0 %2087
    %v2091 = vsel %vm175, %v1617, %v2078
    %v2092 = vsel %vm175, %v1620, %v2080
    %v2093 = vsel %vm722, %v2091, %v2086
    %v2094 = vsel %vm722, %v2092, %v2088
    %v2095 = vld [vmem:[%s10] sm:$0xff]
    %v2096 = vld [vmem:[%s10 + $0x8] sm:$0xff]
    %v2097 = vld [vmem:[%s10 + $0x10] sm:$0xff]
    %v2098 = vld [vmem:[%s10 + $0x18] sm:$0xff]
    %v2099 = vld [vmem:[%s10 + $0x20] sm:$0xff]
    %v2100 = vld [vmem:[%s10 + $0x28] sm:$0xff]
    %v2101 = vld [vmem:[%s10 + $0x30] sm:$0xff]
    %v2102 = vld [vmem:[%s10 + $0x38] sm:$0xff]
    %v2103 = vld [vmem:[%s10 + $0x40] sm:$0xff]
    %v2104 = vld [vmem:[%s10 + $0x48] sm:$0xff]
    %v2105 = vld [vmem:[%s10 + $0x50] sm:$0xff]
    %v2106 = vld [vmem:[%s10 + $0x58] sm:$0xff]
    %v2107 = vld [vmem:[#allocation4] sm:$0x1]
    %v2109 = vperm.slane %v2107, 0
    %v2112 = vsel %vm741, %v2093, 0
    %v2115 = vsel %vm741, %v2094, 0
    %2117 = vmatpush.msra.mxu0 0.0
    %2118 = vmatpush.msra.mxu0 0.0
    %2119 = vmatpush.msra.mxu0 0.0
    %2120 = vmatpush.msra.mxu0 0.0
    %2121 = vmatpush.msra.mxu0 %v2106
    %2122 = vmatpush.msra.mxu0 %v2105
    %2123 = vmatpush.msra.mxu0 %v2104
    %2124 = vmatpush.msra.mxu0 %v2103
    %2125 = vmatpush.msra.mxu0 %v2102
    %2126 = vmatpush.msra.mxu0 %v2101
    %2127 = vmatpush.msra.mxu0 %v2100
    %2128 = vmatpush.msra.mxu0 %v2099
    %2129 = vmatpush.msra.mxu0 %v2098
    %2130 = vmatpush.msra.mxu0 %v2097
    %2131 = vmatpush.msra.mxu0 %v2096
    %2132 = vmatpush.msra.mxu0 %v2095
    %2133 = vmatmul.f32.gmra.mxu0 %v2112
    %v2134 = vpop.f32.mrf.mxu0
    %v2135 = vadd.f32 %v2109, %v2134
    %2136 = vmatmul.f32.gmra.mxu0 %v2115
    %v2137 = vpop.f32.mrf.mxu0
    %v2138 = vadd.f32 %v2109, %v2137
    %2139 = vdwg.mxu0
    %v2140 = vxor.u32 %v2135, 2147483648
    %v2141 = vxor.u32 %v2138, 2147483648
    %v2142 = vmul.f32 %v2140, 1.442695
    %v2143 = vpow.pop %v2142
    %v2144 = vmul.f32 %v2141, 1.442695
    %v2145 = vpow.pop %v2144
    %v2146 = vadd.f32 %v2143, 1.0
    %v2147 = vadd.f32 %v2145, 1.0
    %v2148 = vrcp.pop %v2146
    %v2149 = vmul.f32 %v2146, %v2148
    %v2150 = vsub.f32 1.0, %v2149
    %v2151 = vmul.f32 %v2148, %v2150
    %v2152 = vadd.f32 %v2148, %v2151
    %vm2153 = vweird.f32 %v2146
    %vm2154 = vweird.f32 %v2148
    %vm2155 = vmor %vm2153, %vm2154
    %v2156 = vsel %vm2155, %v2148, %v2152
    %v2157 = vand.u32 2147483647, %v2146
    %vm2158 = vcmp.eq.f32.partialorder %v2157, 8.507059e+37
    %v2159 = vand.u32 %v2146, 2147483648
    %v2160 = vor.u32 1.1754944e-38, %v2159
    %v2161 = vsel %vm2158, %v2160, %v2156
    %v2162 = vmul.f32 1.0, %v2161
    %v2163 = vrcp.pop %v2147
    %v2164 = vmul.f32 %v2147, %v2163
    %v2165 = vsub.f32 1.0, %v2164
    %v2166 = vmul.f32 %v2163, %v2165
    %v2167 = vadd.f32 %v2163, %v2166
    %vm2168 = vweird.f32 %v2147
    %vm2169 = vweird.f32 %v2163
    %vm2170 = vmor %vm2168, %vm2169
    %v2171 = vsel %vm2170, %v2163, %v2167
    %v2172 = vand.u32 2147483647, %v2147
    %vm2173 = vcmp.eq.f32.partialorder %v2172, 8.507059e+37
    %v2174 = vand.u32 %v2147, 2147483648
    %v2175 = vor.u32 1.1754944e-38, %v2174
    %v2176 = vsel %vm2173, %v2175, %v2171
    %v2177 = vmul.f32 1.0, %v2176
    %2179 = vset.pattern.permute.xlu0 0
    %2180 = vperm.xlu0 %2179, %v2162
    %v2181 = vpop.permute.xlu0 %2180
    %2184 = vset.pattern.permute.xlu0 0
    %2185 = vperm.xlu0 %2184, %v2177
    %v2186 = vpop.permute.xlu0 %2185
    %v2188 = vmul.f32 %v2181, %v2075
    %v2189 = vmul.f32 %v2186, %v2076
    %v2190 = vsub.f32 1.0, %v2162
    %v2191 = vsub.f32 1.0, %v2177
    %2193 = vset.pattern.permute.xlu0 0
    %2194 = vperm.xlu0 %2193, %v2190
    %v2195 = vpop.permute.xlu0 %2194
    %2198 = vset.pattern.permute.xlu0 0
    %2199 = vperm.xlu0 %2198, %v2191
    %v2200 = vpop.permute.xlu0 %2199
    %v2202 = vmul.f32 %v2195, %v2026
    %v2203 = vmul.f32 %v2200, %v2027
    %v2204 = vadd.f32 %v2188, %v2202
    %v2205 = vadd.f32 %v2189, %v2203
    %v2207 = vrot.slane %v2204, 1
    %v2208 = vrot.slane %v2204, 2
    %2211 = vst [vmem:[#allocation11 + $0x2] sm:$0x1] %v2204
    %2212 = vst [vmem:[#allocation11 + $0x6] sm:$0x1] %v2207
    %2213 = vst [vmem:[#allocation11 + $0xa] sm:$0x1] %v2208
    %v2215 = vrot.slane %v2205, 1
    %v2216 = vrot.slane %v2205, 2
    %2219 = vst [vmem:[%s850 + $0x2] sm:$0x1] %v2205
    %2220 = vst [vmem:[%s850 + $0x6] sm:$0x1] %v2215
    %2221 = vst [vmem:[%s850 + $0xa] sm:$0x1] %v2216
    %2222 = vmax.xlane.f32.xlu0 %v2204
    %v2223 = vpop.xlane.xlu0 %2222
    %2224 = vmax.xlane.f32.xlu0 %v2205
    %v2225 = vpop.xlane.xlu0 %2224
    %vm2226 = vcmp.eq.f32.partialorder %v2204, %v2223
    %vm2227 = vcmp.eq.f32.partialorder %v2205, %v2225
    %v2228 = vsel %vm2226, %v142, 128
    %v2229 = vsel %vm2227, %v142, 128
    %v2230 = vand.u32 %v2228, 65535
    %v2231 = vshra.s32 %v2228, 16
    %v2232 = vcvt.s32.f32 %v2230
    %v2233 = vcvt.s32.f32 %v2231
    %2234 = vmin.xlane.f32.xlu0 %v2233
    %v2235 = vpop.xlane.xlu0 %2234
    %vm2236 = vcmp.eq.f32.partialorder %v2233, %v2235
    %v2237 = vsel %vm2236, %v2232, inf
    %2238 = vmin.xlane.f32.xlu0 %v2237
    %v2239 = vpop.xlane.xlu0 %2238
    %v2240 = vcvt.f32.s32 %v2239
    %v2241 = vcvt.f32.s32 %v2235
    %v2242 = vshll.u32 %v2241, 16
    %v2243 = vadd.s32 %v2242, %v2240
    %v2244 = vand.u32 %v2229, 65535
    %v2245 = vshra.s32 %v2229, 16
    %v2246 = vcvt.s32.f32 %v2244
    %v2247 = vcvt.s32.f32 %v2245
    %2248 = vmin.xlane.f32.xlu0 %v2247
    %v2249 = vpop.xlane.xlu0 %2248
    %vm2250 = vcmp.eq.f32.partialorder %v2247, %v2249
    %v2251 = vsel %vm2250, %v2246, inf
    %2252 = vmin.xlane.f32.xlu0 %v2251
    %v2253 = vpop.xlane.xlu0 %2252
    %v2254 = vcvt.f32.s32 %v2253
    %v2255 = vcvt.f32.s32 %v2249
    %v2256 = vshll.u32 %v2255, 16
    %v2257 = vadd.s32 %v2256, %v2254
    %vm2258 = vcmp.eq.s32.totalorder %v142, %v2243
    %vm2259 = vcmp.eq.s32.totalorder %v142, %v2257
    %v2260 = vsel %vm2258, 1, 0
    %v2261 = vsel %vm2259, 1, 0
    %v2262 = vcvt.s32.f32 %v2260
    %v2263 = vcvt.s32.f32 %v2261
    %2264 = vmatpush.msra.mxu0 %v114
    %2265 = vmatpush.msra.mxu0 %v113
    %2266 = vmatpush.msra.mxu0 %v112
    %2267 = vmatpush.msra.mxu0 %v111
    %2268 = vmatpush.msra.mxu0 %v110
    %2269 = vmatpush.msra.mxu0 %v109
    %2270 = vmatpush.msra.mxu0 %v108
    %2271 = vmatpush.msra.mxu0 %v107
    %2272 = vmatpush.msra.mxu0 %v106
    %2273 = vmatpush.msra.mxu0 %v105
    %2274 = vmatpush.msra.mxu0 %v104
    %2275 = vmatpush.msra.mxu0 %v103
    %2276 = vmatpush.msra.mxu0 %v102
    %2277 = vmatpush.msra.mxu0 %v101
    %2278 = vmatpush.msra.mxu0 %v100
    %2279 = vmatpush.msra.mxu0 %v99
    %2280 = vmatmul.f32.gmra.mxu0 %v2262
    %v2281 = vpop.f32.mrf.mxu0
    %v2282 = vadd.f32 0.0, %v2281
    %2283 = vmatmul.f32.gmra.mxu0 %v2263
    %v2284 = vpop.f32.mrf.mxu0
    %v2285 = vadd.f32 0.0, %v2284
    %2286 = vdwg.mxu0
    %v2288 = vsel %vm175, %v2282, 0
    %v2291 = vsel %vm175, %v2285, 0
    %2293 = vmatpush.msra.mxu0 0.0
    %2294 = vmatpush.msra.mxu0 0.0
    %2295 = vmatpush.msra.mxu0 0.0
    %2296 = vmatpush.msra.mxu0 0.0
    %2297 = vmatpush.msra.mxu0 0.0
    %2298 = vmatpush.msra.mxu0 0.0
    %2299 = vmatpush.msra.mxu0 0.0
    %2300 = vmatpush.msra.mxu0 0.0
    %2301 = vmatpush.msra.mxu0 0.0
    %2302 = vmatpush.msra.mxu0 0.0
    %2303 = vmatpush.msra.mxu0 0.0
    %2304 = vmatpush.msra.mxu0 0.0
    %2305 = vmatpush.msra.mxu0 %v124
    %2306 = vmatpush.msra.mxu0 %v121
    %2307 = vmatpush.msra.mxu0 %v118
    %2308 = vmatpush.msra.mxu0 %v115
    %2309 = vmatmul.f32.gmra.mxu0 %v2288
    %v2310 = vpop.f32.mrf.mxu0
    %v2311 = vadd.f32 %v169, %v2310
    %2312 = vmatmul.f32.gmra.mxu0 %v2291
    %v2313 = vpop.f32.mrf.mxu0
    %v2314 = vadd.f32 %v169, %v2313
    %2315 = vdwg.mxu0
    %2316 = vmatpush.msra.mxu0 0.0
    %2317 = vmatpush.msra.mxu0 0.0
    %2318 = vmatpush.msra.mxu0 0.0
    %2319 = vmatpush.msra.mxu0 0.0
    %2320 = vmatpush.msra.mxu0 0.0
    %2321 = vmatpush.msra.mxu0 0.0
    %2322 = vmatpush.msra.mxu0 0.0
    %2323 = vmatpush.msra.mxu0 0.0
    %2324 = vmatpush.msra.mxu0 0.0
    %2325 = vmatpush.msra.mxu0 0.0
    %2326 = vmatpush.msra.mxu0 0.0
    %2327 = vmatpush.msra.mxu0 0.0
    %2328 = vmatpush.msra.mxu0 %v125
    %2329 = vmatpush.msra.mxu0 %v122
    %2330 = vmatpush.msra.mxu0 %v119
    %2331 = vmatpush.msra.mxu0 %v116
    %2332 = vmatmul.f32.gmra.mxu0 %v2288
    %v2333 = vpop.f32.mrf.mxu0
    %v2334 = vadd.f32 %v170, %v2333
    %2335 = vmatmul.f32.gmra.mxu0 %v2291
    %v2336 = vpop.f32.mrf.mxu0
    %v2337 = vadd.f32 %v170, %v2336
    %2338 = vdwg.mxu0
    %2339 = vmatpush.msra.mxu0 0.0
    %2340 = vmatpush.msra.mxu0 0.0
    %2341 = vmatpush.msra.mxu0 0.0
    %2342 = vmatpush.msra.mxu0 0.0
    %2343 = vmatpush.msra.mxu0 0.0
    %2344 = vmatpush.msra.mxu0 0.0
    %2345 = vmatpush.msra.mxu0 0.0
    %2346 = vmatpush.msra.mxu0 0.0
    %2347 = vmatpush.msra.mxu0 0.0
    %2348 = vmatpush.msra.mxu0 0.0
    %2349 = vmatpush.msra.mxu0 0.0
    %2350 = vmatpush.msra.mxu0 0.0
    %2351 = vmatpush.msra.mxu0 %v126
    %2352 = vmatpush.msra.mxu0 %v123
    %2353 = vmatpush.msra.mxu0 %v120
    %2354 = vmatpush.msra.mxu0 %v117
    %2355 = vmatmul.f32.gmra.mxu0 %v2288
    %v2356 = vpop.f32.mrf.mxu0
    %v2357 = vadd.f32 %v171, %v2356
    %2358 = vmatmul.f32.gmra.mxu0 %v2291
    %v2359 = vpop.f32.mrf.mxu0
    %v2360 = vadd.f32 %v171, %v2359
    %2361 = vdwg.mxu0
    %2362 = vmatpush.msra.mxu0 0.0
    %2363 = vmatpush.msra.mxu0 0.0
    %2364 = vmatpush.msra.mxu0 0.0
    %2365 = vmatpush.msra.mxu0 0.0
    %2366 = vmatpush.msra.mxu0 0.0
    %2367 = vmatpush.msra.mxu0 0.0
    %2368 = vmatpush.msra.mxu0 0.0
    %2369 = vmatpush.msra.mxu0 0.0
    %2370 = vmatpush.msra.mxu0 0.0
    %2371 = vmatpush.msra.mxu0 0.0
    %2372 = vmatpush.msra.mxu0 0.0
    %2373 = vmatpush.msra.mxu0 0.0
    %2374 = vmatpush.msra.mxu0 %v136
    %2375 = vmatpush.msra.mxu0 %v133
    %2376 = vmatpush.msra.mxu0 %v130
    %2377 = vmatpush.msra.mxu0 %v127
    %2378 = vmatmul.f32.gmra.mxu0 %v1861
    %v2379 = vpop.f32.mrf.mxu0
    %v2380 = vadd.f32 %v252, %v2379
    %2381 = vmatmul.f32.gmra.mxu0 %v1943
    %v2382 = vpop.f32.mrf.mxu0
    %v2383 = vadd.f32 %v252, %v2382
    %2384 = vdwg.mxu0
    %2385 = vmatpush.msra.mxu0 0.0
    %2386 = vmatpush.msra.mxu0 0.0
    %2387 = vmatpush.msra.mxu0 0.0
    %2388 = vmatpush.msra.mxu0 0.0
    %2389 = vmatpush.msra.mxu0 0.0
    %2390 = vmatpush.msra.mxu0 0.0
    %2391 = vmatpush.msra.mxu0 0.0
    %2392 = vmatpush.msra.mxu0 0.0
    %2393 = vmatpush.msra.mxu0 0.0
    %2394 = vmatpush.msra.mxu0 0.0
    %2395 = vmatpush.msra.mxu0 0.0
    %2396 = vmatpush.msra.mxu0 0.0
    %2397 = vmatpush.msra.mxu0 %v137
    %2398 = vmatpush.msra.mxu0 %v134
    %2399 = vmatpush.msra.mxu0 %v131
    %2400 = vmatpush.msra.mxu0 %v128
    %2401 = vmatmul.f32.gmra.mxu0 %v1861
    %v2402 = vpop.f32.mrf.mxu0
    %v2403 = vadd.f32 %v253, %v2402
    %2404 = vmatmul.f32.gmra.mxu0 %v1943
    %v2405 = vpop.f32.mrf.mxu0
    %v2406 = vadd.f32 %v253, %v2405
    %2407 = vdwg.mxu0
    %2408 = vmatpush.msra.mxu0 0.0
    %2409 = vmatpush.msra.mxu0 0.0
    %2410 = vmatpush.msra.mxu0 0.0
    %2411 = vmatpush.msra.mxu0 0.0
    %2412 = vmatpush.msra.mxu0 0.0
    %2413 = vmatpush.msra.mxu0 0.0
    %2414 = vmatpush.msra.mxu0 0.0
    %2415 = vmatpush.msra.mxu0 0.0
    %2416 = vmatpush.msra.mxu0 0.0
    %2417 = vmatpush.msra.mxu0 0.0
    %2418 = vmatpush.msra.mxu0 0.0
    %2419 = vmatpush.msra.mxu0 0.0
    %2420 = vmatpush.msra.mxu0 %v138
    %2421 = vmatpush.msra.mxu0 %v135
    %2422 = vmatpush.msra.mxu0 %v132
    %2423 = vmatpush.msra.mxu0 %v129
    %2424 = vmatmul.f32.gmra.mxu0 %v1861
    %v2425 = vpop.f32.mrf.mxu0
    %v2426 = vadd.f32 %v254, %v2425
    %2427 = vmatmul.f32.gmra.mxu0 %v1943
    %v2428 = vpop.f32.mrf.mxu0
    %v2429 = vadd.f32 %v254, %v2428
    %2430 = vdwg.mxu0
    %v2431 = vadd.f32 %v2311, %v2380
    %v2432 = vadd.f32 %v2314, %v2383
    %v2433 = vxor.u32 %v2431, 2147483648
    %v2434 = vxor.u32 %v2432, 2147483648
    %v2435 = vmul.f32 %v2433, 1.442695
    %v2436 = vpow.pop %v2435
    %v2437 = vmul.f32 %v2434, 1.442695
    %v2438 = vpow.pop %v2437
    %v2439 = vadd.f32 %v2436, 1.0
    %v2440 = vadd.f32 %v2438, 1.0
    %v2441 = vrcp.pop %v2439
    %v2442 = vmul.f32 %v2439, %v2441
    %v2443 = vsub.f32 1.0, %v2442
    %v2444 = vmul.f32 %v2441, %v2443
    %v2445 = vadd.f32 %v2441, %v2444
    %vm2446 = vweird.f32 %v2439
    %vm2447 = vweird.f32 %v2441
    %vm2448 = vmor %vm2446, %vm2447
    %v2449 = vsel %vm2448, %v2441, %v2445
    %v2450 = vand.u32 2147483647, %v2439
    %vm2451 = vcmp.eq.f32.partialorder %v2450, 8.507059e+37
    %v2452 = vand.u32 %v2439, 2147483648
    %v2453 = vor.u32 1.1754944e-38, %v2452
    %v2454 = vsel %vm2451, %v2453, %v2449
    %v2455 = vmul.f32 1.0, %v2454
    %v2456 = vrcp.pop %v2440
    %v2457 = vmul.f32 %v2440, %v2456
    %v2458 = vsub.f32 1.0, %v2457
    %v2459 = vmul.f32 %v2456, %v2458
    %v2460 = vadd.f32 %v2456, %v2459
    %vm2461 = vweird.f32 %v2440
    %vm2462 = vweird.f32 %v2456
    %vm2463 = vmor %vm2461, %vm2462
    %v2464 = vsel %vm2463, %v2456, %v2460
    %v2465 = vand.u32 2147483647, %v2440
    %vm2466 = vcmp.eq.f32.partialorder %v2465, 8.507059e+37
    %v2467 = vand.u32 %v2440, 2147483648
    %v2468 = vor.u32 1.1754944e-38, %v2467
    %v2469 = vsel %vm2466, %v2468, %v2464
    %v2470 = vmul.f32 1.0, %v2469
    %v2471 = vadd.f32 %v2334, %v2403
    %v2472 = vadd.f32 %v2337, %v2406
    %v2473 = vxor.u32 %v2471, 2147483648
    %v2474 = vxor.u32 %v2472, 2147483648
    %v2475 = vmul.f32 %v2473, 1.442695
    %v2476 = vpow.pop %v2475
    %v2477 = vmul.f32 %v2474, 1.442695
    %v2478 = vpow.pop %v2477
    %v2479 = vadd.f32 %v2476, 1.0
    %v2480 = vadd.f32 %v2478, 1.0
    %v2481 = vrcp.pop %v2479
    %v2482 = vmul.f32 %v2479, %v2481
    %v2483 = vsub.f32 1.0, %v2482
    %v2484 = vmul.f32 %v2481, %v2483
    %v2485 = vadd.f32 %v2481, %v2484
    %vm2486 = vweird.f32 %v2479
    %vm2487 = vweird.f32 %v2481
    %vm2488 = vmor %vm2486, %vm2487
    %v2489 = vsel %vm2488, %v2481, %v2485
    %v2490 = vand.u32 2147483647, %v2479
    %vm2491 = vcmp.eq.f32.partialorder %v2490, 8.507059e+37
    %v2492 = vand.u32 %v2479, 2147483648
    %v2493 = vor.u32 1.1754944e-38, %v2492
    %v2494 = vsel %vm2491, %v2493, %v2489
    %v2495 = vmul.f32 1.0, %v2494
    %v2496 = vrcp.pop %v2480
    %v2497 = vmul.f32 %v2480, %v2496
    %v2498 = vsub.f32 1.0, %v2497
    %v2499 = vmul.f32 %v2496, %v2498
    %v2500 = vadd.f32 %v2496, %v2499
    %vm2501 = vweird.f32 %v2480
    %vm2502 = vweird.f32 %v2496
    %vm2503 = vmor %vm2501, %vm2502
    %v2504 = vsel %vm2503, %v2496, %v2500
    %v2505 = vand.u32 2147483647, %v2480
    %vm2506 = vcmp.eq.f32.partialorder %v2505, 8.507059e+37
    %v2507 = vand.u32 %v2480, 2147483648
    %v2508 = vor.u32 1.1754944e-38, %v2507
    %v2509 = vsel %vm2506, %v2508, %v2504
    %v2510 = vmul.f32 1.0, %v2509
    %v2511 = vmul.f32 %v2455, %v2426
    %v2512 = vmul.f32 %v2470, %v2429
    %v2513 = vadd.f32 %v2357, %v2511
    %v2514 = vadd.f32 %v2360, %v2512
    %v2515 = vtanh.pop %v2513
    %v2516 = vtanh.pop %v2514
    %v2517 = vsub.f32 1.0, %v2495
    %v2518 = vsub.f32 1.0, %v2510
    %v2519 = vmul.f32 %v2517, %v2515
    %v2520 = vmul.f32 %v2518, %v2516
    %v2521 = vmul.f32 %v2495, %v1858
    %v2522 = vmul.f32 %v2510, %v1859
    %v2523 = vadd.f32 %v2519, %v2521
    %v2524 = vadd.f32 %v2520, %v2522
    %v2526 = vsel %vm175, %v2523, 0
    %2528 = vmatpush.xpose.msra.mxu0 0.0
    %2529 = vmatpush.xpose.msra.mxu0 0.0
    %2530 = vmatpush.xpose.msra.mxu0 0.0
    %2531 = vmatpush.xpose.msra.mxu0 0.0
    %2532 = vmatpush.xpose.msra.mxu0 0.0
    %2533 = vmatpush.xpose.msra.mxu0 0.0
    %2534 = vmatpush.xpose.msra.mxu0 0.0
    %2535 = vmatpush.xpose.msra.mxu0 0.0
    %2536 = vmatpush.xpose.msra.mxu0 0.0
    %2537 = vmatpush.xpose.msra.mxu0 0.0
    %2538 = vmatpush.xpose.msra.mxu0 0.0
    %2539 = vmatpush.xpose.msra.mxu0 0.0
    %2540 = vmatpush.xpose.msra.mxu0 0.0
    %2541 = vmatpush.xpose.msra.mxu0 0.0
    %2542 = vmatpush.xpose.msra.mxu0 0.0
    %2543 = vmatpush.xpose.msra.mxu0 %v434
    %2544 = vmatmul.f32.gmra.mxu0 %v2526
    %v2545 = vpop.f32.mrf.mxu0
    %v2546 = vadd.f32 %v428, %v2545
    %2547 = vdwg.mxu0
    %v2548 = vsel %vm456, %v2546, -inf
    %2549 = vmax.xlane.f32.xlu0 %v2548
    %v2550 = vpop.xlane.xlu0 %2549
    %v2551 = vsub.f32 %v2546, %v2550
    %v2552 = vmul.f32 %v2551, 1.442695
    %v2553 = vpow.pop %v2552
    %v2554 = vsel %vm456, %v2553, 0.0
    %2555 = vadd.xlane.f32.xlu0 %v2554
    %v2556 = vpop.xlane.xlu0 %2555
    %v2557 = vrcp.pop %v2556
    %v2558 = vmul.f32 %v2556, %v2557
    %v2559 = vsub.f32 2.0, %v2558
    %v2560 = vmul.f32 %v2557, %v2559
    %v2561 = vmul.f32 %v2553, %v2560
    %v2563 = vsel %vm456, %v2561, 0
    %2565 = vmatpush.msra.mxu0 0.0
    %2566 = vmatpush.msra.mxu0 0.0
    %2567 = vmatpush.msra.mxu0 0.0
    %2568 = vmatpush.msra.mxu0 0.0
    %2569 = vmatpush.msra.mxu0 0.0
    %2570 = vmatpush.msra.mxu0 0.0
    %2571 = vmatpush.msra.mxu0 0.0
    %2572 = vmatpush.msra.mxu0 0.0
    %2573 = vmatpush.msra.mxu0 0.0
    %2574 = vmatpush.msra.mxu0 0.0
    %2575 = vmatpush.msra.mxu0 0.0
    %2576 = vmatpush.msra.mxu0 0.0
    %2577 = vmatpush.msra.mxu0 0.0
    %2578 = vmatpush.msra.mxu0 0.0
    %2579 = vmatpush.msra.mxu0 0.0
    %2580 = vmatpush.msra.mxu0 %v158
    %2581 = vmatmul.f32.gmra.mxu0 %v2563
    %v2582 = vpop.f32.mrf.mxu0
    %v2583 = vadd.f32 0.0, %v2582
    %2584 = vdwg.mxu0
    %2585 = vst.msk [vmem:[#allocation2] sm:$0xff] %vm175, %v2583
    %2586 = vmatpush.msra.mxu0 0.0
    %2587 = vmatpush.msra.mxu0 0.0
    %2588 = vmatpush.msra.mxu0 0.0
    %2589 = vmatpush.msra.mxu0 0.0
    %2590 = vmatpush.msra.mxu0 0.0
    %2591 = vmatpush.msra.mxu0 0.0
    %2592 = vmatpush.msra.mxu0 0.0
    %2593 = vmatpush.msra.mxu0 0.0
    %2594 = vmatpush.msra.mxu0 0.0
    %2595 = vmatpush.msra.mxu0 0.0
    %2596 = vmatpush.msra.mxu0 0.0
    %2597 = vmatpush.msra.mxu0 0.0
    %2598 = vmatpush.msra.mxu0 0.0
    %2599 = vmatpush.msra.mxu0 0.0
    %2600 = vmatpush.msra.mxu0 0.0
    %2601 = vmatpush.msra.mxu0 %v149
    %2602 = vmatmul.f32.gmra.mxu0 %v2563
    %v2603 = vpop.f32.mrf.mxu0
    %v2604 = vadd.f32 0.0, %v2603
    %2605 = vdwg.mxu0
    %2606 = vst [vmem:[#allocation3] sm:$0xff] %v2604
    %v2608 = vsel %vm175, %v2524, 0
    %2610 = vmatpush.xpose.msra.mxu0 0.0
    %2611 = vmatpush.xpose.msra.mxu0 0.0
    %2612 = vmatpush.xpose.msra.mxu0 0.0
    %2613 = vmatpush.xpose.msra.mxu0 0.0
    %2614 = vmatpush.xpose.msra.mxu0 0.0
    %2615 = vmatpush.xpose.msra.mxu0 0.0
    %2616 = vmatpush.xpose.msra.mxu0 0.0
    %2617 = vmatpush.xpose.msra.mxu0 0.0
    %2618 = vmatpush.xpose.msra.mxu0 0.0
    %2619 = vmatpush.xpose.msra.mxu0 0.0
    %2620 = vmatpush.xpose.msra.mxu0 0.0
    %2621 = vmatpush.xpose.msra.mxu0 0.0
    %2622 = vmatpush.xpose.msra.mxu0 0.0
    %2623 = vmatpush.xpose.msra.mxu0 0.0
    %2624 = vmatpush.xpose.msra.mxu0 0.0
    %2625 = vmatpush.xpose.msra.mxu0 %v523
    %2626 = vmatmul.f32.gmra.mxu0 %v2608
    %v2627 = vpop.f32.mrf.mxu0
    %v2628 = vadd.f32 %v517, %v2627
    %2629 = vdwg.mxu0
    %v2630 = vsel %vm456, %v2628, -inf
    %2631 = vmax.xlane.f32.xlu0 %v2630
    %v2632 = vpop.xlane.xlu0 %2631
    %v2633 = vsub.f32 %v2628, %v2632
    %v2634 = vmul.f32 %v2633, 1.442695
    %v2635 = vpow.pop %v2634
    %v2636 = vsel %vm456, %v2635, 0.0
    %2637 = vadd.xlane.f32.xlu0 %v2636
    %v2638 = vpop.xlane.xlu0 %2637
    %v2639 = vrcp.pop %v2638
    %v2640 = vmul.f32 %v2638, %v2639
    %v2641 = vsub.f32 2.0, %v2640
    %v2642 = vmul.f32 %v2639, %v2641
    %v2643 = vmul.f32 %v2635, %v2642
    %v2645 = vsel %vm456, %v2643, 0
    %2647 = vmatpush.msra.mxu0 0.0
    %2648 = vmatpush.msra.mxu0 0.0
    %2649 = vmatpush.msra.mxu0 0.0
    %2650 = vmatpush.msra.mxu0 0.0
    %2651 = vmatpush.msra.mxu0 0.0
    %2652 = vmatpush.msra.mxu0 0.0
    %2653 = vmatpush.msra.mxu0 0.0
    %2654 = vmatpush.msra.mxu0 0.0
    %2655 = vmatpush.msra.mxu0 0.0
    %2656 = vmatpush.msra.mxu0 0.0
    %2657 = vmatpush.msra.mxu0 0.0
    %2658 = vmatpush.msra.mxu0 0.0
    %2659 = vmatpush.msra.mxu0 0.0
    %2660 = vmatpush.msra.mxu0 0.0
    %2661 = vmatpush.msra.mxu0 0.0
    %2662 = vmatpush.msra.mxu0 %v160
    %2663 = vmatmul.f32.gmra.mxu0 %v2645
    %v2664 = vpop.f32.mrf.mxu0
    %v2665 = vadd.f32 0.0, %v2664
    %2666 = vdwg.mxu0
    %2667 = vst.msk [vmem:[#allocation2 + $0x8] sm:$0xff] %vm175, %v2665
    %2668 = vmatpush.msra.mxu0 0.0
    %2669 = vmatpush.msra.mxu0 0.0
    %2670 = vmatpush.msra.mxu0 0.0
    %2671 = vmatpush.msra.mxu0 0.0
    %2672 = vmatpush.msra.mxu0 0.0
    %2673 = vmatpush.msra.mxu0 0.0
    %2674 = vmatpush.msra.mxu0 0.0
    %2675 = vmatpush.msra.mxu0 0.0
    %2676 = vmatpush.msra.mxu0 0.0
    %2677 = vmatpush.msra.mxu0 0.0
    %2678 = vmatpush.msra.mxu0 0.0
    %2679 = vmatpush.msra.mxu0 0.0
    %2680 = vmatpush.msra.mxu0 0.0
    %2681 = vmatpush.msra.mxu0 0.0
    %2682 = vmatpush.msra.mxu0 0.0
    %2683 = vmatpush.msra.mxu0 %v157
    %2684 = vmatmul.f32.gmra.mxu0 %v2645
    %v2685 = vpop.f32.mrf.mxu0
    %v2686 = vadd.f32 0.0, %v2685
    %2687 = vdwg.mxu0
    %2688 = vst [vmem:[#allocation3 + $0x8] sm:$0xff] %v2686
    %v2689 = vld [vmem:[#allocation2] sm:$0xff]
    %v2690 = vld [vmem:[#allocation2 + $0x8] sm:$0xff]
    %v2691 = vld [vmem:[#allocation3] sm:$0xff]
    %v2692 = vld [vmem:[#allocation3 + $0x8] sm:$0xff]
    %2693 = vmatpush.xpose.msra.mxu0 %v654
    %2694 = vmatpush.xpose.msra.mxu0 %v651
    %2695 = vmatpush.xpose.msra.mxu0 %v648
    %2696 = vmatpush.xpose.msra.mxu0 %v645
    %2697 = vmatpush.xpose.msra.mxu0 %v642
    %2698 = vmatpush.xpose.msra.mxu0 %v639
    %2699 = vmatpush.xpose.msra.mxu0 %v636
    %2700 = vmatpush.xpose.msra.mxu0 %v633
    %2701 = vmatpush.xpose.msra.mxu0 %v630
    %2702 = vmatpush.xpose.msra.mxu0 %v627
    %2703 = vmatpush.xpose.msra.mxu0 %v624
    %2704 = vmatpush.xpose.msra.mxu0 %v621
    %2705 = vmatpush.xpose.msra.mxu0 %v618
    %2706 = vmatpush.xpose.msra.mxu0 %v615
    %2707 = vmatpush.xpose.msra.mxu0 %v612
    %2708 = vmatpush.xpose.msra.mxu0 %v609
    %2709 = vmatmul.f32.gmra.mxu0 %v2526
    %v2710 = vpop.f32.mrf.mxu0
    %v2711 = vadd.f32 0.0, %v2710
    %2712 = vmatmul.f32.gmra.mxu0 %v2608
    %v2713 = vpop.f32.mrf.mxu0
    %v2714 = vadd.f32 0.0, %v2713
    %2715 = vdwg.mxu0
    %v2716 = vsel %vm679, %v2711, -1e+09
    %v2717 = vsel %vm679, %v2714, -1e+09
    %2718 = vmax.xlane.f32.xlu0 %v2716
    %v2719 = vpop.xlane.xlu0 %2718
    %2720 = vmax.xlane.f32.xlu0 %v2717
    %v2721 = vpop.xlane.xlu0 %2720
    %v2722 = vsub.f32 %v2716, %v2719
    %v2723 = vsub.f32 %v2717, %v2721
    %v2724 = vmul.f32 %v2722, 1.442695
    %v2725 = vpow.pop %v2724
    %v2726 = vmul.f32 %v2723, 1.442695
    %v2727 = vpow.pop %v2726
    %2728 = vadd.xlane.f32.xlu0 %v2725
    %v2729 = vpop.xlane.xlu0 %2728
    %2730 = vadd.xlane.f32.xlu0 %v2727
    %v2731 = vpop.xlane.xlu0 %2730
    %v2732 = vrcp.pop %v2729
    %v2733 = vrcp.pop %v2731
    %v2734 = vmul.f32 %v2729, %v2732
    %v2735 = vmul.f32 %v2731, %v2733
    %v2736 = vsub.f32 2.0, %v2734
    %v2737 = vsub.f32 2.0, %v2735
    %v2738 = vmul.f32 %v2732, %v2736
    %v2739 = vmul.f32 %v2733, %v2737
    %v2740 = vmul.f32 %v2725, %v2738
    %v2741 = vmul.f32 %v2727, %v2739
    %2742 = vrot.lane.b32.xlu0 %v2523, 32
    %v2743 = vpop.permute.xlu0 %2742
    %2744 = vrot.lane.b32.xlu0 %v2524, 32
    %v2745 = vpop.permute.xlu0 %2744
    %2750 = vrot.lane.b32.xlu0 %v2689, 64
    %v2751 = vpop.permute.xlu0 %2750
    %2752 = vrot.lane.b32.xlu0 %v2690, 64
    %v2753 = vpop.permute.xlu0 %2752
    %v2756 = vsel %vm175, %v2282, %v2743
    %v2757 = vsel %vm175, %v2285, %v2745
    %v2758 = vsel %vm722, %v2756, %v2751
    %v2759 = vsel %vm722, %v2757, %v2753
    %v2760 = vld [vmem:[%s10] sm:$0xff]
    %v2761 = vld [vmem:[%s10 + $0x8] sm:$0xff]
    %v2762 = vld [vmem:[%s10 + $0x10] sm:$0xff]
    %v2763 = vld [vmem:[%s10 + $0x18] sm:$0xff]
    %v2764 = vld [vmem:[%s10 + $0x20] sm:$0xff]
    %v2765 = vld [vmem:[%s10 + $0x28] sm:$0xff]
    %v2766 = vld [vmem:[%s10 + $0x30] sm:$0xff]
    %v2767 = vld [vmem:[%s10 + $0x38] sm:$0xff]
    %v2768 = vld [vmem:[%s10 + $0x40] sm:$0xff]
    %v2769 = vld [vmem:[%s10 + $0x48] sm:$0xff]
    %v2770 = vld [vmem:[%s10 + $0x50] sm:$0xff]
    %v2771 = vld [vmem:[%s10 + $0x58] sm:$0xff]
    %v2772 = vld [vmem:[#allocation4] sm:$0x1]
    %v2774 = vperm.slane %v2772, 0
    %v2777 = vsel %vm741, %v2758, 0
    %v2780 = vsel %vm741, %v2759, 0
    %2782 = vmatpush.msra.mxu0 0.0
    %2783 = vmatpush.msra.mxu0 0.0
    %2784 = vmatpush.msra.mxu0 0.0
    %2785 = vmatpush.msra.mxu0 0.0
    %2786 = vmatpush.msra.mxu0 %v2771
    %2787 = vmatpush.msra.mxu0 %v2770
    %2788 = vmatpush.msra.mxu0 %v2769
    %2789 = vmatpush.msra.mxu0 %v2768
    %2790 = vmatpush.msra.mxu0 %v2767
    %2791 = vmatpush.msra.mxu0 %v2766
    %2792 = vmatpush.msra.mxu0 %v2765
    %2793 = vmatpush.msra.mxu0 %v2764
    %2794 = vmatpush.msra.mxu0 %v2763
    %2795 = vmatpush.msra.mxu0 %v2762
    %2796 = vmatpush.msra.mxu0 %v2761
    %2797 = vmatpush.msra.mxu0 %v2760
    %2798 = vmatmul.f32.gmra.mxu0 %v2777
    %v2799 = vpop.f32.mrf.mxu0
    %v2800 = vadd.f32 %v2774, %v2799
    %2801 = vmatmul.f32.gmra.mxu0 %v2780
    %v2802 = vpop.f32.mrf.mxu0
    %v2803 = vadd.f32 %v2774, %v2802
    %2804 = vdwg.mxu0
    %v2805 = vxor.u32 %v2800, 2147483648
    %v2806 = vxor.u32 %v2803, 2147483648
    %v2807 = vmul.f32 %v2805, 1.442695
    %v2808 = vpow.pop %v2807
    %v2809 = vmul.f32 %v2806, 1.442695
    %v2810 = vpow.pop %v2809
    %v2811 = vadd.f32 %v2808, 1.0
    %v2812 = vadd.f32 %v2810, 1.0
    %v2813 = vrcp.pop %v2811
    %v2814 = vmul.f32 %v2811, %v2813
    %v2815 = vsub.f32 1.0, %v2814
    %v2816 = vmul.f32 %v2813, %v2815
    %v2817 = vadd.f32 %v2813, %v2816
    %vm2818 = vweird.f32 %v2811
    %vm2819 = vweird.f32 %v2813
    %vm2820 = vmor %vm2818, %vm2819
    %v2821 = vsel %vm2820, %v2813, %v2817
    %v2822 = vand.u32 2147483647, %v2811
    %vm2823 = vcmp.eq.f32.partialorder %v2822, 8.507059e+37
    %v2824 = vand.u32 %v2811, 2147483648
    %v2825 = vor.u32 1.1754944e-38, %v2824
    %v2826 = vsel %vm2823, %v2825, %v2821
    %v2827 = vmul.f32 1.0, %v2826
    %v2828 = vrcp.pop %v2812
    %v2829 = vmul.f32 %v2812, %v2828
    %v2830 = vsub.f32 1.0, %v2829
    %v2831 = vmul.f32 %v2828, %v2830
    %v2832 = vadd.f32 %v2828, %v2831
    %vm2833 = vweird.f32 %v2812
    %vm2834 = vweird.f32 %v2828
    %vm2835 = vmor %vm2833, %vm2834
    %v2836 = vsel %vm2835, %v2828, %v2832
    %v2837 = vand.u32 2147483647, %v2812
    %vm2838 = vcmp.eq.f32.partialorder %v2837, 8.507059e+37
    %v2839 = vand.u32 %v2812, 2147483648
    %v2840 = vor.u32 1.1754944e-38, %v2839
    %v2841 = vsel %vm2838, %v2840, %v2836
    %v2842 = vmul.f32 1.0, %v2841
    %2844 = vset.pattern.permute.xlu0 0
    %2845 = vperm.xlu0 %2844, %v2827
    %v2846 = vpop.permute.xlu0 %2845
    %2849 = vset.pattern.permute.xlu0 0
    %2850 = vperm.xlu0 %2849, %v2842
    %v2851 = vpop.permute.xlu0 %2850
    %v2853 = vmul.f32 %v2846, %v2740
    %v2854 = vmul.f32 %v2851, %v2741
    %v2855 = vsub.f32 1.0, %v2827
    %v2856 = vsub.f32 1.0, %v2842
    %2858 = vset.pattern.permute.xlu0 0
    %2859 = vperm.xlu0 %2858, %v2855
    %v2860 = vpop.permute.xlu0 %2859
    %2863 = vset.pattern.permute.xlu0 0
    %2864 = vperm.xlu0 %2863, %v2856
    %v2865 = vpop.permute.xlu0 %2864
    %v2867 = vmul.f32 %v2860, %v2691
    %v2868 = vmul.f32 %v2865, %v2692
    %v2869 = vadd.f32 %v2853, %v2867
    %v2870 = vadd.f32 %v2854, %v2868
    %v2872 = vrot.slane %v2869, 1
    %v2873 = vrot.slane %v2869, 2
    %2876 = vst [vmem:[#allocation11 + $0x3] sm:$0x1] %v2869
    %2877 = vst [vmem:[#allocation11 + $0x7] sm:$0x1] %v2872
    %2878 = vst [vmem:[#allocation11 + $0xb] sm:$0x1] %v2873
    %v2880 = vrot.slane %v2870, 1
    %v2881 = vrot.slane %v2870, 2
    %2884 = vst [vmem:[%s850 + $0x3] sm:$0x1] %v2870
    %2885 = vst [vmem:[%s850 + $0x7] sm:$0x1] %v2880
    %2886 = vst [vmem:[%s850 + $0xb] sm:$0x1] %v2881
    // Predicated region
    $region70: #{tpu_custom_call.1} parent=1 // pred_check
      _
    $region71: #{tpu_custom_call.1} parent=1 // pred_check_branch
      %2888 = sbr.rel (0) target = $region73
    $region72: #{tpu_custom_call.1} parent=1 // pred_region
      %2890 = vsyncadd [#allocation7], 0
      %s2891 = sshll.u32 [#allocation11], 4
      %s2892 = int_to_ptr.vmem [resolvable:$true] %s2891
      %s2893 = sshll.u32 %s14, 4
      %s2894 = int_to_ptr.hbm [resolvable:$true] %s2893
      %2899 = dma.vmem_to_hbm [thread:$0]  %s2892, 384, %s2894, [#allocation7], 64, 64, 4
    $region73: #{tpu_custom_call.1} parent=1 // pred_fallthru
      _
    // Predicated region
    $region74: #{tpu_custom_call.1} parent=1 // pred_check
      _
    $region75: #{tpu_custom_call.1} parent=1 // pred_check_branch
      %2901 = sbr.rel (0) target = $region77
    $region76: #{tpu_custom_call.1} parent=1 // pred_region
      _
    $region77: #{tpu_custom_call.1} parent=1 // pred_fallthru
      _
    // Predicated region
    $region78: #{tpu_custom_call.1} parent=1 // pred_check
      _
    $region79: #{tpu_custom_call.1} parent=1 // pred_check_branch
      %2903 = sbr.rel (0) target = $region81
    $region80: #{tpu_custom_call.1} parent=1 // pred_region
      %2905 = dma.done [#allocation7], 384
    $region81: #{tpu_custom_call.1} parent=1 // pred_fallthru
      _
    // Predicated region
    $region82: #{tpu_custom_call.1} parent=1 // pred_check
      _
    $region83: #{tpu_custom_call.1} parent=1 // pred_check_branch
      %2907 = sbr.rel (0) target = $region85
    $region84: #{tpu_custom_call.1} parent=1 // pred_region
      _
    $region85: #{tpu_custom_call.1} parent=1 // pred_fallthru
      _
    %2908 = vsyncpa [#allocation6], 1
    %2909 = vsyncpa [#allocation9], 1
    %2910 = vsyncpa [#allocation7], 1

</llo_original>
